<compile_context>
chip_gen: v5e
topology: v5e:2x2
jax: 0.10.0
libtpu: 0.0.40
codegen_flags: <defaults>
</compile_context>

<pallas_src>
import functools

import jax
import jax.numpy as jnp
from jax.experimental import pallas as pl
from jax.experimental.pallas import tpu as pltpu


# -----------------------------------------------------------------------------
# Fused encoder kernel (B_blk images per grid step)
# -----------------------------------------------------------------------------
def _encoder_kernel(a0_ref,
                    w1, w_r1a, w_r1b, w_c2, w_r2a, w_r2b, w_r3a, w_r3b, w_hd,
                    bias_ref,
                    o_ref,
                    xp1a, xp1b, xp2a, xp2b,
                    *, B, H1, W1, H2, W2):
    f32, bf16 = jnp.float32, jnp.bfloat16
    relu = lambda v: jnp.maximum(v, 0.0)

    Hp1, Wp1 = H1 + 2, W1 + 2
    Hp2, Wp2 = H2 + 2, W2 + 2
    Sp1, Sp2 = Hp1 * Wp1, Hp2 * Wp2
    S1, S2 = H1 * W1, H2 * W2
    R1, R2 = B * Sp1, B * Sp2
    lo1, hi1 = Wp1 + 1, R1 - Wp1 - 1          # slab covering every interior position
    lo2, hi2 = Wp2 + 1, R2 - Wp2 - 1

    # static, lane-aligned offsets into the packed bias vector
    OB_C1, OB_R1A, OB_R1B, OB_C2 = 0, 128, 256, 384
    OB_R2A, OB_R2B, OB_R3A, OB_R3B, OB_HD = 640, 768, 1024, 1152, 1408

    def bias(off, n):
        return bias_ref[:, off:off + n]

    # ---- one-time zeroing: the halo is never written afterwards, interior
    #      rows are fully overwritten every grid step ----
    @pl.when(pl.program_id(0) == 0)
    def _init():
        xp1a[...] = jnp.zeros_like(xp1a)
        xp1b[...] = jnp.zeros_like(xp1b)
        xp2a[...] = jnp.zeros_like(xp2a)
        xp2b[...] = jnp.zeros_like(xp2b)

    def conv3_taps(src_ref, w_ref, Wp, lo, hi, cin):
        """3x3 / s1 / p1 conv as 9 shifted slab matmuls.

        Returns an f32 value of shape (hi - lo, Cout); row i corresponds to the
        flat padded position lo + i (halo rows contain garbage and are never
        stored).
        """
        acc = None
        for di in range(3):
            for dj in range(3):
                t = di * 3 + dj
                shift = (di - 1) * Wp + (dj - 1)
                lhs = src_ref[lo + shift:hi + shift, :].astype(bf16)
                c = jnp.dot(lhs, w_ref[t * cin:(t + 1) * cin, :],
                            preferred_element_type=f32)
                acc = c if acc is None else acc + c
        return acc

    def scatter_interior(dst_ref, val, Sp, Wp, Hn, Wn, lo):
        """Write interior rows of a slab value (row i <-> padded pos lo+i)."""
        for b in range(B):
            for oh in range(Hn):
                p = b * Sp + (oh + 1) * Wp + 1
                dst_ref[p:p + Wn, :] = val[p - lo:p - lo + Wn, :]

    # ---------------- stem: conv(3->128, k8, s4, p2) + ReLU ----------------
    # (patches precomputed outside on the tiny input; K padded to 256 lanes)
    h = jnp.dot(a0_ref[...], w1[...], preferred_element_type=f32) + bias(OB_C1, 128)
    h = relu(h)                                              # (B*S1, 128) f32
    for b in range(B):
        for oh in range(H1):
            dst = b * Sp1 + (oh + 1) * Wp1 + 1
            src = b * S1 + oh * W1
            xp1a[dst:dst + W1, :] = h[src:src + W1, :]

    # ---------------- ResBlock(128): x + conv2(relu(conv1(x))), then ReLU ----
    acc = conv3_taps(xp1a, w_r1a, Wp1, lo1, hi1, 128)
    t1 = relu(acc + bias(OB_R1A, 128))
    scatter_interior(xp1b, t1, Sp1, Wp1, H1, W1, lo1)

    acc = conv3_taps(xp1b, w_r1b, Wp1, lo1, hi1, 128)
    h1 = relu(xp1a[lo1:hi1, :] + acc + bias(OB_R1B, 128))
    scatter_interior(xp1a, h1, Sp1, Wp1, H1, W1, lo1)

    # ---------------- conv(128->256, k4, s2, p1) + ReLU ----------------
    # dense stride-1 valid tap conv over the padded grid; only the stride-2
    # positions (q = b*Sp1 + 2*oh*Wp1 + 2*ow) are extracted afterwards.
    M4 = R1 - 3 * Wp1 - 3
    acc = None
    for di in range(4):
        for dj in range(4):
            t = di * 4 + dj
            shift = di * Wp1 + dj
            lhs = xp1a[shift:shift + M4, :].astype(bf16)
            c = jnp.dot(lhs, w_c2[t * 128:(t + 1) * 128, :],
                        preferred_element_type=f32)
            acc = c if acc is None else acc + c
    d = relu(acc + bias(OB_C2, 256))                         # (M4, 256) f32
    for b in range(B):
        for oh in range(H2):
            for ow in range(W2):
                q = b * Sp1 + (2 * oh) * Wp1 + 2 * ow
                dst = b * Sp2 + (oh + 1) * Wp2 + 1 + ow
                xp2a[dst:dst + 1, :] = d[q:q + 1, :]
    # TODO(synk): at larger W2 replace the per-pixel copies with one
    #             stride-2 pl.ds row gather per output row.

    # ---------------- two ResBlock(256) + ReLU ----------------
    def resblock_256(w_a, ob_a, w_b, ob_b):
        a = conv3_taps(xp2a, w_a, Wp2, lo2, hi2, 256)
        tt = relu(a + bias(ob_a, 128))
        scatter_interior(xp2b, tt, Sp2, Wp2, H2, W2, lo2)
        a = conv3_taps(xp2b, w_b, Wp2, lo2, hi2, 128)
        hh = relu(xp2a[lo2:hi2, :] + a + bias(ob_b, 256))
        scatter_interior(xp2a, hh, Sp2, Wp2, H2, W2, lo2)

    resblock_256(w_r2a, OB_R2A, w_r2b, OB_R2B)
    resblock_256(w_r3a, OB_R3A, w_r3b, OB_R3B)

    # ---------------- head: conv(256->64, padded to 128) + Sigmoid + Binarizer
    acc = conv3_taps(xp2a, w_hd, Wp2, lo2, hi2, 256)
    z = acc + bias(OB_HD, 128)
    # sigmoid(z) > 0.5  <=>  z > 0 ; padded lanes have w=0,b=0 -> z=0 -> 0
    bits = jnp.where(z > 0.0, 1.0, 0.0).astype(bf16)
    for b in range(B):
        for oh in range(H2):
            p = b * Sp2 + (oh + 1) * Wp2 + 1
            dst = b * S2 + oh * W2
            o_ref[dst:dst + W2, :] = bits[p - lo2:p - lo2 + W2, :]


# -----------------------------------------------------------------------------
# Host-side glue: stem im2col, weight/bias packing, pallas_call wrapper
# -----------------------------------------------------------------------------
def _im2col_stem(x, kh, kw, stride, pad):
    # x: (N, C, H, W) -> (N, Ho*Wo, C*kh*kw); column order (c, i, j) matches
    # weight.reshape(Cout, C*kh*kw).
    N, C, H, W = x.shape
    xp = jnp.pad(x, ((0, 0), (0, 0), (pad, pad), (pad, pad)))
    Ho = (H + 2 * pad - kh) // stride + 1
    Wo = (W + 2 * pad - kw) // stride + 1
    cols = []
    for i in range(kh):
        for j in range(kw):
            cols.append(xp[:, :, i:i + stride * Ho:stride, j:j + stride * Wo:stride])
    p = jnp.stack(cols, axis=0)                 # (kh*kw, N, C, Ho, Wo)
    p = p.transpose(1, 3, 4, 2, 0)              # (N, Ho, Wo, C, kh*kw)
    return p.reshape(N, Ho * Wo, C * kh * kw), Ho, Wo


def _pack_conv_w(w):
    # PyTorch (Cout, Cin, kh, kw) -> (kh*kw*Cin, Cout) bf16; rows ordered
    # (tap = di*kw+dj, cin) so the kernel can slice one (Cin, Cout) tap matrix
    # with a static, 128-aligned row offset.
    Cout, Cin, kh, kw = w.shape
    return w.transpose(2, 3, 1, 0).reshape(kh * kw * Cin, Cout).astype(jnp.bfloat16)


def encoder_forward(params, x):
    p = params
    N, Cimg, H, W = x.shape

    # stem patches (tiny input), contraction dim padded to a lane-dense 256
    a0, H1, W1 = _im2col_stem(x, 8, 8, 4, 2)            # (N, S1, Cimg*64)
    S1 = H1 * W1
    K0 = Cimg * 64
    K0p = max(256, ((K0 + 127) // 128) * 128)
    a0 = jnp.pad(a0, ((0, 0), (0, 0), (0, K0p - K0)))
    a0 = a0.reshape(N * S1, K0p).astype(jnp.bfloat16)

    H2 = (H1 - 2) // 2 + 1
    W2 = (W1 - 2) // 2 + 1
    S2 = H2 * W2
    Sp1 = (H1 + 2) * (W1 + 2)
    Sp2 = (H2 + 2) * (W2 + 2)

    # fold as many images as possible into the matmul M dimension
    B_blk = max(d for d in range(1, min(N, 8) + 1) if N % d == 0)
    G = N // B_blk

    # ---- pack weights (bf16 for the MXU), biases into one f32 vector ----
    w1 = jnp.pad(p["c1_w"].reshape(128, K0).T, ((0, K0p - K0), (0, 0))).astype(jnp.bfloat16)
    w_r1a, w_r1b = _pack_conv_w(p["rb1_c1_w"]), _pack_conv_w(p["rb1_c2_w"])
    w_c2 = _pack_conv_w(p["c2_w"])
    w_r2a, w_r2b = _pack_conv_w(p["rb2_c1_w"]), _pack_conv_w(p["rb2_c2_w"])
    w_r3a, w_r3b = _pack_conv_w(p["rb3_c1_w"]), _pack_conv_w(p["rb3_c2_w"])
    w_hd = jnp.pad(_pack_conv_w(p["head_w"]), ((0, 0), (0, 64)))     # 64 -> 128 lanes

    bias = jnp.concatenate([
        p["c1_b"], p["rb1_c1_b"], p["rb1_c2_b"], p["c2_b"],
        p["rb2_c1_b"], p["rb2_c2_b"], p["rb3_c1_b"], p["rb3_c2_b"],
        jnp.pad(p["head_b"], (0, 64)),
    ]).reshape(1, -1).astype(jnp.float32)                            # (1, 1536)

    weights = (w1, w_r1a, w_r1b, w_c2, w_r2a, w_r2b, w_r3a, w_r3b, w_hd, bias)

    kernel = functools.partial(_encoder_kernel, B=B_blk, H1=H1, W1=W1, H2=H2, W2=W2)

    def _full(a):        # batch-invariant, full-array block -> stays VMEM-resident
        return pl.BlockSpec(a.shape, lambda g: (0, 0))

    in_specs = [pl.BlockSpec((B_blk * S1, K0p), lambda g: (g, 0))]
    in_specs += [_full(a) for a in weights]
    out_specs = pl.BlockSpec((B_blk * S2, 128), lambda g: (g, 0))

    out = pl.pallas_call(
        kernel,
        out_shape=jax.ShapeDtypeStruct((N * S2, 128), jnp.bfloat16),
        grid=(G,),
        in_specs=in_specs,
        out_specs=out_specs,
        scratch_shapes=[
            pltpu.VMEM((B_blk * Sp1, 128), jnp.float32),   # padded H1 act (stem / rb1 / k4s2 input)
            pltpu.VMEM((B_blk * Sp1, 128), jnp.float32),   # rb1 conv1 output
            pltpu.VMEM((B_blk * Sp2, 256), jnp.float32),   # padded H2 act (rb2/rb3/head input)
            pltpu.VMEM((B_blk * Sp2, 128), jnp.float32),   # rb2/rb3 conv1 output
        ],
        compiler_params=pltpu.CompilerParams(
            # scratch halos are zeroed only at grid step 0, so the (tiny) grid
            # must stay sequential; megacore split would need per-core re-init.
            dimension_semantics=("arbitrary",),
            vmem_limit_bytes=32 * 1024 * 1024,
        ),
    )(a0, *weights)

    # head emitted 128 bf16 lanes of {0,1}; keep the real 64 channels, NCHW out
    y = out.astype(jnp.float32).reshape(N, S2, 128)[:, :, :64]
    return y.reshape(N, H2, W2, 64).transpose(0, 3, 1, 2)


# -----------------------------------------------------------------------------
# Deterministic parameter init (mirrors the PyTorch module __init__)
# -----------------------------------------------------------------------------
def _kaiming_normal(key, shape):
    fan_in = shape[1] * shape[2] * shape[3]
    std = (2.0 / fan_in) ** 0.5
    return std * jax.random.normal(key, shape, dtype=jnp.float32)


def _xavier_normal(key, shape):
    fan_in = shape[1] * shape[2] * shape[3]
    fan_out = shape[0] * shape[2] * shape[3]
    std = (2.0 / (fan_in + fan_out)) ** 0.5
    return std * jax.random.normal(key, shape, dtype=jnp.float32)


def init_encoder_params(key):
    ks = jax.random.split(key, 8)
    z = lambda *s: jnp.zeros(s, jnp.float32)
    return {
        "c1_w": _kaiming_normal(ks[0], (128, 3, 8, 8)),        "c1_b": z(128),
        "rb1_c1_w": _kaiming_normal(ks[1], (128, 128, 3, 3)),  "rb1_c1_b": z(128),
        "rb1_c2_w": z(128, 128, 3, 3),                         "rb1_c2_b": z(128),
        "c2_w": _kaiming_normal(ks[2], (256, 128, 4, 4)),      "c2_b": z(256),
        "rb2_c1_w": _kaiming_normal(ks[3], (128, 256, 3, 3)),  "rb2_c1_b": z(128),
        "rb2_c2_w": z(256, 128, 3, 3),                         "rb2_c2_b": z(256),
        "rb3_c1_w": _kaiming_normal(ks[4], (128, 256, 3, 3)),  "rb3_c1_b": z(128),
        "rb3_c2_w": z(256, 128, 3, 3),                         "rb3_c2_b": z(256),
        "head_w": _xavier_normal(ks[5], (64, 256, 3, 3)),      "head_b": z(64),
    }


if __name__ == "__main__":
    key = jax.random.PRNGKey(0)
    pkey, xkey = jax.random.split(key)
    params = init_encoder_params(pkey)

    # NCHW input consistent with the stride-4 / stride-2 stem
    x = jax.random.uniform(xkey, (2, 3, 16, 16), dtype=jnp.float32)

    out = jax.jit(encoder_forward)(params, x)
    out = jax.block_until_ready(out)

    assert out.shape == (2, 64, 2, 2), out.shape
    assert out.dtype == jnp.float32
    # Binarizer output must be strictly {0, 1}
    assert bool(jnp.all((out == 0.0) | (out == 1.0)))
    print("KERNEL_OK")
</pallas_src>

<mosaic_0001>
module attributes {stable_mosaic.version = 11 : i64} {
  func.func @_encoder_kernel(%arg0: i32, %arg1: memref<32x256xbf16, #tpu.memory_space<vmem>>, %arg2: memref<256x128xbf16, #tpu.memory_space<vmem>>, %arg3: memref<1152x128xbf16, #tpu.memory_space<vmem>>, %arg4: memref<1152x128xbf16, #tpu.memory_space<vmem>>, %arg5: memref<2048x256xbf16, #tpu.memory_space<vmem>>, %arg6: memref<2304x128xbf16, #tpu.memory_space<vmem>>, %arg7: memref<1152x256xbf16, #tpu.memory_space<vmem>>, %arg8: memref<2304x128xbf16, #tpu.memory_space<vmem>>, %arg9: memref<1152x256xbf16, #tpu.memory_space<vmem>>, %arg10: memref<2304x128xbf16, #tpu.memory_space<vmem>>, %arg11: memref<1x1536xf32, #tpu.memory_space<vmem>>, %arg12: memref<8x128xbf16, #tpu.memory_space<vmem>>, %arg13: memref<72x128xf32, #tpu.memory_space<vmem>>, %arg14: memref<72x128xf32, #tpu.memory_space<vmem>>, %arg15: memref<32x256xf32, #tpu.memory_space<vmem>>, %arg16: memref<32x128xf32, #tpu.memory_space<vmem>>) attributes {dimension_semantics = [#tpu.dimension_semantics<arbitrary>], iteration_bounds = array<i64: 1>, scalar_prefetch = 0 : i64, scratch_operands = 4 : i64, tpu.core_type = #tpu.core_type<tc>, window_params = [{transform_indices = @transform_0, window_bounds = array<i64: 32, 256>}, {pipeline_mode = #tpu.pipeline_mode<synchronous>, transform_indices = @transform_1, window_bounds = array<i64: 256, 128>}, {pipeline_mode = #tpu.pipeline_mode<synchronous>, transform_indices = @transform_2, window_bounds = array<i64: 1152, 128>}, {pipeline_mode = #tpu.pipeline_mode<synchronous>, transform_indices = @transform_3, window_bounds = array<i64: 1152, 128>}, {pipeline_mode = #tpu.pipeline_mode<synchronous>, transform_indices = @transform_4, window_bounds = array<i64: 2048, 256>}, {pipeline_mode = #tpu.pipeline_mode<synchronous>, transform_indices = @transform_5, window_bounds = array<i64: 2304, 128>}, {pipeline_mode = #tpu.pipeline_mode<synchronous>, transform_indices = @transform_6, window_bounds = array<i64: 1152, 256>}, {pipeline_mode = #tpu.pipeline_mode<synchronous>, transform_indices = @transform_7, window_bounds = array<i64: 2304, 128>}, {pipeline_mode = #tpu.pipeline_mode<synchronous>, transform_indices = @transform_8, window_bounds = array<i64: 1152, 256>}, {pipeline_mode = #tpu.pipeline_mode<synchronous>, transform_indices = @transform_9, window_bounds = array<i64: 2304, 128>}, {pipeline_mode = #tpu.pipeline_mode<synchronous>, transform_indices = @transform_10, window_bounds = array<i64: 1, 1536>}, {transform_indices = @transform_11, window_bounds = array<i64: 8, 128>}]} {
    %c0_i32 = arith.constant 0 : i32
    %0 = arith.cmpi eq, %arg0, %c0_i32 : i32
    %1 = arith.extui %0 : i1 to i32
    %c0_i32_0 = arith.constant 0 : i32
    %2 = arith.cmpi ne, %1, %c0_i32_0 : i32
    scf.if %2 {
      %cst_497 = arith.constant 0.000000e+00 : f32
      %552 = vector.broadcast %cst_497 : f32 to vector<72x128xf32>
      %c0_498 = arith.constant 0 : index
      %c0_499 = arith.constant 0 : index
      %553 = vector.load %arg13[%c0_498, %c0_499] : memref<72x128xf32, #tpu.memory_space<vmem>>, vector<72x128xf32>
      tpu.vector_store %arg13[%c0_498, %c0_499], %552 {strides = array<i32>} : memref<72x128xf32, #tpu.memory_space<vmem>>, vector<72x128xf32>,
      %cst_500 = arith.constant 0.000000e+00 : f32
      %554 = vector.broadcast %cst_500 : f32 to vector<72x128xf32>
      %c0_501 = arith.constant 0 : index
      %c0_502 = arith.constant 0 : index
      %555 = vector.load %arg14[%c0_501, %c0_502] : memref<72x128xf32, #tpu.memory_space<vmem>>, vector<72x128xf32>
      tpu.vector_store %arg14[%c0_501, %c0_502], %554 {strides = array<i32>} : memref<72x128xf32, #tpu.memory_space<vmem>>, vector<72x128xf32>,
      %cst_503 = arith.constant 0.000000e+00 : f32
      %556 = vector.broadcast %cst_503 : f32 to vector<32x256xf32>
      %c0_504 = arith.constant 0 : index
      %c0_505 = arith.constant 0 : index
      %557 = vector.load %arg15[%c0_504, %c0_505] : memref<32x256xf32, #tpu.memory_space<vmem>>, vector<32x256xf32>
      tpu.vector_store %arg15[%c0_504, %c0_505], %556 {strides = array<i32>} : memref<32x256xf32, #tpu.memory_space<vmem>>, vector<32x256xf32>,
      %cst_506 = arith.constant 0.000000e+00 : f32
      %558 = vector.broadcast %cst_506 : f32 to vector<32x128xf32>
      %c0_507 = arith.constant 0 : index
      %c0_508 = arith.constant 0 : index
      %559 = vector.load %arg16[%c0_507, %c0_508] : memref<32x128xf32, #tpu.memory_space<vmem>>, vector<32x128xf32>
      tpu.vector_store %arg16[%c0_507, %c0_508], %558 {strides = array<i32>} : memref<32x128xf32, #tpu.memory_space<vmem>>, vector<32x128xf32>,
    } else {
    }
    %c0 = arith.constant 0 : index
    %c0_1 = arith.constant 0 : index
    %3 = vector.load %arg1[%c0, %c0_1] : memref<32x256xbf16, #tpu.memory_space<vmem>>, vector<32x256xbf16>
    %c0_2 = arith.constant 0 : index
    %c0_3 = arith.constant 0 : index
    %4 = vector.load %arg2[%c0_2, %c0_3] : memref<256x128xbf16, #tpu.memory_space<vmem>>, vector<256x128xbf16>
    %cst = arith.constant dense<0.000000e+00> : vector<32x128xf32>
    %5 = tpu.matmul %3, %4, %cst {dimension_numbers = #tpu.dot_dimension_numbers<[1], [0], [0], [1], [0, 0, 1, 1], [], []>} : vector<32x256xbf16>, vector<256x128xbf16>, vector<32x128xf32> -> vector<32x128xf32>
    %c0_4 = arith.constant 0 : index
    %c0_5 = arith.constant 0 : index
    %6 = vector.load %arg11[%c0_4, %c0_5] : memref<1x1536xf32, #tpu.memory_space<vmem>>, vector<1x128xf32>
    %7 = vector.broadcast %6 : vector<1x128xf32> to vector<32x128xf32>
    %8 = arith.addf %5, %7 : vector<32x128xf32>
    %cst_6 = arith.constant 0.000000e+00 : f32
    %9 = vector.broadcast %cst_6 : f32 to vector<32x128xf32>
    %10 = arith.maximumf %8, %9 : vector<32x128xf32>
    %11 = vector.extract_strided_slice %10 {offsets = [0, 0], sizes = [4, 128], strides = [1, 1]} : vector<32x128xf32> to vector<4x128xf32>
    %c7 = arith.constant 7 : index
    %c0_7 = arith.constant 0 : index
    %12 = vector.load %arg13[%c7, %c0_7] : memref<72x128xf32, #tpu.memory_space<vmem>>, vector<4x128xf32>
    tpu.vector_store %arg13[%c7, %c0_7], %11 {strides = array<i32>} : memref<72x128xf32, #tpu.memory_space<vmem>>, vector<4x128xf32>,
    %13 = vector.extract_strided_slice %10 {offsets = [4, 0], sizes = [4, 128], strides = [1, 1]} : vector<32x128xf32> to vector<4x128xf32>
    %c13 = arith.constant 13 : index
    %c0_8 = arith.constant 0 : index
    %14 = vector.load %arg13[%c13, %c0_8] : memref<72x128xf32, #tpu.memory_space<vmem>>, vector<4x128xf32>
    tpu.vector_store %arg13[%c13, %c0_8], %13 {strides = array<i32>} : memref<72x128xf32, #tpu.memory_space<vmem>>, vector<4x128xf32>,
    %15 = vector.extract_strided_slice %10 {offsets = [8, 0], sizes = [4, 128], strides = [1, 1]} : vector<32x128xf32> to vector<4x128xf32>
    %c19 = arith.constant 19 : index
    %c0_9 = arith.constant 0 : index
    %16 = vector.load %arg13[%c19, %c0_9] : memref<72x128xf32, #tpu.memory_space<vmem>>, vector<4x128xf32>
    tpu.vector_store %arg13[%c19, %c0_9], %15 {strides = array<i32>} : memref<72x128xf32, #tpu.memory_space<vmem>>, vector<4x128xf32>,
    %17 = vector.extract_strided_slice %10 {offsets = [12, 0], sizes = [4, 128], strides = [1, 1]} : vector<32x128xf32> to vector<4x128xf32>
    %c25 = arith.constant 25 : index
    %c0_10 = arith.constant 0 : index
    %18 = vector.load %arg13[%c25, %c0_10] : memref<72x128xf32, #tpu.memory_space<vmem>>, vector<4x128xf32>
    tpu.vector_store %arg13[%c25, %c0_10], %17 {strides = array<i32>} : memref<72x128xf32, #tpu.memory_space<vmem>>, vector<4x128xf32>,
    %19 = vector.extract_strided_slice %10 {offsets = [16, 0], sizes = [4, 128], strides = [1, 1]} : vector<32x128xf32> to vector<4x128xf32>
    %c43 = arith.constant 43 : index
    %c0_11 = arith.constant 0 : index
    %20 = vector.load %arg13[%c43, %c0_11] : memref<72x128xf32, #tpu.memory_space<vmem>>, vector<4x128xf32>
    tpu.vector_store %arg13[%c43, %c0_11], %19 {strides = array<i32>} : memref<72x128xf32, #tpu.memory_space<vmem>>, vector<4x128xf32>,
    %21 = vector.extract_strided_slice %10 {offsets = [20, 0], sizes = [4, 128], strides = [1, 1]} : vector<32x128xf32> to vector<4x128xf32>
    %c49 = arith.constant 49 : index
    %c0_12 = arith.constant 0 : index
    %22 = vector.load %arg13[%c49, %c0_12] : memref<72x128xf32, #tpu.memory_space<vmem>>, vector<4x128xf32>
    tpu.vector_store %arg13[%c49, %c0_12], %21 {strides = array<i32>} : memref<72x128xf32, #tpu.memory_space<vmem>>, vector<4x128xf32>,
    %23 = vector.extract_strided_slice %10 {offsets = [24, 0], sizes = [4, 128], strides = [1, 1]} : vector<32x128xf32> to vector<4x128xf32>
    %c55 = arith.constant 55 : index
    %c0_13 = arith.constant 0 : index
    %24 = vector.load %arg13[%c55, %c0_13] : memref<72x128xf32, #tpu.memory_space<vmem>>, vector<4x128xf32>
    tpu.vector_store %arg13[%c55, %c0_13], %23 {strides = array<i32>} : memref<72x128xf32, #tpu.memory_space<vmem>>, vector<4x128xf32>,
    %25 = vector.extract_strided_slice %10 {offsets = [28, 0], sizes = [4, 128], strides = [1, 1]} : vector<32x128xf32> to vector<4x128xf32>
    %c61 = arith.constant 61 : index
    %c0_14 = arith.constant 0 : index
    %26 = vector.load %arg13[%c61, %c0_14] : memref<72x128xf32, #tpu.memory_space<vmem>>, vector<4x128xf32>
    tpu.vector_store %arg13[%c61, %c0_14], %25 {strides = array<i32>} : memref<72x128xf32, #tpu.memory_space<vmem>>, vector<4x128xf32>,
    %c0_15 = arith.constant 0 : index
    %c0_16 = arith.constant 0 : index
    %27 = vector.load %arg13[%c0_15, %c0_16] : memref<72x128xf32, #tpu.memory_space<vmem>>, vector<58x128xf32>
    %28 = arith.truncf %27 : vector<58x128xf32> to vector<58x128xbf16>
    %c0_17 = arith.constant 0 : index
    %c0_18 = arith.constant 0 : index
    %29 = vector.load %arg3[%c0_17, %c0_18] : memref<1152x128xbf16, #tpu.memory_space<vmem>>, vector<128x128xbf16>
    %cst_19 = arith.constant dense<0.000000e+00> : vector<58x128xf32>
    %30 = tpu.matmul %28, %29, %cst_19 {dimension_numbers = #tpu.dot_dimension_numbers<[1], [0], [0], [1], [0, 0, 1, 1], [], []>} : vector<58x128xbf16>, vector<128x128xbf16>, vector<58x128xf32> -> vector<58x128xf32>
    %c1 = arith.constant 1 : index
    %c0_20 = arith.constant 0 : index
    %31 = vector.load %arg13[%c1, %c0_20] : memref<72x128xf32, #tpu.memory_space<vmem>>, vector<58x128xf32>
    %32 = arith.truncf %31 : vector<58x128xf32> to vector<58x128xbf16>
    %c128 = arith.constant 128 : index
    %c0_21 = arith.constant 0 : index
    %33 = vector.load %arg3[%c128, %c0_21] : memref<1152x128xbf16, #tpu.memory_space<vmem>>, vector<128x128xbf16>
    %cst_22 = arith.constant dense<0.000000e+00> : vector<58x128xf32>
    %34 = tpu.matmul %32, %33, %cst_22 {dimension_numbers = #tpu.dot_dimension_numbers<[1], [0], [0], [1], [0, 0, 1, 1], [], []>} : vector<58x128xbf16>, vector<128x128xbf16>, vector<58x128xf32> -> vector<58x128xf32>
    %35 = arith.addf %30, %34 : vector<58x128xf32>
    %c2 = arith.constant 2 : index
    %c0_23 = arith.constant 0 : index
    %36 = vector.load %arg13[%c2, %c0_23] : memref<72x128xf32, #tpu.memory_space<vmem>>, vector<58x128xf32>
    %37 = arith.truncf %36 : vector<58x128xf32> to vector<58x128xbf16>
    %c256 = arith.constant 256 : index
    %c0_24 = arith.constant 0 : index
    %38 = vector.load %arg3[%c256, %c0_24] : memref<1152x128xbf16, #tpu.memory_space<vmem>>, vector<128x128xbf16>
    %cst_25 = arith.constant dense<0.000000e+00> : vector<58x128xf32>
    %39 = tpu.matmul %37, %38, %cst_25 {dimension_numbers = #tpu.dot_dimension_numbers<[1], [0], [0], [1], [0, 0, 1, 1], [], []>} : vector<58x128xbf16>, vector<128x128xbf16>, vector<58x128xf32> -> vector<58x128xf32>
    %40 = arith.addf %35, %39 : vector<58x128xf32>
    %c6 = arith.constant 6 : index
    %c0_26 = arith.constant 0 : index
    %41 = vector.load %arg13[%c6, %c0_26] : memref<72x128xf32, #tpu.memory_space<vmem>>, vector<58x128xf32>
    %42 = arith.truncf %41 : vector<58x128xf32> to vector<58x128xbf16>
    %c384 = arith.constant 384 : index
    %c0_27 = arith.constant 0 : index
    %43 = vector.load %arg3[%c384, %c0_27] : memref<1152x128xbf16, #tpu.memory_space<vmem>>, vector<128x128xbf16>
    %cst_28 = arith.constant dense<0.000000e+00> : vector<58x128xf32>
    %44 = tpu.matmul %42, %43, %cst_28 {dimension_numbers = #tpu.dot_dimension_numbers<[1], [0], [0], [1], [0, 0, 1, 1], [], []>} : vector<58x128xbf16>, vector<128x128xbf16>, vector<58x128xf32> -> vector<58x128xf32>
    %45 = arith.addf %40, %44 : vector<58x128xf32>
    %c7_29 = arith.constant 7 : index
    %c0_30 = arith.constant 0 : index
    %46 = vector.load %arg13[%c7_29, %c0_30] : memref<72x128xf32, #tpu.memory_space<vmem>>, vector<58x128xf32>
    %47 = arith.truncf %46 : vector<58x128xf32> to vector<58x128xbf16>
    %c512 = arith.constant 512 : index
    %c0_31 = arith.constant 0 : index
    %48 = vector.load %arg3[%c512, %c0_31] : memref<1152x128xbf16, #tpu.memory_space<vmem>>, vector<128x128xbf16>
    %cst_32 = arith.constant dense<0.000000e+00> : vector<58x128xf32>
    %49 = tpu.matmul %47, %48, %cst_32 {dimension_numbers = #tpu.dot_dimension_numbers<[1], [0], [0], [1], [0, 0, 1, 1], [], []>} : vector<58x128xbf16>, vector<128x128xbf16>, vector<58x128xf32> -> vector<58x128xf32>
    %50 = arith.addf %45, %49 : vector<58x128xf32>
    %c8 = arith.constant 8 : index
    %c0_33 = arith.constant 0 : index
    %51 = vector.load %arg13[%c8, %c0_33] : memref<72x128xf32, #tpu.memory_space<vmem>>, vector<58x128xf32>
    %52 = arith.truncf %51 : vector<58x128xf32> to vector<58x128xbf16>
    %c640 = arith.constant 640 : index
    %c0_34 = arith.constant 0 : index
    %53 = vector.load %arg3[%c640, %c0_34] : memref<1152x128xbf16, #tpu.memory_space<vmem>>, vector<128x128xbf16>
    %cst_35 = arith.constant dense<0.000000e+00> : vector<58x128xf32>
    %54 = tpu.matmul %52, %53, %cst_35 {dimension_numbers = #tpu.dot_dimension_numbers<[1], [0], [0], [1], [0, 0, 1, 1], [], []>} : vector<58x128xbf16>, vector<128x128xbf16>, vector<58x128xf32> -> vector<58x128xf32>
    %55 = arith.addf %50, %54 : vector<58x128xf32>
    %c12 = arith.constant 12 : index
    %c0_36 = arith.constant 0 : index
    %56 = vector.load %arg13[%c12, %c0_36] : memref<72x128xf32, #tpu.memory_space<vmem>>, vector<58x128xf32>
    %57 = arith.truncf %56 : vector<58x128xf32> to vector<58x128xbf16>
    %c768 = arith.constant 768 : index
    %c0_37 = arith.constant 0 : index
    %58 = vector.load %arg3[%c768, %c0_37] : memref<1152x128xbf16, #tpu.memory_space<vmem>>, vector<128x128xbf16>
    %cst_38 = arith.constant dense<0.000000e+00> : vector<58x128xf32>
    %59 = tpu.matmul %57, %58, %cst_38 {dimension_numbers = #tpu.dot_dimension_numbers<[1], [0], [0], [1], [0, 0, 1, 1], [], []>} : vector<58x128xbf16>, vector<128x128xbf16>, vector<58x128xf32> -> vector<58x128xf32>
    %60 = arith.addf %55, %59 : vector<58x128xf32>
    %c13_39 = arith.constant 13 : index
    %c0_40 = arith.constant 0 : index
    %61 = vector.load %arg13[%c13_39, %c0_40] : memref<72x128xf32, #tpu.memory_space<vmem>>, vector<58x128xf32>
    %62 = arith.truncf %61 : vector<58x128xf32> to vector<58x128xbf16>
    %c896 = arith.constant 896 : index
    %c0_41 = arith.constant 0 : index
    %63 = vector.load %arg3[%c896, %c0_41] : memref<1152x128xbf16, #tpu.memory_space<vmem>>, vector<128x128xbf16>
    %cst_42 = arith.constant dense<0.000000e+00> : vector<58x128xf32>
    %64 = tpu.matmul %62, %63, %cst_42 {dimension_numbers = #tpu.dot_dimension_numbers<[1], [0], [0], [1], [0, 0, 1, 1], [], []>} : vector<58x128xbf16>, vector<128x128xbf16>, vector<58x128xf32> -> vector<58x128xf32>
    %65 = arith.addf %60, %64 : vector<58x128xf32>
    %c14 = arith.constant 14 : index
    %c0_43 = arith.constant 0 : index
    %66 = vector.load %arg13[%c14, %c0_43] : memref<72x128xf32, #tpu.memory_space<vmem>>, vector<58x128xf32>
    %67 = arith.truncf %66 : vector<58x128xf32> to vector<58x128xbf16>
    %c1024 = arith.constant 1024 : index
    %c0_44 = arith.constant 0 : index
    %68 = vector.load %arg3[%c1024, %c0_44] : memref<1152x128xbf16, #tpu.memory_space<vmem>>, vector<128x128xbf16>
    %cst_45 = arith.constant dense<0.000000e+00> : vector<58x128xf32>
    %69 = tpu.matmul %67, %68, %cst_45 {dimension_numbers = #tpu.dot_dimension_numbers<[1], [0], [0], [1], [0, 0, 1, 1], [], []>} : vector<58x128xbf16>, vector<128x128xbf16>, vector<58x128xf32> -> vector<58x128xf32>
    %70 = arith.addf %65, %69 : vector<58x128xf32>
    %c0_46 = arith.constant 0 : index
    %c128_47 = arith.constant 128 : index
    %71 = vector.load %arg11[%c0_46, %c128_47] : memref<1x1536xf32, #tpu.memory_space<vmem>>, vector<1x128xf32>
    %72 = vector.broadcast %71 : vector<1x128xf32> to vector<58x128xf32>
    %73 = arith.addf %70, %72 : vector<58x128xf32>
    %cst_48 = arith.constant 0.000000e+00 : f32
    %74 = vector.broadcast %cst_48 : f32 to vector<58x128xf32>
    %75 = arith.maximumf %73, %74 : vector<58x128xf32>
    %76 = vector.extract_strided_slice %75 {offsets = [0, 0], sizes = [4, 128], strides = [1, 1]} : vector<58x128xf32> to vector<4x128xf32>
    %c7_49 = arith.constant 7 : index
    %c0_50 = arith.constant 0 : index
    %77 = vector.load %arg14[%c7_49, %c0_50] : memref<72x128xf32, #tpu.memory_space<vmem>>, vector<4x128xf32>
    tpu.vector_store %arg14[%c7_49, %c0_50], %76 {strides = array<i32>} : memref<72x128xf32, #tpu.memory_space<vmem>>, vector<4x128xf32>,
    %78 = vector.extract_strided_slice %75 {offsets = [6, 0], sizes = [4, 128], strides = [1, 1]} : vector<58x128xf32> to vector<4x128xf32>
    %c13_51 = arith.constant 13 : index
    %c0_52 = arith.constant 0 : index
    %79 = vector.load %arg14[%c13_51, %c0_52] : memref<72x128xf32, #tpu.memory_space<vmem>>, vector<4x128xf32>
    tpu.vector_store %arg14[%c13_51, %c0_52], %78 {strides = array<i32>} : memref<72x128xf32, #tpu.memory_space<vmem>>, vector<4x128xf32>,
    %80 = vector.extract_strided_slice %75 {offsets = [12, 0], sizes = [4, 128], strides = [1, 1]} : vector<58x128xf32> to vector<4x128xf32>
    %c19_53 = arith.constant 19 : index
    %c0_54 = arith.constant 0 : index
    %81 = vector.load %arg14[%c19_53, %c0_54] : memref<72x128xf32, #tpu.memory_space<vmem>>, vector<4x128xf32>
    tpu.vector_store %arg14[%c19_53, %c0_54], %80 {strides = array<i32>} : memref<72x128xf32, #tpu.memory_space<vmem>>, vector<4x128xf32>,
    %82 = vector.extract_strided_slice %75 {offsets = [18, 0], sizes = [4, 128], strides = [1, 1]} : vector<58x128xf32> to vector<4x128xf32>
    %c25_55 = arith.constant 25 : index
    %c0_56 = arith.constant 0 : index
    %83 = vector.load %arg14[%c25_55, %c0_56] : memref<72x128xf32, #tpu.memory_space<vmem>>, vector<4x128xf32>
    tpu.vector_store %arg14[%c25_55, %c0_56], %82 {strides = array<i32>} : memref<72x128xf32, #tpu.memory_space<vmem>>, vector<4x128xf32>,
    %84 = vector.extract_strided_slice %75 {offsets = [36, 0], sizes = [4, 128], strides = [1, 1]} : vector<58x128xf32> to vector<4x128xf32>
    %c43_57 = arith.constant 43 : index
    %c0_58 = arith.constant 0 : index
    %85 = vector.load %arg14[%c43_57, %c0_58] : memref<72x128xf32, #tpu.memory_space<vmem>>, vector<4x128xf32>
    tpu.vector_store %arg14[%c43_57, %c0_58], %84 {strides = array<i32>} : memref<72x128xf32, #tpu.memory_space<vmem>>, vector<4x128xf32>,
    %86 = vector.extract_strided_slice %75 {offsets = [42, 0], sizes = [4, 128], strides = [1, 1]} : vector<58x128xf32> to vector<4x128xf32>
    %c49_59 = arith.constant 49 : index
    %c0_60 = arith.constant 0 : index
    %87 = vector.load %arg14[%c49_59, %c0_60] : memref<72x128xf32, #tpu.memory_space<vmem>>, vector<4x128xf32>
    tpu.vector_store %arg14[%c49_59, %c0_60], %86 {strides = array<i32>} : memref<72x128xf32, #tpu.memory_space<vmem>>, vector<4x128xf32>,
    %88 = vector.extract_strided_slice %75 {offsets = [48, 0], sizes = [4, 128], strides = [1, 1]} : vector<58x128xf32> to vector<4x128xf32>
    %c55_61 = arith.constant 55 : index
    %c0_62 = arith.constant 0 : index
    %89 = vector.load %arg14[%c55_61, %c0_62] : memref<72x128xf32, #tpu.memory_space<vmem>>, vector<4x128xf32>
    tpu.vector_store %arg14[%c55_61, %c0_62], %88 {strides = array<i32>} : memref<72x128xf32, #tpu.memory_space<vmem>>, vector<4x128xf32>,
    %90 = vector.extract_strided_slice %75 {offsets = [54, 0], sizes = [4, 128], strides = [1, 1]} : vector<58x128xf32> to vector<4x128xf32>
    %c61_63 = arith.constant 61 : index
    %c0_64 = arith.constant 0 : index
    %91 = vector.load %arg14[%c61_63, %c0_64] : memref<72x128xf32, #tpu.memory_space<vmem>>, vector<4x128xf32>
    tpu.vector_store %arg14[%c61_63, %c0_64], %90 {strides = array<i32>} : memref<72x128xf32, #tpu.memory_space<vmem>>, vector<4x128xf32>,
    %c0_65 = arith.constant 0 : index
    %c0_66 = arith.constant 0 : index
    %92 = vector.load %arg14[%c0_65, %c0_66] : memref<72x128xf32, #tpu.memory_space<vmem>>, vector<58x128xf32>
    %93 = arith.truncf %92 : vector<58x128xf32> to vector<58x128xbf16>
    %c0_67 = arith.constant 0 : index
    %c0_68 = arith.constant 0 : index
    %94 = vector.load %arg4[%c0_67, %c0_68] : memref<1152x128xbf16, #tpu.memory_space<vmem>>, vector<128x128xbf16>
    %cst_69 = arith.constant dense<0.000000e+00> : vector<58x128xf32>
    %95 = tpu.matmul %93, %94, %cst_69 {dimension_numbers = #tpu.dot_dimension_numbers<[1], [0], [0], [1], [0, 0, 1, 1], [], []>} : vector<58x128xbf16>, vector<128x128xbf16>, vector<58x128xf32> -> vector<58x128xf32>
    %c1_70 = arith.constant 1 : index
    %c0_71 = arith.constant 0 : index
    %96 = vector.load %arg14[%c1_70, %c0_71] : memref<72x128xf32, #tpu.memory_space<vmem>>, vector<58x128xf32>
    %97 = arith.truncf %96 : vector<58x128xf32> to vector<58x128xbf16>
    %c128_72 = arith.constant 128 : index
    %c0_73 = arith.constant 0 : index
    %98 = vector.load %arg4[%c128_72, %c0_73] : memref<1152x128xbf16, #tpu.memory_space<vmem>>, vector<128x128xbf16>
    %cst_74 = arith.constant dense<0.000000e+00> : vector<58x128xf32>
    %99 = tpu.matmul %97, %98, %cst_74 {dimension_numbers = #tpu.dot_dimension_numbers<[1], [0], [0], [1], [0, 0, 1, 1], [], []>} : vector<58x128xbf16>, vector<128x128xbf16>, vector<58x128xf32> -> vector<58x128xf32>
    %100 = arith.addf %95, %99 : vector<58x128xf32>
    %c2_75 = arith.constant 2 : index
    %c0_76 = arith.constant 0 : index
    %101 = vector.load %arg14[%c2_75, %c0_76] : memref<72x128xf32, #tpu.memory_space<vmem>>, vector<58x128xf32>
    %102 = arith.truncf %101 : vector<58x128xf32> to vector<58x128xbf16>
    %c256_77 = arith.constant 256 : index
    %c0_78 = arith.constant 0 : index
    %103 = vector.load %arg4[%c256_77, %c0_78] : memref<1152x128xbf16, #tpu.memory_space<vmem>>, vector<128x128xbf16>
    %cst_79 = arith.constant dense<0.000000e+00> : vector<58x128xf32>
    %104 = tpu.matmul %102, %103, %cst_79 {dimension_numbers = #tpu.dot_dimension_numbers<[1], [0], [0], [1], [0, 0, 1, 1], [], []>} : vector<58x128xbf16>, vector<128x128xbf16>, vector<58x128xf32> -> vector<58x128xf32>
    %105 = arith.addf %100, %104 : vector<58x128xf32>
    %c6_80 = arith.constant 6 : index
    %c0_81 = arith.constant 0 : index
    %106 = vector.load %arg14[%c6_80, %c0_81] : memref<72x128xf32, #tpu.memory_space<vmem>>, vector<58x128xf32>
    %107 = arith.truncf %106 : vector<58x128xf32> to vector<58x128xbf16>
    %c384_82 = arith.constant 384 : index
    %c0_83 = arith.constant 0 : index
    %108 = vector.load %arg4[%c384_82, %c0_83] : memref<1152x128xbf16, #tpu.memory_space<vmem>>, vector<128x128xbf16>
    %cst_84 = arith.constant dense<0.000000e+00> : vector<58x128xf32>
    %109 = tpu.matmul %107, %108, %cst_84 {dimension_numbers = #tpu.dot_dimension_numbers<[1], [0], [0], [1], [0, 0, 1, 1], [], []>} : vector<58x128xbf16>, vector<128x128xbf16>, vector<58x128xf32> -> vector<58x128xf32>
    %110 = arith.addf %105, %109 : vector<58x128xf32>
    %c7_85 = arith.constant 7 : index
    %c0_86 = arith.constant 0 : index
    %111 = vector.load %arg14[%c7_85, %c0_86] : memref<72x128xf32, #tpu.memory_space<vmem>>, vector<58x128xf32>
    %112 = arith.truncf %111 : vector<58x128xf32> to vector<58x128xbf16>
    %c512_87 = arith.constant 512 : index
    %c0_88 = arith.constant 0 : index
    %113 = vector.load %arg4[%c512_87, %c0_88] : memref<1152x128xbf16, #tpu.memory_space<vmem>>, vector<128x128xbf16>
    %cst_89 = arith.constant dense<0.000000e+00> : vector<58x128xf32>
    %114 = tpu.matmul %112, %113, %cst_89 {dimension_numbers = #tpu.dot_dimension_numbers<[1], [0], [0], [1], [0, 0, 1, 1], [], []>} : vector<58x128xbf16>, vector<128x128xbf16>, vector<58x128xf32> -> vector<58x128xf32>
    %115 = arith.addf %110, %114 : vector<58x128xf32>
    %c8_90 = arith.constant 8 : index
    %c0_91 = arith.constant 0 : index
    %116 = vector.load %arg14[%c8_90, %c0_91] : memref<72x128xf32, #tpu.memory_space<vmem>>, vector<58x128xf32>
    %117 = arith.truncf %116 : vector<58x128xf32> to vector<58x128xbf16>
    %c640_92 = arith.constant 640 : index
    %c0_93 = arith.constant 0 : index
    %118 = vector.load %arg4[%c640_92, %c0_93] : memref<1152x128xbf16, #tpu.memory_space<vmem>>, vector<128x128xbf16>
    %cst_94 = arith.constant dense<0.000000e+00> : vector<58x128xf32>
    %119 = tpu.matmul %117, %118, %cst_94 {dimension_numbers = #tpu.dot_dimension_numbers<[1], [0], [0], [1], [0, 0, 1, 1], [], []>} : vector<58x128xbf16>, vector<128x128xbf16>, vector<58x128xf32> -> vector<58x128xf32>
    %120 = arith.addf %115, %119 : vector<58x128xf32>
    %c12_95 = arith.constant 12 : index
    %c0_96 = arith.constant 0 : index
    %121 = vector.load %arg14[%c12_95, %c0_96] : memref<72x128xf32, #tpu.memory_space<vmem>>, vector<58x128xf32>
    %122 = arith.truncf %121 : vector<58x128xf32> to vector<58x128xbf16>
    %c768_97 = arith.constant 768 : index
    %c0_98 = arith.constant 0 : index
    %123 = vector.load %arg4[%c768_97, %c0_98] : memref<1152x128xbf16, #tpu.memory_space<vmem>>, vector<128x128xbf16>
    %cst_99 = arith.constant dense<0.000000e+00> : vector<58x128xf32>
    %124 = tpu.matmul %122, %123, %cst_99 {dimension_numbers = #tpu.dot_dimension_numbers<[1], [0], [0], [1], [0, 0, 1, 1], [], []>} : vector<58x128xbf16>, vector<128x128xbf16>, vector<58x128xf32> -> vector<58x128xf32>
    %125 = arith.addf %120, %124 : vector<58x128xf32>
    %c13_100 = arith.constant 13 : index
    %c0_101 = arith.constant 0 : index
    %126 = vector.load %arg14[%c13_100, %c0_101] : memref<72x128xf32, #tpu.memory_space<vmem>>, vector<58x128xf32>
    %127 = arith.truncf %126 : vector<58x128xf32> to vector<58x128xbf16>
    %c896_102 = arith.constant 896 : index
    %c0_103 = arith.constant 0 : index
    %128 = vector.load %arg4[%c896_102, %c0_103] : memref<1152x128xbf16, #tpu.memory_space<vmem>>, vector<128x128xbf16>
    %cst_104 = arith.constant dense<0.000000e+00> : vector<58x128xf32>
    %129 = tpu.matmul %127, %128, %cst_104 {dimension_numbers = #tpu.dot_dimension_numbers<[1], [0], [0], [1], [0, 0, 1, 1], [], []>} : vector<58x128xbf16>, vector<128x128xbf16>, vector<58x128xf32> -> vector<58x128xf32>
    %130 = arith.addf %125, %129 : vector<58x128xf32>
    %c14_105 = arith.constant 14 : index
    %c0_106 = arith.constant 0 : index
    %131 = vector.load %arg14[%c14_105, %c0_106] : memref<72x128xf32, #tpu.memory_space<vmem>>, vector<58x128xf32>
    %132 = arith.truncf %131 : vector<58x128xf32> to vector<58x128xbf16>
    %c1024_107 = arith.constant 1024 : index
    %c0_108 = arith.constant 0 : index
    %133 = vector.load %arg4[%c1024_107, %c0_108] : memref<1152x128xbf16, #tpu.memory_space<vmem>>, vector<128x128xbf16>
    %cst_109 = arith.constant dense<0.000000e+00> : vector<58x128xf32>
    %134 = tpu.matmul %132, %133, %cst_109 {dimension_numbers = #tpu.dot_dimension_numbers<[1], [0], [0], [1], [0, 0, 1, 1], [], []>} : vector<58x128xbf16>, vector<128x128xbf16>, vector<58x128xf32> -> vector<58x128xf32>
    %135 = arith.addf %130, %134 : vector<58x128xf32>
    %c7_110 = arith.constant 7 : index
    %c0_111 = arith.constant 0 : index
    %136 = vector.load %arg13[%c7_110, %c0_111] : memref<72x128xf32, #tpu.memory_space<vmem>>, vector<58x128xf32>
    %137 = arith.addf %136, %135 : vector<58x128xf32>
    %c0_112 = arith.constant 0 : index
    %c256_113 = arith.constant 256 : index
    %138 = vector.load %arg11[%c0_112, %c256_113] : memref<1x1536xf32, #tpu.memory_space<vmem>>, vector<1x128xf32>
    %139 = vector.broadcast %138 : vector<1x128xf32> to vector<58x128xf32>
    %140 = arith.addf %137, %139 : vector<58x128xf32>
    %cst_114 = arith.constant 0.000000e+00 : f32
    %141 = vector.broadcast %cst_114 : f32 to vector<58x128xf32>
    %142 = arith.maximumf %140, %141 : vector<58x128xf32>
    %143 = vector.extract_strided_slice %142 {offsets = [0, 0], sizes = [4, 128], strides = [1, 1]} : vector<58x128xf32> to vector<4x128xf32>
    %c7_115 = arith.constant 7 : index
    %c0_116 = arith.constant 0 : index
    %144 = vector.load %arg13[%c7_115, %c0_116] : memref<72x128xf32, #tpu.memory_space<vmem>>, vector<4x128xf32>
    tpu.vector_store %arg13[%c7_115, %c0_116], %143 {strides = array<i32>} : memref<72x128xf32, #tpu.memory_space<vmem>>, vector<4x128xf32>,
    %145 = vector.extract_strided_slice %142 {offsets = [6, 0], sizes = [4, 128], strides = [1, 1]} : vector<58x128xf32> to vector<4x128xf32>
    %c13_117 = arith.constant 13 : index
    %c0_118 = arith.constant 0 : index
    %146 = vector.load %arg13[%c13_117, %c0_118] : memref<72x128xf32, #tpu.memory_space<vmem>>, vector<4x128xf32>
    tpu.vector_store %arg13[%c13_117, %c0_118], %145 {strides = array<i32>} : memref<72x128xf32, #tpu.memory_space<vmem>>, vector<4x128xf32>,
    %147 = vector.extract_strided_slice %142 {offsets = [12, 0], sizes = [4, 128], strides = [1, 1]} : vector<58x128xf32> to vector<4x128xf32>
    %c19_119 = arith.constant 19 : index
    %c0_120 = arith.constant 0 : index
    %148 = vector.load %arg13[%c19_119, %c0_120] : memref<72x128xf32, #tpu.memory_space<vmem>>, vector<4x128xf32>
    tpu.vector_store %arg13[%c19_119, %c0_120], %147 {strides = array<i32>} : memref<72x128xf32, #tpu.memory_space<vmem>>, vector<4x128xf32>,
    %149 = vector.extract_strided_slice %142 {offsets = [18, 0], sizes = [4, 128], strides = [1, 1]} : vector<58x128xf32> to vector<4x128xf32>
    %c25_121 = arith.constant 25 : index
    %c0_122 = arith.constant 0 : index
    %150 = vector.load %arg13[%c25_121, %c0_122] : memref<72x128xf32, #tpu.memory_space<vmem>>, vector<4x128xf32>
    tpu.vector_store %arg13[%c25_121, %c0_122], %149 {strides = array<i32>} : memref<72x128xf32, #tpu.memory_space<vmem>>, vector<4x128xf32>,
    %151 = vector.extract_strided_slice %142 {offsets = [36, 0], sizes = [4, 128], strides = [1, 1]} : vector<58x128xf32> to vector<4x128xf32>
    %c43_123 = arith.constant 43 : index
    %c0_124 = arith.constant 0 : index
    %152 = vector.load %arg13[%c43_123, %c0_124] : memref<72x128xf32, #tpu.memory_space<vmem>>, vector<4x128xf32>
    tpu.vector_store %arg13[%c43_123, %c0_124], %151 {strides = array<i32>} : memref<72x128xf32, #tpu.memory_space<vmem>>, vector<4x128xf32>,
    %153 = vector.extract_strided_slice %142 {offsets = [42, 0], sizes = [4, 128], strides = [1, 1]} : vector<58x128xf32> to vector<4x128xf32>
    %c49_125 = arith.constant 49 : index
    %c0_126 = arith.constant 0 : index
    %154 = vector.load %arg13[%c49_125, %c0_126] : memref<72x128xf32, #tpu.memory_space<vmem>>, vector<4x128xf32>
    tpu.vector_store %arg13[%c49_125, %c0_126], %153 {strides = array<i32>} : memref<72x128xf32, #tpu.memory_space<vmem>>, vector<4x128xf32>,
    %155 = vector.extract_strided_slice %142 {offsets = [48, 0], sizes = [4, 128], strides = [1, 1]} : vector<58x128xf32> to vector<4x128xf32>
    %c55_127 = arith.constant 55 : index
    %c0_128 = arith.constant 0 : index
    %156 = vector.load %arg13[%c55_127, %c0_128] : memref<72x128xf32, #tpu.memory_space<vmem>>, vector<4x128xf32>
    tpu.vector_store %arg13[%c55_127, %c0_128], %155 {strides = array<i32>} : memref<72x128xf32, #tpu.memory_space<vmem>>, vector<4x128xf32>,
    %157 = vector.extract_strided_slice %142 {offsets = [54, 0], sizes = [4, 128], strides = [1, 1]} : vector<58x128xf32> to vector<4x128xf32>
    %c61_129 = arith.constant 61 : index
    %c0_130 = arith.constant 0 : index
    %158 = vector.load %arg13[%c61_129, %c0_130] : memref<72x128xf32, #tpu.memory_space<vmem>>, vector<4x128xf32>
    tpu.vector_store %arg13[%c61_129, %c0_130], %157 {strides = array<i32>} : memref<72x128xf32, #tpu.memory_space<vmem>>, vector<4x128xf32>,
    %c0_131 = arith.constant 0 : index
    %c0_132 = arith.constant 0 : index
    %159 = vector.load %arg13[%c0_131, %c0_132] : memref<72x128xf32, #tpu.memory_space<vmem>>, vector<51x128xf32>
    %160 = arith.truncf %159 : vector<51x128xf32> to vector<51x128xbf16>
    %c0_133 = arith.constant 0 : index
    %c0_134 = arith.constant 0 : index
    %161 = vector.load %arg5[%c0_133, %c0_134] : memref<2048x256xbf16, #tpu.memory_space<vmem>>, vector<128x256xbf16>
    %cst_135 = arith.constant dense<0.000000e+00> : vector<51x256xf32>
    %162 = tpu.matmul %160, %161, %cst_135 {dimension_numbers = #tpu.dot_dimension_numbers<[1], [0], [0], [1], [0, 0, 1, 1], [], []>} : vector<51x128xbf16>, vector<128x256xbf16>, vector<51x256xf32> -> vector<51x256xf32>
    %c1_136 = arith.constant 1 : index
    %c0_137 = arith.constant 0 : index
    %163 = vector.load %arg13[%c1_136, %c0_137] : memref<72x128xf32, #tpu.memory_space<vmem>>, vector<51x128xf32>
    %164 = arith.truncf %163 : vector<51x128xf32> to vector<51x128xbf16>
    %c128_138 = arith.constant 128 : index
    %c0_139 = arith.constant 0 : index
    %165 = vector.load %arg5[%c128_138, %c0_139] : memref<2048x256xbf16, #tpu.memory_space<vmem>>, vector<128x256xbf16>
    %cst_140 = arith.constant dense<0.000000e+00> : vector<51x256xf32>
    %166 = tpu.matmul %164, %165, %cst_140 {dimension_numbers = #tpu.dot_dimension_numbers<[1], [0], [0], [1], [0, 0, 1, 1], [], []>} : vector<51x128xbf16>, vector<128x256xbf16>, vector<51x256xf32> -> vector<51x256xf32>
    %167 = arith.addf %162, %166 : vector<51x256xf32>
    %c2_141 = arith.constant 2 : index
    %c0_142 = arith.constant 0 : index
    %168 = vector.load %arg13[%c2_141, %c0_142] : memref<72x128xf32, #tpu.memory_space<vmem>>, vector<51x128xf32>
    %169 = arith.truncf %168 : vector<51x128xf32> to vector<51x128xbf16>
    %c256_143 = arith.constant 256 : index
    %c0_144 = arith.constant 0 : index
    %170 = vector.load %arg5[%c256_143, %c0_144] : memref<2048x256xbf16, #tpu.memory_space<vmem>>, vector<128x256xbf16>
    %cst_145 = arith.constant dense<0.000000e+00> : vector<51x256xf32>
    %171 = tpu.matmul %169, %170, %cst_145 {dimension_numbers = #tpu.dot_dimension_numbers<[1], [0], [0], [1], [0, 0, 1, 1], [], []>} : vector<51x128xbf16>, vector<128x256xbf16>, vector<51x256xf32> -> vector<51x256xf32>
    %172 = arith.addf %167, %171 : vector<51x256xf32>
    %c3 = arith.constant 3 : index
    %c0_146 = arith.constant 0 : index
    %173 = vector.load %arg13[%c3, %c0_146] : memref<72x128xf32, #tpu.memory_space<vmem>>, vector<51x128xf32>
    %174 = arith.truncf %173 : vector<51x128xf32> to vector<51x128xbf16>
    %c384_147 = arith.constant 384 : index
    %c0_148 = arith.constant 0 : index
    %175 = vector.load %arg5[%c384_147, %c0_148] : memref<2048x256xbf16, #tpu.memory_space<vmem>>, vector<128x256xbf16>
    %cst_149 = arith.constant dense<0.000000e+00> : vector<51x256xf32>
    %176 = tpu.matmul %174, %175, %cst_149 {dimension_numbers = #tpu.dot_dimension_numbers<[1], [0], [0], [1], [0, 0, 1, 1], [], []>} : vector<51x128xbf16>, vector<128x256xbf16>, vector<51x256xf32> -> vector<51x256xf32>
    %177 = arith.addf %172, %176 : vector<51x256xf32>
    %c6_150 = arith.constant 6 : index
    %c0_151 = arith.constant 0 : index
    %178 = vector.load %arg13[%c6_150, %c0_151] : memref<72x128xf32, #tpu.memory_space<vmem>>, vector<51x128xf32>
    %179 = arith.truncf %178 : vector<51x128xf32> to vector<51x128xbf16>
    %c512_152 = arith.constant 512 : index
    %c0_153 = arith.constant 0 : index
    %180 = vector.load %arg5[%c512_152, %c0_153] : memref<2048x256xbf16, #tpu.memory_space<vmem>>, vector<128x256xbf16>
    %cst_154 = arith.constant dense<0.000000e+00> : vector<51x256xf32>
    %181 = tpu.matmul %179, %180, %cst_154 {dimension_numbers = #tpu.dot_dimension_numbers<[1], [0], [0], [1], [0, 0, 1, 1], [], []>} : vector<51x128xbf16>, vector<128x256xbf16>, vector<51x256xf32> -> vector<51x256xf32>
    %182 = arith.addf %177, %181 : vector<51x256xf32>
    %c7_155 = arith.constant 7 : index
    %c0_156 = arith.constant 0 : index
    %183 = vector.load %arg13[%c7_155, %c0_156] : memref<72x128xf32, #tpu.memory_space<vmem>>, vector<51x128xf32>
    %184 = arith.truncf %183 : vector<51x128xf32> to vector<51x128xbf16>
    %c640_157 = arith.constant 640 : index
    %c0_158 = arith.constant 0 : index
    %185 = vector.load %arg5[%c640_157, %c0_158] : memref<2048x256xbf16, #tpu.memory_space<vmem>>, vector<128x256xbf16>
    %cst_159 = arith.constant dense<0.000000e+00> : vector<51x256xf32>
    %186 = tpu.matmul %184, %185, %cst_159 {dimension_numbers = #tpu.dot_dimension_numbers<[1], [0], [0], [1], [0, 0, 1, 1], [], []>} : vector<51x128xbf16>, vector<128x256xbf16>, vector<51x256xf32> -> vector<51x256xf32>
    %187 = arith.addf %182, %186 : vector<51x256xf32>
    %c8_160 = arith.constant 8 : index
    %c0_161 = arith.constant 0 : index
    %188 = vector.load %arg13[%c8_160, %c0_161] : memref<72x128xf32, #tpu.memory_space<vmem>>, vector<51x128xf32>
    %189 = arith.truncf %188 : vector<51x128xf32> to vector<51x128xbf16>
    %c768_162 = arith.constant 768 : index
    %c0_163 = arith.constant 0 : index
    %190 = vector.load %arg5[%c768_162, %c0_163] : memref<2048x256xbf16, #tpu.memory_space<vmem>>, vector<128x256xbf16>
    %cst_164 = arith.constant dense<0.000000e+00> : vector<51x256xf32>
    %191 = tpu.matmul %189, %190, %cst_164 {dimension_numbers = #tpu.dot_dimension_numbers<[1], [0], [0], [1], [0, 0, 1, 1], [], []>} : vector<51x128xbf16>, vector<128x256xbf16>, vector<51x256xf32> -> vector<51x256xf32>
    %192 = arith.addf %187, %191 : vector<51x256xf32>
    %c9 = arith.constant 9 : index
    %c0_165 = arith.constant 0 : index
    %193 = vector.load %arg13[%c9, %c0_165] : memref<72x128xf32, #tpu.memory_space<vmem>>, vector<51x128xf32>
    %194 = arith.truncf %193 : vector<51x128xf32> to vector<51x128xbf16>
    %c896_166 = arith.constant 896 : index
    %c0_167 = arith.constant 0 : index
    %195 = vector.load %arg5[%c896_166, %c0_167] : memref<2048x256xbf16, #tpu.memory_space<vmem>>, vector<128x256xbf16>
    %cst_168 = arith.constant dense<0.000000e+00> : vector<51x256xf32>
    %196 = tpu.matmul %194, %195, %cst_168 {dimension_numbers = #tpu.dot_dimension_numbers<[1], [0], [0], [1], [0, 0, 1, 1], [], []>} : vector<51x128xbf16>, vector<128x256xbf16>, vector<51x256xf32> -> vector<51x256xf32>
    %197 = arith.addf %192, %196 : vector<51x256xf32>
    %c12_169 = arith.constant 12 : index
    %c0_170 = arith.constant 0 : index
    %198 = vector.load %arg13[%c12_169, %c0_170] : memref<72x128xf32, #tpu.memory_space<vmem>>, vector<51x128xf32>
    %199 = arith.truncf %198 : vector<51x128xf32> to vector<51x128xbf16>
    %c1024_171 = arith.constant 1024 : index
    %c0_172 = arith.constant 0 : index
    %200 = vector.load %arg5[%c1024_171, %c0_172] : memref<2048x256xbf16, #tpu.memory_space<vmem>>, vector<128x256xbf16>
    %cst_173 = arith.constant dense<0.000000e+00> : vector<51x256xf32>
    %201 = tpu.matmul %199, %200, %cst_173 {dimension_numbers = #tpu.dot_dimension_numbers<[1], [0], [0], [1], [0, 0, 1, 1], [], []>} : vector<51x128xbf16>, vector<128x256xbf16>, vector<51x256xf32> -> vector<51x256xf32>
    %202 = arith.addf %197, %201 : vector<51x256xf32>
    %c13_174 = arith.constant 13 : index
    %c0_175 = arith.constant 0 : index
    %203 = vector.load %arg13[%c13_174, %c0_175] : memref<72x128xf32, #tpu.memory_space<vmem>>, vector<51x128xf32>
    %204 = arith.truncf %203 : vector<51x128xf32> to vector<51x128xbf16>
    %c1152 = arith.constant 1152 : index
    %c0_176 = arith.constant 0 : index
    %205 = vector.load %arg5[%c1152, %c0_176] : memref<2048x256xbf16, #tpu.memory_space<vmem>>, vector<128x256xbf16>
    %cst_177 = arith.constant dense<0.000000e+00> : vector<51x256xf32>
    %206 = tpu.matmul %204, %205, %cst_177 {dimension_numbers = #tpu.dot_dimension_numbers<[1], [0], [0], [1], [0, 0, 1, 1], [], []>} : vector<51x128xbf16>, vector<128x256xbf16>, vector<51x256xf32> -> vector<51x256xf32>
    %207 = arith.addf %202, %206 : vector<51x256xf32>
    %c14_178 = arith.constant 14 : index
    %c0_179 = arith.constant 0 : index
    %208 = vector.load %arg13[%c14_178, %c0_179] : memref<72x128xf32, #tpu.memory_space<vmem>>, vector<51x128xf32>
    %209 = arith.truncf %208 : vector<51x128xf32> to vector<51x128xbf16>
    %c1280 = arith.constant 1280 : index
    %c0_180 = arith.constant 0 : index
    %210 = vector.load %arg5[%c1280, %c0_180] : memref<2048x256xbf16, #tpu.memory_space<vmem>>, vector<128x256xbf16>
    %cst_181 = arith.constant dense<0.000000e+00> : vector<51x256xf32>
    %211 = tpu.matmul %209, %210, %cst_181 {dimension_numbers = #tpu.dot_dimension_numbers<[1], [0], [0], [1], [0, 0, 1, 1], [], []>} : vector<51x128xbf16>, vector<128x256xbf16>, vector<51x256xf32> -> vector<51x256xf32>
    %212 = arith.addf %207, %211 : vector<51x256xf32>
    %c15 = arith.constant 15 : index
    %c0_182 = arith.constant 0 : index
    %213 = vector.load %arg13[%c15, %c0_182] : memref<72x128xf32, #tpu.memory_space<vmem>>, vector<51x128xf32>
    %214 = arith.truncf %213 : vector<51x128xf32> to vector<51x128xbf16>
    %c1408 = arith.constant 1408 : index
    %c0_183 = arith.constant 0 : index
    %215 = vector.load %arg5[%c1408, %c0_183] : memref<2048x256xbf16, #tpu.memory_space<vmem>>, vector<128x256xbf16>
    %cst_184 = arith.constant dense<0.000000e+00> : vector<51x256xf32>
    %216 = tpu.matmul %214, %215, %cst_184 {dimension_numbers = #tpu.dot_dimension_numbers<[1], [0], [0], [1], [0, 0, 1, 1], [], []>} : vector<51x128xbf16>, vector<128x256xbf16>, vector<51x256xf32> -> vector<51x256xf32>
    %217 = arith.addf %212, %216 : vector<51x256xf32>
    %c18 = arith.constant 18 : index
    %c0_185 = arith.constant 0 : index
    %218 = vector.load %arg13[%c18, %c0_185] : memref<72x128xf32, #tpu.memory_space<vmem>>, vector<51x128xf32>
    %219 = arith.truncf %218 : vector<51x128xf32> to vector<51x128xbf16>
    %c1536 = arith.constant 1536 : index
    %c0_186 = arith.constant 0 : index
    %220 = vector.load %arg5[%c1536, %c0_186] : memref<2048x256xbf16, #tpu.memory_space<vmem>>, vector<128x256xbf16>
    %cst_187 = arith.constant dense<0.000000e+00> : vector<51x256xf32>
    %221 = tpu.matmul %219, %220, %cst_187 {dimension_numbers = #tpu.dot_dimension_numbers<[1], [0], [0], [1], [0, 0, 1, 1], [], []>} : vector<51x128xbf16>, vector<128x256xbf16>, vector<51x256xf32> -> vector<51x256xf32>
    %222 = arith.addf %217, %221 : vector<51x256xf32>
    %c19_188 = arith.constant 19 : index
    %c0_189 = arith.constant 0 : index
    %223 = vector.load %arg13[%c19_188, %c0_189] : memref<72x128xf32, #tpu.memory_space<vmem>>, vector<51x128xf32>
    %224 = arith.truncf %223 : vector<51x128xf32> to vector<51x128xbf16>
    %c1664 = arith.constant 1664 : index
    %c0_190 = arith.constant 0 : index
    %225 = vector.load %arg5[%c1664, %c0_190] : memref<2048x256xbf16, #tpu.memory_space<vmem>>, vector<128x256xbf16>
    %cst_191 = arith.constant dense<0.000000e+00> : vector<51x256xf32>
    %226 = tpu.matmul %224, %225, %cst_191 {dimension_numbers = #tpu.dot_dimension_numbers<[1], [0], [0], [1], [0, 0, 1, 1], [], []>} : vector<51x128xbf16>, vector<128x256xbf16>, vector<51x256xf32> -> vector<51x256xf32>
    %227 = arith.addf %222, %226 : vector<51x256xf32>
    %c20 = arith.constant 20 : index
    %c0_192 = arith.constant 0 : index
    %228 = vector.load %arg13[%c20, %c0_192] : memref<72x128xf32, #tpu.memory_space<vmem>>, vector<51x128xf32>
    %229 = arith.truncf %228 : vector<51x128xf32> to vector<51x128xbf16>
    %c1792 = arith.constant 1792 : index
    %c0_193 = arith.constant 0 : index
    %230 = vector.load %arg5[%c1792, %c0_193] : memref<2048x256xbf16, #tpu.memory_space<vmem>>, vector<128x256xbf16>
    %cst_194 = arith.constant dense<0.000000e+00> : vector<51x256xf32>
    %231 = tpu.matmul %229, %230, %cst_194 {dimension_numbers = #tpu.dot_dimension_numbers<[1], [0], [0], [1], [0, 0, 1, 1], [], []>} : vector<51x128xbf16>, vector<128x256xbf16>, vector<51x256xf32> -> vector<51x256xf32>
    %232 = arith.addf %227, %231 : vector<51x256xf32>
    %c21 = arith.constant 21 : index
    %c0_195 = arith.constant 0 : index
    %233 = vector.load %arg13[%c21, %c0_195] : memref<72x128xf32, #tpu.memory_space<vmem>>, vector<51x128xf32>
    %234 = arith.truncf %233 : vector<51x128xf32> to vector<51x128xbf16>
    %c1920 = arith.constant 1920 : index
    %c0_196 = arith.constant 0 : index
    %235 = vector.load %arg5[%c1920, %c0_196] : memref<2048x256xbf16, #tpu.memory_space<vmem>>, vector<128x256xbf16>
    %cst_197 = arith.constant dense<0.000000e+00> : vector<51x256xf32>
    %236 = tpu.matmul %234, %235, %cst_197 {dimension_numbers = #tpu.dot_dimension_numbers<[1], [0], [0], [1], [0, 0, 1, 1], [], []>} : vector<51x128xbf16>, vector<128x256xbf16>, vector<51x256xf32> -> vector<51x256xf32>
    %237 = arith.addf %232, %236 : vector<51x256xf32>
    %c0_198 = arith.constant 0 : index
    %c384_199 = arith.constant 384 : index
    %238 = vector.load %arg11[%c0_198, %c384_199] : memref<1x1536xf32, #tpu.memory_space<vmem>>, vector<1x256xf32>
    %239 = vector.broadcast %238 : vector<1x256xf32> to vector<51x256xf32>
    %240 = arith.addf %237, %239 : vector<51x256xf32>
    %cst_200 = arith.constant 0.000000e+00 : f32
    %241 = vector.broadcast %cst_200 : f32 to vector<51x256xf32>
    %242 = arith.maximumf %240, %241 : vector<51x256xf32>
    %243 = vector.extract_strided_slice %242 {offsets = [0, 0], sizes = [1, 256], strides = [1, 1]} : vector<51x256xf32> to vector<1x256xf32>
    %c5 = arith.constant 5 : index
    %c0_201 = arith.constant 0 : index
    %244 = vector.load %arg15[%c5, %c0_201] : memref<32x256xf32, #tpu.memory_space<vmem>>, vector<1x256xf32>
    tpu.vector_store %arg15[%c5, %c0_201], %243 {strides = array<i32>} : memref<32x256xf32, #tpu.memory_space<vmem>>, vector<1x256xf32>,
    %245 = vector.extract_strided_slice %242 {offsets = [2, 0], sizes = [1, 256], strides = [1, 1]} : vector<51x256xf32> to vector<1x256xf32>
    %c6_202 = arith.constant 6 : index
    %c0_203 = arith.constant 0 : index
    %246 = vector.load %arg15[%c6_202, %c0_203] : memref<32x256xf32, #tpu.memory_space<vmem>>, vector<1x256xf32>
    tpu.vector_store %arg15[%c6_202, %c0_203], %245 {strides = array<i32>} : memref<32x256xf32, #tpu.memory_space<vmem>>, vector<1x256xf32>,
    %247 = vector.extract_strided_slice %242 {offsets = [12, 0], sizes = [1, 256], strides = [1, 1]} : vector<51x256xf32> to vector<1x256xf32>
    %c9_204 = arith.constant 9 : index
    %c0_205 = arith.constant 0 : index
    %248 = vector.load %arg15[%c9_204, %c0_205] : memref<32x256xf32, #tpu.memory_space<vmem>>, vector<1x256xf32>
    tpu.vector_store %arg15[%c9_204, %c0_205], %247 {strides = array<i32>} : memref<32x256xf32, #tpu.memory_space<vmem>>, vector<1x256xf32>,
    %249 = vector.extract_strided_slice %242 {offsets = [14, 0], sizes = [1, 256], strides = [1, 1]} : vector<51x256xf32> to vector<1x256xf32>
    %c10 = arith.constant 10 : index
    %c0_206 = arith.constant 0 : index
    %250 = vector.load %arg15[%c10, %c0_206] : memref<32x256xf32, #tpu.memory_space<vmem>>, vector<1x256xf32>
    tpu.vector_store %arg15[%c10, %c0_206], %249 {strides = array<i32>} : memref<32x256xf32, #tpu.memory_space<vmem>>, vector<1x256xf32>,
    %251 = vector.extract_strided_slice %242 {offsets = [36, 0], sizes = [1, 256], strides = [1, 1]} : vector<51x256xf32> to vector<1x256xf32>
    %c21_207 = arith.constant 21 : index
    %c0_208 = arith.constant 0 : index
    %252 = vector.load %arg15[%c21_207, %c0_208] : memref<32x256xf32, #tpu.memory_space<vmem>>, vector<1x256xf32>
    tpu.vector_store %arg15[%c21_207, %c0_208], %251 {strides = array<i32>} : memref<32x256xf32, #tpu.memory_space<vmem>>, vector<1x256xf32>,
    %253 = vector.extract_strided_slice %242 {offsets = [38, 0], sizes = [1, 256], strides = [1, 1]} : vector<51x256xf32> to vector<1x256xf32>
    %c22 = arith.constant 22 : index
    %c0_209 = arith.constant 0 : index
    %254 = vector.load %arg15[%c22, %c0_209] : memref<32x256xf32, #tpu.memory_space<vmem>>, vector<1x256xf32>
    tpu.vector_store %arg15[%c22, %c0_209], %253 {strides = array<i32>} : memref<32x256xf32, #tpu.memory_space<vmem>>, vector<1x256xf32>,
    %255 = vector.extract_strided_slice %242 {offsets = [48, 0], sizes = [1, 256], strides = [1, 1]} : vector<51x256xf32> to vector<1x256xf32>
    %c25_210 = arith.constant 25 : index
    %c0_211 = arith.constant 0 : index
    %256 = vector.load %arg15[%c25_210, %c0_211] : memref<32x256xf32, #tpu.memory_space<vmem>>, vector<1x256xf32>
    tpu.vector_store %arg15[%c25_210, %c0_211], %255 {strides = array<i32>} : memref<32x256xf32, #tpu.memory_space<vmem>>, vector<1x256xf32>,
    %257 = vector.extract_strided_slice %242 {offsets = [50, 0], sizes = [1, 256], strides = [1, 1]} : vector<51x256xf32> to vector<1x256xf32>
    %c26 = arith.constant 26 : index
    %c0_212 = arith.constant 0 : index
    %258 = vector.load %arg15[%c26, %c0_212] : memref<32x256xf32, #tpu.memory_space<vmem>>, vector<1x256xf32>
    tpu.vector_store %arg15[%c26, %c0_212], %257 {strides = array<i32>} : memref<32x256xf32, #tpu.memory_space<vmem>>, vector<1x256xf32>,
    %c0_213 = arith.constant 0 : index
    %c0_214 = arith.constant 0 : index
    %259 = vector.load %arg15[%c0_213, %c0_214] : memref<32x256xf32, #tpu.memory_space<vmem>>, vector<22x256xf32>
    %260 = arith.truncf %259 : vector<22x256xf32> to vector<22x256xbf16>
    %c0_215 = arith.constant 0 : index
    %c0_216 = arith.constant 0 : index
    %261 = vector.load %arg6[%c0_215, %c0_216] : memref<2304x128xbf16, #tpu.memory_space<vmem>>, vector<256x128xbf16>
    %cst_217 = arith.constant dense<0.000000e+00> : vector<22x128xf32>
    %262 = tpu.matmul %260, %261, %cst_217 {dimension_numbers = #tpu.dot_dimension_numbers<[1], [0], [0], [1], [0, 0, 1, 1], [], []>} : vector<22x256xbf16>, vector<256x128xbf16>, vector<22x128xf32> -> vector<22x128xf32>
    %c1_218 = arith.constant 1 : index
    %c0_219 = arith.constant 0 : index
    %263 = vector.load %arg15[%c1_218, %c0_219] : memref<32x256xf32, #tpu.memory_space<vmem>>, vector<22x256xf32>
    %264 = arith.truncf %263 : vector<22x256xf32> to vector<22x256xbf16>
    %c256_220 = arith.constant 256 : index
    %c0_221 = arith.constant 0 : index
    %265 = vector.load %arg6[%c256_220, %c0_221] : memref<2304x128xbf16, #tpu.memory_space<vmem>>, vector<256x128xbf16>
    %cst_222 = arith.constant dense<0.000000e+00> : vector<22x128xf32>
    %266 = tpu.matmul %264, %265, %cst_222 {dimension_numbers = #tpu.dot_dimension_numbers<[1], [0], [0], [1], [0, 0, 1, 1], [], []>} : vector<22x256xbf16>, vector<256x128xbf16>, vector<22x128xf32> -> vector<22x128xf32>
    %267 = arith.addf %262, %266 : vector<22x128xf32>
    %c2_223 = arith.constant 2 : index
    %c0_224 = arith.constant 0 : index
    %268 = vector.load %arg15[%c2_223, %c0_224] : memref<32x256xf32, #tpu.memory_space<vmem>>, vector<22x256xf32>
    %269 = arith.truncf %268 : vector<22x256xf32> to vector<22x256xbf16>
    %c512_225 = arith.constant 512 : index
    %c0_226 = arith.constant 0 : index
    %270 = vector.load %arg6[%c512_225, %c0_226] : memref<2304x128xbf16, #tpu.memory_space<vmem>>, vector<256x128xbf16>
    %cst_227 = arith.constant dense<0.000000e+00> : vector<22x128xf32>
    %271 = tpu.matmul %269, %270, %cst_227 {dimension_numbers = #tpu.dot_dimension_numbers<[1], [0], [0], [1], [0, 0, 1, 1], [], []>} : vector<22x256xbf16>, vector<256x128xbf16>, vector<22x128xf32> -> vector<22x128xf32>
    %272 = arith.addf %267, %271 : vector<22x128xf32>
    %c4 = arith.constant 4 : index
    %c0_228 = arith.constant 0 : index
    %273 = vector.load %arg15[%c4, %c0_228] : memref<32x256xf32, #tpu.memory_space<vmem>>, vector<22x256xf32>
    %274 = arith.truncf %273 : vector<22x256xf32> to vector<22x256xbf16>
    %c768_229 = arith.constant 768 : index
    %c0_230 = arith.constant 0 : index
    %275 = vector.load %arg6[%c768_229, %c0_230] : memref<2304x128xbf16, #tpu.memory_space<vmem>>, vector<256x128xbf16>
    %cst_231 = arith.constant dense<0.000000e+00> : vector<22x128xf32>
    %276 = tpu.matmul %274, %275, %cst_231 {dimension_numbers = #tpu.dot_dimension_numbers<[1], [0], [0], [1], [0, 0, 1, 1], [], []>} : vector<22x256xbf16>, vector<256x128xbf16>, vector<22x128xf32> -> vector<22x128xf32>
    %277 = arith.addf %272, %276 : vector<22x128xf32>
    %c5_232 = arith.constant 5 : index
    %c0_233 = arith.constant 0 : index
    %278 = vector.load %arg15[%c5_232, %c0_233] : memref<32x256xf32, #tpu.memory_space<vmem>>, vector<22x256xf32>
    %279 = arith.truncf %278 : vector<22x256xf32> to vector<22x256xbf16>
    %c1024_234 = arith.constant 1024 : index
    %c0_235 = arith.constant 0 : index
    %280 = vector.load %arg6[%c1024_234, %c0_235] : memref<2304x128xbf16, #tpu.memory_space<vmem>>, vector<256x128xbf16>
    %cst_236 = arith.constant dense<0.000000e+00> : vector<22x128xf32>
    %281 = tpu.matmul %279, %280, %cst_236 {dimension_numbers = #tpu.dot_dimension_numbers<[1], [0], [0], [1], [0, 0, 1, 1], [], []>} : vector<22x256xbf16>, vector<256x128xbf16>, vector<22x128xf32> -> vector<22x128xf32>
    %282 = arith.addf %277, %281 : vector<22x128xf32>
    %c6_237 = arith.constant 6 : index
    %c0_238 = arith.constant 0 : index
    %283 = vector.load %arg15[%c6_237, %c0_238] : memref<32x256xf32, #tpu.memory_space<vmem>>, vector<22x256xf32>
    %284 = arith.truncf %283 : vector<22x256xf32> to vector<22x256xbf16>
    %c1280_239 = arith.constant 1280 : index
    %c0_240 = arith.constant 0 : index
    %285 = vector.load %arg6[%c1280_239, %c0_240] : memref<2304x128xbf16, #tpu.memory_space<vmem>>, vector<256x128xbf16>
    %cst_241 = arith.constant dense<0.000000e+00> : vector<22x128xf32>
    %286 = tpu.matmul %284, %285, %cst_241 {dimension_numbers = #tpu.dot_dimension_numbers<[1], [0], [0], [1], [0, 0, 1, 1], [], []>} : vector<22x256xbf16>, vector<256x128xbf16>, vector<22x128xf32> -> vector<22x128xf32>
    %287 = arith.addf %282, %286 : vector<22x128xf32>
    %c8_242 = arith.constant 8 : index
    %c0_243 = arith.constant 0 : index
    %288 = vector.load %arg15[%c8_242, %c0_243] : memref<32x256xf32, #tpu.memory_space<vmem>>, vector<22x256xf32>
    %289 = arith.truncf %288 : vector<22x256xf32> to vector<22x256xbf16>
    %c1536_244 = arith.constant 1536 : index
    %c0_245 = arith.constant 0 : index
    %290 = vector.load %arg6[%c1536_244, %c0_245] : memref<2304x128xbf16, #tpu.memory_space<vmem>>, vector<256x128xbf16>
    %cst_246 = arith.constant dense<0.000000e+00> : vector<22x128xf32>
    %291 = tpu.matmul %289, %290, %cst_246 {dimension_numbers = #tpu.dot_dimension_numbers<[1], [0], [0], [1], [0, 0, 1, 1], [], []>} : vector<22x256xbf16>, vector<256x128xbf16>, vector<22x128xf32> -> vector<22x128xf32>
    %292 = arith.addf %287, %291 : vector<22x128xf32>
    %c9_247 = arith.constant 9 : index
    %c0_248 = arith.constant 0 : index
    %293 = vector.load %arg15[%c9_247, %c0_248] : memref<32x256xf32, #tpu.memory_space<vmem>>, vector<22x256xf32>
    %294 = arith.truncf %293 : vector<22x256xf32> to vector<22x256xbf16>
    %c1792_249 = arith.constant 1792 : index
    %c0_250 = arith.constant 0 : index
    %295 = vector.load %arg6[%c1792_249, %c0_250] : memref<2304x128xbf16, #tpu.memory_space<vmem>>, vector<256x128xbf16>
    %cst_251 = arith.constant dense<0.000000e+00> : vector<22x128xf32>
    %296 = tpu.matmul %294, %295, %cst_251 {dimension_numbers = #tpu.dot_dimension_numbers<[1], [0], [0], [1], [0, 0, 1, 1], [], []>} : vector<22x256xbf16>, vector<256x128xbf16>, vector<22x128xf32> -> vector<22x128xf32>
    %297 = arith.addf %292, %296 : vector<22x128xf32>
    %c10_252 = arith.constant 10 : index
    %c0_253 = arith.constant 0 : index
    %298 = vector.load %arg15[%c10_252, %c0_253] : memref<32x256xf32, #tpu.memory_space<vmem>>, vector<22x256xf32>
    %299 = arith.truncf %298 : vector<22x256xf32> to vector<22x256xbf16>
    %c2048 = arith.constant 2048 : index
    %c0_254 = arith.constant 0 : index
    %300 = vector.load %arg6[%c2048, %c0_254] : memref<2304x128xbf16, #tpu.memory_space<vmem>>, vector<256x128xbf16>
    %cst_255 = arith.constant dense<0.000000e+00> : vector<22x128xf32>
    %301 = tpu.matmul %299, %300, %cst_255 {dimension_numbers = #tpu.dot_dimension_numbers<[1], [0], [0], [1], [0, 0, 1, 1], [], []>} : vector<22x256xbf16>, vector<256x128xbf16>, vector<22x128xf32> -> vector<22x128xf32>
    %302 = arith.addf %297, %301 : vector<22x128xf32>
    %c0_256 = arith.constant 0 : index
    %c640_257 = arith.constant 640 : index
    %303 = vector.load %arg11[%c0_256, %c640_257] : memref<1x1536xf32, #tpu.memory_space<vmem>>, vector<1x128xf32>
    %304 = vector.broadcast %303 : vector<1x128xf32> to vector<22x128xf32>
    %305 = arith.addf %302, %304 : vector<22x128xf32>
    %cst_258 = arith.constant 0.000000e+00 : f32
    %306 = vector.broadcast %cst_258 : f32 to vector<22x128xf32>
    %307 = arith.maximumf %305, %306 : vector<22x128xf32>
    %308 = vector.extract_strided_slice %307 {offsets = [0, 0], sizes = [2, 128], strides = [1, 1]} : vector<22x128xf32> to vector<2x128xf32>
    %c5_259 = arith.constant 5 : index
    %c0_260 = arith.constant 0 : index
    %309 = vector.load %arg16[%c5_259, %c0_260] : memref<32x128xf32, #tpu.memory_space<vmem>>, vector<2x128xf32>
    tpu.vector_store %arg16[%c5_259, %c0_260], %308 {strides = array<i32>} : memref<32x128xf32, #tpu.memory_space<vmem>>, vector<2x128xf32>,
    %310 = vector.extract_strided_slice %307 {offsets = [4, 0], sizes = [2, 128], strides = [1, 1]} : vector<22x128xf32> to vector<2x128xf32>
    %c9_261 = arith.constant 9 : index
    %c0_262 = arith.constant 0 : index
    %311 = vector.load %arg16[%c9_261, %c0_262] : memref<32x128xf32, #tpu.memory_space<vmem>>, vector<2x128xf32>
    tpu.vector_store %arg16[%c9_261, %c0_262], %310 {strides = array<i32>} : memref<32x128xf32, #tpu.memory_space<vmem>>, vector<2x128xf32>,
    %312 = vector.extract_strided_slice %307 {offsets = [16, 0], sizes = [2, 128], strides = [1, 1]} : vector<22x128xf32> to vector<2x128xf32>
    %c21_263 = arith.constant 21 : index
    %c0_264 = arith.constant 0 : index
    %313 = vector.load %arg16[%c21_263, %c0_264] : memref<32x128xf32, #tpu.memory_space<vmem>>, vector<2x128xf32>
    tpu.vector_store %arg16[%c21_263, %c0_264], %312 {strides = array<i32>} : memref<32x128xf32, #tpu.memory_space<vmem>>, vector<2x128xf32>,
    %314 = vector.extract_strided_slice %307 {offsets = [20, 0], sizes = [2, 128], strides = [1, 1]} : vector<22x128xf32> to vector<2x128xf32>
    %c25_265 = arith.constant 25 : index
    %c0_266 = arith.constant 0 : index
    %315 = vector.load %arg16[%c25_265, %c0_266] : memref<32x128xf32, #tpu.memory_space<vmem>>, vector<2x128xf32>
    tpu.vector_store %arg16[%c25_265, %c0_266], %314 {strides = array<i32>} : memref<32x128xf32, #tpu.memory_space<vmem>>, vector<2x128xf32>,
    %c0_267 = arith.constant 0 : index
    %c0_268 = arith.constant 0 : index
    %316 = vector.load %arg16[%c0_267, %c0_268] : memref<32x128xf32, #tpu.memory_space<vmem>>, vector<22x128xf32>
    %317 = arith.truncf %316 : vector<22x128xf32> to vector<22x128xbf16>
    %c0_269 = arith.constant 0 : index
    %c0_270 = arith.constant 0 : index
    %318 = vector.load %arg7[%c0_269, %c0_270] : memref<1152x256xbf16, #tpu.memory_space<vmem>>, vector<128x256xbf16>
    %cst_271 = arith.constant dense<0.000000e+00> : vector<22x256xf32>
    %319 = tpu.matmul %317, %318, %cst_271 {dimension_numbers = #tpu.dot_dimension_numbers<[1], [0], [0], [1], [0, 0, 1, 1], [], []>} : vector<22x128xbf16>, vector<128x256xbf16>, vector<22x256xf32> -> vector<22x256xf32>
    %c1_272 = arith.constant 1 : index
    %c0_273 = arith.constant 0 : index
    %320 = vector.load %arg16[%c1_272, %c0_273] : memref<32x128xf32, #tpu.memory_space<vmem>>, vector<22x128xf32>
    %321 = arith.truncf %320 : vector<22x128xf32> to vector<22x128xbf16>
    %c128_274 = arith.constant 128 : index
    %c0_275 = arith.constant 0 : index
    %322 = vector.load %arg7[%c128_274, %c0_275] : memref<1152x256xbf16, #tpu.memory_space<vmem>>, vector<128x256xbf16>
    %cst_276 = arith.constant dense<0.000000e+00> : vector<22x256xf32>
    %323 = tpu.matmul %321, %322, %cst_276 {dimension_numbers = #tpu.dot_dimension_numbers<[1], [0], [0], [1], [0, 0, 1, 1], [], []>} : vector<22x128xbf16>, vector<128x256xbf16>, vector<22x256xf32> -> vector<22x256xf32>
    %324 = arith.addf %319, %323 : vector<22x256xf32>
    %c2_277 = arith.constant 2 : index
    %c0_278 = arith.constant 0 : index
    %325 = vector.load %arg16[%c2_277, %c0_278] : memref<32x128xf32, #tpu.memory_space<vmem>>, vector<22x128xf32>
    %326 = arith.truncf %325 : vector<22x128xf32> to vector<22x128xbf16>
    %c256_279 = arith.constant 256 : index
    %c0_280 = arith.constant 0 : index
    %327 = vector.load %arg7[%c256_279, %c0_280] : memref<1152x256xbf16, #tpu.memory_space<vmem>>, vector<128x256xbf16>
    %cst_281 = arith.constant dense<0.000000e+00> : vector<22x256xf32>
    %328 = tpu.matmul %326, %327, %cst_281 {dimension_numbers = #tpu.dot_dimension_numbers<[1], [0], [0], [1], [0, 0, 1, 1], [], []>} : vector<22x128xbf16>, vector<128x256xbf16>, vector<22x256xf32> -> vector<22x256xf32>
    %329 = arith.addf %324, %328 : vector<22x256xf32>
    %c4_282 = arith.constant 4 : index
    %c0_283 = arith.constant 0 : index
    %330 = vector.load %arg16[%c4_282, %c0_283] : memref<32x128xf32, #tpu.memory_space<vmem>>, vector<22x128xf32>
    %331 = arith.truncf %330 : vector<22x128xf32> to vector<22x128xbf16>
    %c384_284 = arith.constant 384 : index
    %c0_285 = arith.constant 0 : index
    %332 = vector.load %arg7[%c384_284, %c0_285] : memref<1152x256xbf16, #tpu.memory_space<vmem>>, vector<128x256xbf16>
    %cst_286 = arith.constant dense<0.000000e+00> : vector<22x256xf32>
    %333 = tpu.matmul %331, %332, %cst_286 {dimension_numbers = #tpu.dot_dimension_numbers<[1], [0], [0], [1], [0, 0, 1, 1], [], []>} : vector<22x128xbf16>, vector<128x256xbf16>, vector<22x256xf32> -> vector<22x256xf32>
    %334 = arith.addf %329, %333 : vector<22x256xf32>
    %c5_287 = arith.constant 5 : index
    %c0_288 = arith.constant 0 : index
    %335 = vector.load %arg16[%c5_287, %c0_288] : memref<32x128xf32, #tpu.memory_space<vmem>>, vector<22x128xf32>
    %336 = arith.truncf %335 : vector<22x128xf32> to vector<22x128xbf16>
    %c512_289 = arith.constant 512 : index
    %c0_290 = arith.constant 0 : index
    %337 = vector.load %arg7[%c512_289, %c0_290] : memref<1152x256xbf16, #tpu.memory_space<vmem>>, vector<128x256xbf16>
    %cst_291 = arith.constant dense<0.000000e+00> : vector<22x256xf32>
    %338 = tpu.matmul %336, %337, %cst_291 {dimension_numbers = #tpu.dot_dimension_numbers<[1], [0], [0], [1], [0, 0, 1, 1], [], []>} : vector<22x128xbf16>, vector<128x256xbf16>, vector<22x256xf32> -> vector<22x256xf32>
    %339 = arith.addf %334, %338 : vector<22x256xf32>
    %c6_292 = arith.constant 6 : index
    %c0_293 = arith.constant 0 : index
    %340 = vector.load %arg16[%c6_292, %c0_293] : memref<32x128xf32, #tpu.memory_space<vmem>>, vector<22x128xf32>
    %341 = arith.truncf %340 : vector<22x128xf32> to vector<22x128xbf16>
    %c640_294 = arith.constant 640 : index
    %c0_295 = arith.constant 0 : index
    %342 = vector.load %arg7[%c640_294, %c0_295] : memref<1152x256xbf16, #tpu.memory_space<vmem>>, vector<128x256xbf16>
    %cst_296 = arith.constant dense<0.000000e+00> : vector<22x256xf32>
    %343 = tpu.matmul %341, %342, %cst_296 {dimension_numbers = #tpu.dot_dimension_numbers<[1], [0], [0], [1], [0, 0, 1, 1], [], []>} : vector<22x128xbf16>, vector<128x256xbf16>, vector<22x256xf32> -> vector<22x256xf32>
    %344 = arith.addf %339, %343 : vector<22x256xf32>
    %c8_297 = arith.constant 8 : index
    %c0_298 = arith.constant 0 : index
    %345 = vector.load %arg16[%c8_297, %c0_298] : memref<32x128xf32, #tpu.memory_space<vmem>>, vector<22x128xf32>
    %346 = arith.truncf %345 : vector<22x128xf32> to vector<22x128xbf16>
    %c768_299 = arith.constant 768 : index
    %c0_300 = arith.constant 0 : index
    %347 = vector.load %arg7[%c768_299, %c0_300] : memref<1152x256xbf16, #tpu.memory_space<vmem>>, vector<128x256xbf16>
    %cst_301 = arith.constant dense<0.000000e+00> : vector<22x256xf32>
    %348 = tpu.matmul %346, %347, %cst_301 {dimension_numbers = #tpu.dot_dimension_numbers<[1], [0], [0], [1], [0, 0, 1, 1], [], []>} : vector<22x128xbf16>, vector<128x256xbf16>, vector<22x256xf32> -> vector<22x256xf32>
    %349 = arith.addf %344, %348 : vector<22x256xf32>
    %c9_302 = arith.constant 9 : index
    %c0_303 = arith.constant 0 : index
    %350 = vector.load %arg16[%c9_302, %c0_303] : memref<32x128xf32, #tpu.memory_space<vmem>>, vector<22x128xf32>
    %351 = arith.truncf %350 : vector<22x128xf32> to vector<22x128xbf16>
    %c896_304 = arith.constant 896 : index
    %c0_305 = arith.constant 0 : index
    %352 = vector.load %arg7[%c896_304, %c0_305] : memref<1152x256xbf16, #tpu.memory_space<vmem>>, vector<128x256xbf16>
    %cst_306 = arith.constant dense<0.000000e+00> : vector<22x256xf32>
    %353 = tpu.matmul %351, %352, %cst_306 {dimension_numbers = #tpu.dot_dimension_numbers<[1], [0], [0], [1], [0, 0, 1, 1], [], []>} : vector<22x128xbf16>, vector<128x256xbf16>, vector<22x256xf32> -> vector<22x256xf32>
    %354 = arith.addf %349, %353 : vector<22x256xf32>
    %c10_307 = arith.constant 10 : index
    %c0_308 = arith.constant 0 : index
    %355 = vector.load %arg16[%c10_307, %c0_308] : memref<32x128xf32, #tpu.memory_space<vmem>>, vector<22x128xf32>
    %356 = arith.truncf %355 : vector<22x128xf32> to vector<22x128xbf16>
    %c1024_309 = arith.constant 1024 : index
    %c0_310 = arith.constant 0 : index
    %357 = vector.load %arg7[%c1024_309, %c0_310] : memref<1152x256xbf16, #tpu.memory_space<vmem>>, vector<128x256xbf16>
    %cst_311 = arith.constant dense<0.000000e+00> : vector<22x256xf32>
    %358 = tpu.matmul %356, %357, %cst_311 {dimension_numbers = #tpu.dot_dimension_numbers<[1], [0], [0], [1], [0, 0, 1, 1], [], []>} : vector<22x128xbf16>, vector<128x256xbf16>, vector<22x256xf32> -> vector<22x256xf32>
    %359 = arith.addf %354, %358 : vector<22x256xf32>
    %c5_312 = arith.constant 5 : index
    %c0_313 = arith.constant 0 : index
    %360 = vector.load %arg15[%c5_312, %c0_313] : memref<32x256xf32, #tpu.memory_space<vmem>>, vector<22x256xf32>
    %361 = arith.addf %360, %359 : vector<22x256xf32>
    %c0_314 = arith.constant 0 : index
    %c768_315 = arith.constant 768 : index
    %362 = vector.load %arg11[%c0_314, %c768_315] : memref<1x1536xf32, #tpu.memory_space<vmem>>, vector<1x256xf32>
    %363 = vector.broadcast %362 : vector<1x256xf32> to vector<22x256xf32>
    %364 = arith.addf %361, %363 : vector<22x256xf32>
    %cst_316 = arith.constant 0.000000e+00 : f32
    %365 = vector.broadcast %cst_316 : f32 to vector<22x256xf32>
    %366 = arith.maximumf %364, %365 : vector<22x256xf32>
    %367 = vector.extract_strided_slice %366 {offsets = [0, 0], sizes = [2, 256], strides = [1, 1]} : vector<22x256xf32> to vector<2x256xf32>
    %c5_317 = arith.constant 5 : index
    %c0_318 = arith.constant 0 : index
    %368 = vector.load %arg15[%c5_317, %c0_318] : memref<32x256xf32, #tpu.memory_space<vmem>>, vector<2x256xf32>
    tpu.vector_store %arg15[%c5_317, %c0_318], %367 {strides = array<i32>} : memref<32x256xf32, #tpu.memory_space<vmem>>, vector<2x256xf32>,
    %369 = vector.extract_strided_slice %366 {offsets = [4, 0], sizes = [2, 256], strides = [1, 1]} : vector<22x256xf32> to vector<2x256xf32>
    %c9_319 = arith.constant 9 : index
    %c0_320 = arith.constant 0 : index
    %370 = vector.load %arg15[%c9_319, %c0_320] : memref<32x256xf32, #tpu.memory_space<vmem>>, vector<2x256xf32>
    tpu.vector_store %arg15[%c9_319, %c0_320], %369 {strides = array<i32>} : memref<32x256xf32, #tpu.memory_space<vmem>>, vector<2x256xf32>,
    %371 = vector.extract_strided_slice %366 {offsets = [16, 0], sizes = [2, 256], strides = [1, 1]} : vector<22x256xf32> to vector<2x256xf32>
    %c21_321 = arith.constant 21 : index
    %c0_322 = arith.constant 0 : index
    %372 = vector.load %arg15[%c21_321, %c0_322] : memref<32x256xf32, #tpu.memory_space<vmem>>, vector<2x256xf32>
    tpu.vector_store %arg15[%c21_321, %c0_322], %371 {strides = array<i32>} : memref<32x256xf32, #tpu.memory_space<vmem>>, vector<2x256xf32>,
    %373 = vector.extract_strided_slice %366 {offsets = [20, 0], sizes = [2, 256], strides = [1, 1]} : vector<22x256xf32> to vector<2x256xf32>
    %c25_323 = arith.constant 25 : index
    %c0_324 = arith.constant 0 : index
    %374 = vector.load %arg15[%c25_323, %c0_324] : memref<32x256xf32, #tpu.memory_space<vmem>>, vector<2x256xf32>
    tpu.vector_store %arg15[%c25_323, %c0_324], %373 {strides = array<i32>} : memref<32x256xf32, #tpu.memory_space<vmem>>, vector<2x256xf32>,
    %c0_325 = arith.constant 0 : index
    %c0_326 = arith.constant 0 : index
    %375 = vector.load %arg15[%c0_325, %c0_326] : memref<32x256xf32, #tpu.memory_space<vmem>>, vector<22x256xf32>
    %376 = arith.truncf %375 : vector<22x256xf32> to vector<22x256xbf16>
    %c0_327 = arith.constant 0 : index
    %c0_328 = arith.constant 0 : index
    %377 = vector.load %arg8[%c0_327, %c0_328] : memref<2304x128xbf16, #tpu.memory_space<vmem>>, vector<256x128xbf16>
    %cst_329 = arith.constant dense<0.000000e+00> : vector<22x128xf32>
    %378 = tpu.matmul %376, %377, %cst_329 {dimension_numbers = #tpu.dot_dimension_numbers<[1], [0], [0], [1], [0, 0, 1, 1], [], []>} : vector<22x256xbf16>, vector<256x128xbf16>, vector<22x128xf32> -> vector<22x128xf32>
    %c1_330 = arith.constant 1 : index
    %c0_331 = arith.constant 0 : index
    %379 = vector.load %arg15[%c1_330, %c0_331] : memref<32x256xf32, #tpu.memory_space<vmem>>, vector<22x256xf32>
    %380 = arith.truncf %379 : vector<22x256xf32> to vector<22x256xbf16>
    %c256_332 = arith.constant 256 : index
    %c0_333 = arith.constant 0 : index
    %381 = vector.load %arg8[%c256_332, %c0_333] : memref<2304x128xbf16, #tpu.memory_space<vmem>>, vector<256x128xbf16>
    %cst_334 = arith.constant dense<0.000000e+00> : vector<22x128xf32>
    %382 = tpu.matmul %380, %381, %cst_334 {dimension_numbers = #tpu.dot_dimension_numbers<[1], [0], [0], [1], [0, 0, 1, 1], [], []>} : vector<22x256xbf16>, vector<256x128xbf16>, vector<22x128xf32> -> vector<22x128xf32>
    %383 = arith.addf %378, %382 : vector<22x128xf32>
    %c2_335 = arith.constant 2 : index
    %c0_336 = arith.constant 0 : index
    %384 = vector.load %arg15[%c2_335, %c0_336] : memref<32x256xf32, #tpu.memory_space<vmem>>, vector<22x256xf32>
    %385 = arith.truncf %384 : vector<22x256xf32> to vector<22x256xbf16>
    %c512_337 = arith.constant 512 : index
    %c0_338 = arith.constant 0 : index
    %386 = vector.load %arg8[%c512_337, %c0_338] : memref<2304x128xbf16, #tpu.memory_space<vmem>>, vector<256x128xbf16>
    %cst_339 = arith.constant dense<0.000000e+00> : vector<22x128xf32>
    %387 = tpu.matmul %385, %386, %cst_339 {dimension_numbers = #tpu.dot_dimension_numbers<[1], [0], [0], [1], [0, 0, 1, 1], [], []>} : vector<22x256xbf16>, vector<256x128xbf16>, vector<22x128xf32> -> vector<22x128xf32>
    %388 = arith.addf %383, %387 : vector<22x128xf32>
    %c4_340 = arith.constant 4 : index
    %c0_341 = arith.constant 0 : index
    %389 = vector.load %arg15[%c4_340, %c0_341] : memref<32x256xf32, #tpu.memory_space<vmem>>, vector<22x256xf32>
    %390 = arith.truncf %389 : vector<22x256xf32> to vector<22x256xbf16>
    %c768_342 = arith.constant 768 : index
    %c0_343 = arith.constant 0 : index
    %391 = vector.load %arg8[%c768_342, %c0_343] : memref<2304x128xbf16, #tpu.memory_space<vmem>>, vector<256x128xbf16>
    %cst_344 = arith.constant dense<0.000000e+00> : vector<22x128xf32>
    %392 = tpu.matmul %390, %391, %cst_344 {dimension_numbers = #tpu.dot_dimension_numbers<[1], [0], [0], [1], [0, 0, 1, 1], [], []>} : vector<22x256xbf16>, vector<256x128xbf16>, vector<22x128xf32> -> vector<22x128xf32>
    %393 = arith.addf %388, %392 : vector<22x128xf32>
    %c5_345 = arith.constant 5 : index
    %c0_346 = arith.constant 0 : index
    %394 = vector.load %arg15[%c5_345, %c0_346] : memref<32x256xf32, #tpu.memory_space<vmem>>, vector<22x256xf32>
    %395 = arith.truncf %394 : vector<22x256xf32> to vector<22x256xbf16>
    %c1024_347 = arith.constant 1024 : index
    %c0_348 = arith.constant 0 : index
    %396 = vector.load %arg8[%c1024_347, %c0_348] : memref<2304x128xbf16, #tpu.memory_space<vmem>>, vector<256x128xbf16>
    %cst_349 = arith.constant dense<0.000000e+00> : vector<22x128xf32>
    %397 = tpu.matmul %395, %396, %cst_349 {dimension_numbers = #tpu.dot_dimension_numbers<[1], [0], [0], [1], [0, 0, 1, 1], [], []>} : vector<22x256xbf16>, vector<256x128xbf16>, vector<22x128xf32> -> vector<22x128xf32>
    %398 = arith.addf %393, %397 : vector<22x128xf32>
    %c6_350 = arith.constant 6 : index
    %c0_351 = arith.constant 0 : index
    %399 = vector.load %arg15[%c6_350, %c0_351] : memref<32x256xf32, #tpu.memory_space<vmem>>, vector<22x256xf32>
    %400 = arith.truncf %399 : vector<22x256xf32> to vector<22x256xbf16>
    %c1280_352 = arith.constant 1280 : index
    %c0_353 = arith.constant 0 : index
    %401 = vector.load %arg8[%c1280_352, %c0_353] : memref<2304x128xbf16, #tpu.memory_space<vmem>>, vector<256x128xbf16>
    %cst_354 = arith.constant dense<0.000000e+00> : vector<22x128xf32>
    %402 = tpu.matmul %400, %401, %cst_354 {dimension_numbers = #tpu.dot_dimension_numbers<[1], [0], [0], [1], [0, 0, 1, 1], [], []>} : vector<22x256xbf16>, vector<256x128xbf16>, vector<22x128xf32> -> vector<22x128xf32>
    %403 = arith.addf %398, %402 : vector<22x128xf32>
    %c8_355 = arith.constant 8 : index
    %c0_356 = arith.constant 0 : index
    %404 = vector.load %arg15[%c8_355, %c0_356] : memref<32x256xf32, #tpu.memory_space<vmem>>, vector<22x256xf32>
    %405 = arith.truncf %404 : vector<22x256xf32> to vector<22x256xbf16>
    %c1536_357 = arith.constant 1536 : index
    %c0_358 = arith.constant 0 : index
    %406 = vector.load %arg8[%c1536_357, %c0_358] : memref<2304x128xbf16, #tpu.memory_space<vmem>>, vector<256x128xbf16>
    %cst_359 = arith.constant dense<0.000000e+00> : vector<22x128xf32>
    %407 = tpu.matmul %405, %406, %cst_359 {dimension_numbers = #tpu.dot_dimension_numbers<[1], [0], [0], [1], [0, 0, 1, 1], [], []>} : vector<22x256xbf16>, vector<256x128xbf16>, vector<22x128xf32> -> vector<22x128xf32>
    %408 = arith.addf %403, %407 : vector<22x128xf32>
    %c9_360 = arith.constant 9 : index
    %c0_361 = arith.constant 0 : index
    %409 = vector.load %arg15[%c9_360, %c0_361] : memref<32x256xf32, #tpu.memory_space<vmem>>, vector<22x256xf32>
    %410 = arith.truncf %409 : vector<22x256xf32> to vector<22x256xbf16>
    %c1792_362 = arith.constant 1792 : index
    %c0_363 = arith.constant 0 : index
    %411 = vector.load %arg8[%c1792_362, %c0_363] : memref<2304x128xbf16, #tpu.memory_space<vmem>>, vector<256x128xbf16>
    %cst_364 = arith.constant dense<0.000000e+00> : vector<22x128xf32>
    %412 = tpu.matmul %410, %411, %cst_364 {dimension_numbers = #tpu.dot_dimension_numbers<[1], [0], [0], [1], [0, 0, 1, 1], [], []>} : vector<22x256xbf16>, vector<256x128xbf16>, vector<22x128xf32> -> vector<22x128xf32>
    %413 = arith.addf %408, %412 : vector<22x128xf32>
    %c10_365 = arith.constant 10 : index
    %c0_366 = arith.constant 0 : index
    %414 = vector.load %arg15[%c10_365, %c0_366] : memref<32x256xf32, #tpu.memory_space<vmem>>, vector<22x256xf32>
    %415 = arith.truncf %414 : vector<22x256xf32> to vector<22x256xbf16>
    %c2048_367 = arith.constant 2048 : index
    %c0_368 = arith.constant 0 : index
    %416 = vector.load %arg8[%c2048_367, %c0_368] : memref<2304x128xbf16, #tpu.memory_space<vmem>>, vector<256x128xbf16>
    %cst_369 = arith.constant dense<0.000000e+00> : vector<22x128xf32>
    %417 = tpu.matmul %415, %416, %cst_369 {dimension_numbers = #tpu.dot_dimension_numbers<[1], [0], [0], [1], [0, 0, 1, 1], [], []>} : vector<22x256xbf16>, vector<256x128xbf16>, vector<22x128xf32> -> vector<22x128xf32>
    %418 = arith.addf %413, %417 : vector<22x128xf32>
    %c0_370 = arith.constant 0 : index
    %c1024_371 = arith.constant 1024 : index
    %419 = vector.load %arg11[%c0_370, %c1024_371] : memref<1x1536xf32, #tpu.memory_space<vmem>>, vector<1x128xf32>
    %420 = vector.broadcast %419 : vector<1x128xf32> to vector<22x128xf32>
    %421 = arith.addf %418, %420 : vector<22x128xf32>
    %cst_372 = arith.constant 0.000000e+00 : f32
    %422 = vector.broadcast %cst_372 : f32 to vector<22x128xf32>
    %423 = arith.maximumf %421, %422 : vector<22x128xf32>
    %424 = vector.extract_strided_slice %423 {offsets = [0, 0], sizes = [2, 128], strides = [1, 1]} : vector<22x128xf32> to vector<2x128xf32>
    %c5_373 = arith.constant 5 : index
    %c0_374 = arith.constant 0 : index
    %425 = vector.load %arg16[%c5_373, %c0_374] : memref<32x128xf32, #tpu.memory_space<vmem>>, vector<2x128xf32>
    tpu.vector_store %arg16[%c5_373, %c0_374], %424 {strides = array<i32>} : memref<32x128xf32, #tpu.memory_space<vmem>>, vector<2x128xf32>,
    %426 = vector.extract_strided_slice %423 {offsets = [4, 0], sizes = [2, 128], strides = [1, 1]} : vector<22x128xf32> to vector<2x128xf32>
    %c9_375 = arith.constant 9 : index
    %c0_376 = arith.constant 0 : index
    %427 = vector.load %arg16[%c9_375, %c0_376] : memref<32x128xf32, #tpu.memory_space<vmem>>, vector<2x128xf32>
    tpu.vector_store %arg16[%c9_375, %c0_376], %426 {strides = array<i32>} : memref<32x128xf32, #tpu.memory_space<vmem>>, vector<2x128xf32>,
    %428 = vector.extract_strided_slice %423 {offsets = [16, 0], sizes = [2, 128], strides = [1, 1]} : vector<22x128xf32> to vector<2x128xf32>
    %c21_377 = arith.constant 21 : index
    %c0_378 = arith.constant 0 : index
    %429 = vector.load %arg16[%c21_377, %c0_378] : memref<32x128xf32, #tpu.memory_space<vmem>>, vector<2x128xf32>
    tpu.vector_store %arg16[%c21_377, %c0_378], %428 {strides = array<i32>} : memref<32x128xf32, #tpu.memory_space<vmem>>, vector<2x128xf32>,
    %430 = vector.extract_strided_slice %423 {offsets = [20, 0], sizes = [2, 128], strides = [1, 1]} : vector<22x128xf32> to vector<2x128xf32>
    %c25_379 = arith.constant 25 : index
    %c0_380 = arith.constant 0 : index
    %431 = vector.load %arg16[%c25_379, %c0_380] : memref<32x128xf32, #tpu.memory_space<vmem>>, vector<2x128xf32>
    tpu.vector_store %arg16[%c25_379, %c0_380], %430 {strides = array<i32>} : memref<32x128xf32, #tpu.memory_space<vmem>>, vector<2x128xf32>,
    %c0_381 = arith.constant 0 : index
    %c0_382 = arith.constant 0 : index
    %432 = vector.load %arg16[%c0_381, %c0_382] : memref<32x128xf32, #tpu.memory_space<vmem>>, vector<22x128xf32>
    %433 = arith.truncf %432 : vector<22x128xf32> to vector<22x128xbf16>
    %c0_383 = arith.constant 0 : index
    %c0_384 = arith.constant 0 : index
    %434 = vector.load %arg9[%c0_383, %c0_384] : memref<1152x256xbf16, #tpu.memory_space<vmem>>, vector<128x256xbf16>
    %cst_385 = arith.constant dense<0.000000e+00> : vector<22x256xf32>
    %435 = tpu.matmul %433, %434, %cst_385 {dimension_numbers = #tpu.dot_dimension_numbers<[1], [0], [0], [1], [0, 0, 1, 1], [], []>} : vector<22x128xbf16>, vector<128x256xbf16>, vector<22x256xf32> -> vector<22x256xf32>
    %c1_386 = arith.constant 1 : index
    %c0_387 = arith.constant 0 : index
    %436 = vector.load %arg16[%c1_386, %c0_387] : memref<32x128xf32, #tpu.memory_space<vmem>>, vector<22x128xf32>
    %437 = arith.truncf %436 : vector<22x128xf32> to vector<22x128xbf16>
    %c128_388 = arith.constant 128 : index
    %c0_389 = arith.constant 0 : index
    %438 = vector.load %arg9[%c128_388, %c0_389] : memref<1152x256xbf16, #tpu.memory_space<vmem>>, vector<128x256xbf16>
    %cst_390 = arith.constant dense<0.000000e+00> : vector<22x256xf32>
    %439 = tpu.matmul %437, %438, %cst_390 {dimension_numbers = #tpu.dot_dimension_numbers<[1], [0], [0], [1], [0, 0, 1, 1], [], []>} : vector<22x128xbf16>, vector<128x256xbf16>, vector<22x256xf32> -> vector<22x256xf32>
    %440 = arith.addf %435, %439 : vector<22x256xf32>
    %c2_391 = arith.constant 2 : index
    %c0_392 = arith.constant 0 : index
    %441 = vector.load %arg16[%c2_391, %c0_392] : memref<32x128xf32, #tpu.memory_space<vmem>>, vector<22x128xf32>
    %442 = arith.truncf %441 : vector<22x128xf32> to vector<22x128xbf16>
    %c256_393 = arith.constant 256 : index
    %c0_394 = arith.constant 0 : index
    %443 = vector.load %arg9[%c256_393, %c0_394] : memref<1152x256xbf16, #tpu.memory_space<vmem>>, vector<128x256xbf16>
    %cst_395 = arith.constant dense<0.000000e+00> : vector<22x256xf32>
    %444 = tpu.matmul %442, %443, %cst_395 {dimension_numbers = #tpu.dot_dimension_numbers<[1], [0], [0], [1], [0, 0, 1, 1], [], []>} : vector<22x128xbf16>, vector<128x256xbf16>, vector<22x256xf32> -> vector<22x256xf32>
    %445 = arith.addf %440, %444 : vector<22x256xf32>
    %c4_396 = arith.constant 4 : index
    %c0_397 = arith.constant 0 : index
    %446 = vector.load %arg16[%c4_396, %c0_397] : memref<32x128xf32, #tpu.memory_space<vmem>>, vector<22x128xf32>
    %447 = arith.truncf %446 : vector<22x128xf32> to vector<22x128xbf16>
    %c384_398 = arith.constant 384 : index
    %c0_399 = arith.constant 0 : index
    %448 = vector.load %arg9[%c384_398, %c0_399] : memref<1152x256xbf16, #tpu.memory_space<vmem>>, vector<128x256xbf16>
    %cst_400 = arith.constant dense<0.000000e+00> : vector<22x256xf32>
    %449 = tpu.matmul %447, %448, %cst_400 {dimension_numbers = #tpu.dot_dimension_numbers<[1], [0], [0], [1], [0, 0, 1, 1], [], []>} : vector<22x128xbf16>, vector<128x256xbf16>, vector<22x256xf32> -> vector<22x256xf32>
    %450 = arith.addf %445, %449 : vector<22x256xf32>
    %c5_401 = arith.constant 5 : index
    %c0_402 = arith.constant 0 : index
    %451 = vector.load %arg16[%c5_401, %c0_402] : memref<32x128xf32, #tpu.memory_space<vmem>>, vector<22x128xf32>
    %452 = arith.truncf %451 : vector<22x128xf32> to vector<22x128xbf16>
    %c512_403 = arith.constant 512 : index
    %c0_404 = arith.constant 0 : index
    %453 = vector.load %arg9[%c512_403, %c0_404] : memref<1152x256xbf16, #tpu.memory_space<vmem>>, vector<128x256xbf16>
    %cst_405 = arith.constant dense<0.000000e+00> : vector<22x256xf32>
    %454 = tpu.matmul %452, %453, %cst_405 {dimension_numbers = #tpu.dot_dimension_numbers<[1], [0], [0], [1], [0, 0, 1, 1], [], []>} : vector<22x128xbf16>, vector<128x256xbf16>, vector<22x256xf32> -> vector<22x256xf32>
    %455 = arith.addf %450, %454 : vector<22x256xf32>
    %c6_406 = arith.constant 6 : index
    %c0_407 = arith.constant 0 : index
    %456 = vector.load %arg16[%c6_406, %c0_407] : memref<32x128xf32, #tpu.memory_space<vmem>>, vector<22x128xf32>
    %457 = arith.truncf %456 : vector<22x128xf32> to vector<22x128xbf16>
    %c640_408 = arith.constant 640 : index
    %c0_409 = arith.constant 0 : index
    %458 = vector.load %arg9[%c640_408, %c0_409] : memref<1152x256xbf16, #tpu.memory_space<vmem>>, vector<128x256xbf16>
    %cst_410 = arith.constant dense<0.000000e+00> : vector<22x256xf32>
    %459 = tpu.matmul %457, %458, %cst_410 {dimension_numbers = #tpu.dot_dimension_numbers<[1], [0], [0], [1], [0, 0, 1, 1], [], []>} : vector<22x128xbf16>, vector<128x256xbf16>, vector<22x256xf32> -> vector<22x256xf32>
    %460 = arith.addf %455, %459 : vector<22x256xf32>
    %c8_411 = arith.constant 8 : index
    %c0_412 = arith.constant 0 : index
    %461 = vector.load %arg16[%c8_411, %c0_412] : memref<32x128xf32, #tpu.memory_space<vmem>>, vector<22x128xf32>
    %462 = arith.truncf %461 : vector<22x128xf32> to vector<22x128xbf16>
    %c768_413 = arith.constant 768 : index
    %c0_414 = arith.constant 0 : index
    %463 = vector.load %arg9[%c768_413, %c0_414] : memref<1152x256xbf16, #tpu.memory_space<vmem>>, vector<128x256xbf16>
    %cst_415 = arith.constant dense<0.000000e+00> : vector<22x256xf32>
    %464 = tpu.matmul %462, %463, %cst_415 {dimension_numbers = #tpu.dot_dimension_numbers<[1], [0], [0], [1], [0, 0, 1, 1], [], []>} : vector<22x128xbf16>, vector<128x256xbf16>, vector<22x256xf32> -> vector<22x256xf32>
    %465 = arith.addf %460, %464 : vector<22x256xf32>
    %c9_416 = arith.constant 9 : index
    %c0_417 = arith.constant 0 : index
    %466 = vector.load %arg16[%c9_416, %c0_417] : memref<32x128xf32, #tpu.memory_space<vmem>>, vector<22x128xf32>
    %467 = arith.truncf %466 : vector<22x128xf32> to vector<22x128xbf16>
    %c896_418 = arith.constant 896 : index
    %c0_419 = arith.constant 0 : index
    %468 = vector.load %arg9[%c896_418, %c0_419] : memref<1152x256xbf16, #tpu.memory_space<vmem>>, vector<128x256xbf16>
    %cst_420 = arith.constant dense<0.000000e+00> : vector<22x256xf32>
    %469 = tpu.matmul %467, %468, %cst_420 {dimension_numbers = #tpu.dot_dimension_numbers<[1], [0], [0], [1], [0, 0, 1, 1], [], []>} : vector<22x128xbf16>, vector<128x256xbf16>, vector<22x256xf32> -> vector<22x256xf32>
    %470 = arith.addf %465, %469 : vector<22x256xf32>
    %c10_421 = arith.constant 10 : index
    %c0_422 = arith.constant 0 : index
    %471 = vector.load %arg16[%c10_421, %c0_422] : memref<32x128xf32, #tpu.memory_space<vmem>>, vector<22x128xf32>
    %472 = arith.truncf %471 : vector<22x128xf32> to vector<22x128xbf16>
    %c1024_423 = arith.constant 1024 : index
    %c0_424 = arith.constant 0 : index
    %473 = vector.load %arg9[%c1024_423, %c0_424] : memref<1152x256xbf16, #tpu.memory_space<vmem>>, vector<128x256xbf16>
    %cst_425 = arith.constant dense<0.000000e+00> : vector<22x256xf32>
    %474 = tpu.matmul %472, %473, %cst_425 {dimension_numbers = #tpu.dot_dimension_numbers<[1], [0], [0], [1], [0, 0, 1, 1], [], []>} : vector<22x128xbf16>, vector<128x256xbf16>, vector<22x256xf32> -> vector<22x256xf32>
    %475 = arith.addf %470, %474 : vector<22x256xf32>
    %c5_426 = arith.constant 5 : index
    %c0_427 = arith.constant 0 : index
    %476 = vector.load %arg15[%c5_426, %c0_427] : memref<32x256xf32, #tpu.memory_space<vmem>>, vector<22x256xf32>
    %477 = arith.addf %476, %475 : vector<22x256xf32>
    %c0_428 = arith.constant 0 : index
    %c1152_429 = arith.constant 1152 : index
    %478 = vector.load %arg11[%c0_428, %c1152_429] : memref<1x1536xf32, #tpu.memory_space<vmem>>, vector<1x256xf32>
    %479 = vector.broadcast %478 : vector<1x256xf32> to vector<22x256xf32>
    %480 = arith.addf %477, %479 : vector<22x256xf32>
    %cst_430 = arith.constant 0.000000e+00 : f32
    %481 = vector.broadcast %cst_430 : f32 to vector<22x256xf32>
    %482 = arith.maximumf %480, %481 : vector<22x256xf32>
    %483 = vector.extract_strided_slice %482 {offsets = [0, 0], sizes = [2, 256], strides = [1, 1]} : vector<22x256xf32> to vector<2x256xf32>
    %c5_431 = arith.constant 5 : index
    %c0_432 = arith.constant 0 : index
    %484 = vector.load %arg15[%c5_431, %c0_432] : memref<32x256xf32, #tpu.memory_space<vmem>>, vector<2x256xf32>
    tpu.vector_store %arg15[%c5_431, %c0_432], %483 {strides = array<i32>} : memref<32x256xf32, #tpu.memory_space<vmem>>, vector<2x256xf32>,
    %485 = vector.extract_strided_slice %482 {offsets = [4, 0], sizes = [2, 256], strides = [1, 1]} : vector<22x256xf32> to vector<2x256xf32>
    %c9_433 = arith.constant 9 : index
    %c0_434 = arith.constant 0 : index
    %486 = vector.load %arg15[%c9_433, %c0_434] : memref<32x256xf32, #tpu.memory_space<vmem>>, vector<2x256xf32>
    tpu.vector_store %arg15[%c9_433, %c0_434], %485 {strides = array<i32>} : memref<32x256xf32, #tpu.memory_space<vmem>>, vector<2x256xf32>,
    %487 = vector.extract_strided_slice %482 {offsets = [16, 0], sizes = [2, 256], strides = [1, 1]} : vector<22x256xf32> to vector<2x256xf32>
    %c21_435 = arith.constant 21 : index
    %c0_436 = arith.constant 0 : index
    %488 = vector.load %arg15[%c21_435, %c0_436] : memref<32x256xf32, #tpu.memory_space<vmem>>, vector<2x256xf32>
    tpu.vector_store %arg15[%c21_435, %c0_436], %487 {strides = array<i32>} : memref<32x256xf32, #tpu.memory_space<vmem>>, vector<2x256xf32>,
    %489 = vector.extract_strided_slice %482 {offsets = [20, 0], sizes = [2, 256], strides = [1, 1]} : vector<22x256xf32> to vector<2x256xf32>
    %c25_437 = arith.constant 25 : index
    %c0_438 = arith.constant 0 : index
    %490 = vector.load %arg15[%c25_437, %c0_438] : memref<32x256xf32, #tpu.memory_space<vmem>>, vector<2x256xf32>
    tpu.vector_store %arg15[%c25_437, %c0_438], %489 {strides = array<i32>} : memref<32x256xf32, #tpu.memory_space<vmem>>, vector<2x256xf32>,
    %c0_439 = arith.constant 0 : index
    %c0_440 = arith.constant 0 : index
    %491 = vector.load %arg15[%c0_439, %c0_440] : memref<32x256xf32, #tpu.memory_space<vmem>>, vector<22x256xf32>
    %492 = arith.truncf %491 : vector<22x256xf32> to vector<22x256xbf16>
    %c0_441 = arith.constant 0 : index
    %c0_442 = arith.constant 0 : index
    %493 = vector.load %arg10[%c0_441, %c0_442] : memref<2304x128xbf16, #tpu.memory_space<vmem>>, vector<256x128xbf16>
    %cst_443 = arith.constant dense<0.000000e+00> : vector<22x128xf32>
    %494 = tpu.matmul %492, %493, %cst_443 {dimension_numbers = #tpu.dot_dimension_numbers<[1], [0], [0], [1], [0, 0, 1, 1], [], []>} : vector<22x256xbf16>, vector<256x128xbf16>, vector<22x128xf32> -> vector<22x128xf32>
    %c1_444 = arith.constant 1 : index
    %c0_445 = arith.constant 0 : index
    %495 = vector.load %arg15[%c1_444, %c0_445] : memref<32x256xf32, #tpu.memory_space<vmem>>, vector<22x256xf32>
    %496 = arith.truncf %495 : vector<22x256xf32> to vector<22x256xbf16>
    %c256_446 = arith.constant 256 : index
    %c0_447 = arith.constant 0 : index
    %497 = vector.load %arg10[%c256_446, %c0_447] : memref<2304x128xbf16, #tpu.memory_space<vmem>>, vector<256x128xbf16>
    %cst_448 = arith.constant dense<0.000000e+00> : vector<22x128xf32>
    %498 = tpu.matmul %496, %497, %cst_448 {dimension_numbers = #tpu.dot_dimension_numbers<[1], [0], [0], [1], [0, 0, 1, 1], [], []>} : vector<22x256xbf16>, vector<256x128xbf16>, vector<22x128xf32> -> vector<22x128xf32>
    %499 = arith.addf %494, %498 : vector<22x128xf32>
    %c2_449 = arith.constant 2 : index
    %c0_450 = arith.constant 0 : index
    %500 = vector.load %arg15[%c2_449, %c0_450] : memref<32x256xf32, #tpu.memory_space<vmem>>, vector<22x256xf32>
    %501 = arith.truncf %500 : vector<22x256xf32> to vector<22x256xbf16>
    %c512_451 = arith.constant 512 : index
    %c0_452 = arith.constant 0 : index
    %502 = vector.load %arg10[%c512_451, %c0_452] : memref<2304x128xbf16, #tpu.memory_space<vmem>>, vector<256x128xbf16>
    %cst_453 = arith.constant dense<0.000000e+00> : vector<22x128xf32>
    %503 = tpu.matmul %501, %502, %cst_453 {dimension_numbers = #tpu.dot_dimension_numbers<[1], [0], [0], [1], [0, 0, 1, 1], [], []>} : vector<22x256xbf16>, vector<256x128xbf16>, vector<22x128xf32> -> vector<22x128xf32>
    %504 = arith.addf %499, %503 : vector<22x128xf32>
    %c4_454 = arith.constant 4 : index
    %c0_455 = arith.constant 0 : index
    %505 = vector.load %arg15[%c4_454, %c0_455] : memref<32x256xf32, #tpu.memory_space<vmem>>, vector<22x256xf32>
    %506 = arith.truncf %505 : vector<22x256xf32> to vector<22x256xbf16>
    %c768_456 = arith.constant 768 : index
    %c0_457 = arith.constant 0 : index
    %507 = vector.load %arg10[%c768_456, %c0_457] : memref<2304x128xbf16, #tpu.memory_space<vmem>>, vector<256x128xbf16>
    %cst_458 = arith.constant dense<0.000000e+00> : vector<22x128xf32>
    %508 = tpu.matmul %506, %507, %cst_458 {dimension_numbers = #tpu.dot_dimension_numbers<[1], [0], [0], [1], [0, 0, 1, 1], [], []>} : vector<22x256xbf16>, vector<256x128xbf16>, vector<22x128xf32> -> vector<22x128xf32>
    %509 = arith.addf %504, %508 : vector<22x128xf32>
    %c5_459 = arith.constant 5 : index
    %c0_460 = arith.constant 0 : index
    %510 = vector.load %arg15[%c5_459, %c0_460] : memref<32x256xf32, #tpu.memory_space<vmem>>, vector<22x256xf32>
    %511 = arith.truncf %510 : vector<22x256xf32> to vector<22x256xbf16>
    %c1024_461 = arith.constant 1024 : index
    %c0_462 = arith.constant 0 : index
    %512 = vector.load %arg10[%c1024_461, %c0_462] : memref<2304x128xbf16, #tpu.memory_space<vmem>>, vector<256x128xbf16>
    %cst_463 = arith.constant dense<0.000000e+00> : vector<22x128xf32>
    %513 = tpu.matmul %511, %512, %cst_463 {dimension_numbers = #tpu.dot_dimension_numbers<[1], [0], [0], [1], [0, 0, 1, 1], [], []>} : vector<22x256xbf16>, vector<256x128xbf16>, vector<22x128xf32> -> vector<22x128xf32>
    %514 = arith.addf %509, %513 : vector<22x128xf32>
    %c6_464 = arith.constant 6 : index
    %c0_465 = arith.constant 0 : index
    %515 = vector.load %arg15[%c6_464, %c0_465] : memref<32x256xf32, #tpu.memory_space<vmem>>, vector<22x256xf32>
    %516 = arith.truncf %515 : vector<22x256xf32> to vector<22x256xbf16>
    %c1280_466 = arith.constant 1280 : index
    %c0_467 = arith.constant 0 : index
    %517 = vector.load %arg10[%c1280_466, %c0_467] : memref<2304x128xbf16, #tpu.memory_space<vmem>>, vector<256x128xbf16>
    %cst_468 = arith.constant dense<0.000000e+00> : vector<22x128xf32>
    %518 = tpu.matmul %516, %517, %cst_468 {dimension_numbers = #tpu.dot_dimension_numbers<[1], [0], [0], [1], [0, 0, 1, 1], [], []>} : vector<22x256xbf16>, vector<256x128xbf16>, vector<22x128xf32> -> vector<22x128xf32>
    %519 = arith.addf %514, %518 : vector<22x128xf32>
    %c8_469 = arith.constant 8 : index
    %c0_470 = arith.constant 0 : index
    %520 = vector.load %arg15[%c8_469, %c0_470] : memref<32x256xf32, #tpu.memory_space<vmem>>, vector<22x256xf32>
    %521 = arith.truncf %520 : vector<22x256xf32> to vector<22x256xbf16>
    %c1536_471 = arith.constant 1536 : index
    %c0_472 = arith.constant 0 : index
    %522 = vector.load %arg10[%c1536_471, %c0_472] : memref<2304x128xbf16, #tpu.memory_space<vmem>>, vector<256x128xbf16>
    %cst_473 = arith.constant dense<0.000000e+00> : vector<22x128xf32>
    %523 = tpu.matmul %521, %522, %cst_473 {dimension_numbers = #tpu.dot_dimension_numbers<[1], [0], [0], [1], [0, 0, 1, 1], [], []>} : vector<22x256xbf16>, vector<256x128xbf16>, vector<22x128xf32> -> vector<22x128xf32>
    %524 = arith.addf %519, %523 : vector<22x128xf32>
    %c9_474 = arith.constant 9 : index
    %c0_475 = arith.constant 0 : index
    %525 = vector.load %arg15[%c9_474, %c0_475] : memref<32x256xf32, #tpu.memory_space<vmem>>, vector<22x256xf32>
    %526 = arith.truncf %525 : vector<22x256xf32> to vector<22x256xbf16>
    %c1792_476 = arith.constant 1792 : index
    %c0_477 = arith.constant 0 : index
    %527 = vector.load %arg10[%c1792_476, %c0_477] : memref<2304x128xbf16, #tpu.memory_space<vmem>>, vector<256x128xbf16>
    %cst_478 = arith.constant dense<0.000000e+00> : vector<22x128xf32>
    %528 = tpu.matmul %526, %527, %cst_478 {dimension_numbers = #tpu.dot_dimension_numbers<[1], [0], [0], [1], [0, 0, 1, 1], [], []>} : vector<22x256xbf16>, vector<256x128xbf16>, vector<22x128xf32> -> vector<22x128xf32>
    %529 = arith.addf %524, %528 : vector<22x128xf32>
    %c10_479 = arith.constant 10 : index
    %c0_480 = arith.constant 0 : index
    %530 = vector.load %arg15[%c10_479, %c0_480] : memref<32x256xf32, #tpu.memory_space<vmem>>, vector<22x256xf32>
    %531 = arith.truncf %530 : vector<22x256xf32> to vector<22x256xbf16>
    %c2048_481 = arith.constant 2048 : index
    %c0_482 = arith.constant 0 : index
    %532 = vector.load %arg10[%c2048_481, %c0_482] : memref<2304x128xbf16, #tpu.memory_space<vmem>>, vector<256x128xbf16>
    %cst_483 = arith.constant dense<0.000000e+00> : vector<22x128xf32>
    %533 = tpu.matmul %531, %532, %cst_483 {dimension_numbers = #tpu.dot_dimension_numbers<[1], [0], [0], [1], [0, 0, 1, 1], [], []>} : vector<22x256xbf16>, vector<256x128xbf16>, vector<22x128xf32> -> vector<22x128xf32>
    %534 = arith.addf %529, %533 : vector<22x128xf32>
    %c0_484 = arith.constant 0 : index
    %c1408_485 = arith.constant 1408 : index
    %535 = vector.load %arg11[%c0_484, %c1408_485] : memref<1x1536xf32, #tpu.memory_space<vmem>>, vector<1x128xf32>
    %536 = vector.broadcast %535 : vector<1x128xf32> to vector<22x128xf32>
    %537 = arith.addf %534, %536 : vector<22x128xf32>
    %cst_486 = arith.constant 0.000000e+00 : f32
    %538 = vector.broadcast %cst_486 : f32 to vector<22x128xf32>
    %539 = arith.cmpf ogt, %537, %538 : vector<22x128xf32>
    %cst_487 = arith.constant 1.000000e+00 : f32
    %cst_488 = arith.constant 0.000000e+00 : f32
    %540 = vector.broadcast %cst_487 : f32 to vector<22x128xf32>
    %541 = vector.broadcast %cst_488 : f32 to vector<22x128xf32>
    %542 = arith.select %539, %540, %541 : vector<22x128xi1>, vector<22x128xf32>
    %543 = arith.truncf %542 : vector<22x128xf32> to vector<22x128xbf16>
    %544 = vector.extract_strided_slice %543 {offsets = [0, 0], sizes = [2, 128], strides = [1, 1]} : vector<22x128xbf16> to vector<2x128xbf16>
    %c0_489 = arith.constant 0 : index
    %c0_490 = arith.constant 0 : index
    %545 = vector.load %arg12[%c0_489, %c0_490] : memref<8x128xbf16, #tpu.memory_space<vmem>>, vector<2x128xbf16>
    tpu.vector_store %arg12[%c0_489, %c0_490], %544 {strides = array<i32>} : memref<8x128xbf16, #tpu.memory_space<vmem>>, vector<2x128xbf16>,
    %546 = vector.extract_strided_slice %543 {offsets = [4, 0], sizes = [2, 128], strides = [1, 1]} : vector<22x128xbf16> to vector<2x128xbf16>
    %c2_491 = arith.constant 2 : index
    %c0_492 = arith.constant 0 : index
    %547 = vector.load %arg12[%c2_491, %c0_492] : memref<8x128xbf16, #tpu.memory_space<vmem>>, vector<2x128xbf16>
    tpu.vector_store %arg12[%c2_491, %c0_492], %546 {strides = array<i32>} : memref<8x128xbf16, #tpu.memory_space<vmem>>, vector<2x128xbf16>,
    %548 = vector.extract_strided_slice %543 {offsets = [16, 0], sizes = [2, 128], strides = [1, 1]} : vector<22x128xbf16> to vector<2x128xbf16>
    %c4_493 = arith.constant 4 : index
    %c0_494 = arith.constant 0 : index
    %549 = vector.load %arg12[%c4_493, %c0_494] : memref<8x128xbf16, #tpu.memory_space<vmem>>, vector<2x128xbf16>
    tpu.vector_store %arg12[%c4_493, %c0_494], %548 {strides = array<i32>} : memref<8x128xbf16, #tpu.memory_space<vmem>>, vector<2x128xbf16>,
    %550 = vector.extract_strided_slice %543 {offsets = [20, 0], sizes = [2, 128], strides = [1, 1]} : vector<22x128xbf16> to vector<2x128xbf16>
    %c6_495 = arith.constant 6 : index
    %c0_496 = arith.constant 0 : index
    %551 = vector.load %arg12[%c6_495, %c0_496] : memref<8x128xbf16, #tpu.memory_space<vmem>>, vector<2x128xbf16>
    tpu.vector_store %arg12[%c6_495, %c0_496], %550 {strides = array<i32>} : memref<8x128xbf16, #tpu.memory_space<vmem>>, vector<2x128xbf16>,
    return
  }
  func.func @transform_0(%arg0: i32) -> (i32, i32) {
    %c0_i32 = arith.constant 0 : i32
    %c0_i32_0 = arith.constant 0 : i32
    return %arg0, %c0_i32 : i32, i32
  }
  func.func @transform_1(%arg0: i32) -> (i32, i32) {
    %c0_i32 = arith.constant 0 : i32
    %c0_i32_0 = arith.constant 0 : i32
    %c0_i32_1 = arith.constant 0 : i32
    return %c0_i32, %c0_i32_0 : i32, i32
  }
  func.func @transform_2(%arg0: i32) -> (i32, i32) {
    %c0_i32 = arith.constant 0 : i32
    %c0_i32_0 = arith.constant 0 : i32
    %c0_i32_1 = arith.constant 0 : i32
    return %c0_i32, %c0_i32_0 : i32, i32
  }
  func.func @transform_3(%arg0: i32) -> (i32, i32) {
    %c0_i32 = arith.constant 0 : i32
    %c0_i32_0 = arith.constant 0 : i32
    %c0_i32_1 = arith.constant 0 : i32
    return %c0_i32, %c0_i32_0 : i32, i32
  }
  func.func @transform_4(%arg0: i32) -> (i32, i32) {
    %c0_i32 = arith.constant 0 : i32
    %c0_i32_0 = arith.constant 0 : i32
    %c0_i32_1 = arith.constant 0 : i32
    return %c0_i32, %c0_i32_0 : i32, i32
  }
  func.func @transform_5(%arg0: i32) -> (i32, i32) {
    %c0_i32 = arith.constant 0 : i32
    %c0_i32_0 = arith.constant 0 : i32
    %c0_i32_1 = arith.constant 0 : i32
    return %c0_i32, %c0_i32_0 : i32, i32
  }
  func.func @transform_6(%arg0: i32) -> (i32, i32) {
    %c0_i32 = arith.constant 0 : i32
    %c0_i32_0 = arith.constant 0 : i32
    %c0_i32_1 = arith.constant 0 : i32
    return %c0_i32, %c0_i32_0 : i32, i32
  }
  func.func @transform_7(%arg0: i32) -> (i32, i32) {
    %c0_i32 = arith.constant 0 : i32
    %c0_i32_0 = arith.constant 0 : i32
    %c0_i32_1 = arith.constant 0 : i32
    return %c0_i32, %c0_i32_0 : i32, i32
  }
  func.func @transform_8(%arg0: i32) -> (i32, i32) {
    %c0_i32 = arith.constant 0 : i32
    %c0_i32_0 = arith.constant 0 : i32
    %c0_i32_1 = arith.constant 0 : i32
    return %c0_i32, %c0_i32_0 : i32, i32
  }
  func.func @transform_9(%arg0: i32) -> (i32, i32) {
    %c0_i32 = arith.constant 0 : i32
    %c0_i32_0 = arith.constant 0 : i32
    %c0_i32_1 = arith.constant 0 : i32
    return %c0_i32, %c0_i32_0 : i32, i32
  }
  func.func @transform_10(%arg0: i32) -> (i32, i32) {
    %c0_i32 = arith.constant 0 : i32
    %c0_i32_0 = arith.constant 0 : i32
    %c0_i32_1 = arith.constant 0 : i32
    return %c0_i32, %c0_i32_0 : i32, i32
  }
  func.func @transform_11(%arg0: i32) -> (i32, i32) {
    %c0_i32 = arith.constant 0 : i32
    %c0_i32_0 = arith.constant 0 : i32
    return %arg0, %c0_i32 : i32, i32
  }
}

</mosaic_0001>

<llo_original>
// kernel: custom-call
$region0: #{custom-call}
  %s0 = inlined_call_operand.vmem [shape: f32[1536], index: 0, kind: output, shape index: {}]

// kernel: encoder_forward.1
$region0: #{encoder_forward.1}
  #allocation0 [shape = 'u32[]', space=smem, size = 0x4, offset = 0x4, fixed_abs, tag = 'smem constant byte address 0x4 - core index']
  #allocation1 [shape = 'u32[72,128]{1,0:T(1,128)}', space=vmem, size = 0x9000, scoped, tag = 'internal scratch']
  #allocation2 [shape = 'f32[72,128]{1,0:T(8,128)}', space=vmem, size = 0x9000, scoped, tag = 'scratch operand']
  #allocation3 [shape = 'f32[72,128]{1,0:T(8,128)}', space=vmem, size = 0x9000, scoped, tag = 'scratch operand']
  #allocation4 [shape = 'f32[32,256]{1,0:T(8,128)}', space=vmem, size = 0x8000, scoped, tag = 'scratch operand']
  #allocation5 [shape = 'f32[32,128]{1,0:T(8,128)}', space=vmem, size = 0x4000, scoped, tag = 'scratch operand']
  %s0 = inlined_call_operand.vmem [shape: bf16[32,256], index: 0, kind: input, shape index: {}]
  %s1 = inlined_call_operand.vmem [shape: bf16[256,128], index: 1, kind: input, shape index: {}]
  %s2 = inlined_call_operand.vmem [shape: bf16[1152,128], index: 2, kind: input, shape index: {}]
  %s3 = inlined_call_operand.vmem [shape: bf16[1152,128], index: 3, kind: input, shape index: {}]
  %s4 = inlined_call_operand.vmem [shape: bf16[2048,256], index: 4, kind: input, shape index: {}]
  %s5 = inlined_call_operand.vmem [shape: bf16[2304,128], index: 5, kind: input, shape index: {}]
  %s6 = inlined_call_operand.vmem [shape: bf16[1152,256], index: 6, kind: input, shape index: {}]
  %s7 = inlined_call_operand.vmem [shape: bf16[2304,128], index: 7, kind: input, shape index: {}]
  %s8 = inlined_call_operand.vmem [shape: bf16[1152,256], index: 8, kind: input, shape index: {}]
  %s9 = inlined_call_operand.vmem [shape: bf16[2304,128], index: 9, kind: input, shape index: {}]
  %s10 = inlined_call_operand.vmem [shape: f32[1,1536], index: 10, kind: input, shape index: {}]
  %s11 = inlined_call_operand.vmem [shape: bf16[8,128], index: 11, kind: output, shape index: {}]
  %s12 = sld [smem:[#allocation0]]
  $region58: #{encoder_forward.1} parent=0
    _
  %s14 = ssub.s32 1, %s12
  %s15 = scalar_select 0, %s14, %s12
  // Predicated region
  $region2: #{encoder_forward.1} parent=0 // pred_check
    _
  $region3: #{encoder_forward.1} parent=0 // pred_check_branch
    %17 = sbr.rel (0) target = $region5
  $region4: #{encoder_forward.1} parent=0 // pred_region
    _
  $region5: #{encoder_forward.1} parent=0 // pred_fallthru
    _
  // Predicated region
  $region6: #{encoder_forward.1} parent=0 // pred_check
    _
  $region7: #{encoder_forward.1} parent=0 // pred_check_branch
    %19 = sbr.rel (0) target = $region9
  $region8: #{encoder_forward.1} parent=0 // pred_region
    _
  $region9: #{encoder_forward.1} parent=0 // pred_fallthru
    _
  // Predicated region
  $region10: #{encoder_forward.1} parent=0 // pred_check
    _
  $region11: #{encoder_forward.1} parent=0 // pred_check_branch
    %21 = sbr.rel (0) target = $region13
  $region12: #{encoder_forward.1} parent=0 // pred_region
    _
  $region13: #{encoder_forward.1} parent=0 // pred_fallthru
    _
  // Predicated region
  $region14: #{encoder_forward.1} parent=0 // pred_check
    _
  $region15: #{encoder_forward.1} parent=0 // pred_check_branch
    %23 = sbr.rel (0) target = $region17
  $region16: #{encoder_forward.1} parent=0 // pred_region
    _
  $region17: #{encoder_forward.1} parent=0 // pred_fallthru
    _
  // Predicated region
  $region18: #{encoder_forward.1} parent=0 // pred_check
    _
  $region19: #{encoder_forward.1} parent=0 // pred_check_branch
    %25 = sbr.rel (0) target = $region21
  $region20: #{encoder_forward.1} parent=0 // pred_region
    _
  $region21: #{encoder_forward.1} parent=0 // pred_fallthru
    _
  // Predicated region
  $region22: #{encoder_forward.1} parent=0 // pred_check
    _
  $region23: #{encoder_forward.1} parent=0 // pred_check_branch
    %27 = sbr.rel (0) target = $region25
  $region24: #{encoder_forward.1} parent=0 // pred_region
    _
  $region25: #{encoder_forward.1} parent=0 // pred_fallthru
    _
  // Predicated region
  $region26: #{encoder_forward.1} parent=0 // pred_check
    _
  $region27: #{encoder_forward.1} parent=0 // pred_check_branch
    %29 = sbr.rel (0) target = $region29
  $region28: #{encoder_forward.1} parent=0 // pred_region
    _
  $region29: #{encoder_forward.1} parent=0 // pred_fallthru
    _
  // Predicated region
  $region30: #{encoder_forward.1} parent=0 // pred_check
    _
  $region31: #{encoder_forward.1} parent=0 // pred_check_branch
    %31 = sbr.rel (0) target = $region33
  $region32: #{encoder_forward.1} parent=0 // pred_region
    _
  $region33: #{encoder_forward.1} parent=0 // pred_fallthru
    _
  // Predicated region
  $region34: #{encoder_forward.1} parent=0 // pred_check
    _
  $region35: #{encoder_forward.1} parent=0 // pred_check_branch
    %33 = sbr.rel (0) target = $region37
  $region36: #{encoder_forward.1} parent=0 // pred_region
    _
  $region37: #{encoder_forward.1} parent=0 // pred_fallthru
    _
  // Predicated region
  $region38: #{encoder_forward.1} parent=0 // pred_check
    _
  $region39: #{encoder_forward.1} parent=0 // pred_check_branch
    %35 = sbr.rel (0) target = $region41
  $region40: #{encoder_forward.1} parent=0 // pred_region
    _
  $region41: #{encoder_forward.1} parent=0 // pred_fallthru
    _
  // Predicated region
  $region42: #{encoder_forward.1} parent=0 // pred_check
    _
  $region43: #{encoder_forward.1} parent=0 // pred_check_branch
    %37 = sbr.rel (0) target = $region45
  $region44: #{encoder_forward.1} parent=0 // pred_region
    _
  $region45: #{encoder_forward.1} parent=0 // pred_fallthru
    _
  %p38 = scmp.eq.s32.totalorder 0, 0
  // Predicated region
  $region46: #{encoder_forward.1} parent=0 // pred_check
    %p39 = pneg %p38
  $region47: #{encoder_forward.1} parent=0 // pred_check_branch
    %41 = sbr.rel (%p39) target = $region49
  $region48: #{encoder_forward.1} parent=0 // pred_region
    %42 = vst [vmem:[#allocation2] sm:$0xff] 0.0
    %43 = vst [vmem:[#allocation2 + $0x8] sm:$0xff] 0.0
    %44 = vst [vmem:[#allocation2 + $0x10] sm:$0xff] 0.0
    %45 = vst [vmem:[#allocation2 + $0x18] sm:$0xff] 0.0
    %46 = vst [vmem:[#allocation2 + $0x20] sm:$0xff] 0.0
    %47 = vst [vmem:[#allocation2 + $0x28] sm:$0xff] 0.0
    %48 = vst [vmem:[#allocation2 + $0x30] sm:$0xff] 0.0
    %49 = vst [vmem:[#allocation2 + $0x38] sm:$0xff] 0.0
    %50 = vst [vmem:[#allocation2 + $0x40] sm:$0xff] 0.0
    %51 = vst [vmem:[#allocation3] sm:$0xff] 0.0
    %52 = vst [vmem:[#allocation3 + $0x8] sm:$0xff] 0.0
    %53 = vst [vmem:[#allocation3 + $0x10] sm:$0xff] 0.0
    %54 = vst [vmem:[#allocation3 + $0x18] sm:$0xff] 0.0
    %55 = vst [vmem:[#allocation3 + $0x20] sm:$0xff] 0.0
    %56 = vst [vmem:[#allocation3 + $0x28] sm:$0xff] 0.0
    %57 = vst [vmem:[#allocation3 + $0x30] sm:$0xff] 0.0
    %58 = vst [vmem:[#allocation3 + $0x38] sm:$0xff] 0.0
    %59 = vst [vmem:[#allocation3 + $0x40] sm:$0xff] 0.0
    %60 = vst [vmem:[#allocation4] sm:$0xff] 0.0
    %61 = vst [vmem:[#allocation4 + $0x8] sm:$0xff] 0.0
    %62 = vst [vmem:[#allocation4 + $0x10] sm:$0xff] 0.0
    %63 = vst [vmem:[#allocation4 + $0x18] sm:$0xff] 0.0
    %64 = vst [vmem:[#allocation4 + $0x20] sm:$0xff] 0.0
    %65 = vst [vmem:[#allocation4 + $0x28] sm:$0xff] 0.0
    %66 = vst [vmem:[#allocation4 + $0x30] sm:$0xff] 0.0
    %67 = vst [vmem:[#allocation4 + $0x38] sm:$0xff] 0.0
    %68 = vst [vmem:[#allocation5] sm:$0xff] 0.0
    %69 = vst [vmem:[#allocation5 + $0x8] sm:$0xff] 0.0
    %70 = vst [vmem:[#allocation5 + $0x10] sm:$0xff] 0.0
    %71 = vst [vmem:[#allocation5 + $0x18] sm:$0xff] 0.0
  $region49: #{encoder_forward.1} parent=0 // pred_fallthru
    _
  %v72 = vld [vmem:[%s0] sm:$0xff]
  %v73 = vld [vmem:[%s0 + $0x8] sm:$0xff]
  %v74 = vld [vmem:[%s0 + $0x10] sm:$0xff]
  %v75 = vld [vmem:[%s0 + $0x18] sm:$0xff]
  %v76 = vld [vmem:[%s1] sm:$0xf]
  %v77 = vld [vmem:[%s1 + $0x4] sm:$0xf]
  %v78 = vld [vmem:[%s1 + $0x8] sm:$0xf]
  %v79 = vld [vmem:[%s1 + $0xc] sm:$0xf]
  %v80 = vld [vmem:[%s1 + $0x10] sm:$0xf]
  %v81 = vld [vmem:[%s1 + $0x14] sm:$0xf]
  %v82 = vld [vmem:[%s1 + $0x18] sm:$0xf]
  %v83 = vld [vmem:[%s1 + $0x1c] sm:$0xf]
  %v84 = vld [vmem:[%s1 + $0x20] sm:$0xf]
  %v85 = vld [vmem:[%s1 + $0x24] sm:$0xf]
  %v86 = vld [vmem:[%s1 + $0x28] sm:$0xf]
  %v87 = vld [vmem:[%s1 + $0x2c] sm:$0xf]
  %v88 = vld [vmem:[%s1 + $0x30] sm:$0xf]
  %v89 = vld [vmem:[%s1 + $0x34] sm:$0xf]
  %v90 = vld [vmem:[%s1 + $0x38] sm:$0xf]
  %v91 = vld [vmem:[%s1 + $0x3c] sm:$0xf]
  %v92 = vld [vmem:[%s1 + $0x40] sm:$0xf]
  %v93 = vld [vmem:[%s1 + $0x44] sm:$0xf]
  %v94 = vld [vmem:[%s1 + $0x48] sm:$0xf]
  %v95 = vld [vmem:[%s1 + $0x4c] sm:$0xf]
  %v96 = vld [vmem:[%s1 + $0x50] sm:$0xf]
  %v97 = vld [vmem:[%s1 + $0x54] sm:$0xf]
  %v98 = vld [vmem:[%s1 + $0x58] sm:$0xf]
  %v99 = vld [vmem:[%s1 + $0x5c] sm:$0xf]
  %v100 = vld [vmem:[%s1 + $0x60] sm:$0xf]
  %v101 = vld [vmem:[%s1 + $0x64] sm:$0xf]
  %v102 = vld [vmem:[%s1 + $0x68] sm:$0xf]
  %v103 = vld [vmem:[%s1 + $0x6c] sm:$0xf]
  %v104 = vld [vmem:[%s1 + $0x70] sm:$0xf]
  %v105 = vld [vmem:[%s1 + $0x74] sm:$0xf]
  %v106 = vld [vmem:[%s1 + $0x78] sm:$0xf]
  %v107 = vld [vmem:[%s1 + $0x7c] sm:$0xf]
  %v108 = vld [vmem:[%s10] sm:$0x1]
  %v110 = vperm.slane %v108, 0
  %v116 = vunpack.c.l.b16 %v72
  %v117 = vunpack.c.h.b16 %v72
  %v118 = vunpack.c.l.b16 %v73
  %v119 = vunpack.c.h.b16 %v73
  %v120 = vunpack.c.l.b16 %v74
  %v121 = vunpack.c.h.b16 %v74
  %v122 = vunpack.c.l.b16 %v75
  %v123 = vunpack.c.h.b16 %v75
  %v124 = vpack.c.b16 %v118, %v116
  %v125 = vpack.c.b16 %v119, %v117
  %v126 = vpack.c.b16 %v122, %v120
  %v127 = vpack.c.b16 %v123, %v121
  %v164 = vunpack.c.l.b16 %v76
  %v165 = vunpack.c.l.b16 %v77
  %v166 = vunpack.c.l.b16 %v78
  %v167 = vunpack.c.l.b16 %v79
  %v168 = vunpack.c.l.b16 %v80
  %v169 = vunpack.c.l.b16 %v81
  %v170 = vunpack.c.l.b16 %v82
  %v171 = vunpack.c.l.b16 %v83
  %v172 = vunpack.c.l.b16 %v84
  %v173 = vunpack.c.l.b16 %v85
  %v174 = vunpack.c.l.b16 %v86
  %v175 = vunpack.c.l.b16 %v87
  %v176 = vunpack.c.l.b16 %v88
  %v177 = vunpack.c.l.b16 %v89
  %v178 = vunpack.c.l.b16 %v90
  %v179 = vunpack.c.l.b16 %v91
  %v180 = vunpack.c.l.b16 %v92
  %v181 = vunpack.c.l.b16 %v93
  %v182 = vunpack.c.l.b16 %v94
  %v183 = vunpack.c.l.b16 %v95
  %v184 = vunpack.c.l.b16 %v96
  %v185 = vunpack.c.l.b16 %v97
  %v186 = vunpack.c.l.b16 %v98
  %v187 = vunpack.c.l.b16 %v99
  %v188 = vunpack.c.l.b16 %v100
  %v189 = vunpack.c.l.b16 %v101
  %v190 = vunpack.c.l.b16 %v102
  %v191 = vunpack.c.l.b16 %v103
  %v192 = vunpack.c.l.b16 %v104
  %v193 = vunpack.c.l.b16 %v105
  %v194 = vunpack.c.l.b16 %v106
  %v195 = vunpack.c.l.b16 %v107
  %v196 = vpack.c.b16 %v165, %v164
  %v197 = vpack.c.b16 %v167, %v166
  %v198 = vpack.c.b16 %v169, %v168
  %v199 = vpack.c.b16 %v171, %v170
  %v200 = vpack.c.b16 %v173, %v172
  %v201 = vpack.c.b16 %v175, %v174
  %v202 = vpack.c.b16 %v177, %v176
  %v203 = vpack.c.b16 %v179, %v178
  %v204 = vpack.c.b16 %v181, %v180
  %v205 = vpack.c.b16 %v183, %v182
  %v206 = vpack.c.b16 %v185, %v184
  %v207 = vpack.c.b16 %v187, %v186
  %v208 = vpack.c.b16 %v189, %v188
  %v209 = vpack.c.b16 %v191, %v190
  %v210 = vpack.c.b16 %v193, %v192
  %v211 = vpack.c.b16 %v195, %v194
  %228 = vmatpush.bf16.msra.mxu0 %v203
  %229 = vmatpush.bf16.msra.mxu0 %v202
  %230 = vmatpush.bf16.msra.mxu0 %v201
  %231 = vmatpush.bf16.msra.mxu0 %v200
  %232 = vmatpush.bf16.msra.mxu0 %v199
  %233 = vmatpush.bf16.msra.mxu0 %v198
  %234 = vmatpush.bf16.msra.mxu0 %v197
  %235 = vmatpush.bf16.msra.mxu0 %v196
  %236 = vmatmul.bf16.gmra.mxu0 %v124
  %v237 = vpop.f32.mrf.mxu0
  %v238 = vadd.f32 %v110, %v237
  %v239 = vpop.f32.mrf.mxu0
  %v240 = vadd.f32 %v110, %v239
  %241 = vmatmul.bf16.gmra.mxu0 %v126
  %v242 = vpop.f32.mrf.mxu0
  %v243 = vadd.f32 %v110, %v242
  %v244 = vpop.f32.mrf.mxu0
  %v245 = vadd.f32 %v110, %v244
  %246 = vdwg.mxu0
  %247 = vmatpush.bf16.msra.mxu0 %v211
  %248 = vmatpush.bf16.msra.mxu0 %v210
  %249 = vmatpush.bf16.msra.mxu0 %v209
  %250 = vmatpush.bf16.msra.mxu0 %v208
  %251 = vmatpush.bf16.msra.mxu0 %v207
  %252 = vmatpush.bf16.msra.mxu0 %v206
  %253 = vmatpush.bf16.msra.mxu0 %v205
  %254 = vmatpush.bf16.msra.mxu0 %v204
  %255 = vmatmul.bf16.gmra.mxu0 %v125
  %v256 = vpop.f32.mrf.mxu0
  %v257 = vadd.f32 %v238, %v256
  %v258 = vpop.f32.mrf.mxu0
  %v259 = vadd.f32 %v240, %v258
  %260 = vmatmul.bf16.gmra.mxu0 %v127
  %v261 = vpop.f32.mrf.mxu0
  %v262 = vadd.f32 %v243, %v261
  %v263 = vpop.f32.mrf.mxu0
  %v264 = vadd.f32 %v245, %v263
  %265 = vdwg.mxu0
  %v266 = vmax.f32 %v257, 0.0
  %v267 = vmax.f32 %v259, 0.0
  %v268 = vmax.f32 %v262, 0.0
  %v269 = vmax.f32 %v264, 0.0
  %270 = vst [vmem:[#allocation2 + $0x7] sm:$0xf] %v266
  %271 = vst [vmem:[#allocation2 + $0x9] sm:$0xf0] %v266
  %272 = vst [vmem:[#allocation2 + $0x13] sm:$0xf] %v267
  %273 = vst [vmem:[#allocation2 + $0x15] sm:$0xf0] %v267
  %274 = vst [vmem:[#allocation2 + $0x2b] sm:$0xf] %v268
  %275 = vst [vmem:[#allocation2 + $0x2d] sm:$0xf0] %v268
  %276 = vst [vmem:[#allocation2 + $0x37] sm:$0xf] %v269
  %277 = vst [vmem:[#allocation2 + $0x39] sm:$0xf0] %v269
  %v278 = vld [vmem:[#allocation2] sm:$0xff]
  %v279 = vld [vmem:[#allocation2 + $0x8] sm:$0xff]
  %v280 = vld [vmem:[#allocation2 + $0x10] sm:$0xff]
  %v281 = vld [vmem:[#allocation2 + $0x18] sm:$0xff]
  %v282 = vld [vmem:[#allocation2 + $0x20] sm:$0xff]
  %v283 = vld [vmem:[#allocation2 + $0x28] sm:$0xff]
  %v284 = vld [vmem:[#allocation2 + $0x30] sm:$0xff]
  %v285 = vld [vmem:[#allocation2 + $0x38] sm:$0x3]
  %v286 = vpack.c.bf16 %v279, %v278
  %v287 = vpack.c.bf16 %v281, %v280
  %v288 = vpack.c.bf16 %v283, %v282
  %v289 = vpack.c.bf16 %v285, %v284
  %v290 = vld [vmem:[%s2] sm:$0xf]
  %v291 = vld [vmem:[%s2 + $0x4] sm:$0xf]
  %v292 = vld [vmem:[%s2 + $0x8] sm:$0xf]
  %v293 = vld [vmem:[%s2 + $0xc] sm:$0xf]
  %v294 = vld [vmem:[%s2 + $0x10] sm:$0xf]
  %v295 = vld [vmem:[%s2 + $0x14] sm:$0xf]
  %v296 = vld [vmem:[%s2 + $0x18] sm:$0xf]
  %v297 = vld [vmem:[%s2 + $0x1c] sm:$0xf]
  %v298 = vld [vmem:[%s2 + $0x20] sm:$0xf]
  %v299 = vld [vmem:[%s2 + $0x24] sm:$0xf]
  %v300 = vld [vmem:[%s2 + $0x28] sm:$0xf]
  %v301 = vld [vmem:[%s2 + $0x2c] sm:$0xf]
  %v302 = vld [vmem:[%s2 + $0x30] sm:$0xf]
  %v303 = vld [vmem:[%s2 + $0x34] sm:$0xf]
  %v304 = vld [vmem:[%s2 + $0x38] sm:$0xf]
  %v305 = vld [vmem:[%s2 + $0x3c] sm:$0xf]
  %v306 = vld [vmem:[#allocation2 + $0x1] sm:$0xff]
  %v307 = vld [vmem:[#allocation2 + $0x9] sm:$0xff]
  %v308 = vld [vmem:[#allocation2 + $0x11] sm:$0xff]
  %v309 = vld [vmem:[#allocation2 + $0x19] sm:$0xff]
  %v310 = vld [vmem:[#allocation2 + $0x21] sm:$0xff]
  %v311 = vld [vmem:[#allocation2 + $0x29] sm:$0xff]
  %v312 = vld [vmem:[#allocation2 + $0x31] sm:$0xff]
  %v313 = vld [vmem:[#allocation2 + $0x39] sm:$0x3]
  %v314 = vpack.c.bf16 %v307, %v306
  %v315 = vpack.c.bf16 %v309, %v308
  %v316 = vpack.c.bf16 %v311, %v310
  %v317 = vpack.c.bf16 %v313, %v312
  %v318 = vld [vmem:[%s2 + $0x40] sm:$0xf]
  %v319 = vld [vmem:[%s2 + $0x44] sm:$0xf]
  %v320 = vld [vmem:[%s2 + $0x48] sm:$0xf]
  %v321 = vld [vmem:[%s2 + $0x4c] sm:$0xf]
  %v322 = vld [vmem:[%s2 + $0x50] sm:$0xf]
  %v323 = vld [vmem:[%s2 + $0x54] sm:$0xf]
  %v324 = vld [vmem:[%s2 + $0x58] sm:$0xf]
  %v325 = vld [vmem:[%s2 + $0x5c] sm:$0xf]
  %v326 = vld [vmem:[%s2 + $0x60] sm:$0xf]
  %v327 = vld [vmem:[%s2 + $0x64] sm:$0xf]
  %v328 = vld [vmem:[%s2 + $0x68] sm:$0xf]
  %v329 = vld [vmem:[%s2 + $0x6c] sm:$0xf]
  %v330 = vld [vmem:[%s2 + $0x70] sm:$0xf]
  %v331 = vld [vmem:[%s2 + $0x74] sm:$0xf]
  %v332 = vld [vmem:[%s2 + $0x78] sm:$0xf]
  %v333 = vld [vmem:[%s2 + $0x7c] sm:$0xf]
  %v350 = vunpack.c.l.b16 %v318
  %v351 = vunpack.c.l.b16 %v319
  %v352 = vunpack.c.l.b16 %v320
  %v353 = vunpack.c.l.b16 %v321
  %v354 = vunpack.c.l.b16 %v322
  %v355 = vunpack.c.l.b16 %v323
  %v356 = vunpack.c.l.b16 %v324
  %v357 = vunpack.c.l.b16 %v325
  %v358 = vunpack.c.l.b16 %v326
  %v359 = vunpack.c.l.b16 %v327
  %v360 = vunpack.c.l.b16 %v328
  %v361 = vunpack.c.l.b16 %v329
  %v362 = vunpack.c.l.b16 %v330
  %v363 = vunpack.c.l.b16 %v331
  %v364 = vunpack.c.l.b16 %v332
  %v365 = vunpack.c.l.b16 %v333
  %v366 = vpack.c.b16 %v351, %v350
  %v367 = vpack.c.b16 %v353, %v352
  %v368 = vpack.c.b16 %v355, %v354
  %v369 = vpack.c.b16 %v357, %v356
  %v370 = vpack.c.b16 %v359, %v358
  %v371 = vpack.c.b16 %v361, %v360
  %v372 = vpack.c.b16 %v363, %v362
  %v373 = vpack.c.b16 %v365, %v364
  %382 = vmatpush.bf16.msra.mxu0 %v373
  %383 = vmatpush.bf16.msra.mxu0 %v372
  %384 = vmatpush.bf16.msra.mxu0 %v371
  %385 = vmatpush.bf16.msra.mxu0 %v370
  %386 = vmatpush.bf16.msra.mxu0 %v369
  %387 = vmatpush.bf16.msra.mxu0 %v368
  %388 = vmatpush.bf16.msra.mxu0 %v367
  %389 = vmatpush.bf16.msra.mxu0 %v366
  %390 = vmatmul.bf16.gmra.mxu0 %v314
  %v391 = vpop.f32.mrf.mxu0
  %v392 = vadd.f32 0.0, %v391
  %v393 = vpop.f32.mrf.mxu0
  %v394 = vadd.f32 0.0, %v393
  %395 = vmatmul.bf16.gmra.mxu0 %v315
  %v396 = vpop.f32.mrf.mxu0
  %v397 = vadd.f32 0.0, %v396
  %v398 = vpop.f32.mrf.mxu0
  %399 = vmatmul.bf16.gmra.mxu0 %v316
  %v400 = vpop.f32.mrf.mxu0
  %v401 = vadd.f32 0.0, %v400
  %v402 = vpop.f32.mrf.mxu0
  %v403 = vadd.f32 0.0, %v402
  %404 = vmatmul.bf16.gmra.mxu0 %v317
  %v405 = vpop.f32.mrf.mxu0
  %v406 = vadd.f32 0.0, %v405
  %v407 = vpop.f32.mrf.mxu0
  %v408 = vadd.f32 0.0, %v407
  %409 = vdwg.mxu0
  %v426 = vunpack.c.l.b16 %v290
  %v427 = vunpack.c.l.b16 %v291
  %v428 = vunpack.c.l.b16 %v292
  %v429 = vunpack.c.l.b16 %v293
  %v430 = vunpack.c.l.b16 %v294
  %v431 = vunpack.c.l.b16 %v295
  %v432 = vunpack.c.l.b16 %v296
  %v433 = vunpack.c.l.b16 %v297
  %v434 = vunpack.c.l.b16 %v298
  %v435 = vunpack.c.l.b16 %v299
  %v436 = vunpack.c.l.b16 %v300
  %v437 = vunpack.c.l.b16 %v301
  %v438 = vunpack.c.l.b16 %v302
  %v439 = vunpack.c.l.b16 %v303
  %v440 = vunpack.c.l.b16 %v304
  %v441 = vunpack.c.l.b16 %v305
  %v442 = vpack.c.b16 %v427, %v426
  %v443 = vpack.c.b16 %v429, %v428
  %v444 = vpack.c.b16 %v431, %v430
  %v445 = vpack.c.b16 %v433, %v432
  %v446 = vpack.c.b16 %v435, %v434
  %v447 = vpack.c.b16 %v437, %v436
  %v448 = vpack.c.b16 %v439, %v438
  %v449 = vpack.c.b16 %v441, %v440
  %458 = vmatpush.bf16.msra.mxu0 %v449
  %459 = vmatpush.bf16.msra.mxu0 %v448
  %460 = vmatpush.bf16.msra.mxu0 %v447
  %461 = vmatpush.bf16.msra.mxu0 %v446
  %462 = vmatpush.bf16.msra.mxu0 %v445
  %463 = vmatpush.bf16.msra.mxu0 %v444
  %464 = vmatpush.bf16.msra.mxu0 %v443
  %465 = vmatpush.bf16.msra.mxu0 %v442
  %466 = vmatmul.bf16.gmra.mxu0 %v286
  %v467 = vpop.f32.mrf.mxu0
  %v468 = vadd.f32 %v392, %v467
  %v469 = vpop.f32.mrf.mxu0
  %v470 = vadd.f32 %v394, %v469
  %471 = vmatmul.bf16.gmra.mxu0 %v287
  %v472 = vpop.f32.mrf.mxu0
  %v473 = vadd.f32 %v397, %v472
  %v474 = vpop.f32.mrf.mxu0
  %475 = vmatmul.bf16.gmra.mxu0 %v288
  %v476 = vpop.f32.mrf.mxu0
  %v477 = vadd.f32 %v401, %v476
  %v478 = vpop.f32.mrf.mxu0
  %v479 = vadd.f32 %v403, %v478
  %480 = vmatmul.bf16.gmra.mxu0 %v289
  %v481 = vpop.f32.mrf.mxu0
  %v482 = vadd.f32 %v406, %v481
  %v483 = vpop.f32.mrf.mxu0
  %v484 = vadd.f32 %v408, %v483
  %485 = vdwg.mxu0
  %v486 = vld [vmem:[#allocation2 + $0x2] sm:$0xff]
  %v487 = vld [vmem:[#allocation2 + $0xa] sm:$0xff]
  %v488 = vld [vmem:[#allocation2 + $0x12] sm:$0xff]
  %v489 = vld [vmem:[#allocation2 + $0x1a] sm:$0xff]
  %v490 = vld [vmem:[#allocation2 + $0x22] sm:$0xff]
  %v491 = vld [vmem:[#allocation2 + $0x2a] sm:$0xff]
  %v492 = vld [vmem:[#allocation2 + $0x32] sm:$0xff]
  %v493 = vld [vmem:[#allocation2 + $0x3a] sm:$0x3]
  %v494 = vpack.c.bf16 %v487, %v486
  %v495 = vpack.c.bf16 %v489, %v488
  %v496 = vpack.c.bf16 %v491, %v490
  %v497 = vpack.c.bf16 %v493, %v492
  %v498 = vld [vmem:[%s2 + $0x80] sm:$0xf]
  %v499 = vld [vmem:[%s2 + $0x84] sm:$0xf]
  %v500 = vld [vmem:[%s2 + $0x88] sm:$0xf]
  %v501 = vld [vmem:[%s2 + $0x8c] sm:$0xf]
  %v502 = vld [vmem:[%s2 + $0x90] sm:$0xf]
  %v503 = vld [vmem:[%s2 + $0x94] sm:$0xf]
  %v504 = vld [vmem:[%s2 + $0x98] sm:$0xf]
  %v505 = vld [vmem:[%s2 + $0x9c] sm:$0xf]
  %v506 = vld [vmem:[%s2 + $0xa0] sm:$0xf]
  %v507 = vld [vmem:[%s2 + $0xa4] sm:$0xf]
  %v508 = vld [vmem:[%s2 + $0xa8] sm:$0xf]
  %v509 = vld [vmem:[%s2 + $0xac] sm:$0xf]
  %v510 = vld [vmem:[%s2 + $0xb0] sm:$0xf]
  %v511 = vld [vmem:[%s2 + $0xb4] sm:$0xf]
  %v512 = vld [vmem:[%s2 + $0xb8] sm:$0xf]
  %v513 = vld [vmem:[%s2 + $0xbc] sm:$0xf]
  %v530 = vunpack.c.l.b16 %v498
  %v531 = vunpack.c.l.b16 %v499
  %v532 = vunpack.c.l.b16 %v500
  %v533 = vunpack.c.l.b16 %v501
  %v534 = vunpack.c.l.b16 %v502
  %v535 = vunpack.c.l.b16 %v503
  %v536 = vunpack.c.l.b16 %v504
  %v537 = vunpack.c.l.b16 %v505
  %v538 = vunpack.c.l.b16 %v506
  %v539 = vunpack.c.l.b16 %v507
  %v540 = vunpack.c.l.b16 %v508
  %v541 = vunpack.c.l.b16 %v509
  %v542 = vunpack.c.l.b16 %v510
  %v543 = vunpack.c.l.b16 %v511
  %v544 = vunpack.c.l.b16 %v512
  %v545 = vunpack.c.l.b16 %v513
  %v546 = vpack.c.b16 %v531, %v530
  %v547 = vpack.c.b16 %v533, %v532
  %v548 = vpack.c.b16 %v535, %v534
  %v549 = vpack.c.b16 %v537, %v536
  %v550 = vpack.c.b16 %v539, %v538
  %v551 = vpack.c.b16 %v541, %v540
  %v552 = vpack.c.b16 %v543, %v542
  %v553 = vpack.c.b16 %v545, %v544
  %562 = vmatpush.bf16.msra.mxu0 %v553
  %563 = vmatpush.bf16.msra.mxu0 %v552
  %564 = vmatpush.bf16.msra.mxu0 %v551
  %565 = vmatpush.bf16.msra.mxu0 %v550
  %566 = vmatpush.bf16.msra.mxu0 %v549
  %567 = vmatpush.bf16.msra.mxu0 %v548
  %568 = vmatpush.bf16.msra.mxu0 %v547
  %569 = vmatpush.bf16.msra.mxu0 %v546
  %570 = vmatmul.bf16.gmra.mxu0 %v494
  %v571 = vpop.f32.mrf.mxu0
  %v572 = vadd.f32 0.0, %v571
  %v573 = vpop.f32.mrf.mxu0
  %v574 = vadd.f32 0.0, %v573
  %575 = vmatmul.bf16.gmra.mxu0 %v495
  %v576 = vpop.f32.mrf.mxu0
  %v577 = vadd.f32 0.0, %v576
  %v578 = vpop.f32.mrf.mxu0
  %579 = vmatmul.bf16.gmra.mxu0 %v496
  %v580 = vpop.f32.mrf.mxu0
  %v581 = vadd.f32 0.0, %v580
  %v582 = vpop.f32.mrf.mxu0
  %v583 = vadd.f32 0.0, %v582
  %584 = vmatmul.bf16.gmra.mxu0 %v497
  %v585 = vpop.f32.mrf.mxu0
  %v586 = vadd.f32 0.0, %v585
  %v587 = vpop.f32.mrf.mxu0
  %v588 = vadd.f32 0.0, %v587
  %589 = vdwg.mxu0
  %v590 = vadd.f32 %v468, %v572
  %v591 = vadd.f32 %v470, %v574
  %v592 = vadd.f32 %v473, %v577
  %v593 = vadd.f32 %v477, %v581
  %v594 = vadd.f32 %v479, %v583
  %v595 = vadd.f32 %v482, %v586
  %v596 = vadd.f32 %v484, %v588
  %v597 = vld [vmem:[#allocation2 + $0x6] sm:$0xff]
  %v598 = vld [vmem:[#allocation2 + $0xe] sm:$0xff]
  %v599 = vld [vmem:[#allocation2 + $0x16] sm:$0xff]
  %v600 = vld [vmem:[#allocation2 + $0x1e] sm:$0xff]
  %v601 = vld [vmem:[#allocation2 + $0x26] sm:$0xff]
  %v602 = vld [vmem:[#allocation2 + $0x2e] sm:$0xff]
  %v603 = vld [vmem:[#allocation2 + $0x36] sm:$0xff]
  %v604 = vld [vmem:[#allocation2 + $0x3e] sm:$0x3]
  %v605 = vpack.c.bf16 %v598, %v597
  %v606 = vpack.c.bf16 %v600, %v599
  %v607 = vpack.c.bf16 %v602, %v601
  %v608 = vpack.c.bf16 %v604, %v603
  %v609 = vld [vmem:[%s2 + $0xc0] sm:$0xf]
  %v610 = vld [vmem:[%s2 + $0xc4] sm:$0xf]
  %v611 = vld [vmem:[%s2 + $0xc8] sm:$0xf]
  %v612 = vld [vmem:[%s2 + $0xcc] sm:$0xf]
  %v613 = vld [vmem:[%s2 + $0xd0] sm:$0xf]
  %v614 = vld [vmem:[%s2 + $0xd4] sm:$0xf]
  %v615 = vld [vmem:[%s2 + $0xd8] sm:$0xf]
  %v616 = vld [vmem:[%s2 + $0xdc] sm:$0xf]
  %v617 = vld [vmem:[%s2 + $0xe0] sm:$0xf]
  %v618 = vld [vmem:[%s2 + $0xe4] sm:$0xf]
  %v619 = vld [vmem:[%s2 + $0xe8] sm:$0xf]
  %v620 = vld [vmem:[%s2 + $0xec] sm:$0xf]
  %v621 = vld [vmem:[%s2 + $0xf0] sm:$0xf]
  %v622 = vld [vmem:[%s2 + $0xf4] sm:$0xf]
  %v623 = vld [vmem:[%s2 + $0xf8] sm:$0xf]
  %v624 = vld [vmem:[%s2 + $0xfc] sm:$0xf]
  %v641 = vunpack.c.l.b16 %v609
  %v642 = vunpack.c.l.b16 %v610
  %v643 = vunpack.c.l.b16 %v611
  %v644 = vunpack.c.l.b16 %v612
  %v645 = vunpack.c.l.b16 %v613
  %v646 = vunpack.c.l.b16 %v614
  %v647 = vunpack.c.l.b16 %v615
  %v648 = vunpack.c.l.b16 %v616
  %v649 = vunpack.c.l.b16 %v617
  %v650 = vunpack.c.l.b16 %v618
  %v651 = vunpack.c.l.b16 %v619
  %v652 = vunpack.c.l.b16 %v620
  %v653 = vunpack.c.l.b16 %v621
  %v654 = vunpack.c.l.b16 %v622
  %v655 = vunpack.c.l.b16 %v623
  %v656 = vunpack.c.l.b16 %v624
  %v657 = vpack.c.b16 %v642, %v641
  %v658 = vpack.c.b16 %v644, %v643
  %v659 = vpack.c.b16 %v646, %v645
  %v660 = vpack.c.b16 %v648, %v647
  %v661 = vpack.c.b16 %v650, %v649
  %v662 = vpack.c.b16 %v652, %v651
  %v663 = vpack.c.b16 %v654, %v653
  %v664 = vpack.c.b16 %v656, %v655
  %673 = vmatpush.bf16.msra.mxu0 %v664
  %674 = vmatpush.bf16.msra.mxu0 %v663
  %675 = vmatpush.bf16.msra.mxu0 %v662
  %676 = vmatpush.bf16.msra.mxu0 %v661
  %677 = vmatpush.bf16.msra.mxu0 %v660
  %678 = vmatpush.bf16.msra.mxu0 %v659
  %679 = vmatpush.bf16.msra.mxu0 %v658
  %680 = vmatpush.bf16.msra.mxu0 %v657
  %681 = vmatmul.bf16.gmra.mxu0 %v605
  %v682 = vpop.f32.mrf.mxu0
  %v683 = vadd.f32 0.0, %v682
  %v684 = vpop.f32.mrf.mxu0
  %v685 = vadd.f32 0.0, %v684
  %686 = vmatmul.bf16.gmra.mxu0 %v606
  %v687 = vpop.f32.mrf.mxu0
  %v688 = vadd.f32 0.0, %v687
  %v689 = vpop.f32.mrf.mxu0
  %690 = vmatmul.bf16.gmra.mxu0 %v607
  %v691 = vpop.f32.mrf.mxu0
  %v692 = vadd.f32 0.0, %v691
  %v693 = vpop.f32.mrf.mxu0
  %v694 = vadd.f32 0.0, %v693
  %695 = vmatmul.bf16.gmra.mxu0 %v608
  %v696 = vpop.f32.mrf.mxu0
  %v697 = vadd.f32 0.0, %v696
  %v698 = vpop.f32.mrf.mxu0
  %v699 = vadd.f32 0.0, %v698
  %700 = vdwg.mxu0
  %v701 = vadd.f32 %v590, %v683
  %v702 = vadd.f32 %v591, %v685
  %v703 = vadd.f32 %v592, %v688
  %v704 = vadd.f32 %v593, %v692
  %v705 = vadd.f32 %v594, %v694
  %v706 = vadd.f32 %v595, %v697
  %v707 = vadd.f32 %v596, %v699
  %v708 = vld [vmem:[#allocation2 + $0x7] sm:$0xff]
  %v709 = vld [vmem:[#allocation2 + $0xf] sm:$0xff]
  %v710 = vld [vmem:[#allocation2 + $0x17] sm:$0xff]
  %v711 = vld [vmem:[#allocation2 + $0x1f] sm:$0xff]
  %v712 = vld [vmem:[#allocation2 + $0x27] sm:$0xff]
  %v713 = vld [vmem:[#allocation2 + $0x2f] sm:$0xff]
  %v714 = vld [vmem:[#allocation2 + $0x37] sm:$0xff]
  %v715 = vld [vmem:[#allocation2 + $0x3f] sm:$0x3]
  %v716 = vpack.c.bf16 %v709, %v708
  %v717 = vpack.c.bf16 %v711, %v710
  %v718 = vpack.c.bf16 %v713, %v712
  %v719 = vpack.c.bf16 %v715, %v714
  %v720 = vld [vmem:[%s2 + $0x100] sm:$0xf]
  %v721 = vld [vmem:[%s2 + $0x104] sm:$0xf]
  %v722 = vld [vmem:[%s2 + $0x108] sm:$0xf]
  %v723 = vld [vmem:[%s2 + $0x10c] sm:$0xf]
  %v724 = vld [vmem:[%s2 + $0x110] sm:$0xf]
  %v725 = vld [vmem:[%s2 + $0x114] sm:$0xf]
  %v726 = vld [vmem:[%s2 + $0x118] sm:$0xf]
  %v727 = vld [vmem:[%s2 + $0x11c] sm:$0xf]
  %v728 = vld [vmem:[%s2 + $0x120] sm:$0xf]
  %v729 = vld [vmem:[%s2 + $0x124] sm:$0xf]
  %v730 = vld [vmem:[%s2 + $0x128] sm:$0xf]
  %v731 = vld [vmem:[%s2 + $0x12c] sm:$0xf]
  %v732 = vld [vmem:[%s2 + $0x130] sm:$0xf]
  %v733 = vld [vmem:[%s2 + $0x134] sm:$0xf]
  %v734 = vld [vmem:[%s2 + $0x138] sm:$0xf]
  %v735 = vld [vmem:[%s2 + $0x13c] sm:$0xf]
  %v752 = vunpack.c.l.b16 %v720
  %v753 = vunpack.c.l.b16 %v721
  %v754 = vunpack.c.l.b16 %v722
  %v755 = vunpack.c.l.b16 %v723
  %v756 = vunpack.c.l.b16 %v724
  %v757 = vunpack.c.l.b16 %v725
  %v758 = vunpack.c.l.b16 %v726
  %v759 = vunpack.c.l.b16 %v727
  %v760 = vunpack.c.l.b16 %v728
  %v761 = vunpack.c.l.b16 %v729
  %v762 = vunpack.c.l.b16 %v730
  %v763 = vunpack.c.l.b16 %v731
  %v764 = vunpack.c.l.b16 %v732
  %v765 = vunpack.c.l.b16 %v733
  %v766 = vunpack.c.l.b16 %v734
  %v767 = vunpack.c.l.b16 %v735
  %v768 = vpack.c.b16 %v753, %v752
  %v769 = vpack.c.b16 %v755, %v754
  %v770 = vpack.c.b16 %v757, %v756
  %v771 = vpack.c.b16 %v759, %v758
  %v772 = vpack.c.b16 %v761, %v760
  %v773 = vpack.c.b16 %v763, %v762
  %v774 = vpack.c.b16 %v765, %v764
  %v775 = vpack.c.b16 %v767, %v766
  %784 = vmatpush.bf16.msra.mxu0 %v775
  %785 = vmatpush.bf16.msra.mxu0 %v774
  %786 = vmatpush.bf16.msra.mxu0 %v773
  %787 = vmatpush.bf16.msra.mxu0 %v772
  %788 = vmatpush.bf16.msra.mxu0 %v771
  %789 = vmatpush.bf16.msra.mxu0 %v770
  %790 = vmatpush.bf16.msra.mxu0 %v769
  %791 = vmatpush.bf16.msra.mxu0 %v768
  %792 = vmatmul.bf16.gmra.mxu0 %v716
  %v793 = vpop.f32.mrf.mxu0
  %v794 = vadd.f32 0.0, %v793
  %v795 = vpop.f32.mrf.mxu0
  %v796 = vadd.f32 0.0, %v795
  %797 = vmatmul.bf16.gmra.mxu0 %v717
  %v798 = vpop.f32.mrf.mxu0
  %v799 = vadd.f32 0.0, %v798
  %v800 = vpop.f32.mrf.mxu0
  %801 = vmatmul.bf16.gmra.mxu0 %v718
  %v802 = vpop.f32.mrf.mxu0
  %v803 = vadd.f32 0.0, %v802
  %v804 = vpop.f32.mrf.mxu0
  %v805 = vadd.f32 0.0, %v804
  %806 = vmatmul.bf16.gmra.mxu0 %v719
  %v807 = vpop.f32.mrf.mxu0
  %v808 = vadd.f32 0.0, %v807
  %v809 = vpop.f32.mrf.mxu0
  %v810 = vadd.f32 0.0, %v809
  %811 = vdwg.mxu0
  %v812 = vadd.f32 %v701, %v794
  %v813 = vadd.f32 %v702, %v796
  %v814 = vadd.f32 %v703, %v799
  %v815 = vadd.f32 %v704, %v803
  %v816 = vadd.f32 %v705, %v805
  %v817 = vadd.f32 %v706, %v808
  %v818 = vadd.f32 %v707, %v810
  %v819 = vld [vmem:[#allocation2 + $0x8] sm:$0xff]
  %v820 = vld [vmem:[#allocation2 + $0x10] sm:$0xff]
  %v821 = vld [vmem:[#allocation2 + $0x18] sm:$0xff]
  %v822 = vld [vmem:[#allocation2 + $0x20] sm:$0xff]
  %v823 = vld [vmem:[#allocation2 + $0x28] sm:$0xff]
  %v824 = vld [vmem:[#allocation2 + $0x30] sm:$0xff]
  %v825 = vld [vmem:[#allocation2 + $0x38] sm:$0xff]
  %v826 = vld [vmem:[#allocation2 + $0x40] sm:$0x3]
  %v827 = vpack.c.bf16 %v820, %v819
  %v828 = vpack.c.bf16 %v822, %v821
  %v829 = vpack.c.bf16 %v824, %v823
  %v830 = vpack.c.bf16 %v826, %v825
  %v831 = vld [vmem:[%s2 + $0x140] sm:$0xf]
  %v832 = vld [vmem:[%s2 + $0x144] sm:$0xf]
  %v833 = vld [vmem:[%s2 + $0x148] sm:$0xf]
  %v834 = vld [vmem:[%s2 + $0x14c] sm:$0xf]
  %v835 = vld [vmem:[%s2 + $0x150] sm:$0xf]
  %v836 = vld [vmem:[%s2 + $0x154] sm:$0xf]
  %v837 = vld [vmem:[%s2 + $0x158] sm:$0xf]
  %v838 = vld [vmem:[%s2 + $0x15c] sm:$0xf]
  %v839 = vld [vmem:[%s2 + $0x160] sm:$0xf]
  %v840 = vld [vmem:[%s2 + $0x164] sm:$0xf]
  %v841 = vld [vmem:[%s2 + $0x168] sm:$0xf]
  %v842 = vld [vmem:[%s2 + $0x16c] sm:$0xf]
  %v843 = vld [vmem:[%s2 + $0x170] sm:$0xf]
  %v844 = vld [vmem:[%s2 + $0x174] sm:$0xf]
  %v845 = vld [vmem:[%s2 + $0x178] sm:$0xf]
  %v846 = vld [vmem:[%s2 + $0x17c] sm:$0xf]
  %v863 = vunpack.c.l.b16 %v831
  %v864 = vunpack.c.l.b16 %v832
  %v865 = vunpack.c.l.b16 %v833
  %v866 = vunpack.c.l.b16 %v834
  %v867 = vunpack.c.l.b16 %v835
  %v868 = vunpack.c.l.b16 %v836
  %v869 = vunpack.c.l.b16 %v837
  %v870 = vunpack.c.l.b16 %v838
  %v871 = vunpack.c.l.b16 %v839
  %v872 = vunpack.c.l.b16 %v840
  %v873 = vunpack.c.l.b16 %v841
  %v874 = vunpack.c.l.b16 %v842
  %v875 = vunpack.c.l.b16 %v843
  %v876 = vunpack.c.l.b16 %v844
  %v877 = vunpack.c.l.b16 %v845
  %v878 = vunpack.c.l.b16 %v846
  %v879 = vpack.c.b16 %v864, %v863
  %v880 = vpack.c.b16 %v866, %v865
  %v881 = vpack.c.b16 %v868, %v867
  %v882 = vpack.c.b16 %v870, %v869
  %v883 = vpack.c.b16 %v872, %v871
  %v884 = vpack.c.b16 %v874, %v873
  %v885 = vpack.c.b16 %v876, %v875
  %v886 = vpack.c.b16 %v878, %v877
  %895 = vmatpush.bf16.msra.mxu0 %v886
  %896 = vmatpush.bf16.msra.mxu0 %v885
  %897 = vmatpush.bf16.msra.mxu0 %v884
  %898 = vmatpush.bf16.msra.mxu0 %v883
  %899 = vmatpush.bf16.msra.mxu0 %v882
  %900 = vmatpush.bf16.msra.mxu0 %v881
  %901 = vmatpush.bf16.msra.mxu0 %v880
  %902 = vmatpush.bf16.msra.mxu0 %v879
  %903 = vmatmul.bf16.gmra.mxu0 %v827
  %v904 = vpop.f32.mrf.mxu0
  %v905 = vadd.f32 0.0, %v904
  %v906 = vpop.f32.mrf.mxu0
  %v907 = vadd.f32 0.0, %v906
  %908 = vmatmul.bf16.gmra.mxu0 %v828
  %v909 = vpop.f32.mrf.mxu0
  %v910 = vadd.f32 0.0, %v909
  %v911 = vpop.f32.mrf.mxu0
  %912 = vmatmul.bf16.gmra.mxu0 %v829
  %v913 = vpop.f32.mrf.mxu0
  %v914 = vadd.f32 0.0, %v913
  %v915 = vpop.f32.mrf.mxu0
  %v916 = vadd.f32 0.0, %v915
  %917 = vmatmul.bf16.gmra.mxu0 %v830
  %v918 = vpop.f32.mrf.mxu0
  %v919 = vadd.f32 0.0, %v918
  %v920 = vpop.f32.mrf.mxu0
  %v921 = vadd.f32 0.0, %v920
  %922 = vdwg.mxu0
  %v923 = vadd.f32 %v812, %v905
  %v924 = vadd.f32 %v813, %v907
  %v925 = vadd.f32 %v814, %v910
  %v926 = vadd.f32 %v815, %v914
  %v927 = vadd.f32 %v816, %v916
  %v928 = vadd.f32 %v817, %v919
  %v929 = vadd.f32 %v818, %v921
  %v930 = vld [vmem:[#allocation2 + $0xc] sm:$0xff]
  %v931 = vld [vmem:[#allocation2 + $0x14] sm:$0xff]
  %v932 = vld [vmem:[#allocation2 + $0x1c] sm:$0xff]
  %v933 = vld [vmem:[#allocation2 + $0x24] sm:$0xff]
  %v934 = vld [vmem:[#allocation2 + $0x2c] sm:$0xff]
  %v935 = vld [vmem:[#allocation2 + $0x34] sm:$0xff]
  %v936 = vld [vmem:[#allocation2 + $0x3c] sm:$0xff]
  %v937 = vld [vmem:[#allocation2 + $0x44] sm:$0x3]
  %v938 = vpack.c.bf16 %v931, %v930
  %v939 = vpack.c.bf16 %v933, %v932
  %v940 = vpack.c.bf16 %v935, %v934
  %v941 = vpack.c.bf16 %v937, %v936
  %v942 = vld [vmem:[%s2 + $0x180] sm:$0xf]
  %v943 = vld [vmem:[%s2 + $0x184] sm:$0xf]
  %v944 = vld [vmem:[%s2 + $0x188] sm:$0xf]
  %v945 = vld [vmem:[%s2 + $0x18c] sm:$0xf]
  %v946 = vld [vmem:[%s2 + $0x190] sm:$0xf]
  %v947 = vld [vmem:[%s2 + $0x194] sm:$0xf]
  %v948 = vld [vmem:[%s2 + $0x198] sm:$0xf]
  %v949 = vld [vmem:[%s2 + $0x19c] sm:$0xf]
  %v950 = vld [vmem:[%s2 + $0x1a0] sm:$0xf]
  %v951 = vld [vmem:[%s2 + $0x1a4] sm:$0xf]
  %v952 = vld [vmem:[%s2 + $0x1a8] sm:$0xf]
  %v953 = vld [vmem:[%s2 + $0x1ac] sm:$0xf]
  %v954 = vld [vmem:[%s2 + $0x1b0] sm:$0xf]
  %v955 = vld [vmem:[%s2 + $0x1b4] sm:$0xf]
  %v956 = vld [vmem:[%s2 + $0x1b8] sm:$0xf]
  %v957 = vld [vmem:[%s2 + $0x1bc] sm:$0xf]
  %v974 = vunpack.c.l.b16 %v942
  %v975 = vunpack.c.l.b16 %v943
  %v976 = vunpack.c.l.b16 %v944
  %v977 = vunpack.c.l.b16 %v945
  %v978 = vunpack.c.l.b16 %v946
  %v979 = vunpack.c.l.b16 %v947
  %v980 = vunpack.c.l.b16 %v948
  %v981 = vunpack.c.l.b16 %v949
  %v982 = vunpack.c.l.b16 %v950
  %v983 = vunpack.c.l.b16 %v951
  %v984 = vunpack.c.l.b16 %v952
  %v985 = vunpack.c.l.b16 %v953
  %v986 = vunpack.c.l.b16 %v954
  %v987 = vunpack.c.l.b16 %v955
  %v988 = vunpack.c.l.b16 %v956
  %v989 = vunpack.c.l.b16 %v957
  %v990 = vpack.c.b16 %v975, %v974
  %v991 = vpack.c.b16 %v977, %v976
  %v992 = vpack.c.b16 %v979, %v978
  %v993 = vpack.c.b16 %v981, %v980
  %v994 = vpack.c.b16 %v983, %v982
  %v995 = vpack.c.b16 %v985, %v984
  %v996 = vpack.c.b16 %v987, %v986
  %v997 = vpack.c.b16 %v989, %v988
  %1006 = vmatpush.bf16.msra.mxu0 %v997
  %1007 = vmatpush.bf16.msra.mxu0 %v996
  %1008 = vmatpush.bf16.msra.mxu0 %v995
  %1009 = vmatpush.bf16.msra.mxu0 %v994
  %1010 = vmatpush.bf16.msra.mxu0 %v993
  %1011 = vmatpush.bf16.msra.mxu0 %v992
  %1012 = vmatpush.bf16.msra.mxu0 %v991
  %1013 = vmatpush.bf16.msra.mxu0 %v990
  %1014 = vmatmul.bf16.gmra.mxu0 %v938
  %v1015 = vpop.f32.mrf.mxu0
  %v1016 = vadd.f32 0.0, %v1015
  %v1017 = vpop.f32.mrf.mxu0
  %v1018 = vadd.f32 0.0, %v1017
  %1019 = vmatmul.bf16.gmra.mxu0 %v939
  %v1020 = vpop.f32.mrf.mxu0
  %v1021 = vadd.f32 0.0, %v1020
  %v1022 = vpop.f32.mrf.mxu0
  %1023 = vmatmul.bf16.gmra.mxu0 %v940
  %v1024 = vpop.f32.mrf.mxu0
  %v1025 = vadd.f32 0.0, %v1024
  %v1026 = vpop.f32.mrf.mxu0
  %v1027 = vadd.f32 0.0, %v1026
  %1028 = vmatmul.bf16.gmra.mxu0 %v941
  %v1029 = vpop.f32.mrf.mxu0
  %v1030 = vadd.f32 0.0, %v1029
  %v1031 = vpop.f32.mrf.mxu0
  %v1032 = vadd.f32 0.0, %v1031
  %1033 = vdwg.mxu0
  %v1034 = vadd.f32 %v923, %v1016
  %v1035 = vadd.f32 %v924, %v1018
  %v1036 = vadd.f32 %v925, %v1021
  %v1037 = vadd.f32 %v926, %v1025
  %v1038 = vadd.f32 %v927, %v1027
  %v1039 = vadd.f32 %v928, %v1030
  %v1040 = vadd.f32 %v929, %v1032
  %v1041 = vld [vmem:[#allocation2 + $0xd] sm:$0xff]
  %v1042 = vld [vmem:[#allocation2 + $0x15] sm:$0xff]
  %v1043 = vld [vmem:[#allocation2 + $0x1d] sm:$0xff]
  %v1044 = vld [vmem:[#allocation2 + $0x25] sm:$0xff]
  %v1045 = vld [vmem:[#allocation2 + $0x2d] sm:$0xff]
  %v1046 = vld [vmem:[#allocation2 + $0x35] sm:$0xff]
  %v1047 = vld [vmem:[#allocation2 + $0x3d] sm:$0xff]
  %v1048 = vld [vmem:[#allocation2 + $0x45] sm:$0x3]
  %v1049 = vpack.c.bf16 %v1042, %v1041
  %v1050 = vpack.c.bf16 %v1044, %v1043
  %v1051 = vpack.c.bf16 %v1046, %v1045
  %v1052 = vpack.c.bf16 %v1048, %v1047
  %v1053 = vld [vmem:[%s2 + $0x1c0] sm:$0xf]
  %v1054 = vld [vmem:[%s2 + $0x1c4] sm:$0xf]
  %v1055 = vld [vmem:[%s2 + $0x1c8] sm:$0xf]
  %v1056 = vld [vmem:[%s2 + $0x1cc] sm:$0xf]
  %v1057 = vld [vmem:[%s2 + $0x1d0] sm:$0xf]
  %v1058 = vld [vmem:[%s2 + $0x1d4] sm:$0xf]
  %v1059 = vld [vmem:[%s2 + $0x1d8] sm:$0xf]
  %v1060 = vld [vmem:[%s2 + $0x1dc] sm:$0xf]
  %v1061 = vld [vmem:[%s2 + $0x1e0] sm:$0xf]
  %v1062 = vld [vmem:[%s2 + $0x1e4] sm:$0xf]
  %v1063 = vld [vmem:[%s2 + $0x1e8] sm:$0xf]
  %v1064 = vld [vmem:[%s2 + $0x1ec] sm:$0xf]
  %v1065 = vld [vmem:[%s2 + $0x1f0] sm:$0xf]
  %v1066 = vld [vmem:[%s2 + $0x1f4] sm:$0xf]
  %v1067 = vld [vmem:[%s2 + $0x1f8] sm:$0xf]
  %v1068 = vld [vmem:[%s2 + $0x1fc] sm:$0xf]
  %v1085 = vunpack.c.l.b16 %v1053
  %v1086 = vunpack.c.l.b16 %v1054
  %v1087 = vunpack.c.l.b16 %v1055
  %v1088 = vunpack.c.l.b16 %v1056
  %v1089 = vunpack.c.l.b16 %v1057
  %v1090 = vunpack.c.l.b16 %v1058
  %v1091 = vunpack.c.l.b16 %v1059
  %v1092 = vunpack.c.l.b16 %v1060
  %v1093 = vunpack.c.l.b16 %v1061
  %v1094 = vunpack.c.l.b16 %v1062
  %v1095 = vunpack.c.l.b16 %v1063
  %v1096 = vunpack.c.l.b16 %v1064
  %v1097 = vunpack.c.l.b16 %v1065
  %v1098 = vunpack.c.l.b16 %v1066
  %v1099 = vunpack.c.l.b16 %v1067
  %v1100 = vunpack.c.l.b16 %v1068
  %v1101 = vpack.c.b16 %v1086, %v1085
  %v1102 = vpack.c.b16 %v1088, %v1087
  %v1103 = vpack.c.b16 %v1090, %v1089
  %v1104 = vpack.c.b16 %v1092, %v1091
  %v1105 = vpack.c.b16 %v1094, %v1093
  %v1106 = vpack.c.b16 %v1096, %v1095
  %v1107 = vpack.c.b16 %v1098, %v1097
  %v1108 = vpack.c.b16 %v1100, %v1099
  %1117 = vmatpush.bf16.msra.mxu0 %v1108
  %1118 = vmatpush.bf16.msra.mxu0 %v1107
  %1119 = vmatpush.bf16.msra.mxu0 %v1106
  %1120 = vmatpush.bf16.msra.mxu0 %v1105
  %1121 = vmatpush.bf16.msra.mxu0 %v1104
  %1122 = vmatpush.bf16.msra.mxu0 %v1103
  %1123 = vmatpush.bf16.msra.mxu0 %v1102
  %1124 = vmatpush.bf16.msra.mxu0 %v1101
  %1125 = vmatmul.bf16.gmra.mxu0 %v1049
  %v1126 = vpop.f32.mrf.mxu0
  %v1127 = vadd.f32 0.0, %v1126
  %v1128 = vpop.f32.mrf.mxu0
  %v1129 = vadd.f32 0.0, %v1128
  %1130 = vmatmul.bf16.gmra.mxu0 %v1050
  %v1131 = vpop.f32.mrf.mxu0
  %v1132 = vadd.f32 0.0, %v1131
  %v1133 = vpop.f32.mrf.mxu0
  %1134 = vmatmul.bf16.gmra.mxu0 %v1051
  %v1135 = vpop.f32.mrf.mxu0
  %v1136 = vadd.f32 0.0, %v1135
  %v1137 = vpop.f32.mrf.mxu0
  %v1138 = vadd.f32 0.0, %v1137
  %1139 = vmatmul.bf16.gmra.mxu0 %v1052
  %v1140 = vpop.f32.mrf.mxu0
  %v1141 = vadd.f32 0.0, %v1140
  %v1142 = vpop.f32.mrf.mxu0
  %v1143 = vadd.f32 0.0, %v1142
  %1144 = vdwg.mxu0
  %v1145 = vadd.f32 %v1034, %v1127
  %v1146 = vadd.f32 %v1035, %v1129
  %v1147 = vadd.f32 %v1036, %v1132
  %v1148 = vadd.f32 %v1037, %v1136
  %v1149 = vadd.f32 %v1038, %v1138
  %v1150 = vadd.f32 %v1039, %v1141
  %v1151 = vadd.f32 %v1040, %v1143
  %v1152 = vld [vmem:[#allocation2 + $0xe] sm:$0xff]
  %v1153 = vld [vmem:[#allocation2 + $0x16] sm:$0xff]
  %v1154 = vld [vmem:[#allocation2 + $0x1e] sm:$0xff]
  %v1155 = vld [vmem:[#allocation2 + $0x26] sm:$0xff]
  %v1156 = vld [vmem:[#allocation2 + $0x2e] sm:$0xff]
  %v1157 = vld [vmem:[#allocation2 + $0x36] sm:$0xff]
  %v1158 = vld [vmem:[#allocation2 + $0x3e] sm:$0xff]
  %v1159 = vld [vmem:[#allocation2 + $0x46] sm:$0x3]
  %v1160 = vpack.c.bf16 %v1153, %v1152
  %v1161 = vpack.c.bf16 %v1155, %v1154
  %v1162 = vpack.c.bf16 %v1157, %v1156
  %v1163 = vpack.c.bf16 %v1159, %v1158
  %v1164 = vld [vmem:[%s2 + $0x200] sm:$0xf]
  %v1165 = vld [vmem:[%s2 + $0x204] sm:$0xf]
  %v1166 = vld [vmem:[%s2 + $0x208] sm:$0xf]
  %v1167 = vld [vmem:[%s2 + $0x20c] sm:$0xf]
  %v1168 = vld [vmem:[%s2 + $0x210] sm:$0xf]
  %v1169 = vld [vmem:[%s2 + $0x214] sm:$0xf]
  %v1170 = vld [vmem:[%s2 + $0x218] sm:$0xf]
  %v1171 = vld [vmem:[%s2 + $0x21c] sm:$0xf]
  %v1172 = vld [vmem:[%s2 + $0x220] sm:$0xf]
  %v1173 = vld [vmem:[%s2 + $0x224] sm:$0xf]
  %v1174 = vld [vmem:[%s2 + $0x228] sm:$0xf]
  %v1175 = vld [vmem:[%s2 + $0x22c] sm:$0xf]
  %v1176 = vld [vmem:[%s2 + $0x230] sm:$0xf]
  %v1177 = vld [vmem:[%s2 + $0x234] sm:$0xf]
  %v1178 = vld [vmem:[%s2 + $0x238] sm:$0xf]
  %v1179 = vld [vmem:[%s2 + $0x23c] sm:$0xf]
  %v1196 = vunpack.c.l.b16 %v1164
  %v1197 = vunpack.c.l.b16 %v1165
  %v1198 = vunpack.c.l.b16 %v1166
  %v1199 = vunpack.c.l.b16 %v1167
  %v1200 = vunpack.c.l.b16 %v1168
  %v1201 = vunpack.c.l.b16 %v1169
  %v1202 = vunpack.c.l.b16 %v1170
  %v1203 = vunpack.c.l.b16 %v1171
  %v1204 = vunpack.c.l.b16 %v1172
  %v1205 = vunpack.c.l.b16 %v1173
  %v1206 = vunpack.c.l.b16 %v1174
  %v1207 = vunpack.c.l.b16 %v1175
  %v1208 = vunpack.c.l.b16 %v1176
  %v1209 = vunpack.c.l.b16 %v1177
  %v1210 = vunpack.c.l.b16 %v1178
  %v1211 = vunpack.c.l.b16 %v1179
  %v1212 = vpack.c.b16 %v1197, %v1196
  %v1213 = vpack.c.b16 %v1199, %v1198
  %v1214 = vpack.c.b16 %v1201, %v1200
  %v1215 = vpack.c.b16 %v1203, %v1202
  %v1216 = vpack.c.b16 %v1205, %v1204
  %v1217 = vpack.c.b16 %v1207, %v1206
  %v1218 = vpack.c.b16 %v1209, %v1208
  %v1219 = vpack.c.b16 %v1211, %v1210
  %1228 = vmatpush.bf16.msra.mxu0 %v1219
  %1229 = vmatpush.bf16.msra.mxu0 %v1218
  %1230 = vmatpush.bf16.msra.mxu0 %v1217
  %1231 = vmatpush.bf16.msra.mxu0 %v1216
  %1232 = vmatpush.bf16.msra.mxu0 %v1215
  %1233 = vmatpush.bf16.msra.mxu0 %v1214
  %1234 = vmatpush.bf16.msra.mxu0 %v1213
  %1235 = vmatpush.bf16.msra.mxu0 %v1212
  %1236 = vmatmul.bf16.gmra.mxu0 %v1160
  %v1237 = vpop.f32.mrf.mxu0
  %v1238 = vadd.f32 0.0, %v1237
  %v1239 = vpop.f32.mrf.mxu0
  %v1240 = vadd.f32 0.0, %v1239
  %1241 = vmatmul.bf16.gmra.mxu0 %v1161
  %v1242 = vpop.f32.mrf.mxu0
  %v1243 = vadd.f32 0.0, %v1242
  %v1244 = vpop.f32.mrf.mxu0
  %1245 = vmatmul.bf16.gmra.mxu0 %v1162
  %v1246 = vpop.f32.mrf.mxu0
  %v1247 = vadd.f32 0.0, %v1246
  %v1248 = vpop.f32.mrf.mxu0
  %v1249 = vadd.f32 0.0, %v1248
  %1250 = vmatmul.bf16.gmra.mxu0 %v1163
  %v1251 = vpop.f32.mrf.mxu0
  %v1252 = vadd.f32 0.0, %v1251
  %v1253 = vpop.f32.mrf.mxu0
  %v1254 = vadd.f32 0.0, %v1253
  %1255 = vdwg.mxu0
  %v1256 = vadd.f32 %v1145, %v1238
  %v1257 = vadd.f32 %v1146, %v1240
  %v1258 = vadd.f32 %v1147, %v1243
  %v1259 = vadd.f32 %v1148, %v1247
  %v1260 = vadd.f32 %v1149, %v1249
  %v1261 = vadd.f32 %v1150, %v1252
  %v1262 = vadd.f32 %v1151, %v1254
  %v1263 = vld [vmem:[%s10 + $0x1] sm:$0x1]
  %v1265 = vperm.slane %v1263, 0
  %v1267 = vadd.f32 %v1256, %v1265
  %v1268 = vadd.f32 %v1257, %v1265
  %v1269 = vadd.f32 %v1258, %v1265
  %v1270 = vadd.f32 %v1259, %v1265
  %v1271 = vadd.f32 %v1260, %v1265
  %v1272 = vadd.f32 %v1261, %v1265
  %v1273 = vadd.f32 %v1262, %v1265
  %v1274 = vmax.f32 %v1267, 0.0
  %v1275 = vmax.f32 %v1268, 0.0
  %v1276 = vmax.f32 %v1269, 0.0
  %v1277 = vmax.f32 %v1270, 0.0
  %v1278 = vmax.f32 %v1271, 0.0
  %v1279 = vmax.f32 %v1272, 0.0
  %v1280 = vmax.f32 %v1273, 0.0
  %1281 = vst [vmem:[#allocation3 + $0x7] sm:$0xf] %v1274
  %1282 = vst [vmem:[#allocation3 + $0x7] sm:$0xc0] %v1274
  %1283 = vst [vmem:[#allocation3 + $0xf] sm:$0x3] %v1275
  %1284 = vst [vmem:[#allocation3 + $0xf] sm:$0xf0] %v1275
  %1285 = vst [vmem:[#allocation3 + $0x17] sm:$0x3c] %v1276
  %1286 = vst [vmem:[#allocation3 + $0x27] sm:$0xf0] %v1277
  %1287 = vst [vmem:[#allocation3 + $0x2f] sm:$0x3c] %v1278
  %1288 = vst [vmem:[#allocation3 + $0x37] sm:$0xf] %v1279
  %1289 = vst [vmem:[#allocation3 + $0x37] sm:$0xc0] %v1279
  %1290 = vst [vmem:[#allocation3 + $0x3f] sm:$0x3] %v1280
  %v1291 = vld [vmem:[#allocation3] sm:$0xff]
  %v1292 = vld [vmem:[#allocation3 + $0x8] sm:$0xff]
  %v1293 = vld [vmem:[#allocation3 + $0x10] sm:$0xff]
  %v1294 = vld [vmem:[#allocation3 + $0x18] sm:$0xff]
  %v1295 = vld [vmem:[#allocation3 + $0x20] sm:$0xff]
  %v1296 = vld [vmem:[#allocation3 + $0x28] sm:$0xff]
  %v1297 = vld [vmem:[#allocation3 + $0x30] sm:$0xff]
  %v1298 = vld [vmem:[#allocation3 + $0x38] sm:$0x3]
  %v1299 = vpack.c.bf16 %v1292, %v1291
  %v1300 = vpack.c.bf16 %v1294, %v1293
  %v1301 = vpack.c.bf16 %v1296, %v1295
  %v1302 = vpack.c.bf16 %v1298, %v1297
  %v1303 = vld [vmem:[%s3] sm:$0xf]
  %v1304 = vld [vmem:[%s3 + $0x4] sm:$0xf]
  %v1305 = vld [vmem:[%s3 + $0x8] sm:$0xf]
  %v1306 = vld [vmem:[%s3 + $0xc] sm:$0xf]
  %v1307 = vld [vmem:[%s3 + $0x10] sm:$0xf]
  %v1308 = vld [vmem:[%s3 + $0x14] sm:$0xf]
  %v1309 = vld [vmem:[%s3 + $0x18] sm:$0xf]
  %v1310 = vld [vmem:[%s3 + $0x1c] sm:$0xf]
  %v1311 = vld [vmem:[%s3 + $0x20] sm:$0xf]
  %v1312 = vld [vmem:[%s3 + $0x24] sm:$0xf]
  %v1313 = vld [vmem:[%s3 + $0x28] sm:$0xf]
  %v1314 = vld [vmem:[%s3 + $0x2c] sm:$0xf]
  %v1315 = vld [vmem:[%s3 + $0x30] sm:$0xf]
  %v1316 = vld [vmem:[%s3 + $0x34] sm:$0xf]
  %v1317 = vld [vmem:[%s3 + $0x38] sm:$0xf]
  %v1318 = vld [vmem:[%s3 + $0x3c] sm:$0xf]
  %v1319 = vld [vmem:[#allocation3 + $0x1] sm:$0xff]
  %v1320 = vld [vmem:[#allocation3 + $0x9] sm:$0xff]
  %v1321 = vld [vmem:[#allocation3 + $0x11] sm:$0xff]
  %v1322 = vld [vmem:[#allocation3 + $0x19] sm:$0xff]
  %v1323 = vld [vmem:[#allocation3 + $0x21] sm:$0xff]
  %v1324 = vld [vmem:[#allocation3 + $0x29] sm:$0xff]
  %v1325 = vld [vmem:[#allocation3 + $0x31] sm:$0xff]
  %v1326 = vld [vmem:[#allocation3 + $0x39] sm:$0x3]
  %v1327 = vpack.c.bf16 %v1320, %v1319
  %v1328 = vpack.c.bf16 %v1322, %v1321
  %v1329 = vpack.c.bf16 %v1324, %v1323
  %v1330 = vpack.c.bf16 %v1326, %v1325
  %v1331 = vld [vmem:[%s3 + $0x40] sm:$0xf]
  %v1332 = vld [vmem:[%s3 + $0x44] sm:$0xf]
  %v1333 = vld [vmem:[%s3 + $0x48] sm:$0xf]
  %v1334 = vld [vmem:[%s3 + $0x4c] sm:$0xf]
  %v1335 = vld [vmem:[%s3 + $0x50] sm:$0xf]
  %v1336 = vld [vmem:[%s3 + $0x54] sm:$0xf]
  %v1337 = vld [vmem:[%s3 + $0x58] sm:$0xf]
  %v1338 = vld [vmem:[%s3 + $0x5c] sm:$0xf]
  %v1339 = vld [vmem:[%s3 + $0x60] sm:$0xf]
  %v1340 = vld [vmem:[%s3 + $0x64] sm:$0xf]
  %v1341 = vld [vmem:[%s3 + $0x68] sm:$0xf]
  %v1342 = vld [vmem:[%s3 + $0x6c] sm:$0xf]
  %v1343 = vld [vmem:[%s3 + $0x70] sm:$0xf]
  %v1344 = vld [vmem:[%s3 + $0x74] sm:$0xf]
  %v1345 = vld [vmem:[%s3 + $0x78] sm:$0xf]
  %v1346 = vld [vmem:[%s3 + $0x7c] sm:$0xf]
  %v1363 = vunpack.c.l.b16 %v1331
  %v1364 = vunpack.c.l.b16 %v1332
  %v1365 = vunpack.c.l.b16 %v1333
  %v1366 = vunpack.c.l.b16 %v1334
  %v1367 = vunpack.c.l.b16 %v1335
  %v1368 = vunpack.c.l.b16 %v1336
  %v1369 = vunpack.c.l.b16 %v1337
  %v1370 = vunpack.c.l.b16 %v1338
  %v1371 = vunpack.c.l.b16 %v1339
  %v1372 = vunpack.c.l.b16 %v1340
  %v1373 = vunpack.c.l.b16 %v1341
  %v1374 = vunpack.c.l.b16 %v1342
  %v1375 = vunpack.c.l.b16 %v1343
  %v1376 = vunpack.c.l.b16 %v1344
  %v1377 = vunpack.c.l.b16 %v1345
  %v1378 = vunpack.c.l.b16 %v1346
  %v1379 = vpack.c.b16 %v1364, %v1363
  %v1380 = vpack.c.b16 %v1366, %v1365
  %v1381 = vpack.c.b16 %v1368, %v1367
  %v1382 = vpack.c.b16 %v1370, %v1369
  %v1383 = vpack.c.b16 %v1372, %v1371
  %v1384 = vpack.c.b16 %v1374, %v1373
  %v1385 = vpack.c.b16 %v1376, %v1375
  %v1386 = vpack.c.b16 %v1378, %v1377
  %1395 = vmatpush.bf16.msra.mxu0 %v1386
  %1396 = vmatpush.bf16.msra.mxu0 %v1385
  %1397 = vmatpush.bf16.msra.mxu0 %v1384
  %1398 = vmatpush.bf16.msra.mxu0 %v1383
  %1399 = vmatpush.bf16.msra.mxu0 %v1382
  %1400 = vmatpush.bf16.msra.mxu0 %v1381
  %1401 = vmatpush.bf16.msra.mxu0 %v1380
  %1402 = vmatpush.bf16.msra.mxu0 %v1379
  %1403 = vmatmul.bf16.gmra.mxu0 %v1327
  %v1404 = vpop.f32.mrf.mxu0
  %v1405 = vadd.f32 0.0, %v1404
  %v1406 = vpop.f32.mrf.mxu0
  %v1407 = vadd.f32 0.0, %v1406
  %1408 = vmatmul.bf16.gmra.mxu0 %v1328
  %v1409 = vpop.f32.mrf.mxu0
  %v1410 = vadd.f32 0.0, %v1409
  %v1411 = vpop.f32.mrf.mxu0
  %1412 = vmatmul.bf16.gmra.mxu0 %v1329
  %v1413 = vpop.f32.mrf.mxu0
  %v1414 = vadd.f32 0.0, %v1413
  %v1415 = vpop.f32.mrf.mxu0
  %v1416 = vadd.f32 0.0, %v1415
  %1417 = vmatmul.bf16.gmra.mxu0 %v1330
  %v1418 = vpop.f32.mrf.mxu0
  %v1419 = vadd.f32 0.0, %v1418
  %v1420 = vpop.f32.mrf.mxu0
  %v1421 = vadd.f32 0.0, %v1420
  %1422 = vdwg.mxu0
  %v1439 = vunpack.c.l.b16 %v1303
  %v1440 = vunpack.c.l.b16 %v1304
  %v1441 = vunpack.c.l.b16 %v1305
  %v1442 = vunpack.c.l.b16 %v1306
  %v1443 = vunpack.c.l.b16 %v1307
  %v1444 = vunpack.c.l.b16 %v1308
  %v1445 = vunpack.c.l.b16 %v1309
  %v1446 = vunpack.c.l.b16 %v1310
  %v1447 = vunpack.c.l.b16 %v1311
  %v1448 = vunpack.c.l.b16 %v1312
  %v1449 = vunpack.c.l.b16 %v1313
  %v1450 = vunpack.c.l.b16 %v1314
  %v1451 = vunpack.c.l.b16 %v1315
  %v1452 = vunpack.c.l.b16 %v1316
  %v1453 = vunpack.c.l.b16 %v1317
  %v1454 = vunpack.c.l.b16 %v1318
  %v1455 = vpack.c.b16 %v1440, %v1439
  %v1456 = vpack.c.b16 %v1442, %v1441
  %v1457 = vpack.c.b16 %v1444, %v1443
  %v1458 = vpack.c.b16 %v1446, %v1445
  %v1459 = vpack.c.b16 %v1448, %v1447
  %v1460 = vpack.c.b16 %v1450, %v1449
  %v1461 = vpack.c.b16 %v1452, %v1451
  %v1462 = vpack.c.b16 %v1454, %v1453
  %1471 = vmatpush.bf16.msra.mxu0 %v1462
  %1472 = vmatpush.bf16.msra.mxu0 %v1461
  %1473 = vmatpush.bf16.msra.mxu0 %v1460
  %1474 = vmatpush.bf16.msra.mxu0 %v1459
  %1475 = vmatpush.bf16.msra.mxu0 %v1458
  %1476 = vmatpush.bf16.msra.mxu0 %v1457
  %1477 = vmatpush.bf16.msra.mxu0 %v1456
  %1478 = vmatpush.bf16.msra.mxu0 %v1455
  %1479 = vmatmul.bf16.gmra.mxu0 %v1299
  %v1480 = vpop.f32.mrf.mxu0
  %v1481 = vadd.f32 %v1405, %v1480
  %v1482 = vpop.f32.mrf.mxu0
  %v1483 = vadd.f32 %v1407, %v1482
  %1484 = vmatmul.bf16.gmra.mxu0 %v1300
  %v1485 = vpop.f32.mrf.mxu0
  %v1486 = vadd.f32 %v1410, %v1485
  %v1487 = vpop.f32.mrf.mxu0
  %1488 = vmatmul.bf16.gmra.mxu0 %v1301
  %v1489 = vpop.f32.mrf.mxu0
  %v1490 = vadd.f32 %v1414, %v1489
  %v1491 = vpop.f32.mrf.mxu0
  %v1492 = vadd.f32 %v1416, %v1491
  %1493 = vmatmul.bf16.gmra.mxu0 %v1302
  %v1494 = vpop.f32.mrf.mxu0
  %v1495 = vadd.f32 %v1419, %v1494
  %v1496 = vpop.f32.mrf.mxu0
  %v1497 = vadd.f32 %v1421, %v1496
  %1498 = vdwg.mxu0
  %v1499 = vld [vmem:[#allocation3 + $0x2] sm:$0xff]
  %v1500 = vld [vmem:[#allocation3 + $0xa] sm:$0xff]
  %v1501 = vld [vmem:[#allocation3 + $0x12] sm:$0xff]
  %v1502 = vld [vmem:[#allocation3 + $0x1a] sm:$0xff]
  %v1503 = vld [vmem:[#allocation3 + $0x22] sm:$0xff]
  %v1504 = vld [vmem:[#allocation3 + $0x2a] sm:$0xff]
  %v1505 = vld [vmem:[#allocation3 + $0x32] sm:$0xff]
  %v1506 = vld [vmem:[#allocation3 + $0x3a] sm:$0x3]
  %v1507 = vpack.c.bf16 %v1500, %v1499
  %v1508 = vpack.c.bf16 %v1502, %v1501
  %v1509 = vpack.c.bf16 %v1504, %v1503
  %v1510 = vpack.c.bf16 %v1506, %v1505
  %v1511 = vld [vmem:[%s3 + $0x80] sm:$0xf]
  %v1512 = vld [vmem:[%s3 + $0x84] sm:$0xf]
  %v1513 = vld [vmem:[%s3 + $0x88] sm:$0xf]
  %v1514 = vld [vmem:[%s3 + $0x8c] sm:$0xf]
  %v1515 = vld [vmem:[%s3 + $0x90] sm:$0xf]
  %v1516 = vld [vmem:[%s3 + $0x94] sm:$0xf]
  %v1517 = vld [vmem:[%s3 + $0x98] sm:$0xf]
  %v1518 = vld [vmem:[%s3 + $0x9c] sm:$0xf]
  %v1519 = vld [vmem:[%s3 + $0xa0] sm:$0xf]
  %v1520 = vld [vmem:[%s3 + $0xa4] sm:$0xf]
  %v1521 = vld [vmem:[%s3 + $0xa8] sm:$0xf]
  %v1522 = vld [vmem:[%s3 + $0xac] sm:$0xf]
  %v1523 = vld [vmem:[%s3 + $0xb0] sm:$0xf]
  %v1524 = vld [vmem:[%s3 + $0xb4] sm:$0xf]
  %v1525 = vld [vmem:[%s3 + $0xb8] sm:$0xf]
  %v1526 = vld [vmem:[%s3 + $0xbc] sm:$0xf]
  %v1543 = vunpack.c.l.b16 %v1511
  %v1544 = vunpack.c.l.b16 %v1512
  %v1545 = vunpack.c.l.b16 %v1513
  %v1546 = vunpack.c.l.b16 %v1514
  %v1547 = vunpack.c.l.b16 %v1515
  %v1548 = vunpack.c.l.b16 %v1516
  %v1549 = vunpack.c.l.b16 %v1517
  %v1550 = vunpack.c.l.b16 %v1518
  %v1551 = vunpack.c.l.b16 %v1519
  %v1552 = vunpack.c.l.b16 %v1520
  %v1553 = vunpack.c.l.b16 %v1521
  %v1554 = vunpack.c.l.b16 %v1522
  %v1555 = vunpack.c.l.b16 %v1523
  %v1556 = vunpack.c.l.b16 %v1524
  %v1557 = vunpack.c.l.b16 %v1525
  %v1558 = vunpack.c.l.b16 %v1526
  %v1559 = vpack.c.b16 %v1544, %v1543
  %v1560 = vpack.c.b16 %v1546, %v1545
  %v1561 = vpack.c.b16 %v1548, %v1547
  %v1562 = vpack.c.b16 %v1550, %v1549
  %v1563 = vpack.c.b16 %v1552, %v1551
  %v1564 = vpack.c.b16 %v1554, %v1553
  %v1565 = vpack.c.b16 %v1556, %v1555
  %v1566 = vpack.c.b16 %v1558, %v1557
  %1575 = vmatpush.bf16.msra.mxu0 %v1566
  %1576 = vmatpush.bf16.msra.mxu0 %v1565
  %1577 = vmatpush.bf16.msra.mxu0 %v1564
  %1578 = vmatpush.bf16.msra.mxu0 %v1563
  %1579 = vmatpush.bf16.msra.mxu0 %v1562
  %1580 = vmatpush.bf16.msra.mxu0 %v1561
  %1581 = vmatpush.bf16.msra.mxu0 %v1560
  %1582 = vmatpush.bf16.msra.mxu0 %v1559
  %1583 = vmatmul.bf16.gmra.mxu0 %v1507
  %v1584 = vpop.f32.mrf.mxu0
  %v1585 = vadd.f32 0.0, %v1584
  %v1586 = vpop.f32.mrf.mxu0
  %v1587 = vadd.f32 0.0, %v1586
  %1588 = vmatmul.bf16.gmra.mxu0 %v1508
  %v1589 = vpop.f32.mrf.mxu0
  %v1590 = vadd.f32 0.0, %v1589
  %v1591 = vpop.f32.mrf.mxu0
  %1592 = vmatmul.bf16.gmra.mxu0 %v1509
  %v1593 = vpop.f32.mrf.mxu0
  %v1594 = vadd.f32 0.0, %v1593
  %v1595 = vpop.f32.mrf.mxu0
  %v1596 = vadd.f32 0.0, %v1595
  %1597 = vmatmul.bf16.gmra.mxu0 %v1510
  %v1598 = vpop.f32.mrf.mxu0
  %v1599 = vadd.f32 0.0, %v1598
  %v1600 = vpop.f32.mrf.mxu0
  %v1601 = vadd.f32 0.0, %v1600
  %1602 = vdwg.mxu0
  %v1603 = vadd.f32 %v1481, %v1585
  %v1604 = vadd.f32 %v1483, %v1587
  %v1605 = vadd.f32 %v1486, %v1590
  %v1606 = vadd.f32 %v1490, %v1594
  %v1607 = vadd.f32 %v1492, %v1596
  %v1608 = vadd.f32 %v1495, %v1599
  %v1609 = vadd.f32 %v1497, %v1601
  %v1610 = vld [vmem:[#allocation3 + $0x6] sm:$0xff]
  %v1611 = vld [vmem:[#allocation3 + $0xe] sm:$0xff]
  %v1612 = vld [vmem:[#allocation3 + $0x16] sm:$0xff]
  %v1613 = vld [vmem:[#allocation3 + $0x1e] sm:$0xff]
  %v1614 = vld [vmem:[#allocation3 + $0x26] sm:$0xff]
  %v1615 = vld [vmem:[#allocation3 + $0x2e] sm:$0xff]
  %v1616 = vld [vmem:[#allocation3 + $0x36] sm:$0xff]
  %v1617 = vld [vmem:[#allocation3 + $0x3e] sm:$0x3]
  %v1618 = vpack.c.bf16 %v1611, %v1610
  %v1619 = vpack.c.bf16 %v1613, %v1612
  %v1620 = vpack.c.bf16 %v1615, %v1614
  %v1621 = vpack.c.bf16 %v1617, %v1616
  %v1622 = vld [vmem:[%s3 + $0xc0] sm:$0xf]
  %v1623 = vld [vmem:[%s3 + $0xc4] sm:$0xf]
  %v1624 = vld [vmem:[%s3 + $0xc8] sm:$0xf]
  %v1625 = vld [vmem:[%s3 + $0xcc] sm:$0xf]
  %v1626 = vld [vmem:[%s3 + $0xd0] sm:$0xf]
  %v1627 = vld [vmem:[%s3 + $0xd4] sm:$0xf]
  %v1628 = vld [vmem:[%s3 + $0xd8] sm:$0xf]
  %v1629 = vld [vmem:[%s3 + $0xdc] sm:$0xf]
  %v1630 = vld [vmem:[%s3 + $0xe0] sm:$0xf]
  %v1631 = vld [vmem:[%s3 + $0xe4] sm:$0xf]
  %v1632 = vld [vmem:[%s3 + $0xe8] sm:$0xf]
  %v1633 = vld [vmem:[%s3 + $0xec] sm:$0xf]
  %v1634 = vld [vmem:[%s3 + $0xf0] sm:$0xf]
  %v1635 = vld [vmem:[%s3 + $0xf4] sm:$0xf]
  %v1636 = vld [vmem:[%s3 + $0xf8] sm:$0xf]
  %v1637 = vld [vmem:[%s3 + $0xfc] sm:$0xf]
  %v1654 = vunpack.c.l.b16 %v1622
  %v1655 = vunpack.c.l.b16 %v1623
  %v1656 = vunpack.c.l.b16 %v1624
  %v1657 = vunpack.c.l.b16 %v1625
  %v1658 = vunpack.c.l.b16 %v1626
  %v1659 = vunpack.c.l.b16 %v1627
  %v1660 = vunpack.c.l.b16 %v1628
  %v1661 = vunpack.c.l.b16 %v1629
  %v1662 = vunpack.c.l.b16 %v1630
  %v1663 = vunpack.c.l.b16 %v1631
  %v1664 = vunpack.c.l.b16 %v1632
  %v1665 = vunpack.c.l.b16 %v1633
  %v1666 = vunpack.c.l.b16 %v1634
  %v1667 = vunpack.c.l.b16 %v1635
  %v1668 = vunpack.c.l.b16 %v1636
  %v1669 = vunpack.c.l.b16 %v1637
  %v1670 = vpack.c.b16 %v1655, %v1654
  %v1671 = vpack.c.b16 %v1657, %v1656
  %v1672 = vpack.c.b16 %v1659, %v1658
  %v1673 = vpack.c.b16 %v1661, %v1660
  %v1674 = vpack.c.b16 %v1663, %v1662
  %v1675 = vpack.c.b16 %v1665, %v1664
  %v1676 = vpack.c.b16 %v1667, %v1666
  %v1677 = vpack.c.b16 %v1669, %v1668
  %1686 = vmatpush.bf16.msra.mxu0 %v1677
  %1687 = vmatpush.bf16.msra.mxu0 %v1676
  %1688 = vmatpush.bf16.msra.mxu0 %v1675
  %1689 = vmatpush.bf16.msra.mxu0 %v1674
  %1690 = vmatpush.bf16.msra.mxu0 %v1673
  %1691 = vmatpush.bf16.msra.mxu0 %v1672
  %1692 = vmatpush.bf16.msra.mxu0 %v1671
  %1693 = vmatpush.bf16.msra.mxu0 %v1670
  %1694 = vmatmul.bf16.gmra.mxu0 %v1618
  %v1695 = vpop.f32.mrf.mxu0
  %v1696 = vadd.f32 0.0, %v1695
  %v1697 = vpop.f32.mrf.mxu0
  %v1698 = vadd.f32 0.0, %v1697
  %1699 = vmatmul.bf16.gmra.mxu0 %v1619
  %v1700 = vpop.f32.mrf.mxu0
  %v1701 = vadd.f32 0.0, %v1700
  %v1702 = vpop.f32.mrf.mxu0
  %1703 = vmatmul.bf16.gmra.mxu0 %v1620
  %v1704 = vpop.f32.mrf.mxu0
  %v1705 = vadd.f32 0.0, %v1704
  %v1706 = vpop.f32.mrf.mxu0
  %v1707 = vadd.f32 0.0, %v1706
  %1708 = vmatmul.bf16.gmra.mxu0 %v1621
  %v1709 = vpop.f32.mrf.mxu0
  %v1710 = vadd.f32 0.0, %v1709
  %v1711 = vpop.f32.mrf.mxu0
  %v1712 = vadd.f32 0.0, %v1711
  %1713 = vdwg.mxu0
  %v1714 = vadd.f32 %v1603, %v1696
  %v1715 = vadd.f32 %v1604, %v1698
  %v1716 = vadd.f32 %v1605, %v1701
  %v1717 = vadd.f32 %v1606, %v1705
  %v1718 = vadd.f32 %v1607, %v1707
  %v1719 = vadd.f32 %v1608, %v1710
  %v1720 = vadd.f32 %v1609, %v1712
  %v1721 = vld [vmem:[#allocation3 + $0x7] sm:$0xff]
  %v1722 = vld [vmem:[#allocation3 + $0xf] sm:$0xff]
  %v1723 = vld [vmem:[#allocation3 + $0x17] sm:$0xff]
  %v1724 = vld [vmem:[#allocation3 + $0x1f] sm:$0xff]
  %v1725 = vld [vmem:[#allocation3 + $0x27] sm:$0xff]
  %v1726 = vld [vmem:[#allocation3 + $0x2f] sm:$0xff]
  %v1727 = vld [vmem:[#allocation3 + $0x37] sm:$0xff]
  %v1728 = vld [vmem:[#allocation3 + $0x3f] sm:$0x3]
  %v1729 = vpack.c.bf16 %v1722, %v1721
  %v1730 = vpack.c.bf16 %v1724, %v1723
  %v1731 = vpack.c.bf16 %v1726, %v1725
  %v1732 = vpack.c.bf16 %v1728, %v1727
  %v1733 = vld [vmem:[%s3 + $0x100] sm:$0xf]
  %v1734 = vld [vmem:[%s3 + $0x104] sm:$0xf]
  %v1735 = vld [vmem:[%s3 + $0x108] sm:$0xf]
  %v1736 = vld [vmem:[%s3 + $0x10c] sm:$0xf]
  %v1737 = vld [vmem:[%s3 + $0x110] sm:$0xf]
  %v1738 = vld [vmem:[%s3 + $0x114] sm:$0xf]
  %v1739 = vld [vmem:[%s3 + $0x118] sm:$0xf]
  %v1740 = vld [vmem:[%s3 + $0x11c] sm:$0xf]
  %v1741 = vld [vmem:[%s3 + $0x120] sm:$0xf]
  %v1742 = vld [vmem:[%s3 + $0x124] sm:$0xf]
  %v1743 = vld [vmem:[%s3 + $0x128] sm:$0xf]
  %v1744 = vld [vmem:[%s3 + $0x12c] sm:$0xf]
  %v1745 = vld [vmem:[%s3 + $0x130] sm:$0xf]
  %v1746 = vld [vmem:[%s3 + $0x134] sm:$0xf]
  %v1747 = vld [vmem:[%s3 + $0x138] sm:$0xf]
  %v1748 = vld [vmem:[%s3 + $0x13c] sm:$0xf]
  %v1765 = vunpack.c.l.b16 %v1733
  %v1766 = vunpack.c.l.b16 %v1734
  %v1767 = vunpack.c.l.b16 %v1735
  %v1768 = vunpack.c.l.b16 %v1736
  %v1769 = vunpack.c.l.b16 %v1737
  %v1770 = vunpack.c.l.b16 %v1738
  %v1771 = vunpack.c.l.b16 %v1739
  %v1772 = vunpack.c.l.b16 %v1740
  %v1773 = vunpack.c.l.b16 %v1741
  %v1774 = vunpack.c.l.b16 %v1742
  %v1775 = vunpack.c.l.b16 %v1743
  %v1776 = vunpack.c.l.b16 %v1744
  %v1777 = vunpack.c.l.b16 %v1745
  %v1778 = vunpack.c.l.b16 %v1746
  %v1779 = vunpack.c.l.b16 %v1747
  %v1780 = vunpack.c.l.b16 %v1748
  %v1781 = vpack.c.b16 %v1766, %v1765
  %v1782 = vpack.c.b16 %v1768, %v1767
  %v1783 = vpack.c.b16 %v1770, %v1769
  %v1784 = vpack.c.b16 %v1772, %v1771
  %v1785 = vpack.c.b16 %v1774, %v1773
  %v1786 = vpack.c.b16 %v1776, %v1775
  %v1787 = vpack.c.b16 %v1778, %v1777
  %v1788 = vpack.c.b16 %v1780, %v1779
  %1797 = vmatpush.bf16.msra.mxu0 %v1788
  %1798 = vmatpush.bf16.msra.mxu0 %v1787
  %1799 = vmatpush.bf16.msra.mxu0 %v1786
  %1800 = vmatpush.bf16.msra.mxu0 %v1785
  %1801 = vmatpush.bf16.msra.mxu0 %v1784
  %1802 = vmatpush.bf16.msra.mxu0 %v1783
  %1803 = vmatpush.bf16.msra.mxu0 %v1782
  %1804 = vmatpush.bf16.msra.mxu0 %v1781
  %1805 = vmatmul.bf16.gmra.mxu0 %v1729
  %v1806 = vpop.f32.mrf.mxu0
  %v1807 = vadd.f32 0.0, %v1806
  %v1808 = vpop.f32.mrf.mxu0
  %v1809 = vadd.f32 0.0, %v1808
  %1810 = vmatmul.bf16.gmra.mxu0 %v1730
  %v1811 = vpop.f32.mrf.mxu0
  %v1812 = vadd.f32 0.0, %v1811
  %v1813 = vpop.f32.mrf.mxu0
  %1814 = vmatmul.bf16.gmra.mxu0 %v1731
  %v1815 = vpop.f32.mrf.mxu0
  %v1816 = vadd.f32 0.0, %v1815
  %v1817 = vpop.f32.mrf.mxu0
  %v1818 = vadd.f32 0.0, %v1817
  %1819 = vmatmul.bf16.gmra.mxu0 %v1732
  %v1820 = vpop.f32.mrf.mxu0
  %v1821 = vadd.f32 0.0, %v1820
  %v1822 = vpop.f32.mrf.mxu0
  %v1823 = vadd.f32 0.0, %v1822
  %1824 = vdwg.mxu0
  %v1825 = vadd.f32 %v1714, %v1807
  %v1826 = vadd.f32 %v1715, %v1809
  %v1827 = vadd.f32 %v1716, %v1812
  %v1828 = vadd.f32 %v1717, %v1816
  %v1829 = vadd.f32 %v1718, %v1818
  %v1830 = vadd.f32 %v1719, %v1821
  %v1831 = vadd.f32 %v1720, %v1823
  %v1832 = vld [vmem:[#allocation3 + $0x8] sm:$0xff]
  %v1833 = vld [vmem:[#allocation3 + $0x10] sm:$0xff]
  %v1834 = vld [vmem:[#allocation3 + $0x18] sm:$0xff]
  %v1835 = vld [vmem:[#allocation3 + $0x20] sm:$0xff]
  %v1836 = vld [vmem:[#allocation3 + $0x28] sm:$0xff]
  %v1837 = vld [vmem:[#allocation3 + $0x30] sm:$0xff]
  %v1838 = vld [vmem:[#allocation3 + $0x38] sm:$0xff]
  %v1839 = vld [vmem:[#allocation3 + $0x40] sm:$0x3]
  %v1840 = vpack.c.bf16 %v1833, %v1832
  %v1841 = vpack.c.bf16 %v1835, %v1834
  %v1842 = vpack.c.bf16 %v1837, %v1836
  %v1843 = vpack.c.bf16 %v1839, %v1838
  %v1844 = vld [vmem:[%s3 + $0x140] sm:$0xf]
  %v1845 = vld [vmem:[%s3 + $0x144] sm:$0xf]
  %v1846 = vld [vmem:[%s3 + $0x148] sm:$0xf]
  %v1847 = vld [vmem:[%s3 + $0x14c] sm:$0xf]
  %v1848 = vld [vmem:[%s3 + $0x150] sm:$0xf]
  %v1849 = vld [vmem:[%s3 + $0x154] sm:$0xf]
  %v1850 = vld [vmem:[%s3 + $0x158] sm:$0xf]
  %v1851 = vld [vmem:[%s3 + $0x15c] sm:$0xf]
  %v1852 = vld [vmem:[%s3 + $0x160] sm:$0xf]
  %v1853 = vld [vmem:[%s3 + $0x164] sm:$0xf]
  %v1854 = vld [vmem:[%s3 + $0x168] sm:$0xf]
  %v1855 = vld [vmem:[%s3 + $0x16c] sm:$0xf]
  %v1856 = vld [vmem:[%s3 + $0x170] sm:$0xf]
  %v1857 = vld [vmem:[%s3 + $0x174] sm:$0xf]
  %v1858 = vld [vmem:[%s3 + $0x178] sm:$0xf]
  %v1859 = vld [vmem:[%s3 + $0x17c] sm:$0xf]
  %v1876 = vunpack.c.l.b16 %v1844
  %v1877 = vunpack.c.l.b16 %v1845
  %v1878 = vunpack.c.l.b16 %v1846
  %v1879 = vunpack.c.l.b16 %v1847
  %v1880 = vunpack.c.l.b16 %v1848
  %v1881 = vunpack.c.l.b16 %v1849
  %v1882 = vunpack.c.l.b16 %v1850
  %v1883 = vunpack.c.l.b16 %v1851
  %v1884 = vunpack.c.l.b16 %v1852
  %v1885 = vunpack.c.l.b16 %v1853
  %v1886 = vunpack.c.l.b16 %v1854
  %v1887 = vunpack.c.l.b16 %v1855
  %v1888 = vunpack.c.l.b16 %v1856
  %v1889 = vunpack.c.l.b16 %v1857
  %v1890 = vunpack.c.l.b16 %v1858
  %v1891 = vunpack.c.l.b16 %v1859
  %v1892 = vpack.c.b16 %v1877, %v1876
  %v1893 = vpack.c.b16 %v1879, %v1878
  %v1894 = vpack.c.b16 %v1881, %v1880
  %v1895 = vpack.c.b16 %v1883, %v1882
  %v1896 = vpack.c.b16 %v1885, %v1884
  %v1897 = vpack.c.b16 %v1887, %v1886
  %v1898 = vpack.c.b16 %v1889, %v1888
  %v1899 = vpack.c.b16 %v1891, %v1890
  %1908 = vmatpush.bf16.msra.mxu0 %v1899
  %1909 = vmatpush.bf16.msra.mxu0 %v1898
  %1910 = vmatpush.bf16.msra.mxu0 %v1897
  %1911 = vmatpush.bf16.msra.mxu0 %v1896
  %1912 = vmatpush.bf16.msra.mxu0 %v1895
  %1913 = vmatpush.bf16.msra.mxu0 %v1894
  %1914 = vmatpush.bf16.msra.mxu0 %v1893
  %1915 = vmatpush.bf16.msra.mxu0 %v1892
  %1916 = vmatmul.bf16.gmra.mxu0 %v1840
  %v1917 = vpop.f32.mrf.mxu0
  %v1918 = vadd.f32 0.0, %v1917
  %v1919 = vpop.f32.mrf.mxu0
  %v1920 = vadd.f32 0.0, %v1919
  %1921 = vmatmul.bf16.gmra.mxu0 %v1841
  %v1922 = vpop.f32.mrf.mxu0
  %v1923 = vadd.f32 0.0, %v1922
  %v1924 = vpop.f32.mrf.mxu0
  %1925 = vmatmul.bf16.gmra.mxu0 %v1842
  %v1926 = vpop.f32.mrf.mxu0
  %v1927 = vadd.f32 0.0, %v1926
  %v1928 = vpop.f32.mrf.mxu0
  %v1929 = vadd.f32 0.0, %v1928
  %1930 = vmatmul.bf16.gmra.mxu0 %v1843
  %v1931 = vpop.f32.mrf.mxu0
  %v1932 = vadd.f32 0.0, %v1931
  %v1933 = vpop.f32.mrf.mxu0
  %v1934 = vadd.f32 0.0, %v1933
  %1935 = vdwg.mxu0
  %v1936 = vadd.f32 %v1825, %v1918
  %v1937 = vadd.f32 %v1826, %v1920
  %v1938 = vadd.f32 %v1827, %v1923
  %v1939 = vadd.f32 %v1828, %v1927
  %v1940 = vadd.f32 %v1829, %v1929
  %v1941 = vadd.f32 %v1830, %v1932
  %v1942 = vadd.f32 %v1831, %v1934
  %v1943 = vld [vmem:[#allocation3 + $0xc] sm:$0xff]
  %v1944 = vld [vmem:[#allocation3 + $0x14] sm:$0xff]
  %v1945 = vld [vmem:[#allocation3 + $0x1c] sm:$0xff]
  %v1946 = vld [vmem:[#allocation3 + $0x24] sm:$0xff]
  %v1947 = vld [vmem:[#allocation3 + $0x2c] sm:$0xff]
  %v1948 = vld [vmem:[#allocation3 + $0x34] sm:$0xff]
  %v1949 = vld [vmem:[#allocation3 + $0x3c] sm:$0xff]
  %v1950 = vld [vmem:[#allocation3 + $0x44] sm:$0x3]
  %v1951 = vpack.c.bf16 %v1944, %v1943
  %v1952 = vpack.c.bf16 %v1946, %v1945
  %v1953 = vpack.c.bf16 %v1948, %v1947
  %v1954 = vpack.c.bf16 %v1950, %v1949
  %v1955 = vld [vmem:[%s3 + $0x180] sm:$0xf]
  %v1956 = vld [vmem:[%s3 + $0x184] sm:$0xf]
  %v1957 = vld [vmem:[%s3 + $0x188] sm:$0xf]
  %v1958 = vld [vmem:[%s3 + $0x18c] sm:$0xf]
  %v1959 = vld [vmem:[%s3 + $0x190] sm:$0xf]
  %v1960 = vld [vmem:[%s3 + $0x194] sm:$0xf]
  %v1961 = vld [vmem:[%s3 + $0x198] sm:$0xf]
  %v1962 = vld [vmem:[%s3 + $0x19c] sm:$0xf]
  %v1963 = vld [vmem:[%s3 + $0x1a0] sm:$0xf]
  %v1964 = vld [vmem:[%s3 + $0x1a4] sm:$0xf]
  %v1965 = vld [vmem:[%s3 + $0x1a8] sm:$0xf]
  %v1966 = vld [vmem:[%s3 + $0x1ac] sm:$0xf]
  %v1967 = vld [vmem:[%s3 + $0x1b0] sm:$0xf]
  %v1968 = vld [vmem:[%s3 + $0x1b4] sm:$0xf]
  %v1969 = vld [vmem:[%s3 + $0x1b8] sm:$0xf]
  %v1970 = vld [vmem:[%s3 + $0x1bc] sm:$0xf]
  %v1987 = vunpack.c.l.b16 %v1955
  %v1988 = vunpack.c.l.b16 %v1956
  %v1989 = vunpack.c.l.b16 %v1957
  %v1990 = vunpack.c.l.b16 %v1958
  %v1991 = vunpack.c.l.b16 %v1959
  %v1992 = vunpack.c.l.b16 %v1960
  %v1993 = vunpack.c.l.b16 %v1961
  %v1994 = vunpack.c.l.b16 %v1962
  %v1995 = vunpack.c.l.b16 %v1963
  %v1996 = vunpack.c.l.b16 %v1964
  %v1997 = vunpack.c.l.b16 %v1965
  %v1998 = vunpack.c.l.b16 %v1966
  %v1999 = vunpack.c.l.b16 %v1967
  %v2000 = vunpack.c.l.b16 %v1968
  %v2001 = vunpack.c.l.b16 %v1969
  %v2002 = vunpack.c.l.b16 %v1970
  %v2003 = vpack.c.b16 %v1988, %v1987
  %v2004 = vpack.c.b16 %v1990, %v1989
  %v2005 = vpack.c.b16 %v1992, %v1991
  %v2006 = vpack.c.b16 %v1994, %v1993
  %v2007 = vpack.c.b16 %v1996, %v1995
  %v2008 = vpack.c.b16 %v1998, %v1997
  %v2009 = vpack.c.b16 %v2000, %v1999
  %v2010 = vpack.c.b16 %v2002, %v2001
  %2019 = vmatpush.bf16.msra.mxu0 %v2010
  %2020 = vmatpush.bf16.msra.mxu0 %v2009
  %2021 = vmatpush.bf16.msra.mxu0 %v2008
  %2022 = vmatpush.bf16.msra.mxu0 %v2007
  %2023 = vmatpush.bf16.msra.mxu0 %v2006
  %2024 = vmatpush.bf16.msra.mxu0 %v2005
  %2025 = vmatpush.bf16.msra.mxu0 %v2004
  %2026 = vmatpush.bf16.msra.mxu0 %v2003
  %2027 = vmatmul.bf16.gmra.mxu0 %v1951
  %v2028 = vpop.f32.mrf.mxu0
  %v2029 = vadd.f32 0.0, %v2028
  %v2030 = vpop.f32.mrf.mxu0
  %v2031 = vadd.f32 0.0, %v2030
  %2032 = vmatmul.bf16.gmra.mxu0 %v1952
  %v2033 = vpop.f32.mrf.mxu0
  %v2034 = vadd.f32 0.0, %v2033
  %v2035 = vpop.f32.mrf.mxu0
  %2036 = vmatmul.bf16.gmra.mxu0 %v1953
  %v2037 = vpop.f32.mrf.mxu0
  %v2038 = vadd.f32 0.0, %v2037
  %v2039 = vpop.f32.mrf.mxu0
  %v2040 = vadd.f32 0.0, %v2039
  %2041 = vmatmul.bf16.gmra.mxu0 %v1954
  %v2042 = vpop.f32.mrf.mxu0
  %v2043 = vadd.f32 0.0, %v2042
  %v2044 = vpop.f32.mrf.mxu0
  %v2045 = vadd.f32 0.0, %v2044
  %2046 = vdwg.mxu0
  %v2047 = vadd.f32 %v1936, %v2029
  %v2048 = vadd.f32 %v1937, %v2031
  %v2049 = vadd.f32 %v1938, %v2034
  %v2050 = vadd.f32 %v1939, %v2038
  %v2051 = vadd.f32 %v1940, %v2040
  %v2052 = vadd.f32 %v1941, %v2043
  %v2053 = vadd.f32 %v1942, %v2045
  %v2054 = vld [vmem:[#allocation3 + $0xd] sm:$0xff]
  %v2055 = vld [vmem:[#allocation3 + $0x15] sm:$0xff]
  %v2056 = vld [vmem:[#allocation3 + $0x1d] sm:$0xff]
  %v2057 = vld [vmem:[#allocation3 + $0x25] sm:$0xff]
  %v2058 = vld [vmem:[#allocation3 + $0x2d] sm:$0xff]
  %v2059 = vld [vmem:[#allocation3 + $0x35] sm:$0xff]
  %v2060 = vld [vmem:[#allocation3 + $0x3d] sm:$0xff]
  %v2061 = vld [vmem:[#allocation3 + $0x45] sm:$0x3]
  %v2062 = vpack.c.bf16 %v2055, %v2054
  %v2063 = vpack.c.bf16 %v2057, %v2056
  %v2064 = vpack.c.bf16 %v2059, %v2058
  %v2065 = vpack.c.bf16 %v2061, %v2060
  %v2066 = vld [vmem:[%s3 + $0x1c0] sm:$0xf]
  %v2067 = vld [vmem:[%s3 + $0x1c4] sm:$0xf]
  %v2068 = vld [vmem:[%s3 + $0x1c8] sm:$0xf]
  %v2069 = vld [vmem:[%s3 + $0x1cc] sm:$0xf]
  %v2070 = vld [vmem:[%s3 + $0x1d0] sm:$0xf]
  %v2071 = vld [vmem:[%s3 + $0x1d4] sm:$0xf]
  %v2072 = vld [vmem:[%s3 + $0x1d8] sm:$0xf]
  %v2073 = vld [vmem:[%s3 + $0x1dc] sm:$0xf]
  %v2074 = vld [vmem:[%s3 + $0x1e0] sm:$0xf]
  %v2075 = vld [vmem:[%s3 + $0x1e4] sm:$0xf]
  %v2076 = vld [vmem:[%s3 + $0x1e8] sm:$0xf]
  %v2077 = vld [vmem:[%s3 + $0x1ec] sm:$0xf]
  %v2078 = vld [vmem:[%s3 + $0x1f0] sm:$0xf]
  %v2079 = vld [vmem:[%s3 + $0x1f4] sm:$0xf]
  %v2080 = vld [vmem:[%s3 + $0x1f8] sm:$0xf]
  %v2081 = vld [vmem:[%s3 + $0x1fc] sm:$0xf]
  %v2098 = vunpack.c.l.b16 %v2066
  %v2099 = vunpack.c.l.b16 %v2067
  %v2100 = vunpack.c.l.b16 %v2068
  %v2101 = vunpack.c.l.b16 %v2069
  %v2102 = vunpack.c.l.b16 %v2070
  %v2103 = vunpack.c.l.b16 %v2071
  %v2104 = vunpack.c.l.b16 %v2072
  %v2105 = vunpack.c.l.b16 %v2073
  %v2106 = vunpack.c.l.b16 %v2074
  %v2107 = vunpack.c.l.b16 %v2075
  %v2108 = vunpack.c.l.b16 %v2076
  %v2109 = vunpack.c.l.b16 %v2077
  %v2110 = vunpack.c.l.b16 %v2078
  %v2111 = vunpack.c.l.b16 %v2079
  %v2112 = vunpack.c.l.b16 %v2080
  %v2113 = vunpack.c.l.b16 %v2081
  %v2114 = vpack.c.b16 %v2099, %v2098
  %v2115 = vpack.c.b16 %v2101, %v2100
  %v2116 = vpack.c.b16 %v2103, %v2102
  %v2117 = vpack.c.b16 %v2105, %v2104
  %v2118 = vpack.c.b16 %v2107, %v2106
  %v2119 = vpack.c.b16 %v2109, %v2108
  %v2120 = vpack.c.b16 %v2111, %v2110
  %v2121 = vpack.c.b16 %v2113, %v2112
  %2130 = vmatpush.bf16.msra.mxu0 %v2121
  %2131 = vmatpush.bf16.msra.mxu0 %v2120
  %2132 = vmatpush.bf16.msra.mxu0 %v2119
  %2133 = vmatpush.bf16.msra.mxu0 %v2118
  %2134 = vmatpush.bf16.msra.mxu0 %v2117
  %2135 = vmatpush.bf16.msra.mxu0 %v2116
  %2136 = vmatpush.bf16.msra.mxu0 %v2115
  %2137 = vmatpush.bf16.msra.mxu0 %v2114
  %2138 = vmatmul.bf16.gmra.mxu0 %v2062
  %v2139 = vpop.f32.mrf.mxu0
  %v2140 = vadd.f32 0.0, %v2139
  %v2141 = vpop.f32.mrf.mxu0
  %v2142 = vadd.f32 0.0, %v2141
  %2143 = vmatmul.bf16.gmra.mxu0 %v2063
  %v2144 = vpop.f32.mrf.mxu0
  %v2145 = vadd.f32 0.0, %v2144
  %v2146 = vpop.f32.mrf.mxu0
  %2147 = vmatmul.bf16.gmra.mxu0 %v2064
  %v2148 = vpop.f32.mrf.mxu0
  %v2149 = vadd.f32 0.0, %v2148
  %v2150 = vpop.f32.mrf.mxu0
  %v2151 = vadd.f32 0.0, %v2150
  %2152 = vmatmul.bf16.gmra.mxu0 %v2065
  %v2153 = vpop.f32.mrf.mxu0
  %v2154 = vadd.f32 0.0, %v2153
  %v2155 = vpop.f32.mrf.mxu0
  %v2156 = vadd.f32 0.0, %v2155
  %2157 = vdwg.mxu0
  %v2158 = vadd.f32 %v2047, %v2140
  %v2159 = vadd.f32 %v2048, %v2142
  %v2160 = vadd.f32 %v2049, %v2145
  %v2161 = vadd.f32 %v2050, %v2149
  %v2162 = vadd.f32 %v2051, %v2151
  %v2163 = vadd.f32 %v2052, %v2154
  %v2164 = vadd.f32 %v2053, %v2156
  %v2165 = vld [vmem:[#allocation3 + $0xe] sm:$0xff]
  %v2166 = vld [vmem:[#allocation3 + $0x16] sm:$0xff]
  %v2167 = vld [vmem:[#allocation3 + $0x1e] sm:$0xff]
  %v2168 = vld [vmem:[#allocation3 + $0x26] sm:$0xff]
  %v2169 = vld [vmem:[#allocation3 + $0x2e] sm:$0xff]
  %v2170 = vld [vmem:[#allocation3 + $0x36] sm:$0xff]
  %v2171 = vld [vmem:[#allocation3 + $0x3e] sm:$0xff]
  %v2172 = vld [vmem:[#allocation3 + $0x46] sm:$0x3]
  %v2173 = vpack.c.bf16 %v2166, %v2165
  %v2174 = vpack.c.bf16 %v2168, %v2167
  %v2175 = vpack.c.bf16 %v2170, %v2169
  %v2176 = vpack.c.bf16 %v2172, %v2171
  %v2177 = vld [vmem:[%s3 + $0x200] sm:$0xf]
  %v2178 = vld [vmem:[%s3 + $0x204] sm:$0xf]
  %v2179 = vld [vmem:[%s3 + $0x208] sm:$0xf]
  %v2180 = vld [vmem:[%s3 + $0x20c] sm:$0xf]
  %v2181 = vld [vmem:[%s3 + $0x210] sm:$0xf]
  %v2182 = vld [vmem:[%s3 + $0x214] sm:$0xf]
  %v2183 = vld [vmem:[%s3 + $0x218] sm:$0xf]
  %v2184 = vld [vmem:[%s3 + $0x21c] sm:$0xf]
  %v2185 = vld [vmem:[%s3 + $0x220] sm:$0xf]
  %v2186 = vld [vmem:[%s3 + $0x224] sm:$0xf]
  %v2187 = vld [vmem:[%s3 + $0x228] sm:$0xf]
  %v2188 = vld [vmem:[%s3 + $0x22c] sm:$0xf]
  %v2189 = vld [vmem:[%s3 + $0x230] sm:$0xf]
  %v2190 = vld [vmem:[%s3 + $0x234] sm:$0xf]
  %v2191 = vld [vmem:[%s3 + $0x238] sm:$0xf]
  %v2192 = vld [vmem:[%s3 + $0x23c] sm:$0xf]
  %v2209 = vunpack.c.l.b16 %v2177
  %v2210 = vunpack.c.l.b16 %v2178
  %v2211 = vunpack.c.l.b16 %v2179
  %v2212 = vunpack.c.l.b16 %v2180
  %v2213 = vunpack.c.l.b16 %v2181
  %v2214 = vunpack.c.l.b16 %v2182
  %v2215 = vunpack.c.l.b16 %v2183
  %v2216 = vunpack.c.l.b16 %v2184
  %v2217 = vunpack.c.l.b16 %v2185
  %v2218 = vunpack.c.l.b16 %v2186
  %v2219 = vunpack.c.l.b16 %v2187
  %v2220 = vunpack.c.l.b16 %v2188
  %v2221 = vunpack.c.l.b16 %v2189
  %v2222 = vunpack.c.l.b16 %v2190
  %v2223 = vunpack.c.l.b16 %v2191
  %v2224 = vunpack.c.l.b16 %v2192
  %v2225 = vpack.c.b16 %v2210, %v2209
  %v2226 = vpack.c.b16 %v2212, %v2211
  %v2227 = vpack.c.b16 %v2214, %v2213
  %v2228 = vpack.c.b16 %v2216, %v2215
  %v2229 = vpack.c.b16 %v2218, %v2217
  %v2230 = vpack.c.b16 %v2220, %v2219
  %v2231 = vpack.c.b16 %v2222, %v2221
  %v2232 = vpack.c.b16 %v2224, %v2223
  %2241 = vmatpush.bf16.msra.mxu0 %v2232
  %2242 = vmatpush.bf16.msra.mxu0 %v2231
  %2243 = vmatpush.bf16.msra.mxu0 %v2230
  %2244 = vmatpush.bf16.msra.mxu0 %v2229
  %2245 = vmatpush.bf16.msra.mxu0 %v2228
  %2246 = vmatpush.bf16.msra.mxu0 %v2227
  %2247 = vmatpush.bf16.msra.mxu0 %v2226
  %2248 = vmatpush.bf16.msra.mxu0 %v2225
  %2249 = vmatmul.bf16.gmra.mxu0 %v2173
  %v2250 = vpop.f32.mrf.mxu0
  %v2251 = vadd.f32 0.0, %v2250
  %v2252 = vpop.f32.mrf.mxu0
  %v2253 = vadd.f32 0.0, %v2252
  %2254 = vmatmul.bf16.gmra.mxu0 %v2174
  %v2255 = vpop.f32.mrf.mxu0
  %v2256 = vadd.f32 0.0, %v2255
  %v2257 = vpop.f32.mrf.mxu0
  %2258 = vmatmul.bf16.gmra.mxu0 %v2175
  %v2259 = vpop.f32.mrf.mxu0
  %v2260 = vadd.f32 0.0, %v2259
  %v2261 = vpop.f32.mrf.mxu0
  %v2262 = vadd.f32 0.0, %v2261
  %2263 = vmatmul.bf16.gmra.mxu0 %v2176
  %v2264 = vpop.f32.mrf.mxu0
  %v2265 = vadd.f32 0.0, %v2264
  %v2266 = vpop.f32.mrf.mxu0
  %v2267 = vadd.f32 0.0, %v2266
  %2268 = vdwg.mxu0
  %v2269 = vadd.f32 %v2158, %v2251
  %v2270 = vadd.f32 %v2159, %v2253
  %v2271 = vadd.f32 %v2160, %v2256
  %v2272 = vadd.f32 %v2161, %v2260
  %v2273 = vadd.f32 %v2162, %v2262
  %v2274 = vadd.f32 %v2163, %v2265
  %v2275 = vadd.f32 %v2164, %v2267
  %v2276 = vld [vmem:[#allocation2 + $0x7] sm:$0xff]
  %v2277 = vld [vmem:[#allocation2 + $0xf] sm:$0xff]
  %v2278 = vld [vmem:[#allocation2 + $0x17] sm:$0xff]
  %v2279 = vld [vmem:[#allocation2 + $0x27] sm:$0xff]
  %v2280 = vld [vmem:[#allocation2 + $0x2f] sm:$0xff]
  %v2281 = vld [vmem:[#allocation2 + $0x37] sm:$0xff]
  %v2282 = vld [vmem:[#allocation2 + $0x3f] sm:$0x3]
  %v2283 = vadd.f32 %v2276, %v2269
  %v2284 = vadd.f32 %v2277, %v2270
  %v2285 = vadd.f32 %v2278, %v2271
  %v2286 = vadd.f32 %v2279, %v2272
  %v2287 = vadd.f32 %v2280, %v2273
  %v2288 = vadd.f32 %v2281, %v2274
  %v2289 = vadd.f32 %v2282, %v2275
  %v2290 = vld [vmem:[%s10 + $0x2] sm:$0x1]
  %v2292 = vperm.slane %v2290, 0
  %v2294 = vadd.f32 %v2283, %v2292
  %v2295 = vadd.f32 %v2284, %v2292
  %v2296 = vadd.f32 %v2285, %v2292
  %v2297 = vadd.f32 %v2286, %v2292
  %v2298 = vadd.f32 %v2287, %v2292
  %v2299 = vadd.f32 %v2288, %v2292
  %v2300 = vadd.f32 %v2289, %v2292
  %v2301 = vmax.f32 %v2294, 0.0
  %v2302 = vmax.f32 %v2295, 0.0
  %v2303 = vmax.f32 %v2296, 0.0
  %v2304 = vmax.f32 %v2297, 0.0
  %v2305 = vmax.f32 %v2298, 0.0
  %v2306 = vmax.f32 %v2299, 0.0
  %v2307 = vmax.f32 %v2300, 0.0
  %2308 = vst [vmem:[#allocation2 + $0x7] sm:$0xf] %v2301
  %2309 = vst [vmem:[#allocation2 + $0x7] sm:$0xc0] %v2301
  %2310 = vst [vmem:[#allocation2 + $0xf] sm:$0x3] %v2302
  %2311 = vst [vmem:[#allocation2 + $0xf] sm:$0xf0] %v2302
  %2312 = vst [vmem:[#allocation2 + $0x17] sm:$0x3c] %v2303
  %2313 = vst [vmem:[#allocation2 + $0x27] sm:$0xf0] %v2304
  %2314 = vst [vmem:[#allocation2 + $0x2f] sm:$0x3c] %v2305
  %2315 = vst [vmem:[#allocation2 + $0x37] sm:$0xf] %v2306
  %2316 = vst [vmem:[#allocation2 + $0x37] sm:$0xc0] %v2306
  %2317 = vst [vmem:[#allocation2 + $0x3f] sm:$0x3] %v2307
  %v2318 = vld [vmem:[#allocation2] sm:$0xff]
  %v2319 = vld [vmem:[#allocation2 + $0x8] sm:$0xff]
  %v2320 = vld [vmem:[#allocation2 + $0x10] sm:$0xff]
  %v2321 = vld [vmem:[#allocation2 + $0x18] sm:$0xff]
  %v2322 = vld [vmem:[#allocation2 + $0x20] sm:$0xff]
  %v2323 = vld [vmem:[#allocation2 + $0x28] sm:$0xff]
  %v2324 = vld [vmem:[#allocation2 + $0x30] sm:$0x7]
  %v2325 = vpack.c.bf16 %v2319, %v2318
  %v2326 = vpack.c.bf16 %v2321, %v2320
  %v2327 = vpack.c.bf16 %v2323, %v2322
  %v2328 = vpack.c.bf16 %v2324, %v2324
  %v2329 = vld [vmem:[%s4] sm:$0xff]
  %v2330 = vld [vmem:[%s4 + $0x8] sm:$0xff]
  %v2331 = vld [vmem:[%s4 + $0x10] sm:$0xff]
  %v2332 = vld [vmem:[%s4 + $0x18] sm:$0xff]
  %v2333 = vld [vmem:[%s4 + $0x20] sm:$0xff]
  %v2334 = vld [vmem:[%s4 + $0x28] sm:$0xff]
  %v2335 = vld [vmem:[%s4 + $0x30] sm:$0xff]
  %v2336 = vld [vmem:[%s4 + $0x38] sm:$0xff]
  %v2337 = vld [vmem:[%s4 + $0x40] sm:$0xff]
  %v2338 = vld [vmem:[%s4 + $0x48] sm:$0xff]
  %v2339 = vld [vmem:[%s4 + $0x50] sm:$0xff]
  %v2340 = vld [vmem:[%s4 + $0x58] sm:$0xff]
  %v2341 = vld [vmem:[%s4 + $0x60] sm:$0xff]
  %v2342 = vld [vmem:[%s4 + $0x68] sm:$0xff]
  %v2343 = vld [vmem:[%s4 + $0x70] sm:$0xff]
  %v2344 = vld [vmem:[%s4 + $0x78] sm:$0xff]
  %v2345 = vld [vmem:[#allocation2 + $0x1] sm:$0xff]
  %v2346 = vld [vmem:[#allocation2 + $0x9] sm:$0xff]
  %v2347 = vld [vmem:[#allocation2 + $0x11] sm:$0xff]
  %v2348 = vld [vmem:[#allocation2 + $0x19] sm:$0xff]
  %v2349 = vld [vmem:[#allocation2 + $0x21] sm:$0xff]
  %v2350 = vld [vmem:[#allocation2 + $0x29] sm:$0xff]
  %v2351 = vld [vmem:[#allocation2 + $0x31] sm:$0x7]
  %v2352 = vpack.c.bf16 %v2346, %v2345
  %v2353 = vpack.c.bf16 %v2348, %v2347
  %v2354 = vpack.c.bf16 %v2350, %v2349
  %v2355 = vpack.c.bf16 %v2351, %v2351
  %v2356 = vld [vmem:[%s4 + $0x80] sm:$0xff]
  %v2357 = vld [vmem:[%s4 + $0x88] sm:$0xff]
  %v2358 = vld [vmem:[%s4 + $0x90] sm:$0xff]
  %v2359 = vld [vmem:[%s4 + $0x98] sm:$0xff]
  %v2360 = vld [vmem:[%s4 + $0xa0] sm:$0xff]
  %v2361 = vld [vmem:[%s4 + $0xa8] sm:$0xff]
  %v2362 = vld [vmem:[%s4 + $0xb0] sm:$0xff]
  %v2363 = vld [vmem:[%s4 + $0xb8] sm:$0xff]
  %v2364 = vld [vmem:[%s4 + $0xc0] sm:$0xff]
  %v2365 = vld [vmem:[%s4 + $0xc8] sm:$0xff]
  %v2366 = vld [vmem:[%s4 + $0xd0] sm:$0xff]
  %v2367 = vld [vmem:[%s4 + $0xd8] sm:$0xff]
  %v2368 = vld [vmem:[%s4 + $0xe0] sm:$0xff]
  %v2369 = vld [vmem:[%s4 + $0xe8] sm:$0xff]
  %v2370 = vld [vmem:[%s4 + $0xf0] sm:$0xff]
  %v2371 = vld [vmem:[%s4 + $0xf8] sm:$0xff]
  %v2388 = vunpack.c.l.b16 %v2356
  %v2389 = vunpack.c.h.b16 %v2356
  %v2390 = vunpack.c.l.b16 %v2357
  %v2391 = vunpack.c.h.b16 %v2357
  %v2392 = vunpack.c.l.b16 %v2358
  %v2393 = vunpack.c.h.b16 %v2358
  %v2394 = vunpack.c.l.b16 %v2359
  %v2395 = vunpack.c.h.b16 %v2359
  %v2396 = vunpack.c.l.b16 %v2360
  %v2397 = vunpack.c.h.b16 %v2360
  %v2398 = vunpack.c.l.b16 %v2361
  %v2399 = vunpack.c.h.b16 %v2361
  %v2400 = vunpack.c.l.b16 %v2362
  %v2401 = vunpack.c.h.b16 %v2362
  %v2402 = vunpack.c.l.b16 %v2363
  %v2403 = vunpack.c.h.b16 %v2363
  %v2404 = vunpack.c.l.b16 %v2364
  %v2405 = vunpack.c.h.b16 %v2364
  %v2406 = vunpack.c.l.b16 %v2365
  %v2407 = vunpack.c.h.b16 %v2365
  %v2408 = vunpack.c.l.b16 %v2366
  %v2409 = vunpack.c.h.b16 %v2366
  %v2410 = vunpack.c.l.b16 %v2367
  %v2411 = vunpack.c.h.b16 %v2367
  %v2412 = vunpack.c.l.b16 %v2368
  %v2413 = vunpack.c.h.b16 %v2368
  %v2414 = vunpack.c.l.b16 %v2369
  %v2415 = vunpack.c.h.b16 %v2369
  %v2416 = vunpack.c.l.b16 %v2370
  %v2417 = vunpack.c.h.b16 %v2370
  %v2418 = vunpack.c.l.b16 %v2371
  %v2419 = vunpack.c.h.b16 %v2371
  %v2420 = vpack.c.b16 %v2390, %v2388
  %v2421 = vpack.c.b16 %v2391, %v2389
  %v2422 = vpack.c.b16 %v2394, %v2392
  %v2423 = vpack.c.b16 %v2395, %v2393
  %v2424 = vpack.c.b16 %v2398, %v2396
  %v2425 = vpack.c.b16 %v2399, %v2397
  %v2426 = vpack.c.b16 %v2402, %v2400
  %v2427 = vpack.c.b16 %v2403, %v2401
  %v2428 = vpack.c.b16 %v2406, %v2404
  %v2429 = vpack.c.b16 %v2407, %v2405
  %v2430 = vpack.c.b16 %v2410, %v2408
  %v2431 = vpack.c.b16 %v2411, %v2409
  %v2432 = vpack.c.b16 %v2414, %v2412
  %v2433 = vpack.c.b16 %v2415, %v2413
  %v2434 = vpack.c.b16 %v2418, %v2416
  %v2435 = vpack.c.b16 %v2419, %v2417
  %2452 = vmatpush.bf16.msra.mxu0 %v2434
  %2453 = vmatpush.bf16.msra.mxu0 %v2432
  %2454 = vmatpush.bf16.msra.mxu0 %v2430
  %2455 = vmatpush.bf16.msra.mxu0 %v2428
  %2456 = vmatpush.bf16.msra.mxu0 %v2426
  %2457 = vmatpush.bf16.msra.mxu0 %v2424
  %2458 = vmatpush.bf16.msra.mxu0 %v2422
  %2459 = vmatpush.bf16.msra.mxu0 %v2420
  %2460 = vmatmul.bf16.gmra.mxu0 %v2352
  %v2461 = vpop.f32.mrf.mxu0
  %v2462 = vadd.f32 0.0, %v2461
  %v2463 = vpop.f32.mrf.mxu0
  %v2464 = vadd.f32 0.0, %v2463
  %2465 = vmatmul.bf16.gmra.mxu0 %v2353
  %v2466 = vpop.f32.mrf.mxu0
  %v2467 = vpop.f32.mrf.mxu0
  %2468 = vmatmul.bf16.gmra.mxu0 %v2354
  %v2469 = vpop.f32.mrf.mxu0
  %v2470 = vadd.f32 0.0, %v2469
  %v2471 = vpop.f32.mrf.mxu0
  %2472 = vmatmul.bf16.gmra.mxu0 %v2355
  %v2473 = vpop.f32.mrf.mxu0
  %v2474 = vadd.f32 0.0, %v2473
  %v2475 = vpop.f32.mrf.mxu0
  %2476 = vdwg.mxu0
  %2477 = vmatpush.bf16.msra.mxu0 %v2435
  %2478 = vmatpush.bf16.msra.mxu0 %v2433
  %2479 = vmatpush.bf16.msra.mxu0 %v2431
  %2480 = vmatpush.bf16.msra.mxu0 %v2429
  %2481 = vmatpush.bf16.msra.mxu0 %v2427
  %2482 = vmatpush.bf16.msra.mxu0 %v2425
  %2483 = vmatpush.bf16.msra.mxu0 %v2423
  %2484 = vmatpush.bf16.msra.mxu0 %v2421
  %2485 = vmatmul.bf16.gmra.mxu0 %v2352
  %v2486 = vpop.f32.mrf.mxu0
  %v2487 = vadd.f32 0.0, %v2486
  %v2488 = vpop.f32.mrf.mxu0
  %v2489 = vadd.f32 0.0, %v2488
  %2490 = vmatmul.bf16.gmra.mxu0 %v2353
  %v2491 = vpop.f32.mrf.mxu0
  %v2492 = vpop.f32.mrf.mxu0
  %2493 = vmatmul.bf16.gmra.mxu0 %v2354
  %v2494 = vpop.f32.mrf.mxu0
  %v2495 = vadd.f32 0.0, %v2494
  %v2496 = vpop.f32.mrf.mxu0
  %2497 = vmatmul.bf16.gmra.mxu0 %v2355
  %v2498 = vpop.f32.mrf.mxu0
  %v2499 = vadd.f32 0.0, %v2498
  %v2500 = vpop.f32.mrf.mxu0
  %2501 = vdwg.mxu0
  %v2518 = vunpack.c.l.b16 %v2329
  %v2519 = vunpack.c.h.b16 %v2329
  %v2520 = vunpack.c.l.b16 %v2330
  %v2521 = vunpack.c.h.b16 %v2330
  %v2522 = vunpack.c.l.b16 %v2331
  %v2523 = vunpack.c.h.b16 %v2331
  %v2524 = vunpack.c.l.b16 %v2332
  %v2525 = vunpack.c.h.b16 %v2332
  %v2526 = vunpack.c.l.b16 %v2333
  %v2527 = vunpack.c.h.b16 %v2333
  %v2528 = vunpack.c.l.b16 %v2334
  %v2529 = vunpack.c.h.b16 %v2334
  %v2530 = vunpack.c.l.b16 %v2335
  %v2531 = vunpack.c.h.b16 %v2335
  %v2532 = vunpack.c.l.b16 %v2336
  %v2533 = vunpack.c.h.b16 %v2336
  %v2534 = vunpack.c.l.b16 %v2337
  %v2535 = vunpack.c.h.b16 %v2337
  %v2536 = vunpack.c.l.b16 %v2338
  %v2537 = vunpack.c.h.b16 %v2338
  %v2538 = vunpack.c.l.b16 %v2339
  %v2539 = vunpack.c.h.b16 %v2339
  %v2540 = vunpack.c.l.b16 %v2340
  %v2541 = vunpack.c.h.b16 %v2340
  %v2542 = vunpack.c.l.b16 %v2341
  %v2543 = vunpack.c.h.b16 %v2341
  %v2544 = vunpack.c.l.b16 %v2342
  %v2545 = vunpack.c.h.b16 %v2342
  %v2546 = vunpack.c.l.b16 %v2343
  %v2547 = vunpack.c.h.b16 %v2343
  %v2548 = vunpack.c.l.b16 %v2344
  %v2549 = vunpack.c.h.b16 %v2344
  %v2550 = vpack.c.b16 %v2520, %v2518
  %v2551 = vpack.c.b16 %v2521, %v2519
  %v2552 = vpack.c.b16 %v2524, %v2522
  %v2553 = vpack.c.b16 %v2525, %v2523
  %v2554 = vpack.c.b16 %v2528, %v2526
  %v2555 = vpack.c.b16 %v2529, %v2527
  %v2556 = vpack.c.b16 %v2532, %v2530
  %v2557 = vpack.c.b16 %v2533, %v2531
  %v2558 = vpack.c.b16 %v2536, %v2534
  %v2559 = vpack.c.b16 %v2537, %v2535
  %v2560 = vpack.c.b16 %v2540, %v2538
  %v2561 = vpack.c.b16 %v2541, %v2539
  %v2562 = vpack.c.b16 %v2544, %v2542
  %v2563 = vpack.c.b16 %v2545, %v2543
  %v2564 = vpack.c.b16 %v2548, %v2546
  %v2565 = vpack.c.b16 %v2549, %v2547
  %2582 = vmatpush.bf16.msra.mxu0 %v2564
  %2583 = vmatpush.bf16.msra.mxu0 %v2562
  %2584 = vmatpush.bf16.msra.mxu0 %v2560
  %2585 = vmatpush.bf16.msra.mxu0 %v2558
  %2586 = vmatpush.bf16.msra.mxu0 %v2556
  %2587 = vmatpush.bf16.msra.mxu0 %v2554
  %2588 = vmatpush.bf16.msra.mxu0 %v2552
  %2589 = vmatpush.bf16.msra.mxu0 %v2550
  %2590 = vmatmul.bf16.gmra.mxu0 %v2325
  %v2591 = vpop.f32.mrf.mxu0
  %v2592 = vadd.f32 %v2462, %v2591
  %v2593 = vpop.f32.mrf.mxu0
  %v2594 = vadd.f32 %v2464, %v2593
  %2595 = vmatmul.bf16.gmra.mxu0 %v2326
  %v2596 = vpop.f32.mrf.mxu0
  %v2597 = vpop.f32.mrf.mxu0
  %2598 = vmatmul.bf16.gmra.mxu0 %v2327
  %v2599 = vpop.f32.mrf.mxu0
  %v2600 = vadd.f32 %v2470, %v2599
  %v2601 = vpop.f32.mrf.mxu0
  %2602 = vmatmul.bf16.gmra.mxu0 %v2328
  %v2603 = vpop.f32.mrf.mxu0
  %v2604 = vadd.f32 %v2474, %v2603
  %v2605 = vpop.f32.mrf.mxu0
  %2606 = vdwg.mxu0
  %2607 = vmatpush.bf16.msra.mxu0 %v2565
  %2608 = vmatpush.bf16.msra.mxu0 %v2563
  %2609 = vmatpush.bf16.msra.mxu0 %v2561
  %2610 = vmatpush.bf16.msra.mxu0 %v2559
  %2611 = vmatpush.bf16.msra.mxu0 %v2557
  %2612 = vmatpush.bf16.msra.mxu0 %v2555
  %2613 = vmatpush.bf16.msra.mxu0 %v2553
  %2614 = vmatpush.bf16.msra.mxu0 %v2551
  %2615 = vmatmul.bf16.gmra.mxu0 %v2325
  %v2616 = vpop.f32.mrf.mxu0
  %v2617 = vadd.f32 %v2487, %v2616
  %v2618 = vpop.f32.mrf.mxu0
  %v2619 = vadd.f32 %v2489, %v2618
  %2620 = vmatmul.bf16.gmra.mxu0 %v2326
  %v2621 = vpop.f32.mrf.mxu0
  %v2622 = vpop.f32.mrf.mxu0
  %2623 = vmatmul.bf16.gmra.mxu0 %v2327
  %v2624 = vpop.f32.mrf.mxu0
  %v2625 = vadd.f32 %v2495, %v2624
  %v2626 = vpop.f32.mrf.mxu0
  %2627 = vmatmul.bf16.gmra.mxu0 %v2328
  %v2628 = vpop.f32.mrf.mxu0
  %v2629 = vadd.f32 %v2499, %v2628
  %v2630 = vpop.f32.mrf.mxu0
  %2631 = vdwg.mxu0
  %v2632 = vld [vmem:[#allocation2 + $0x2] sm:$0xff]
  %v2633 = vld [vmem:[#allocation2 + $0xa] sm:$0xff]
  %v2634 = vld [vmem:[#allocation2 + $0x12] sm:$0xff]
  %v2635 = vld [vmem:[#allocation2 + $0x1a] sm:$0xff]
  %v2636 = vld [vmem:[#allocation2 + $0x22] sm:$0xff]
  %v2637 = vld [vmem:[#allocation2 + $0x2a] sm:$0xff]
  %v2638 = vld [vmem:[#allocation2 + $0x32] sm:$0x7]
  %v2639 = vpack.c.bf16 %v2633, %v2632
  %v2640 = vpack.c.bf16 %v2635, %v2634
  %v2641 = vpack.c.bf16 %v2637, %v2636
  %v2642 = vpack.c.bf16 %v2638, %v2638
  %v2643 = vld [vmem:[%s4 + $0x100] sm:$0xff]
  %v2644 = vld [vmem:[%s4 + $0x108] sm:$0xff]
  %v2645 = vld [vmem:[%s4 + $0x110] sm:$0xff]
  %v2646 = vld [vmem:[%s4 + $0x118] sm:$0xff]
  %v2647 = vld [vmem:[%s4 + $0x120] sm:$0xff]
  %v2648 = vld [vmem:[%s4 + $0x128] sm:$0xff]
  %v2649 = vld [vmem:[%s4 + $0x130] sm:$0xff]
  %v2650 = vld [vmem:[%s4 + $0x138] sm:$0xff]
  %v2651 = vld [vmem:[%s4 + $0x140] sm:$0xff]
  %v2652 = vld [vmem:[%s4 + $0x148] sm:$0xff]
  %v2653 = vld [vmem:[%s4 + $0x150] sm:$0xff]
  %v2654 = vld [vmem:[%s4 + $0x158] sm:$0xff]
  %v2655 = vld [vmem:[%s4 + $0x160] sm:$0xff]
  %v2656 = vld [vmem:[%s4 + $0x168] sm:$0xff]
  %v2657 = vld [vmem:[%s4 + $0x170] sm:$0xff]
  %v2658 = vld [vmem:[%s4 + $0x178] sm:$0xff]
  %v2675 = vunpack.c.l.b16 %v2643
  %v2676 = vunpack.c.h.b16 %v2643
  %v2677 = vunpack.c.l.b16 %v2644
  %v2678 = vunpack.c.h.b16 %v2644
  %v2679 = vunpack.c.l.b16 %v2645
  %v2680 = vunpack.c.h.b16 %v2645
  %v2681 = vunpack.c.l.b16 %v2646
  %v2682 = vunpack.c.h.b16 %v2646
  %v2683 = vunpack.c.l.b16 %v2647
  %v2684 = vunpack.c.h.b16 %v2647
  %v2685 = vunpack.c.l.b16 %v2648
  %v2686 = vunpack.c.h.b16 %v2648
  %v2687 = vunpack.c.l.b16 %v2649
  %v2688 = vunpack.c.h.b16 %v2649
  %v2689 = vunpack.c.l.b16 %v2650
  %v2690 = vunpack.c.h.b16 %v2650
  %v2691 = vunpack.c.l.b16 %v2651
  %v2692 = vunpack.c.h.b16 %v2651
  %v2693 = vunpack.c.l.b16 %v2652
  %v2694 = vunpack.c.h.b16 %v2652
  %v2695 = vunpack.c.l.b16 %v2653
  %v2696 = vunpack.c.h.b16 %v2653
  %v2697 = vunpack.c.l.b16 %v2654
  %v2698 = vunpack.c.h.b16 %v2654
  %v2699 = vunpack.c.l.b16 %v2655
  %v2700 = vunpack.c.h.b16 %v2655
  %v2701 = vunpack.c.l.b16 %v2656
  %v2702 = vunpack.c.h.b16 %v2656
  %v2703 = vunpack.c.l.b16 %v2657
  %v2704 = vunpack.c.h.b16 %v2657
  %v2705 = vunpack.c.l.b16 %v2658
  %v2706 = vunpack.c.h.b16 %v2658
  %v2707 = vpack.c.b16 %v2677, %v2675
  %v2708 = vpack.c.b16 %v2678, %v2676
  %v2709 = vpack.c.b16 %v2681, %v2679
  %v2710 = vpack.c.b16 %v2682, %v2680
  %v2711 = vpack.c.b16 %v2685, %v2683
  %v2712 = vpack.c.b16 %v2686, %v2684
  %v2713 = vpack.c.b16 %v2689, %v2687
  %v2714 = vpack.c.b16 %v2690, %v2688
  %v2715 = vpack.c.b16 %v2693, %v2691
  %v2716 = vpack.c.b16 %v2694, %v2692
  %v2717 = vpack.c.b16 %v2697, %v2695
  %v2718 = vpack.c.b16 %v2698, %v2696
  %v2719 = vpack.c.b16 %v2701, %v2699
  %v2720 = vpack.c.b16 %v2702, %v2700
  %v2721 = vpack.c.b16 %v2705, %v2703
  %v2722 = vpack.c.b16 %v2706, %v2704
  %2739 = vmatpush.bf16.msra.mxu0 %v2721
  %2740 = vmatpush.bf16.msra.mxu0 %v2719
  %2741 = vmatpush.bf16.msra.mxu0 %v2717
  %2742 = vmatpush.bf16.msra.mxu0 %v2715
  %2743 = vmatpush.bf16.msra.mxu0 %v2713
  %2744 = vmatpush.bf16.msra.mxu0 %v2711
  %2745 = vmatpush.bf16.msra.mxu0 %v2709
  %2746 = vmatpush.bf16.msra.mxu0 %v2707
  %2747 = vmatmul.bf16.gmra.mxu0 %v2639
  %v2748 = vpop.f32.mrf.mxu0
  %v2749 = vadd.f32 0.0, %v2748
  %v2750 = vpop.f32.mrf.mxu0
  %v2751 = vadd.f32 0.0, %v2750
  %2752 = vmatmul.bf16.gmra.mxu0 %v2640
  %v2753 = vpop.f32.mrf.mxu0
  %v2754 = vpop.f32.mrf.mxu0
  %2755 = vmatmul.bf16.gmra.mxu0 %v2641
  %v2756 = vpop.f32.mrf.mxu0
  %v2757 = vadd.f32 0.0, %v2756
  %v2758 = vpop.f32.mrf.mxu0
  %2759 = vmatmul.bf16.gmra.mxu0 %v2642
  %v2760 = vpop.f32.mrf.mxu0
  %v2761 = vadd.f32 0.0, %v2760
  %v2762 = vpop.f32.mrf.mxu0
  %2763 = vdwg.mxu0
  %2764 = vmatpush.bf16.msra.mxu0 %v2722
  %2765 = vmatpush.bf16.msra.mxu0 %v2720
  %2766 = vmatpush.bf16.msra.mxu0 %v2718
  %2767 = vmatpush.bf16.msra.mxu0 %v2716
  %2768 = vmatpush.bf16.msra.mxu0 %v2714
  %2769 = vmatpush.bf16.msra.mxu0 %v2712
  %2770 = vmatpush.bf16.msra.mxu0 %v2710
  %2771 = vmatpush.bf16.msra.mxu0 %v2708
  %2772 = vmatmul.bf16.gmra.mxu0 %v2639
  %v2773 = vpop.f32.mrf.mxu0
  %v2774 = vadd.f32 0.0, %v2773
  %v2775 = vpop.f32.mrf.mxu0
  %v2776 = vadd.f32 0.0, %v2775
  %2777 = vmatmul.bf16.gmra.mxu0 %v2640
  %v2778 = vpop.f32.mrf.mxu0
  %v2779 = vpop.f32.mrf.mxu0
  %2780 = vmatmul.bf16.gmra.mxu0 %v2641
  %v2781 = vpop.f32.mrf.mxu0
  %v2782 = vadd.f32 0.0, %v2781
  %v2783 = vpop.f32.mrf.mxu0
  %2784 = vmatmul.bf16.gmra.mxu0 %v2642
  %v2785 = vpop.f32.mrf.mxu0
  %v2786 = vadd.f32 0.0, %v2785
  %v2787 = vpop.f32.mrf.mxu0
  %2788 = vdwg.mxu0
  %v2789 = vadd.f32 %v2592, %v2749
  %v2790 = vadd.f32 %v2617, %v2774
  %v2791 = vadd.f32 %v2594, %v2751
  %v2792 = vadd.f32 %v2619, %v2776
  %v2793 = vadd.f32 %v2600, %v2757
  %v2794 = vadd.f32 %v2625, %v2782
  %v2795 = vadd.f32 %v2604, %v2761
  %v2796 = vadd.f32 %v2629, %v2786
  %v2797 = vld [vmem:[#allocation2 + $0x3] sm:$0xff]
  %v2798 = vld [vmem:[#allocation2 + $0xb] sm:$0xff]
  %v2799 = vld [vmem:[#allocation2 + $0x13] sm:$0xff]
  %v2800 = vld [vmem:[#allocation2 + $0x1b] sm:$0xff]
  %v2801 = vld [vmem:[#allocation2 + $0x23] sm:$0xff]
  %v2802 = vld [vmem:[#allocation2 + $0x2b] sm:$0xff]
  %v2803 = vld [vmem:[#allocation2 + $0x33] sm:$0x7]
  %v2804 = vpack.c.bf16 %v2798, %v2797
  %v2805 = vpack.c.bf16 %v2800, %v2799
  %v2806 = vpack.c.bf16 %v2802, %v2801
  %v2807 = vpack.c.bf16 %v2803, %v2803
  %v2808 = vld [vmem:[%s4 + $0x180] sm:$0xff]
  %v2809 = vld [vmem:[%s4 + $0x188] sm:$0xff]
  %v2810 = vld [vmem:[%s4 + $0x190] sm:$0xff]
  %v2811 = vld [vmem:[%s4 + $0x198] sm:$0xff]
  %v2812 = vld [vmem:[%s4 + $0x1a0] sm:$0xff]
  %v2813 = vld [vmem:[%s4 + $0x1a8] sm:$0xff]
  %v2814 = vld [vmem:[%s4 + $0x1b0] sm:$0xff]
  %v2815 = vld [vmem:[%s4 + $0x1b8] sm:$0xff]
  %v2816 = vld [vmem:[%s4 + $0x1c0] sm:$0xff]
  %v2817 = vld [vmem:[%s4 + $0x1c8] sm:$0xff]
  %v2818 = vld [vmem:[%s4 + $0x1d0] sm:$0xff]
  %v2819 = vld [vmem:[%s4 + $0x1d8] sm:$0xff]
  %v2820 = vld [vmem:[%s4 + $0x1e0] sm:$0xff]
  %v2821 = vld [vmem:[%s4 + $0x1e8] sm:$0xff]
  %v2822 = vld [vmem:[%s4 + $0x1f0] sm:$0xff]
  %v2823 = vld [vmem:[%s4 + $0x1f8] sm:$0xff]
  %v2840 = vunpack.c.l.b16 %v2808
  %v2841 = vunpack.c.h.b16 %v2808
  %v2842 = vunpack.c.l.b16 %v2809
  %v2843 = vunpack.c.h.b16 %v2809
  %v2844 = vunpack.c.l.b16 %v2810
  %v2845 = vunpack.c.h.b16 %v2810
  %v2846 = vunpack.c.l.b16 %v2811
  %v2847 = vunpack.c.h.b16 %v2811
  %v2848 = vunpack.c.l.b16 %v2812
  %v2849 = vunpack.c.h.b16 %v2812
  %v2850 = vunpack.c.l.b16 %v2813
  %v2851 = vunpack.c.h.b16 %v2813
  %v2852 = vunpack.c.l.b16 %v2814
  %v2853 = vunpack.c.h.b16 %v2814
  %v2854 = vunpack.c.l.b16 %v2815
  %v2855 = vunpack.c.h.b16 %v2815
  %v2856 = vunpack.c.l.b16 %v2816
  %v2857 = vunpack.c.h.b16 %v2816
  %v2858 = vunpack.c.l.b16 %v2817
  %v2859 = vunpack.c.h.b16 %v2817
  %v2860 = vunpack.c.l.b16 %v2818
  %v2861 = vunpack.c.h.b16 %v2818
  %v2862 = vunpack.c.l.b16 %v2819
  %v2863 = vunpack.c.h.b16 %v2819
  %v2864 = vunpack.c.l.b16 %v2820
  %v2865 = vunpack.c.h.b16 %v2820
  %v2866 = vunpack.c.l.b16 %v2821
  %v2867 = vunpack.c.h.b16 %v2821
  %v2868 = vunpack.c.l.b16 %v2822
  %v2869 = vunpack.c.h.b16 %v2822
  %v2870 = vunpack.c.l.b16 %v2823
  %v2871 = vunpack.c.h.b16 %v2823
  %v2872 = vpack.c.b16 %v2842, %v2840
  %v2873 = vpack.c.b16 %v2843, %v2841
  %v2874 = vpack.c.b16 %v2846, %v2844
  %v2875 = vpack.c.b16 %v2847, %v2845
  %v2876 = vpack.c.b16 %v2850, %v2848
  %v2877 = vpack.c.b16 %v2851, %v2849
  %v2878 = vpack.c.b16 %v2854, %v2852
  %v2879 = vpack.c.b16 %v2855, %v2853
  %v2880 = vpack.c.b16 %v2858, %v2856
  %v2881 = vpack.c.b16 %v2859, %v2857
  %v2882 = vpack.c.b16 %v2862, %v2860
  %v2883 = vpack.c.b16 %v2863, %v2861
  %v2884 = vpack.c.b16 %v2866, %v2864
  %v2885 = vpack.c.b16 %v2867, %v2865
  %v2886 = vpack.c.b16 %v2870, %v2868
  %v2887 = vpack.c.b16 %v2871, %v2869
  %2904 = vmatpush.bf16.msra.mxu0 %v2886
  %2905 = vmatpush.bf16.msra.mxu0 %v2884
  %2906 = vmatpush.bf16.msra.mxu0 %v2882
  %2907 = vmatpush.bf16.msra.mxu0 %v2880
  %2908 = vmatpush.bf16.msra.mxu0 %v2878
  %2909 = vmatpush.bf16.msra.mxu0 %v2876
  %2910 = vmatpush.bf16.msra.mxu0 %v2874
  %2911 = vmatpush.bf16.msra.mxu0 %v2872
  %2912 = vmatmul.bf16.gmra.mxu0 %v2804
  %v2913 = vpop.f32.mrf.mxu0
  %v2914 = vadd.f32 0.0, %v2913
  %v2915 = vpop.f32.mrf.mxu0
  %v2916 = vadd.f32 0.0, %v2915
  %2917 = vmatmul.bf16.gmra.mxu0 %v2805
  %v2918 = vpop.f32.mrf.mxu0
  %v2919 = vpop.f32.mrf.mxu0
  %2920 = vmatmul.bf16.gmra.mxu0 %v2806
  %v2921 = vpop.f32.mrf.mxu0
  %v2922 = vadd.f32 0.0, %v2921
  %v2923 = vpop.f32.mrf.mxu0
  %2924 = vmatmul.bf16.gmra.mxu0 %v2807
  %v2925 = vpop.f32.mrf.mxu0
  %v2926 = vadd.f32 0.0, %v2925
  %v2927 = vpop.f32.mrf.mxu0
  %2928 = vdwg.mxu0
  %2929 = vmatpush.bf16.msra.mxu0 %v2887
  %2930 = vmatpush.bf16.msra.mxu0 %v2885
  %2931 = vmatpush.bf16.msra.mxu0 %v2883
  %2932 = vmatpush.bf16.msra.mxu0 %v2881
  %2933 = vmatpush.bf16.msra.mxu0 %v2879
  %2934 = vmatpush.bf16.msra.mxu0 %v2877
  %2935 = vmatpush.bf16.msra.mxu0 %v2875
  %2936 = vmatpush.bf16.msra.mxu0 %v2873
  %2937 = vmatmul.bf16.gmra.mxu0 %v2804
  %v2938 = vpop.f32.mrf.mxu0
  %v2939 = vadd.f32 0.0, %v2938
  %v2940 = vpop.f32.mrf.mxu0
  %v2941 = vadd.f32 0.0, %v2940
  %2942 = vmatmul.bf16.gmra.mxu0 %v2805
  %v2943 = vpop.f32.mrf.mxu0
  %v2944 = vpop.f32.mrf.mxu0
  %2945 = vmatmul.bf16.gmra.mxu0 %v2806
  %v2946 = vpop.f32.mrf.mxu0
  %v2947 = vadd.f32 0.0, %v2946
  %v2948 = vpop.f32.mrf.mxu0
  %2949 = vmatmul.bf16.gmra.mxu0 %v2807
  %v2950 = vpop.f32.mrf.mxu0
  %v2951 = vadd.f32 0.0, %v2950
  %v2952 = vpop.f32.mrf.mxu0
  %2953 = vdwg.mxu0
  %v2954 = vadd.f32 %v2789, %v2914
  %v2955 = vadd.f32 %v2790, %v2939
  %v2956 = vadd.f32 %v2791, %v2916
  %v2957 = vadd.f32 %v2792, %v2941
  %v2958 = vadd.f32 %v2793, %v2922
  %v2959 = vadd.f32 %v2794, %v2947
  %v2960 = vadd.f32 %v2795, %v2926
  %v2961 = vadd.f32 %v2796, %v2951
  %v2962 = vld [vmem:[#allocation2 + $0x6] sm:$0xff]
  %v2963 = vld [vmem:[#allocation2 + $0xe] sm:$0xff]
  %v2964 = vld [vmem:[#allocation2 + $0x16] sm:$0xff]
  %v2965 = vld [vmem:[#allocation2 + $0x1e] sm:$0xff]
  %v2966 = vld [vmem:[#allocation2 + $0x26] sm:$0xff]
  %v2967 = vld [vmem:[#allocation2 + $0x2e] sm:$0xff]
  %v2968 = vld [vmem:[#allocation2 + $0x36] sm:$0x7]
  %v2969 = vpack.c.bf16 %v2963, %v2962
  %v2970 = vpack.c.bf16 %v2965, %v2964
  %v2971 = vpack.c.bf16 %v2967, %v2966
  %v2972 = vpack.c.bf16 %v2968, %v2968
  %v2973 = vld [vmem:[%s4 + $0x200] sm:$0xff]
  %v2974 = vld [vmem:[%s4 + $0x208] sm:$0xff]
  %v2975 = vld [vmem:[%s4 + $0x210] sm:$0xff]
  %v2976 = vld [vmem:[%s4 + $0x218] sm:$0xff]
  %v2977 = vld [vmem:[%s4 + $0x220] sm:$0xff]
  %v2978 = vld [vmem:[%s4 + $0x228] sm:$0xff]
  %v2979 = vld [vmem:[%s4 + $0x230] sm:$0xff]
  %v2980 = vld [vmem:[%s4 + $0x238] sm:$0xff]
  %v2981 = vld [vmem:[%s4 + $0x240] sm:$0xff]
  %v2982 = vld [vmem:[%s4 + $0x248] sm:$0xff]
  %v2983 = vld [vmem:[%s4 + $0x250] sm:$0xff]
  %v2984 = vld [vmem:[%s4 + $0x258] sm:$0xff]
  %v2985 = vld [vmem:[%s4 + $0x260] sm:$0xff]
  %v2986 = vld [vmem:[%s4 + $0x268] sm:$0xff]
  %v2987 = vld [vmem:[%s4 + $0x270] sm:$0xff]
  %v2988 = vld [vmem:[%s4 + $0x278] sm:$0xff]
  %v3005 = vunpack.c.l.b16 %v2973
  %v3006 = vunpack.c.h.b16 %v2973
  %v3007 = vunpack.c.l.b16 %v2974
  %v3008 = vunpack.c.h.b16 %v2974
  %v3009 = vunpack.c.l.b16 %v2975
  %v3010 = vunpack.c.h.b16 %v2975
  %v3011 = vunpack.c.l.b16 %v2976
  %v3012 = vunpack.c.h.b16 %v2976
  %v3013 = vunpack.c.l.b16 %v2977
  %v3014 = vunpack.c.h.b16 %v2977
  %v3015 = vunpack.c.l.b16 %v2978
  %v3016 = vunpack.c.h.b16 %v2978
  %v3017 = vunpack.c.l.b16 %v2979
  %v3018 = vunpack.c.h.b16 %v2979
  %v3019 = vunpack.c.l.b16 %v2980
  %v3020 = vunpack.c.h.b16 %v2980
  %v3021 = vunpack.c.l.b16 %v2981
  %v3022 = vunpack.c.h.b16 %v2981
  %v3023 = vunpack.c.l.b16 %v2982
  %v3024 = vunpack.c.h.b16 %v2982
  %v3025 = vunpack.c.l.b16 %v2983
  %v3026 = vunpack.c.h.b16 %v2983
  %v3027 = vunpack.c.l.b16 %v2984
  %v3028 = vunpack.c.h.b16 %v2984
  %v3029 = vunpack.c.l.b16 %v2985
  %v3030 = vunpack.c.h.b16 %v2985
  %v3031 = vunpack.c.l.b16 %v2986
  %v3032 = vunpack.c.h.b16 %v2986
  %v3033 = vunpack.c.l.b16 %v2987
  %v3034 = vunpack.c.h.b16 %v2987
  %v3035 = vunpack.c.l.b16 %v2988
  %v3036 = vunpack.c.h.b16 %v2988
  %v3037 = vpack.c.b16 %v3007, %v3005
  %v3038 = vpack.c.b16 %v3008, %v3006
  %v3039 = vpack.c.b16 %v3011, %v3009
  %v3040 = vpack.c.b16 %v3012, %v3010
  %v3041 = vpack.c.b16 %v3015, %v3013
  %v3042 = vpack.c.b16 %v3016, %v3014
  %v3043 = vpack.c.b16 %v3019, %v3017
  %v3044 = vpack.c.b16 %v3020, %v3018
  %v3045 = vpack.c.b16 %v3023, %v3021
  %v3046 = vpack.c.b16 %v3024, %v3022
  %v3047 = vpack.c.b16 %v3027, %v3025
  %v3048 = vpack.c.b16 %v3028, %v3026
  %v3049 = vpack.c.b16 %v3031, %v3029
  %v3050 = vpack.c.b16 %v3032, %v3030
  %v3051 = vpack.c.b16 %v3035, %v3033
  %v3052 = vpack.c.b16 %v3036, %v3034
  %3069 = vmatpush.bf16.msra.mxu0 %v3051
  %3070 = vmatpush.bf16.msra.mxu0 %v3049
  %3071 = vmatpush.bf16.msra.mxu0 %v3047
  %3072 = vmatpush.bf16.msra.mxu0 %v3045
  %3073 = vmatpush.bf16.msra.mxu0 %v3043
  %3074 = vmatpush.bf16.msra.mxu0 %v3041
  %3075 = vmatpush.bf16.msra.mxu0 %v3039
  %3076 = vmatpush.bf16.msra.mxu0 %v3037
  %3077 = vmatmul.bf16.gmra.mxu0 %v2969
  %v3078 = vpop.f32.mrf.mxu0
  %v3079 = vadd.f32 0.0, %v3078
  %v3080 = vpop.f32.mrf.mxu0
  %v3081 = vadd.f32 0.0, %v3080
  %3082 = vmatmul.bf16.gmra.mxu0 %v2970
  %v3083 = vpop.f32.mrf.mxu0
  %v3084 = vpop.f32.mrf.mxu0
  %3085 = vmatmul.bf16.gmra.mxu0 %v2971
  %v3086 = vpop.f32.mrf.mxu0
  %v3087 = vadd.f32 0.0, %v3086
  %v3088 = vpop.f32.mrf.mxu0
  %3089 = vmatmul.bf16.gmra.mxu0 %v2972
  %v3090 = vpop.f32.mrf.mxu0
  %v3091 = vadd.f32 0.0, %v3090
  %v3092 = vpop.f32.mrf.mxu0
  %3093 = vdwg.mxu0
  %3094 = vmatpush.bf16.msra.mxu0 %v3052
  %3095 = vmatpush.bf16.msra.mxu0 %v3050
  %3096 = vmatpush.bf16.msra.mxu0 %v3048
  %3097 = vmatpush.bf16.msra.mxu0 %v3046
  %3098 = vmatpush.bf16.msra.mxu0 %v3044
  %3099 = vmatpush.bf16.msra.mxu0 %v3042
  %3100 = vmatpush.bf16.msra.mxu0 %v3040
  %3101 = vmatpush.bf16.msra.mxu0 %v3038
  %3102 = vmatmul.bf16.gmra.mxu0 %v2969
  %v3103 = vpop.f32.mrf.mxu0
  %v3104 = vadd.f32 0.0, %v3103
  %v3105 = vpop.f32.mrf.mxu0
  %v3106 = vadd.f32 0.0, %v3105
  %3107 = vmatmul.bf16.gmra.mxu0 %v2970
  %v3108 = vpop.f32.mrf.mxu0
  %v3109 = vpop.f32.mrf.mxu0
  %3110 = vmatmul.bf16.gmra.mxu0 %v2971
  %v3111 = vpop.f32.mrf.mxu0
  %v3112 = vadd.f32 0.0, %v3111
  %v3113 = vpop.f32.mrf.mxu0
  %3114 = vmatmul.bf16.gmra.mxu0 %v2972
  %v3115 = vpop.f32.mrf.mxu0
  %v3116 = vadd.f32 0.0, %v3115
  %v3117 = vpop.f32.mrf.mxu0
  %3118 = vdwg.mxu0
  %v3119 = vadd.f32 %v2954, %v3079
  %v3120 = vadd.f32 %v2955, %v3104
  %v3121 = vadd.f32 %v2956, %v3081
  %v3122 = vadd.f32 %v2957, %v3106
  %v3123 = vadd.f32 %v2958, %v3087
  %v3124 = vadd.f32 %v2959, %v3112
  %v3125 = vadd.f32 %v2960, %v3091
  %v3126 = vadd.f32 %v2961, %v3116
  %v3127 = vld [vmem:[#allocation2 + $0x7] sm:$0xff]
  %v3128 = vld [vmem:[#allocation2 + $0xf] sm:$0xff]
  %v3129 = vld [vmem:[#allocation2 + $0x17] sm:$0xff]
  %v3130 = vld [vmem:[#allocation2 + $0x1f] sm:$0xff]
  %v3131 = vld [vmem:[#allocation2 + $0x27] sm:$0xff]
  %v3132 = vld [vmem:[#allocation2 + $0x2f] sm:$0xff]
  %v3133 = vld [vmem:[#allocation2 + $0x37] sm:$0x7]
  %v3134 = vpack.c.bf16 %v3128, %v3127
  %v3135 = vpack.c.bf16 %v3130, %v3129
  %v3136 = vpack.c.bf16 %v3132, %v3131
  %v3137 = vpack.c.bf16 %v3133, %v3133
  %v3138 = vld [vmem:[%s4 + $0x280] sm:$0xff]
  %v3139 = vld [vmem:[%s4 + $0x288] sm:$0xff]
  %v3140 = vld [vmem:[%s4 + $0x290] sm:$0xff]
  %v3141 = vld [vmem:[%s4 + $0x298] sm:$0xff]
  %v3142 = vld [vmem:[%s4 + $0x2a0] sm:$0xff]
  %v3143 = vld [vmem:[%s4 + $0x2a8] sm:$0xff]
  %v3144 = vld [vmem:[%s4 + $0x2b0] sm:$0xff]
  %v3145 = vld [vmem:[%s4 + $0x2b8] sm:$0xff]
  %v3146 = vld [vmem:[%s4 + $0x2c0] sm:$0xff]
  %v3147 = vld [vmem:[%s4 + $0x2c8] sm:$0xff]
  %v3148 = vld [vmem:[%s4 + $0x2d0] sm:$0xff]
  %v3149 = vld [vmem:[%s4 + $0x2d8] sm:$0xff]
  %v3150 = vld [vmem:[%s4 + $0x2e0] sm:$0xff]
  %v3151 = vld [vmem:[%s4 + $0x2e8] sm:$0xff]
  %v3152 = vld [vmem:[%s4 + $0x2f0] sm:$0xff]
  %v3153 = vld [vmem:[%s4 + $0x2f8] sm:$0xff]
  %v3170 = vunpack.c.l.b16 %v3138
  %v3171 = vunpack.c.h.b16 %v3138
  %v3172 = vunpack.c.l.b16 %v3139
  %v3173 = vunpack.c.h.b16 %v3139
  %v3174 = vunpack.c.l.b16 %v3140
  %v3175 = vunpack.c.h.b16 %v3140
  %v3176 = vunpack.c.l.b16 %v3141
  %v3177 = vunpack.c.h.b16 %v3141
  %v3178 = vunpack.c.l.b16 %v3142
  %v3179 = vunpack.c.h.b16 %v3142
  %v3180 = vunpack.c.l.b16 %v3143
  %v3181 = vunpack.c.h.b16 %v3143
  %v3182 = vunpack.c.l.b16 %v3144
  %v3183 = vunpack.c.h.b16 %v3144
  %v3184 = vunpack.c.l.b16 %v3145
  %v3185 = vunpack.c.h.b16 %v3145
  %v3186 = vunpack.c.l.b16 %v3146
  %v3187 = vunpack.c.h.b16 %v3146
  %v3188 = vunpack.c.l.b16 %v3147
  %v3189 = vunpack.c.h.b16 %v3147
  %v3190 = vunpack.c.l.b16 %v3148
  %v3191 = vunpack.c.h.b16 %v3148
  %v3192 = vunpack.c.l.b16 %v3149
  %v3193 = vunpack.c.h.b16 %v3149
  %v3194 = vunpack.c.l.b16 %v3150
  %v3195 = vunpack.c.h.b16 %v3150
  %v3196 = vunpack.c.l.b16 %v3151
  %v3197 = vunpack.c.h.b16 %v3151
  %v3198 = vunpack.c.l.b16 %v3152
  %v3199 = vunpack.c.h.b16 %v3152
  %v3200 = vunpack.c.l.b16 %v3153
  %v3201 = vunpack.c.h.b16 %v3153
  %v3202 = vpack.c.b16 %v3172, %v3170
  %v3203 = vpack.c.b16 %v3173, %v3171
  %v3204 = vpack.c.b16 %v3176, %v3174
  %v3205 = vpack.c.b16 %v3177, %v3175
  %v3206 = vpack.c.b16 %v3180, %v3178
  %v3207 = vpack.c.b16 %v3181, %v3179
  %v3208 = vpack.c.b16 %v3184, %v3182
  %v3209 = vpack.c.b16 %v3185, %v3183
  %v3210 = vpack.c.b16 %v3188, %v3186
  %v3211 = vpack.c.b16 %v3189, %v3187
  %v3212 = vpack.c.b16 %v3192, %v3190
  %v3213 = vpack.c.b16 %v3193, %v3191
  %v3214 = vpack.c.b16 %v3196, %v3194
  %v3215 = vpack.c.b16 %v3197, %v3195
  %v3216 = vpack.c.b16 %v3200, %v3198
  %v3217 = vpack.c.b16 %v3201, %v3199
  %3234 = vmatpush.bf16.msra.mxu0 %v3216
  %3235 = vmatpush.bf16.msra.mxu0 %v3214
  %3236 = vmatpush.bf16.msra.mxu0 %v3212
  %3237 = vmatpush.bf16.msra.mxu0 %v3210
  %3238 = vmatpush.bf16.msra.mxu0 %v3208
  %3239 = vmatpush.bf16.msra.mxu0 %v3206
  %3240 = vmatpush.bf16.msra.mxu0 %v3204
  %3241 = vmatpush.bf16.msra.mxu0 %v3202
  %3242 = vmatmul.bf16.gmra.mxu0 %v3134
  %v3243 = vpop.f32.mrf.mxu0
  %v3244 = vadd.f32 0.0, %v3243
  %v3245 = vpop.f32.mrf.mxu0
  %v3246 = vadd.f32 0.0, %v3245
  %3247 = vmatmul.bf16.gmra.mxu0 %v3135
  %v3248 = vpop.f32.mrf.mxu0
  %v3249 = vpop.f32.mrf.mxu0
  %3250 = vmatmul.bf16.gmra.mxu0 %v3136
  %v3251 = vpop.f32.mrf.mxu0
  %v3252 = vadd.f32 0.0, %v3251
  %v3253 = vpop.f32.mrf.mxu0
  %3254 = vmatmul.bf16.gmra.mxu0 %v3137
  %v3255 = vpop.f32.mrf.mxu0
  %v3256 = vadd.f32 0.0, %v3255
  %v3257 = vpop.f32.mrf.mxu0
  %3258 = vdwg.mxu0
  %3259 = vmatpush.bf16.msra.mxu0 %v3217
  %3260 = vmatpush.bf16.msra.mxu0 %v3215
  %3261 = vmatpush.bf16.msra.mxu0 %v3213
  %3262 = vmatpush.bf16.msra.mxu0 %v3211
  %3263 = vmatpush.bf16.msra.mxu0 %v3209
  %3264 = vmatpush.bf16.msra.mxu0 %v3207
  %3265 = vmatpush.bf16.msra.mxu0 %v3205
  %3266 = vmatpush.bf16.msra.mxu0 %v3203
  %3267 = vmatmul.bf16.gmra.mxu0 %v3134
  %v3268 = vpop.f32.mrf.mxu0
  %v3269 = vadd.f32 0.0, %v3268
  %v3270 = vpop.f32.mrf.mxu0
  %v3271 = vadd.f32 0.0, %v3270
  %3272 = vmatmul.bf16.gmra.mxu0 %v3135
  %v3273 = vpop.f32.mrf.mxu0
  %v3274 = vpop.f32.mrf.mxu0
  %3275 = vmatmul.bf16.gmra.mxu0 %v3136
  %v3276 = vpop.f32.mrf.mxu0
  %v3277 = vadd.f32 0.0, %v3276
  %v3278 = vpop.f32.mrf.mxu0
  %3279 = vmatmul.bf16.gmra.mxu0 %v3137
  %v3280 = vpop.f32.mrf.mxu0
  %v3281 = vadd.f32 0.0, %v3280
  %v3282 = vpop.f32.mrf.mxu0
  %3283 = vdwg.mxu0
  %v3284 = vadd.f32 %v3119, %v3244
  %v3285 = vadd.f32 %v3120, %v3269
  %v3286 = vadd.f32 %v3121, %v3246
  %v3287 = vadd.f32 %v3122, %v3271
  %v3288 = vadd.f32 %v3123, %v3252
  %v3289 = vadd.f32 %v3124, %v3277
  %v3290 = vadd.f32 %v3125, %v3256
  %v3291 = vadd.f32 %v3126, %v3281
  %v3292 = vld [vmem:[#allocation2 + $0x8] sm:$0xff]
  %v3293 = vld [vmem:[#allocation2 + $0x10] sm:$0xff]
  %v3294 = vld [vmem:[#allocation2 + $0x18] sm:$0xff]
  %v3295 = vld [vmem:[#allocation2 + $0x20] sm:$0xff]
  %v3296 = vld [vmem:[#allocation2 + $0x28] sm:$0xff]
  %v3297 = vld [vmem:[#allocation2 + $0x30] sm:$0xff]
  %v3298 = vld [vmem:[#allocation2 + $0x38] sm:$0x7]
  %v3299 = vpack.c.bf16 %v3293, %v3292
  %v3300 = vpack.c.bf16 %v3295, %v3294
  %v3301 = vpack.c.bf16 %v3297, %v3296
  %v3302 = vpack.c.bf16 %v3298, %v3298
  %v3303 = vld [vmem:[%s4 + $0x300] sm:$0xff]
  %v3304 = vld [vmem:[%s4 + $0x308] sm:$0xff]
  %v3305 = vld [vmem:[%s4 + $0x310] sm:$0xff]
  %v3306 = vld [vmem:[%s4 + $0x318] sm:$0xff]
  %v3307 = vld [vmem:[%s4 + $0x320] sm:$0xff]
  %v3308 = vld [vmem:[%s4 + $0x328] sm:$0xff]
  %v3309 = vld [vmem:[%s4 + $0x330] sm:$0xff]
  %v3310 = vld [vmem:[%s4 + $0x338] sm:$0xff]
  %v3311 = vld [vmem:[%s4 + $0x340] sm:$0xff]
  %v3312 = vld [vmem:[%s4 + $0x348] sm:$0xff]
  %v3313 = vld [vmem:[%s4 + $0x350] sm:$0xff]
  %v3314 = vld [vmem:[%s4 + $0x358] sm:$0xff]
  %v3315 = vld [vmem:[%s4 + $0x360] sm:$0xff]
  %v3316 = vld [vmem:[%s4 + $0x368] sm:$0xff]
  %v3317 = vld [vmem:[%s4 + $0x370] sm:$0xff]
  %v3318 = vld [vmem:[%s4 + $0x378] sm:$0xff]
  %v3335 = vunpack.c.l.b16 %v3303
  %v3336 = vunpack.c.h.b16 %v3303
  %v3337 = vunpack.c.l.b16 %v3304
  %v3338 = vunpack.c.h.b16 %v3304
  %v3339 = vunpack.c.l.b16 %v3305
  %v3340 = vunpack.c.h.b16 %v3305
  %v3341 = vunpack.c.l.b16 %v3306
  %v3342 = vunpack.c.h.b16 %v3306
  %v3343 = vunpack.c.l.b16 %v3307
  %v3344 = vunpack.c.h.b16 %v3307
  %v3345 = vunpack.c.l.b16 %v3308
  %v3346 = vunpack.c.h.b16 %v3308
  %v3347 = vunpack.c.l.b16 %v3309
  %v3348 = vunpack.c.h.b16 %v3309
  %v3349 = vunpack.c.l.b16 %v3310
  %v3350 = vunpack.c.h.b16 %v3310
  %v3351 = vunpack.c.l.b16 %v3311
  %v3352 = vunpack.c.h.b16 %v3311
  %v3353 = vunpack.c.l.b16 %v3312
  %v3354 = vunpack.c.h.b16 %v3312
  %v3355 = vunpack.c.l.b16 %v3313
  %v3356 = vunpack.c.h.b16 %v3313
  %v3357 = vunpack.c.l.b16 %v3314
  %v3358 = vunpack.c.h.b16 %v3314
  %v3359 = vunpack.c.l.b16 %v3315
  %v3360 = vunpack.c.h.b16 %v3315
  %v3361 = vunpack.c.l.b16 %v3316
  %v3362 = vunpack.c.h.b16 %v3316
  %v3363 = vunpack.c.l.b16 %v3317
  %v3364 = vunpack.c.h.b16 %v3317
  %v3365 = vunpack.c.l.b16 %v3318
  %v3366 = vunpack.c.h.b16 %v3318
  %v3367 = vpack.c.b16 %v3337, %v3335
  %v3368 = vpack.c.b16 %v3338, %v3336
  %v3369 = vpack.c.b16 %v3341, %v3339
  %v3370 = vpack.c.b16 %v3342, %v3340
  %v3371 = vpack.c.b16 %v3345, %v3343
  %v3372 = vpack.c.b16 %v3346, %v3344
  %v3373 = vpack.c.b16 %v3349, %v3347
  %v3374 = vpack.c.b16 %v3350, %v3348
  %v3375 = vpack.c.b16 %v3353, %v3351
  %v3376 = vpack.c.b16 %v3354, %v3352
  %v3377 = vpack.c.b16 %v3357, %v3355
  %v3378 = vpack.c.b16 %v3358, %v3356
  %v3379 = vpack.c.b16 %v3361, %v3359
  %v3380 = vpack.c.b16 %v3362, %v3360
  %v3381 = vpack.c.b16 %v3365, %v3363
  %v3382 = vpack.c.b16 %v3366, %v3364
  %3399 = vmatpush.bf16.msra.mxu0 %v3381
  %3400 = vmatpush.bf16.msra.mxu0 %v3379
  %3401 = vmatpush.bf16.msra.mxu0 %v3377
  %3402 = vmatpush.bf16.msra.mxu0 %v3375
  %3403 = vmatpush.bf16.msra.mxu0 %v3373
  %3404 = vmatpush.bf16.msra.mxu0 %v3371
  %3405 = vmatpush.bf16.msra.mxu0 %v3369
  %3406 = vmatpush.bf16.msra.mxu0 %v3367
  %3407 = vmatmul.bf16.gmra.mxu0 %v3299
  %v3408 = vpop.f32.mrf.mxu0
  %v3409 = vadd.f32 0.0, %v3408
  %v3410 = vpop.f32.mrf.mxu0
  %v3411 = vadd.f32 0.0, %v3410
  %3412 = vmatmul.bf16.gmra.mxu0 %v3300
  %v3413 = vpop.f32.mrf.mxu0
  %v3414 = vpop.f32.mrf.mxu0
  %3415 = vmatmul.bf16.gmra.mxu0 %v3301
  %v3416 = vpop.f32.mrf.mxu0
  %v3417 = vadd.f32 0.0, %v3416
  %v3418 = vpop.f32.mrf.mxu0
  %3419 = vmatmul.bf16.gmra.mxu0 %v3302
  %v3420 = vpop.f32.mrf.mxu0
  %v3421 = vadd.f32 0.0, %v3420
  %v3422 = vpop.f32.mrf.mxu0
  %3423 = vdwg.mxu0
  %3424 = vmatpush.bf16.msra.mxu0 %v3382
  %3425 = vmatpush.bf16.msra.mxu0 %v3380
  %3426 = vmatpush.bf16.msra.mxu0 %v3378
  %3427 = vmatpush.bf16.msra.mxu0 %v3376
  %3428 = vmatpush.bf16.msra.mxu0 %v3374
  %3429 = vmatpush.bf16.msra.mxu0 %v3372
  %3430 = vmatpush.bf16.msra.mxu0 %v3370
  %3431 = vmatpush.bf16.msra.mxu0 %v3368
  %3432 = vmatmul.bf16.gmra.mxu0 %v3299
  %v3433 = vpop.f32.mrf.mxu0
  %v3434 = vadd.f32 0.0, %v3433
  %v3435 = vpop.f32.mrf.mxu0
  %v3436 = vadd.f32 0.0, %v3435
  %3437 = vmatmul.bf16.gmra.mxu0 %v3300
  %v3438 = vpop.f32.mrf.mxu0
  %v3439 = vpop.f32.mrf.mxu0
  %3440 = vmatmul.bf16.gmra.mxu0 %v3301
  %v3441 = vpop.f32.mrf.mxu0
  %v3442 = vadd.f32 0.0, %v3441
  %v3443 = vpop.f32.mrf.mxu0
  %3444 = vmatmul.bf16.gmra.mxu0 %v3302
  %v3445 = vpop.f32.mrf.mxu0
  %v3446 = vadd.f32 0.0, %v3445
  %v3447 = vpop.f32.mrf.mxu0
  %3448 = vdwg.mxu0
  %v3449 = vadd.f32 %v3284, %v3409
  %v3450 = vadd.f32 %v3285, %v3434
  %v3451 = vadd.f32 %v3286, %v3411
  %v3452 = vadd.f32 %v3287, %v3436
  %v3453 = vadd.f32 %v3288, %v3417
  %v3454 = vadd.f32 %v3289, %v3442
  %v3455 = vadd.f32 %v3290, %v3421
  %v3456 = vadd.f32 %v3291, %v3446
  %v3457 = vld [vmem:[#allocation2 + $0x9] sm:$0xff]
  %v3458 = vld [vmem:[#allocation2 + $0x11] sm:$0xff]
  %v3459 = vld [vmem:[#allocation2 + $0x19] sm:$0xff]
  %v3460 = vld [vmem:[#allocation2 + $0x21] sm:$0xff]
  %v3461 = vld [vmem:[#allocation2 + $0x29] sm:$0xff]
  %v3462 = vld [vmem:[#allocation2 + $0x31] sm:$0xff]
  %v3463 = vld [vmem:[#allocation2 + $0x39] sm:$0x7]
  %v3464 = vpack.c.bf16 %v3458, %v3457
  %v3465 = vpack.c.bf16 %v3460, %v3459
  %v3466 = vpack.c.bf16 %v3462, %v3461
  %v3467 = vpack.c.bf16 %v3463, %v3463
  %v3468 = vld [vmem:[%s4 + $0x380] sm:$0xff]
  %v3469 = vld [vmem:[%s4 + $0x388] sm:$0xff]
  %v3470 = vld [vmem:[%s4 + $0x390] sm:$0xff]
  %v3471 = vld [vmem:[%s4 + $0x398] sm:$0xff]
  %v3472 = vld [vmem:[%s4 + $0x3a0] sm:$0xff]
  %v3473 = vld [vmem:[%s4 + $0x3a8] sm:$0xff]
  %v3474 = vld [vmem:[%s4 + $0x3b0] sm:$0xff]
  %v3475 = vld [vmem:[%s4 + $0x3b8] sm:$0xff]
  %v3476 = vld [vmem:[%s4 + $0x3c0] sm:$0xff]
  %v3477 = vld [vmem:[%s4 + $0x3c8] sm:$0xff]
  %v3478 = vld [vmem:[%s4 + $0x3d0] sm:$0xff]
  %v3479 = vld [vmem:[%s4 + $0x3d8] sm:$0xff]
  %v3480 = vld [vmem:[%s4 + $0x3e0] sm:$0xff]
  %v3481 = vld [vmem:[%s4 + $0x3e8] sm:$0xff]
  %v3482 = vld [vmem:[%s4 + $0x3f0] sm:$0xff]
  %v3483 = vld [vmem:[%s4 + $0x3f8] sm:$0xff]
  %v3500 = vunpack.c.l.b16 %v3468
  %v3501 = vunpack.c.h.b16 %v3468
  %v3502 = vunpack.c.l.b16 %v3469
  %v3503 = vunpack.c.h.b16 %v3469
  %v3504 = vunpack.c.l.b16 %v3470
  %v3505 = vunpack.c.h.b16 %v3470
  %v3506 = vunpack.c.l.b16 %v3471
  %v3507 = vunpack.c.h.b16 %v3471
  %v3508 = vunpack.c.l.b16 %v3472
  %v3509 = vunpack.c.h.b16 %v3472
  %v3510 = vunpack.c.l.b16 %v3473
  %v3511 = vunpack.c.h.b16 %v3473
  %v3512 = vunpack.c.l.b16 %v3474
  %v3513 = vunpack.c.h.b16 %v3474
  %v3514 = vunpack.c.l.b16 %v3475
  %v3515 = vunpack.c.h.b16 %v3475
  %v3516 = vunpack.c.l.b16 %v3476
  %v3517 = vunpack.c.h.b16 %v3476
  %v3518 = vunpack.c.l.b16 %v3477
  %v3519 = vunpack.c.h.b16 %v3477
  %v3520 = vunpack.c.l.b16 %v3478
  %v3521 = vunpack.c.h.b16 %v3478
  %v3522 = vunpack.c.l.b16 %v3479
  %v3523 = vunpack.c.h.b16 %v3479
  %v3524 = vunpack.c.l.b16 %v3480
  %v3525 = vunpack.c.h.b16 %v3480
  %v3526 = vunpack.c.l.b16 %v3481
  %v3527 = vunpack.c.h.b16 %v3481
  %v3528 = vunpack.c.l.b16 %v3482
  %v3529 = vunpack.c.h.b16 %v3482
  %v3530 = vunpack.c.l.b16 %v3483
  %v3531 = vunpack.c.h.b16 %v3483
  %v3532 = vpack.c.b16 %v3502, %v3500
  %v3533 = vpack.c.b16 %v3503, %v3501
  %v3534 = vpack.c.b16 %v3506, %v3504
  %v3535 = vpack.c.b16 %v3507, %v3505
  %v3536 = vpack.c.b16 %v3510, %v3508
  %v3537 = vpack.c.b16 %v3511, %v3509
  %v3538 = vpack.c.b16 %v3514, %v3512
  %v3539 = vpack.c.b16 %v3515, %v3513
  %v3540 = vpack.c.b16 %v3518, %v3516
  %v3541 = vpack.c.b16 %v3519, %v3517
  %v3542 = vpack.c.b16 %v3522, %v3520
  %v3543 = vpack.c.b16 %v3523, %v3521
  %v3544 = vpack.c.b16 %v3526, %v3524
  %v3545 = vpack.c.b16 %v3527, %v3525
  %v3546 = vpack.c.b16 %v3530, %v3528
  %v3547 = vpack.c.b16 %v3531, %v3529
  %3564 = vmatpush.bf16.msra.mxu0 %v3546
  %3565 = vmatpush.bf16.msra.mxu0 %v3544
  %3566 = vmatpush.bf16.msra.mxu0 %v3542
  %3567 = vmatpush.bf16.msra.mxu0 %v3540
  %3568 = vmatpush.bf16.msra.mxu0 %v3538
  %3569 = vmatpush.bf16.msra.mxu0 %v3536
  %3570 = vmatpush.bf16.msra.mxu0 %v3534
  %3571 = vmatpush.bf16.msra.mxu0 %v3532
  %3572 = vmatmul.bf16.gmra.mxu0 %v3464
  %v3573 = vpop.f32.mrf.mxu0
  %v3574 = vadd.f32 0.0, %v3573
  %v3575 = vpop.f32.mrf.mxu0
  %v3576 = vadd.f32 0.0, %v3575
  %3577 = vmatmul.bf16.gmra.mxu0 %v3465
  %v3578 = vpop.f32.mrf.mxu0
  %v3579 = vpop.f32.mrf.mxu0
  %3580 = vmatmul.bf16.gmra.mxu0 %v3466
  %v3581 = vpop.f32.mrf.mxu0
  %v3582 = vadd.f32 0.0, %v3581
  %v3583 = vpop.f32.mrf.mxu0
  %3584 = vmatmul.bf16.gmra.mxu0 %v3467
  %v3585 = vpop.f32.mrf.mxu0
  %v3586 = vadd.f32 0.0, %v3585
  %v3587 = vpop.f32.mrf.mxu0
  %3588 = vdwg.mxu0
  %3589 = vmatpush.bf16.msra.mxu0 %v3547
  %3590 = vmatpush.bf16.msra.mxu0 %v3545
  %3591 = vmatpush.bf16.msra.mxu0 %v3543
  %3592 = vmatpush.bf16.msra.mxu0 %v3541
  %3593 = vmatpush.bf16.msra.mxu0 %v3539
  %3594 = vmatpush.bf16.msra.mxu0 %v3537
  %3595 = vmatpush.bf16.msra.mxu0 %v3535
  %3596 = vmatpush.bf16.msra.mxu0 %v3533
  %3597 = vmatmul.bf16.gmra.mxu0 %v3464
  %v3598 = vpop.f32.mrf.mxu0
  %v3599 = vadd.f32 0.0, %v3598
  %v3600 = vpop.f32.mrf.mxu0
  %v3601 = vadd.f32 0.0, %v3600
  %3602 = vmatmul.bf16.gmra.mxu0 %v3465
  %v3603 = vpop.f32.mrf.mxu0
  %v3604 = vpop.f32.mrf.mxu0
  %3605 = vmatmul.bf16.gmra.mxu0 %v3466
  %v3606 = vpop.f32.mrf.mxu0
  %v3607 = vadd.f32 0.0, %v3606
  %v3608 = vpop.f32.mrf.mxu0
  %3609 = vmatmul.bf16.gmra.mxu0 %v3467
  %v3610 = vpop.f32.mrf.mxu0
  %v3611 = vadd.f32 0.0, %v3610
  %v3612 = vpop.f32.mrf.mxu0
  %3613 = vdwg.mxu0
  %v3614 = vadd.f32 %v3449, %v3574
  %v3615 = vadd.f32 %v3450, %v3599
  %v3616 = vadd.f32 %v3451, %v3576
  %v3617 = vadd.f32 %v3452, %v3601
  %v3618 = vadd.f32 %v3453, %v3582
  %v3619 = vadd.f32 %v3454, %v3607
  %v3620 = vadd.f32 %v3455, %v3586
  %v3621 = vadd.f32 %v3456, %v3611
  %v3622 = vld [vmem:[#allocation2 + $0xc] sm:$0xff]
  %v3623 = vld [vmem:[#allocation2 + $0x14] sm:$0xff]
  %v3624 = vld [vmem:[#allocation2 + $0x1c] sm:$0xff]
  %v3625 = vld [vmem:[#allocation2 + $0x24] sm:$0xff]
  %v3626 = vld [vmem:[#allocation2 + $0x2c] sm:$0xff]
  %v3627 = vld [vmem:[#allocation2 + $0x34] sm:$0xff]
  %v3628 = vld [vmem:[#allocation2 + $0x3c] sm:$0x7]
  %v3629 = vpack.c.bf16 %v3623, %v3622
  %v3630 = vpack.c.bf16 %v3625, %v3624
  %v3631 = vpack.c.bf16 %v3627, %v3626
  %v3632 = vpack.c.bf16 %v3628, %v3628
  %v3633 = vld [vmem:[%s4 + $0x400] sm:$0xff]
  %v3634 = vld [vmem:[%s4 + $0x408] sm:$0xff]
  %v3635 = vld [vmem:[%s4 + $0x410] sm:$0xff]
  %v3636 = vld [vmem:[%s4 + $0x418] sm:$0xff]
  %v3637 = vld [vmem:[%s4 + $0x420] sm:$0xff]
  %v3638 = vld [vmem:[%s4 + $0x428] sm:$0xff]
  %v3639 = vld [vmem:[%s4 + $0x430] sm:$0xff]
  %v3640 = vld [vmem:[%s4 + $0x438] sm:$0xff]
  %v3641 = vld [vmem:[%s4 + $0x440] sm:$0xff]
  %v3642 = vld [vmem:[%s4 + $0x448] sm:$0xff]
  %v3643 = vld [vmem:[%s4 + $0x450] sm:$0xff]
  %v3644 = vld [vmem:[%s4 + $0x458] sm:$0xff]
  %v3645 = vld [vmem:[%s4 + $0x460] sm:$0xff]
  %v3646 = vld [vmem:[%s4 + $0x468] sm:$0xff]
  %v3647 = vld [vmem:[%s4 + $0x470] sm:$0xff]
  %v3648 = vld [vmem:[%s4 + $0x478] sm:$0xff]
  %v3665 = vunpack.c.l.b16 %v3633
  %v3666 = vunpack.c.h.b16 %v3633
  %v3667 = vunpack.c.l.b16 %v3634
  %v3668 = vunpack.c.h.b16 %v3634
  %v3669 = vunpack.c.l.b16 %v3635
  %v3670 = vunpack.c.h.b16 %v3635
  %v3671 = vunpack.c.l.b16 %v3636
  %v3672 = vunpack.c.h.b16 %v3636
  %v3673 = vunpack.c.l.b16 %v3637
  %v3674 = vunpack.c.h.b16 %v3637
  %v3675 = vunpack.c.l.b16 %v3638
  %v3676 = vunpack.c.h.b16 %v3638
  %v3677 = vunpack.c.l.b16 %v3639
  %v3678 = vunpack.c.h.b16 %v3639
  %v3679 = vunpack.c.l.b16 %v3640
  %v3680 = vunpack.c.h.b16 %v3640
  %v3681 = vunpack.c.l.b16 %v3641
  %v3682 = vunpack.c.h.b16 %v3641
  %v3683 = vunpack.c.l.b16 %v3642
  %v3684 = vunpack.c.h.b16 %v3642
  %v3685 = vunpack.c.l.b16 %v3643
  %v3686 = vunpack.c.h.b16 %v3643
  %v3687 = vunpack.c.l.b16 %v3644
  %v3688 = vunpack.c.h.b16 %v3644
  %v3689 = vunpack.c.l.b16 %v3645
  %v3690 = vunpack.c.h.b16 %v3645
  %v3691 = vunpack.c.l.b16 %v3646
  %v3692 = vunpack.c.h.b16 %v3646
  %v3693 = vunpack.c.l.b16 %v3647
  %v3694 = vunpack.c.h.b16 %v3647
  %v3695 = vunpack.c.l.b16 %v3648
  %v3696 = vunpack.c.h.b16 %v3648
  %v3697 = vpack.c.b16 %v3667, %v3665
  %v3698 = vpack.c.b16 %v3668, %v3666
  %v3699 = vpack.c.b16 %v3671, %v3669
  %v3700 = vpack.c.b16 %v3672, %v3670
  %v3701 = vpack.c.b16 %v3675, %v3673
  %v3702 = vpack.c.b16 %v3676, %v3674
  %v3703 = vpack.c.b16 %v3679, %v3677
  %v3704 = vpack.c.b16 %v3680, %v3678
  %v3705 = vpack.c.b16 %v3683, %v3681
  %v3706 = vpack.c.b16 %v3684, %v3682
  %v3707 = vpack.c.b16 %v3687, %v3685
  %v3708 = vpack.c.b16 %v3688, %v3686
  %v3709 = vpack.c.b16 %v3691, %v3689
  %v3710 = vpack.c.b16 %v3692, %v3690
  %v3711 = vpack.c.b16 %v3695, %v3693
  %v3712 = vpack.c.b16 %v3696, %v3694
  %3729 = vmatpush.bf16.msra.mxu0 %v3711
  %3730 = vmatpush.bf16.msra.mxu0 %v3709
  %3731 = vmatpush.bf16.msra.mxu0 %v3707
  %3732 = vmatpush.bf16.msra.mxu0 %v3705
  %3733 = vmatpush.bf16.msra.mxu0 %v3703
  %3734 = vmatpush.bf16.msra.mxu0 %v3701
  %3735 = vmatpush.bf16.msra.mxu0 %v3699
  %3736 = vmatpush.bf16.msra.mxu0 %v3697
  %3737 = vmatmul.bf16.gmra.mxu0 %v3629
  %v3738 = vpop.f32.mrf.mxu0
  %v3739 = vadd.f32 0.0, %v3738
  %v3740 = vpop.f32.mrf.mxu0
  %v3741 = vadd.f32 0.0, %v3740
  %3742 = vmatmul.bf16.gmra.mxu0 %v3630
  %v3743 = vpop.f32.mrf.mxu0
  %v3744 = vpop.f32.mrf.mxu0
  %3745 = vmatmul.bf16.gmra.mxu0 %v3631
  %v3746 = vpop.f32.mrf.mxu0
  %v3747 = vadd.f32 0.0, %v3746
  %v3748 = vpop.f32.mrf.mxu0
  %3749 = vmatmul.bf16.gmra.mxu0 %v3632
  %v3750 = vpop.f32.mrf.mxu0
  %v3751 = vadd.f32 0.0, %v3750
  %v3752 = vpop.f32.mrf.mxu0
  %3753 = vdwg.mxu0
  %3754 = vmatpush.bf16.msra.mxu0 %v3712
  %3755 = vmatpush.bf16.msra.mxu0 %v3710
  %3756 = vmatpush.bf16.msra.mxu0 %v3708
  %3757 = vmatpush.bf16.msra.mxu0 %v3706
  %3758 = vmatpush.bf16.msra.mxu0 %v3704
  %3759 = vmatpush.bf16.msra.mxu0 %v3702
  %3760 = vmatpush.bf16.msra.mxu0 %v3700
  %3761 = vmatpush.bf16.msra.mxu0 %v3698
  %3762 = vmatmul.bf16.gmra.mxu0 %v3629
  %v3763 = vpop.f32.mrf.mxu0
  %v3764 = vadd.f32 0.0, %v3763
  %v3765 = vpop.f32.mrf.mxu0
  %v3766 = vadd.f32 0.0, %v3765
  %3767 = vmatmul.bf16.gmra.mxu0 %v3630
  %v3768 = vpop.f32.mrf.mxu0
  %v3769 = vpop.f32.mrf.mxu0
  %3770 = vmatmul.bf16.gmra.mxu0 %v3631
  %v3771 = vpop.f32.mrf.mxu0
  %v3772 = vadd.f32 0.0, %v3771
  %v3773 = vpop.f32.mrf.mxu0
  %3774 = vmatmul.bf16.gmra.mxu0 %v3632
  %v3775 = vpop.f32.mrf.mxu0
  %v3776 = vadd.f32 0.0, %v3775
  %v3777 = vpop.f32.mrf.mxu0
  %3778 = vdwg.mxu0
  %v3779 = vadd.f32 %v3614, %v3739
  %v3780 = vadd.f32 %v3615, %v3764
  %v3781 = vadd.f32 %v3616, %v3741
  %v3782 = vadd.f32 %v3617, %v3766
  %v3783 = vadd.f32 %v3618, %v3747
  %v3784 = vadd.f32 %v3619, %v3772
  %v3785 = vadd.f32 %v3620, %v3751
  %v3786 = vadd.f32 %v3621, %v3776
  %v3787 = vld [vmem:[#allocation2 + $0xd] sm:$0xff]
  %v3788 = vld [vmem:[#allocation2 + $0x15] sm:$0xff]
  %v3789 = vld [vmem:[#allocation2 + $0x1d] sm:$0xff]
  %v3790 = vld [vmem:[#allocation2 + $0x25] sm:$0xff]
  %v3791 = vld [vmem:[#allocation2 + $0x2d] sm:$0xff]
  %v3792 = vld [vmem:[#allocation2 + $0x35] sm:$0xff]
  %v3793 = vld [vmem:[#allocation2 + $0x3d] sm:$0x7]
  %v3794 = vpack.c.bf16 %v3788, %v3787
  %v3795 = vpack.c.bf16 %v3790, %v3789
  %v3796 = vpack.c.bf16 %v3792, %v3791
  %v3797 = vpack.c.bf16 %v3793, %v3793
  %v3798 = vld [vmem:[%s4 + $0x480] sm:$0xff]
  %v3799 = vld [vmem:[%s4 + $0x488] sm:$0xff]
  %v3800 = vld [vmem:[%s4 + $0x490] sm:$0xff]
  %v3801 = vld [vmem:[%s4 + $0x498] sm:$0xff]
  %v3802 = vld [vmem:[%s4 + $0x4a0] sm:$0xff]
  %v3803 = vld [vmem:[%s4 + $0x4a8] sm:$0xff]
  %v3804 = vld [vmem:[%s4 + $0x4b0] sm:$0xff]
  %v3805 = vld [vmem:[%s4 + $0x4b8] sm:$0xff]
  %v3806 = vld [vmem:[%s4 + $0x4c0] sm:$0xff]
  %v3807 = vld [vmem:[%s4 + $0x4c8] sm:$0xff]
  %v3808 = vld [vmem:[%s4 + $0x4d0] sm:$0xff]
  %v3809 = vld [vmem:[%s4 + $0x4d8] sm:$0xff]
  %v3810 = vld [vmem:[%s4 + $0x4e0] sm:$0xff]
  %v3811 = vld [vmem:[%s4 + $0x4e8] sm:$0xff]
  %v3812 = vld [vmem:[%s4 + $0x4f0] sm:$0xff]
  %v3813 = vld [vmem:[%s4 + $0x4f8] sm:$0xff]
  %v3830 = vunpack.c.l.b16 %v3798
  %v3831 = vunpack.c.h.b16 %v3798
  %v3832 = vunpack.c.l.b16 %v3799
  %v3833 = vunpack.c.h.b16 %v3799
  %v3834 = vunpack.c.l.b16 %v3800
  %v3835 = vunpack.c.h.b16 %v3800
  %v3836 = vunpack.c.l.b16 %v3801
  %v3837 = vunpack.c.h.b16 %v3801
  %v3838 = vunpack.c.l.b16 %v3802
  %v3839 = vunpack.c.h.b16 %v3802
  %v3840 = vunpack.c.l.b16 %v3803
  %v3841 = vunpack.c.h.b16 %v3803
  %v3842 = vunpack.c.l.b16 %v3804
  %v3843 = vunpack.c.h.b16 %v3804
  %v3844 = vunpack.c.l.b16 %v3805
  %v3845 = vunpack.c.h.b16 %v3805
  %v3846 = vunpack.c.l.b16 %v3806
  %v3847 = vunpack.c.h.b16 %v3806
  %v3848 = vunpack.c.l.b16 %v3807
  %v3849 = vunpack.c.h.b16 %v3807
  %v3850 = vunpack.c.l.b16 %v3808
  %v3851 = vunpack.c.h.b16 %v3808
  %v3852 = vunpack.c.l.b16 %v3809
  %v3853 = vunpack.c.h.b16 %v3809
  %v3854 = vunpack.c.l.b16 %v3810
  %v3855 = vunpack.c.h.b16 %v3810
  %v3856 = vunpack.c.l.b16 %v3811
  %v3857 = vunpack.c.h.b16 %v3811
  %v3858 = vunpack.c.l.b16 %v3812
  %v3859 = vunpack.c.h.b16 %v3812
  %v3860 = vunpack.c.l.b16 %v3813
  %v3861 = vunpack.c.h.b16 %v3813
  %v3862 = vpack.c.b16 %v3832, %v3830
  %v3863 = vpack.c.b16 %v3833, %v3831
  %v3864 = vpack.c.b16 %v3836, %v3834
  %v3865 = vpack.c.b16 %v3837, %v3835
  %v3866 = vpack.c.b16 %v3840, %v3838
  %v3867 = vpack.c.b16 %v3841, %v3839
  %v3868 = vpack.c.b16 %v3844, %v3842
  %v3869 = vpack.c.b16 %v3845, %v3843
  %v3870 = vpack.c.b16 %v3848, %v3846
  %v3871 = vpack.c.b16 %v3849, %v3847
  %v3872 = vpack.c.b16 %v3852, %v3850
  %v3873 = vpack.c.b16 %v3853, %v3851
  %v3874 = vpack.c.b16 %v3856, %v3854
  %v3875 = vpack.c.b16 %v3857, %v3855
  %v3876 = vpack.c.b16 %v3860, %v3858
  %v3877 = vpack.c.b16 %v3861, %v3859
  %3894 = vmatpush.bf16.msra.mxu0 %v3876
  %3895 = vmatpush.bf16.msra.mxu0 %v3874
  %3896 = vmatpush.bf16.msra.mxu0 %v3872
  %3897 = vmatpush.bf16.msra.mxu0 %v3870
  %3898 = vmatpush.bf16.msra.mxu0 %v3868
  %3899 = vmatpush.bf16.msra.mxu0 %v3866
  %3900 = vmatpush.bf16.msra.mxu0 %v3864
  %3901 = vmatpush.bf16.msra.mxu0 %v3862
  %3902 = vmatmul.bf16.gmra.mxu0 %v3794
  %v3903 = vpop.f32.mrf.mxu0
  %v3904 = vadd.f32 0.0, %v3903
  %v3905 = vpop.f32.mrf.mxu0
  %v3906 = vadd.f32 0.0, %v3905
  %3907 = vmatmul.bf16.gmra.mxu0 %v3795
  %v3908 = vpop.f32.mrf.mxu0
  %v3909 = vpop.f32.mrf.mxu0
  %3910 = vmatmul.bf16.gmra.mxu0 %v3796
  %v3911 = vpop.f32.mrf.mxu0
  %v3912 = vadd.f32 0.0, %v3911
  %v3913 = vpop.f32.mrf.mxu0
  %3914 = vmatmul.bf16.gmra.mxu0 %v3797
  %v3915 = vpop.f32.mrf.mxu0
  %v3916 = vadd.f32 0.0, %v3915
  %v3917 = vpop.f32.mrf.mxu0
  %3918 = vdwg.mxu0
  %3919 = vmatpush.bf16.msra.mxu0 %v3877
  %3920 = vmatpush.bf16.msra.mxu0 %v3875
  %3921 = vmatpush.bf16.msra.mxu0 %v3873
  %3922 = vmatpush.bf16.msra.mxu0 %v3871
  %3923 = vmatpush.bf16.msra.mxu0 %v3869
  %3924 = vmatpush.bf16.msra.mxu0 %v3867
  %3925 = vmatpush.bf16.msra.mxu0 %v3865
  %3926 = vmatpush.bf16.msra.mxu0 %v3863
  %3927 = vmatmul.bf16.gmra.mxu0 %v3794
  %v3928 = vpop.f32.mrf.mxu0
  %v3929 = vadd.f32 0.0, %v3928
  %v3930 = vpop.f32.mrf.mxu0
  %v3931 = vadd.f32 0.0, %v3930
  %3932 = vmatmul.bf16.gmra.mxu0 %v3795
  %v3933 = vpop.f32.mrf.mxu0
  %v3934 = vpop.f32.mrf.mxu0
  %3935 = vmatmul.bf16.gmra.mxu0 %v3796
  %v3936 = vpop.f32.mrf.mxu0
  %v3937 = vadd.f32 0.0, %v3936
  %v3938 = vpop.f32.mrf.mxu0
  %3939 = vmatmul.bf16.gmra.mxu0 %v3797
  %v3940 = vpop.f32.mrf.mxu0
  %v3941 = vadd.f32 0.0, %v3940
  %v3942 = vpop.f32.mrf.mxu0
  %3943 = vdwg.mxu0
  %v3944 = vadd.f32 %v3779, %v3904
  %v3945 = vadd.f32 %v3780, %v3929
  %v3946 = vadd.f32 %v3781, %v3906
  %v3947 = vadd.f32 %v3782, %v3931
  %v3948 = vadd.f32 %v3783, %v3912
  %v3949 = vadd.f32 %v3784, %v3937
  %v3950 = vadd.f32 %v3785, %v3916
  %v3951 = vadd.f32 %v3786, %v3941
  %v3952 = vld [vmem:[#allocation2 + $0xe] sm:$0xff]
  %v3953 = vld [vmem:[#allocation2 + $0x16] sm:$0xff]
  %v3954 = vld [vmem:[#allocation2 + $0x1e] sm:$0xff]
  %v3955 = vld [vmem:[#allocation2 + $0x26] sm:$0xff]
  %v3956 = vld [vmem:[#allocation2 + $0x2e] sm:$0xff]
  %v3957 = vld [vmem:[#allocation2 + $0x36] sm:$0xff]
  %v3958 = vld [vmem:[#allocation2 + $0x3e] sm:$0x7]
  %v3959 = vpack.c.bf16 %v3953, %v3952
  %v3960 = vpack.c.bf16 %v3955, %v3954
  %v3961 = vpack.c.bf16 %v3957, %v3956
  %v3962 = vpack.c.bf16 %v3958, %v3958
  %v3963 = vld [vmem:[%s4 + $0x500] sm:$0xff]
  %v3964 = vld [vmem:[%s4 + $0x508] sm:$0xff]
  %v3965 = vld [vmem:[%s4 + $0x510] sm:$0xff]
  %v3966 = vld [vmem:[%s4 + $0x518] sm:$0xff]
  %v3967 = vld [vmem:[%s4 + $0x520] sm:$0xff]
  %v3968 = vld [vmem:[%s4 + $0x528] sm:$0xff]
  %v3969 = vld [vmem:[%s4 + $0x530] sm:$0xff]
  %v3970 = vld [vmem:[%s4 + $0x538] sm:$0xff]
  %v3971 = vld [vmem:[%s4 + $0x540] sm:$0xff]
  %v3972 = vld [vmem:[%s4 + $0x548] sm:$0xff]
  %v3973 = vld [vmem:[%s4 + $0x550] sm:$0xff]
  %v3974 = vld [vmem:[%s4 + $0x558] sm:$0xff]
  %v3975 = vld [vmem:[%s4 + $0x560] sm:$0xff]
  %v3976 = vld [vmem:[%s4 + $0x568] sm:$0xff]
  %v3977 = vld [vmem:[%s4 + $0x570] sm:$0xff]
  %v3978 = vld [vmem:[%s4 + $0x578] sm:$0xff]
  %v3995 = vunpack.c.l.b16 %v3963
  %v3996 = vunpack.c.h.b16 %v3963
  %v3997 = vunpack.c.l.b16 %v3964
  %v3998 = vunpack.c.h.b16 %v3964
  %v3999 = vunpack.c.l.b16 %v3965
  %v4000 = vunpack.c.h.b16 %v3965
  %v4001 = vunpack.c.l.b16 %v3966
  %v4002 = vunpack.c.h.b16 %v3966
  %v4003 = vunpack.c.l.b16 %v3967
  %v4004 = vunpack.c.h.b16 %v3967
  %v4005 = vunpack.c.l.b16 %v3968
  %v4006 = vunpack.c.h.b16 %v3968
  %v4007 = vunpack.c.l.b16 %v3969
  %v4008 = vunpack.c.h.b16 %v3969
  %v4009 = vunpack.c.l.b16 %v3970
  %v4010 = vunpack.c.h.b16 %v3970
  %v4011 = vunpack.c.l.b16 %v3971
  %v4012 = vunpack.c.h.b16 %v3971
  %v4013 = vunpack.c.l.b16 %v3972
  %v4014 = vunpack.c.h.b16 %v3972
  %v4015 = vunpack.c.l.b16 %v3973
  %v4016 = vunpack.c.h.b16 %v3973
  %v4017 = vunpack.c.l.b16 %v3974
  %v4018 = vunpack.c.h.b16 %v3974
  %v4019 = vunpack.c.l.b16 %v3975
  %v4020 = vunpack.c.h.b16 %v3975
  %v4021 = vunpack.c.l.b16 %v3976
  %v4022 = vunpack.c.h.b16 %v3976
  %v4023 = vunpack.c.l.b16 %v3977
  %v4024 = vunpack.c.h.b16 %v3977
  %v4025 = vunpack.c.l.b16 %v3978
  %v4026 = vunpack.c.h.b16 %v3978
  %v4027 = vpack.c.b16 %v3997, %v3995
  %v4028 = vpack.c.b16 %v3998, %v3996
  %v4029 = vpack.c.b16 %v4001, %v3999
  %v4030 = vpack.c.b16 %v4002, %v4000
  %v4031 = vpack.c.b16 %v4005, %v4003
  %v4032 = vpack.c.b16 %v4006, %v4004
  %v4033 = vpack.c.b16 %v4009, %v4007
  %v4034 = vpack.c.b16 %v4010, %v4008
  %v4035 = vpack.c.b16 %v4013, %v4011
  %v4036 = vpack.c.b16 %v4014, %v4012
  %v4037 = vpack.c.b16 %v4017, %v4015
  %v4038 = vpack.c.b16 %v4018, %v4016
  %v4039 = vpack.c.b16 %v4021, %v4019
  %v4040 = vpack.c.b16 %v4022, %v4020
  %v4041 = vpack.c.b16 %v4025, %v4023
  %v4042 = vpack.c.b16 %v4026, %v4024
  %4059 = vmatpush.bf16.msra.mxu0 %v4041
  %4060 = vmatpush.bf16.msra.mxu0 %v4039
  %4061 = vmatpush.bf16.msra.mxu0 %v4037
  %4062 = vmatpush.bf16.msra.mxu0 %v4035
  %4063 = vmatpush.bf16.msra.mxu0 %v4033
  %4064 = vmatpush.bf16.msra.mxu0 %v4031
  %4065 = vmatpush.bf16.msra.mxu0 %v4029
  %4066 = vmatpush.bf16.msra.mxu0 %v4027
  %4067 = vmatmul.bf16.gmra.mxu0 %v3959
  %v4068 = vpop.f32.mrf.mxu0
  %v4069 = vadd.f32 0.0, %v4068
  %v4070 = vpop.f32.mrf.mxu0
  %v4071 = vadd.f32 0.0, %v4070
  %4072 = vmatmul.bf16.gmra.mxu0 %v3960
  %v4073 = vpop.f32.mrf.mxu0
  %v4074 = vpop.f32.mrf.mxu0
  %4075 = vmatmul.bf16.gmra.mxu0 %v3961
  %v4076 = vpop.f32.mrf.mxu0
  %v4077 = vadd.f32 0.0, %v4076
  %v4078 = vpop.f32.mrf.mxu0
  %4079 = vmatmul.bf16.gmra.mxu0 %v3962
  %v4080 = vpop.f32.mrf.mxu0
  %v4081 = vadd.f32 0.0, %v4080
  %v4082 = vpop.f32.mrf.mxu0
  %4083 = vdwg.mxu0
  %4084 = vmatpush.bf16.msra.mxu0 %v4042
  %4085 = vmatpush.bf16.msra.mxu0 %v4040
  %4086 = vmatpush.bf16.msra.mxu0 %v4038
  %4087 = vmatpush.bf16.msra.mxu0 %v4036
  %4088 = vmatpush.bf16.msra.mxu0 %v4034
  %4089 = vmatpush.bf16.msra.mxu0 %v4032
  %4090 = vmatpush.bf16.msra.mxu0 %v4030
  %4091 = vmatpush.bf16.msra.mxu0 %v4028
  %4092 = vmatmul.bf16.gmra.mxu0 %v3959
  %v4093 = vpop.f32.mrf.mxu0
  %v4094 = vadd.f32 0.0, %v4093
  %v4095 = vpop.f32.mrf.mxu0
  %v4096 = vadd.f32 0.0, %v4095
  %4097 = vmatmul.bf16.gmra.mxu0 %v3960
  %v4098 = vpop.f32.mrf.mxu0
  %v4099 = vpop.f32.mrf.mxu0
  %4100 = vmatmul.bf16.gmra.mxu0 %v3961
  %v4101 = vpop.f32.mrf.mxu0
  %v4102 = vadd.f32 0.0, %v4101
  %v4103 = vpop.f32.mrf.mxu0
  %4104 = vmatmul.bf16.gmra.mxu0 %v3962
  %v4105 = vpop.f32.mrf.mxu0
  %v4106 = vadd.f32 0.0, %v4105
  %v4107 = vpop.f32.mrf.mxu0
  %4108 = vdwg.mxu0
  %v4109 = vadd.f32 %v3944, %v4069
  %v4110 = vadd.f32 %v3945, %v4094
  %v4111 = vadd.f32 %v3946, %v4071
  %v4112 = vadd.f32 %v3947, %v4096
  %v4113 = vadd.f32 %v3948, %v4077
  %v4114 = vadd.f32 %v3949, %v4102
  %v4115 = vadd.f32 %v3950, %v4081
  %v4116 = vadd.f32 %v3951, %v4106
  %v4117 = vld [vmem:[#allocation2 + $0xf] sm:$0xff]
  %v4118 = vld [vmem:[#allocation2 + $0x17] sm:$0xff]
  %v4119 = vld [vmem:[#allocation2 + $0x1f] sm:$0xff]
  %v4120 = vld [vmem:[#allocation2 + $0x27] sm:$0xff]
  %v4121 = vld [vmem:[#allocation2 + $0x2f] sm:$0xff]
  %v4122 = vld [vmem:[#allocation2 + $0x37] sm:$0xff]
  %v4123 = vld [vmem:[#allocation2 + $0x3f] sm:$0x7]
  %v4124 = vpack.c.bf16 %v4118, %v4117
  %v4125 = vpack.c.bf16 %v4120, %v4119
  %v4126 = vpack.c.bf16 %v4122, %v4121
  %v4127 = vpack.c.bf16 %v4123, %v4123
  %v4128 = vld [vmem:[%s4 + $0x580] sm:$0xff]
  %v4129 = vld [vmem:[%s4 + $0x588] sm:$0xff]
  %v4130 = vld [vmem:[%s4 + $0x590] sm:$0xff]
  %v4131 = vld [vmem:[%s4 + $0x598] sm:$0xff]
  %v4132 = vld [vmem:[%s4 + $0x5a0] sm:$0xff]
  %v4133 = vld [vmem:[%s4 + $0x5a8] sm:$0xff]
  %v4134 = vld [vmem:[%s4 + $0x5b0] sm:$0xff]
  %v4135 = vld [vmem:[%s4 + $0x5b8] sm:$0xff]
  %v4136 = vld [vmem:[%s4 + $0x5c0] sm:$0xff]
  %v4137 = vld [vmem:[%s4 + $0x5c8] sm:$0xff]
  %v4138 = vld [vmem:[%s4 + $0x5d0] sm:$0xff]
  %v4139 = vld [vmem:[%s4 + $0x5d8] sm:$0xff]
  %v4140 = vld [vmem:[%s4 + $0x5e0] sm:$0xff]
  %v4141 = vld [vmem:[%s4 + $0x5e8] sm:$0xff]
  %v4142 = vld [vmem:[%s4 + $0x5f0] sm:$0xff]
  %v4143 = vld [vmem:[%s4 + $0x5f8] sm:$0xff]
  %v4160 = vunpack.c.l.b16 %v4128
  %v4161 = vunpack.c.h.b16 %v4128
  %v4162 = vunpack.c.l.b16 %v4129
  %v4163 = vunpack.c.h.b16 %v4129
  %v4164 = vunpack.c.l.b16 %v4130
  %v4165 = vunpack.c.h.b16 %v4130
  %v4166 = vunpack.c.l.b16 %v4131
  %v4167 = vunpack.c.h.b16 %v4131
  %v4168 = vunpack.c.l.b16 %v4132
  %v4169 = vunpack.c.h.b16 %v4132
  %v4170 = vunpack.c.l.b16 %v4133
  %v4171 = vunpack.c.h.b16 %v4133
  %v4172 = vunpack.c.l.b16 %v4134
  %v4173 = vunpack.c.h.b16 %v4134
  %v4174 = vunpack.c.l.b16 %v4135
  %v4175 = vunpack.c.h.b16 %v4135
  %v4176 = vunpack.c.l.b16 %v4136
  %v4177 = vunpack.c.h.b16 %v4136
  %v4178 = vunpack.c.l.b16 %v4137
  %v4179 = vunpack.c.h.b16 %v4137
  %v4180 = vunpack.c.l.b16 %v4138
  %v4181 = vunpack.c.h.b16 %v4138
  %v4182 = vunpack.c.l.b16 %v4139
  %v4183 = vunpack.c.h.b16 %v4139
  %v4184 = vunpack.c.l.b16 %v4140
  %v4185 = vunpack.c.h.b16 %v4140
  %v4186 = vunpack.c.l.b16 %v4141
  %v4187 = vunpack.c.h.b16 %v4141
  %v4188 = vunpack.c.l.b16 %v4142
  %v4189 = vunpack.c.h.b16 %v4142
  %v4190 = vunpack.c.l.b16 %v4143
  %v4191 = vunpack.c.h.b16 %v4143
  %v4192 = vpack.c.b16 %v4162, %v4160
  %v4193 = vpack.c.b16 %v4163, %v4161
  %v4194 = vpack.c.b16 %v4166, %v4164
  %v4195 = vpack.c.b16 %v4167, %v4165
  %v4196 = vpack.c.b16 %v4170, %v4168
  %v4197 = vpack.c.b16 %v4171, %v4169
  %v4198 = vpack.c.b16 %v4174, %v4172
  %v4199 = vpack.c.b16 %v4175, %v4173
  %v4200 = vpack.c.b16 %v4178, %v4176
  %v4201 = vpack.c.b16 %v4179, %v4177
  %v4202 = vpack.c.b16 %v4182, %v4180
  %v4203 = vpack.c.b16 %v4183, %v4181
  %v4204 = vpack.c.b16 %v4186, %v4184
  %v4205 = vpack.c.b16 %v4187, %v4185
  %v4206 = vpack.c.b16 %v4190, %v4188
  %v4207 = vpack.c.b16 %v4191, %v4189
  %4224 = vmatpush.bf16.msra.mxu0 %v4206
  %4225 = vmatpush.bf16.msra.mxu0 %v4204
  %4226 = vmatpush.bf16.msra.mxu0 %v4202
  %4227 = vmatpush.bf16.msra.mxu0 %v4200
  %4228 = vmatpush.bf16.msra.mxu0 %v4198
  %4229 = vmatpush.bf16.msra.mxu0 %v4196
  %4230 = vmatpush.bf16.msra.mxu0 %v4194
  %4231 = vmatpush.bf16.msra.mxu0 %v4192
  %4232 = vmatmul.bf16.gmra.mxu0 %v4124
  %v4233 = vpop.f32.mrf.mxu0
  %v4234 = vadd.f32 0.0, %v4233
  %v4235 = vpop.f32.mrf.mxu0
  %v4236 = vadd.f32 0.0, %v4235
  %4237 = vmatmul.bf16.gmra.mxu0 %v4125
  %v4238 = vpop.f32.mrf.mxu0
  %v4239 = vpop.f32.mrf.mxu0
  %4240 = vmatmul.bf16.gmra.mxu0 %v4126
  %v4241 = vpop.f32.mrf.mxu0
  %v4242 = vadd.f32 0.0, %v4241
  %v4243 = vpop.f32.mrf.mxu0
  %4244 = vmatmul.bf16.gmra.mxu0 %v4127
  %v4245 = vpop.f32.mrf.mxu0
  %v4246 = vadd.f32 0.0, %v4245
  %v4247 = vpop.f32.mrf.mxu0
  %4248 = vdwg.mxu0
  %4249 = vmatpush.bf16.msra.mxu0 %v4207
  %4250 = vmatpush.bf16.msra.mxu0 %v4205
  %4251 = vmatpush.bf16.msra.mxu0 %v4203
  %4252 = vmatpush.bf16.msra.mxu0 %v4201
  %4253 = vmatpush.bf16.msra.mxu0 %v4199
  %4254 = vmatpush.bf16.msra.mxu0 %v4197
  %4255 = vmatpush.bf16.msra.mxu0 %v4195
  %4256 = vmatpush.bf16.msra.mxu0 %v4193
  %4257 = vmatmul.bf16.gmra.mxu0 %v4124
  %v4258 = vpop.f32.mrf.mxu0
  %v4259 = vadd.f32 0.0, %v4258
  %v4260 = vpop.f32.mrf.mxu0
  %v4261 = vadd.f32 0.0, %v4260
  %4262 = vmatmul.bf16.gmra.mxu0 %v4125
  %v4263 = vpop.f32.mrf.mxu0
  %v4264 = vpop.f32.mrf.mxu0
  %4265 = vmatmul.bf16.gmra.mxu0 %v4126
  %v4266 = vpop.f32.mrf.mxu0
  %v4267 = vadd.f32 0.0, %v4266
  %v4268 = vpop.f32.mrf.mxu0
  %4269 = vmatmul.bf16.gmra.mxu0 %v4127
  %v4270 = vpop.f32.mrf.mxu0
  %v4271 = vadd.f32 0.0, %v4270
  %v4272 = vpop.f32.mrf.mxu0
  %4273 = vdwg.mxu0
  %v4274 = vadd.f32 %v4109, %v4234
  %v4275 = vadd.f32 %v4110, %v4259
  %v4276 = vadd.f32 %v4111, %v4236
  %v4277 = vadd.f32 %v4112, %v4261
  %v4278 = vadd.f32 %v4113, %v4242
  %v4279 = vadd.f32 %v4114, %v4267
  %v4280 = vadd.f32 %v4115, %v4246
  %v4281 = vadd.f32 %v4116, %v4271
  %v4282 = vld [vmem:[#allocation2 + $0x12] sm:$0xff]
  %v4283 = vld [vmem:[#allocation2 + $0x1a] sm:$0xff]
  %v4284 = vld [vmem:[#allocation2 + $0x22] sm:$0xff]
  %v4285 = vld [vmem:[#allocation2 + $0x2a] sm:$0xff]
  %v4286 = vld [vmem:[#allocation2 + $0x32] sm:$0xff]
  %v4287 = vld [vmem:[#allocation2 + $0x3a] sm:$0xff]
  %v4288 = vld [vmem:[#allocation2 + $0x42] sm:$0x7]
  %v4289 = vpack.c.bf16 %v4283, %v4282
  %v4290 = vpack.c.bf16 %v4285, %v4284
  %v4291 = vpack.c.bf16 %v4287, %v4286
  %v4292 = vpack.c.bf16 %v4288, %v4288
  %v4293 = vld [vmem:[%s4 + $0x600] sm:$0xff]
  %v4294 = vld [vmem:[%s4 + $0x608] sm:$0xff]
  %v4295 = vld [vmem:[%s4 + $0x610] sm:$0xff]
  %v4296 = vld [vmem:[%s4 + $0x618] sm:$0xff]
  %v4297 = vld [vmem:[%s4 + $0x620] sm:$0xff]
  %v4298 = vld [vmem:[%s4 + $0x628] sm:$0xff]
  %v4299 = vld [vmem:[%s4 + $0x630] sm:$0xff]
  %v4300 = vld [vmem:[%s4 + $0x638] sm:$0xff]
  %v4301 = vld [vmem:[%s4 + $0x640] sm:$0xff]
  %v4302 = vld [vmem:[%s4 + $0x648] sm:$0xff]
  %v4303 = vld [vmem:[%s4 + $0x650] sm:$0xff]
  %v4304 = vld [vmem:[%s4 + $0x658] sm:$0xff]
  %v4305 = vld [vmem:[%s4 + $0x660] sm:$0xff]
  %v4306 = vld [vmem:[%s4 + $0x668] sm:$0xff]
  %v4307 = vld [vmem:[%s4 + $0x670] sm:$0xff]
  %v4308 = vld [vmem:[%s4 + $0x678] sm:$0xff]
  %v4325 = vunpack.c.l.b16 %v4293
  %v4326 = vunpack.c.h.b16 %v4293
  %v4327 = vunpack.c.l.b16 %v4294
  %v4328 = vunpack.c.h.b16 %v4294
  %v4329 = vunpack.c.l.b16 %v4295
  %v4330 = vunpack.c.h.b16 %v4295
  %v4331 = vunpack.c.l.b16 %v4296
  %v4332 = vunpack.c.h.b16 %v4296
  %v4333 = vunpack.c.l.b16 %v4297
  %v4334 = vunpack.c.h.b16 %v4297
  %v4335 = vunpack.c.l.b16 %v4298
  %v4336 = vunpack.c.h.b16 %v4298
  %v4337 = vunpack.c.l.b16 %v4299
  %v4338 = vunpack.c.h.b16 %v4299
  %v4339 = vunpack.c.l.b16 %v4300
  %v4340 = vunpack.c.h.b16 %v4300
  %v4341 = vunpack.c.l.b16 %v4301
  %v4342 = vunpack.c.h.b16 %v4301
  %v4343 = vunpack.c.l.b16 %v4302
  %v4344 = vunpack.c.h.b16 %v4302
  %v4345 = vunpack.c.l.b16 %v4303
  %v4346 = vunpack.c.h.b16 %v4303
  %v4347 = vunpack.c.l.b16 %v4304
  %v4348 = vunpack.c.h.b16 %v4304
  %v4349 = vunpack.c.l.b16 %v4305
  %v4350 = vunpack.c.h.b16 %v4305
  %v4351 = vunpack.c.l.b16 %v4306
  %v4352 = vunpack.c.h.b16 %v4306
  %v4353 = vunpack.c.l.b16 %v4307
  %v4354 = vunpack.c.h.b16 %v4307
  %v4355 = vunpack.c.l.b16 %v4308
  %v4356 = vunpack.c.h.b16 %v4308
  %v4357 = vpack.c.b16 %v4327, %v4325
  %v4358 = vpack.c.b16 %v4328, %v4326
  %v4359 = vpack.c.b16 %v4331, %v4329
  %v4360 = vpack.c.b16 %v4332, %v4330
  %v4361 = vpack.c.b16 %v4335, %v4333
  %v4362 = vpack.c.b16 %v4336, %v4334
  %v4363 = vpack.c.b16 %v4339, %v4337
  %v4364 = vpack.c.b16 %v4340, %v4338
  %v4365 = vpack.c.b16 %v4343, %v4341
  %v4366 = vpack.c.b16 %v4344, %v4342
  %v4367 = vpack.c.b16 %v4347, %v4345
  %v4368 = vpack.c.b16 %v4348, %v4346
  %v4369 = vpack.c.b16 %v4351, %v4349
  %v4370 = vpack.c.b16 %v4352, %v4350
  %v4371 = vpack.c.b16 %v4355, %v4353
  %v4372 = vpack.c.b16 %v4356, %v4354
  %4389 = vmatpush.bf16.msra.mxu0 %v4371
  %4390 = vmatpush.bf16.msra.mxu0 %v4369
  %4391 = vmatpush.bf16.msra.mxu0 %v4367
  %4392 = vmatpush.bf16.msra.mxu0 %v4365
  %4393 = vmatpush.bf16.msra.mxu0 %v4363
  %4394 = vmatpush.bf16.msra.mxu0 %v4361
  %4395 = vmatpush.bf16.msra.mxu0 %v4359
  %4396 = vmatpush.bf16.msra.mxu0 %v4357
  %4397 = vmatmul.bf16.gmra.mxu0 %v4289
  %v4398 = vpop.f32.mrf.mxu0
  %v4399 = vadd.f32 0.0, %v4398
  %v4400 = vpop.f32.mrf.mxu0
  %v4401 = vadd.f32 0.0, %v4400
  %4402 = vmatmul.bf16.gmra.mxu0 %v4290
  %v4403 = vpop.f32.mrf.mxu0
  %v4404 = vpop.f32.mrf.mxu0
  %4405 = vmatmul.bf16.gmra.mxu0 %v4291
  %v4406 = vpop.f32.mrf.mxu0
  %v4407 = vadd.f32 0.0, %v4406
  %v4408 = vpop.f32.mrf.mxu0
  %4409 = vmatmul.bf16.gmra.mxu0 %v4292
  %v4410 = vpop.f32.mrf.mxu0
  %v4411 = vadd.f32 0.0, %v4410
  %v4412 = vpop.f32.mrf.mxu0
  %4413 = vdwg.mxu0
  %4414 = vmatpush.bf16.msra.mxu0 %v4372
  %4415 = vmatpush.bf16.msra.mxu0 %v4370
  %4416 = vmatpush.bf16.msra.mxu0 %v4368
  %4417 = vmatpush.bf16.msra.mxu0 %v4366
  %4418 = vmatpush.bf16.msra.mxu0 %v4364
  %4419 = vmatpush.bf16.msra.mxu0 %v4362
  %4420 = vmatpush.bf16.msra.mxu0 %v4360
  %4421 = vmatpush.bf16.msra.mxu0 %v4358
  %4422 = vmatmul.bf16.gmra.mxu0 %v4289
  %v4423 = vpop.f32.mrf.mxu0
  %v4424 = vadd.f32 0.0, %v4423
  %v4425 = vpop.f32.mrf.mxu0
  %v4426 = vadd.f32 0.0, %v4425
  %4427 = vmatmul.bf16.gmra.mxu0 %v4290
  %v4428 = vpop.f32.mrf.mxu0
  %v4429 = vpop.f32.mrf.mxu0
  %4430 = vmatmul.bf16.gmra.mxu0 %v4291
  %v4431 = vpop.f32.mrf.mxu0
  %v4432 = vadd.f32 0.0, %v4431
  %v4433 = vpop.f32.mrf.mxu0
  %4434 = vmatmul.bf16.gmra.mxu0 %v4292
  %v4435 = vpop.f32.mrf.mxu0
  %v4436 = vadd.f32 0.0, %v4435
  %v4437 = vpop.f32.mrf.mxu0
  %4438 = vdwg.mxu0
  %v4439 = vadd.f32 %v4274, %v4399
  %v4440 = vadd.f32 %v4275, %v4424
  %v4441 = vadd.f32 %v4276, %v4401
  %v4442 = vadd.f32 %v4277, %v4426
  %v4443 = vadd.f32 %v4278, %v4407
  %v4444 = vadd.f32 %v4279, %v4432
  %v4445 = vadd.f32 %v4280, %v4411
  %v4446 = vadd.f32 %v4281, %v4436
  %v4447 = vld [vmem:[#allocation2 + $0x13] sm:$0xff]
  %v4448 = vld [vmem:[#allocation2 + $0x1b] sm:$0xff]
  %v4449 = vld [vmem:[#allocation2 + $0x23] sm:$0xff]
  %v4450 = vld [vmem:[#allocation2 + $0x2b] sm:$0xff]
  %v4451 = vld [vmem:[#allocation2 + $0x33] sm:$0xff]
  %v4452 = vld [vmem:[#allocation2 + $0x3b] sm:$0xff]
  %v4453 = vld [vmem:[#allocation2 + $0x43] sm:$0x7]
  %v4454 = vpack.c.bf16 %v4448, %v4447
  %v4455 = vpack.c.bf16 %v4450, %v4449
  %v4456 = vpack.c.bf16 %v4452, %v4451
  %v4457 = vpack.c.bf16 %v4453, %v4453
  %v4458 = vld [vmem:[%s4 + $0x680] sm:$0xff]
  %v4459 = vld [vmem:[%s4 + $0x688] sm:$0xff]
  %v4460 = vld [vmem:[%s4 + $0x690] sm:$0xff]
  %v4461 = vld [vmem:[%s4 + $0x698] sm:$0xff]
  %v4462 = vld [vmem:[%s4 + $0x6a0] sm:$0xff]
  %v4463 = vld [vmem:[%s4 + $0x6a8] sm:$0xff]
  %v4464 = vld [vmem:[%s4 + $0x6b0] sm:$0xff]
  %v4465 = vld [vmem:[%s4 + $0x6b8] sm:$0xff]
  %v4466 = vld [vmem:[%s4 + $0x6c0] sm:$0xff]
  %v4467 = vld [vmem:[%s4 + $0x6c8] sm:$0xff]
  %v4468 = vld [vmem:[%s4 + $0x6d0] sm:$0xff]
  %v4469 = vld [vmem:[%s4 + $0x6d8] sm:$0xff]
  %v4470 = vld [vmem:[%s4 + $0x6e0] sm:$0xff]
  %v4471 = vld [vmem:[%s4 + $0x6e8] sm:$0xff]
  %v4472 = vld [vmem:[%s4 + $0x6f0] sm:$0xff]
  %v4473 = vld [vmem:[%s4 + $0x6f8] sm:$0xff]
  %v4490 = vunpack.c.l.b16 %v4458
  %v4491 = vunpack.c.h.b16 %v4458
  %v4492 = vunpack.c.l.b16 %v4459
  %v4493 = vunpack.c.h.b16 %v4459
  %v4494 = vunpack.c.l.b16 %v4460
  %v4495 = vunpack.c.h.b16 %v4460
  %v4496 = vunpack.c.l.b16 %v4461
  %v4497 = vunpack.c.h.b16 %v4461
  %v4498 = vunpack.c.l.b16 %v4462
  %v4499 = vunpack.c.h.b16 %v4462
  %v4500 = vunpack.c.l.b16 %v4463
  %v4501 = vunpack.c.h.b16 %v4463
  %v4502 = vunpack.c.l.b16 %v4464
  %v4503 = vunpack.c.h.b16 %v4464
  %v4504 = vunpack.c.l.b16 %v4465
  %v4505 = vunpack.c.h.b16 %v4465
  %v4506 = vunpack.c.l.b16 %v4466
  %v4507 = vunpack.c.h.b16 %v4466
  %v4508 = vunpack.c.l.b16 %v4467
  %v4509 = vunpack.c.h.b16 %v4467
  %v4510 = vunpack.c.l.b16 %v4468
  %v4511 = vunpack.c.h.b16 %v4468
  %v4512 = vunpack.c.l.b16 %v4469
  %v4513 = vunpack.c.h.b16 %v4469
  %v4514 = vunpack.c.l.b16 %v4470
  %v4515 = vunpack.c.h.b16 %v4470
  %v4516 = vunpack.c.l.b16 %v4471
  %v4517 = vunpack.c.h.b16 %v4471
  %v4518 = vunpack.c.l.b16 %v4472
  %v4519 = vunpack.c.h.b16 %v4472
  %v4520 = vunpack.c.l.b16 %v4473
  %v4521 = vunpack.c.h.b16 %v4473
  %v4522 = vpack.c.b16 %v4492, %v4490
  %v4523 = vpack.c.b16 %v4493, %v4491
  %v4524 = vpack.c.b16 %v4496, %v4494
  %v4525 = vpack.c.b16 %v4497, %v4495
  %v4526 = vpack.c.b16 %v4500, %v4498
  %v4527 = vpack.c.b16 %v4501, %v4499
  %v4528 = vpack.c.b16 %v4504, %v4502
  %v4529 = vpack.c.b16 %v4505, %v4503
  %v4530 = vpack.c.b16 %v4508, %v4506
  %v4531 = vpack.c.b16 %v4509, %v4507
  %v4532 = vpack.c.b16 %v4512, %v4510
  %v4533 = vpack.c.b16 %v4513, %v4511
  %v4534 = vpack.c.b16 %v4516, %v4514
  %v4535 = vpack.c.b16 %v4517, %v4515
  %v4536 = vpack.c.b16 %v4520, %v4518
  %v4537 = vpack.c.b16 %v4521, %v4519
  %4554 = vmatpush.bf16.msra.mxu0 %v4536
  %4555 = vmatpush.bf16.msra.mxu0 %v4534
  %4556 = vmatpush.bf16.msra.mxu0 %v4532
  %4557 = vmatpush.bf16.msra.mxu0 %v4530
  %4558 = vmatpush.bf16.msra.mxu0 %v4528
  %4559 = vmatpush.bf16.msra.mxu0 %v4526
  %4560 = vmatpush.bf16.msra.mxu0 %v4524
  %4561 = vmatpush.bf16.msra.mxu0 %v4522
  %4562 = vmatmul.bf16.gmra.mxu0 %v4454
  %v4563 = vpop.f32.mrf.mxu0
  %v4564 = vadd.f32 0.0, %v4563
  %v4565 = vpop.f32.mrf.mxu0
  %v4566 = vadd.f32 0.0, %v4565
  %4567 = vmatmul.bf16.gmra.mxu0 %v4455
  %v4568 = vpop.f32.mrf.mxu0
  %v4569 = vpop.f32.mrf.mxu0
  %4570 = vmatmul.bf16.gmra.mxu0 %v4456
  %v4571 = vpop.f32.mrf.mxu0
  %v4572 = vadd.f32 0.0, %v4571
  %v4573 = vpop.f32.mrf.mxu0
  %4574 = vmatmul.bf16.gmra.mxu0 %v4457
  %v4575 = vpop.f32.mrf.mxu0
  %v4576 = vadd.f32 0.0, %v4575
  %v4577 = vpop.f32.mrf.mxu0
  %4578 = vdwg.mxu0
  %4579 = vmatpush.bf16.msra.mxu0 %v4537
  %4580 = vmatpush.bf16.msra.mxu0 %v4535
  %4581 = vmatpush.bf16.msra.mxu0 %v4533
  %4582 = vmatpush.bf16.msra.mxu0 %v4531
  %4583 = vmatpush.bf16.msra.mxu0 %v4529
  %4584 = vmatpush.bf16.msra.mxu0 %v4527
  %4585 = vmatpush.bf16.msra.mxu0 %v4525
  %4586 = vmatpush.bf16.msra.mxu0 %v4523
  %4587 = vmatmul.bf16.gmra.mxu0 %v4454
  %v4588 = vpop.f32.mrf.mxu0
  %v4589 = vadd.f32 0.0, %v4588
  %v4590 = vpop.f32.mrf.mxu0
  %v4591 = vadd.f32 0.0, %v4590
  %4592 = vmatmul.bf16.gmra.mxu0 %v4455
  %v4593 = vpop.f32.mrf.mxu0
  %v4594 = vpop.f32.mrf.mxu0
  %4595 = vmatmul.bf16.gmra.mxu0 %v4456
  %v4596 = vpop.f32.mrf.mxu0
  %v4597 = vadd.f32 0.0, %v4596
  %v4598 = vpop.f32.mrf.mxu0
  %4599 = vmatmul.bf16.gmra.mxu0 %v4457
  %v4600 = vpop.f32.mrf.mxu0
  %v4601 = vadd.f32 0.0, %v4600
  %v4602 = vpop.f32.mrf.mxu0
  %4603 = vdwg.mxu0
  %v4604 = vadd.f32 %v4439, %v4564
  %v4605 = vadd.f32 %v4440, %v4589
  %v4606 = vadd.f32 %v4441, %v4566
  %v4607 = vadd.f32 %v4442, %v4591
  %v4608 = vadd.f32 %v4443, %v4572
  %v4609 = vadd.f32 %v4444, %v4597
  %v4610 = vadd.f32 %v4445, %v4576
  %v4611 = vadd.f32 %v4446, %v4601
  %v4612 = vld [vmem:[#allocation2 + $0x14] sm:$0xff]
  %v4613 = vld [vmem:[#allocation2 + $0x1c] sm:$0xff]
  %v4614 = vld [vmem:[#allocation2 + $0x24] sm:$0xff]
  %v4615 = vld [vmem:[#allocation2 + $0x2c] sm:$0xff]
  %v4616 = vld [vmem:[#allocation2 + $0x34] sm:$0xff]
  %v4617 = vld [vmem:[#allocation2 + $0x3c] sm:$0xff]
  %v4618 = vld [vmem:[#allocation2 + $0x44] sm:$0x7]
  %v4619 = vpack.c.bf16 %v4613, %v4612
  %v4620 = vpack.c.bf16 %v4615, %v4614
  %v4621 = vpack.c.bf16 %v4617, %v4616
  %v4622 = vpack.c.bf16 %v4618, %v4618
  %v4623 = vld [vmem:[%s4 + $0x700] sm:$0xff]
  %v4624 = vld [vmem:[%s4 + $0x708] sm:$0xff]
  %v4625 = vld [vmem:[%s4 + $0x710] sm:$0xff]
  %v4626 = vld [vmem:[%s4 + $0x718] sm:$0xff]
  %v4627 = vld [vmem:[%s4 + $0x720] sm:$0xff]
  %v4628 = vld [vmem:[%s4 + $0x728] sm:$0xff]
  %v4629 = vld [vmem:[%s4 + $0x730] sm:$0xff]
  %v4630 = vld [vmem:[%s4 + $0x738] sm:$0xff]
  %v4631 = vld [vmem:[%s4 + $0x740] sm:$0xff]
  %v4632 = vld [vmem:[%s4 + $0x748] sm:$0xff]
  %v4633 = vld [vmem:[%s4 + $0x750] sm:$0xff]
  %v4634 = vld [vmem:[%s4 + $0x758] sm:$0xff]
  %v4635 = vld [vmem:[%s4 + $0x760] sm:$0xff]
  %v4636 = vld [vmem:[%s4 + $0x768] sm:$0xff]
  %v4637 = vld [vmem:[%s4 + $0x770] sm:$0xff]
  %v4638 = vld [vmem:[%s4 + $0x778] sm:$0xff]
  %v4655 = vunpack.c.l.b16 %v4623
  %v4656 = vunpack.c.h.b16 %v4623
  %v4657 = vunpack.c.l.b16 %v4624
  %v4658 = vunpack.c.h.b16 %v4624
  %v4659 = vunpack.c.l.b16 %v4625
  %v4660 = vunpack.c.h.b16 %v4625
  %v4661 = vunpack.c.l.b16 %v4626
  %v4662 = vunpack.c.h.b16 %v4626
  %v4663 = vunpack.c.l.b16 %v4627
  %v4664 = vunpack.c.h.b16 %v4627
  %v4665 = vunpack.c.l.b16 %v4628
  %v4666 = vunpack.c.h.b16 %v4628
  %v4667 = vunpack.c.l.b16 %v4629
  %v4668 = vunpack.c.h.b16 %v4629
  %v4669 = vunpack.c.l.b16 %v4630
  %v4670 = vunpack.c.h.b16 %v4630
  %v4671 = vunpack.c.l.b16 %v4631
  %v4672 = vunpack.c.h.b16 %v4631
  %v4673 = vunpack.c.l.b16 %v4632
  %v4674 = vunpack.c.h.b16 %v4632
  %v4675 = vunpack.c.l.b16 %v4633
  %v4676 = vunpack.c.h.b16 %v4633
  %v4677 = vunpack.c.l.b16 %v4634
  %v4678 = vunpack.c.h.b16 %v4634
  %v4679 = vunpack.c.l.b16 %v4635
  %v4680 = vunpack.c.h.b16 %v4635
  %v4681 = vunpack.c.l.b16 %v4636
  %v4682 = vunpack.c.h.b16 %v4636
  %v4683 = vunpack.c.l.b16 %v4637
  %v4684 = vunpack.c.h.b16 %v4637
  %v4685 = vunpack.c.l.b16 %v4638
  %v4686 = vunpack.c.h.b16 %v4638
  %v4687 = vpack.c.b16 %v4657, %v4655
  %v4688 = vpack.c.b16 %v4658, %v4656
  %v4689 = vpack.c.b16 %v4661, %v4659
  %v4690 = vpack.c.b16 %v4662, %v4660
  %v4691 = vpack.c.b16 %v4665, %v4663
  %v4692 = vpack.c.b16 %v4666, %v4664
  %v4693 = vpack.c.b16 %v4669, %v4667
  %v4694 = vpack.c.b16 %v4670, %v4668
  %v4695 = vpack.c.b16 %v4673, %v4671
  %v4696 = vpack.c.b16 %v4674, %v4672
  %v4697 = vpack.c.b16 %v4677, %v4675
  %v4698 = vpack.c.b16 %v4678, %v4676
  %v4699 = vpack.c.b16 %v4681, %v4679
  %v4700 = vpack.c.b16 %v4682, %v4680
  %v4701 = vpack.c.b16 %v4685, %v4683
  %v4702 = vpack.c.b16 %v4686, %v4684
  %4719 = vmatpush.bf16.msra.mxu0 %v4701
  %4720 = vmatpush.bf16.msra.mxu0 %v4699
  %4721 = vmatpush.bf16.msra.mxu0 %v4697
  %4722 = vmatpush.bf16.msra.mxu0 %v4695
  %4723 = vmatpush.bf16.msra.mxu0 %v4693
  %4724 = vmatpush.bf16.msra.mxu0 %v4691
  %4725 = vmatpush.bf16.msra.mxu0 %v4689
  %4726 = vmatpush.bf16.msra.mxu0 %v4687
  %4727 = vmatmul.bf16.gmra.mxu0 %v4619
  %v4728 = vpop.f32.mrf.mxu0
  %v4729 = vadd.f32 0.0, %v4728
  %v4730 = vpop.f32.mrf.mxu0
  %v4731 = vadd.f32 0.0, %v4730
  %4732 = vmatmul.bf16.gmra.mxu0 %v4620
  %v4733 = vpop.f32.mrf.mxu0
  %v4734 = vpop.f32.mrf.mxu0
  %4735 = vmatmul.bf16.gmra.mxu0 %v4621
  %v4736 = vpop.f32.mrf.mxu0
  %v4737 = vadd.f32 0.0, %v4736
  %v4738 = vpop.f32.mrf.mxu0
  %4739 = vmatmul.bf16.gmra.mxu0 %v4622
  %v4740 = vpop.f32.mrf.mxu0
  %v4741 = vadd.f32 0.0, %v4740
  %v4742 = vpop.f32.mrf.mxu0
  %4743 = vdwg.mxu0
  %4744 = vmatpush.bf16.msra.mxu0 %v4702
  %4745 = vmatpush.bf16.msra.mxu0 %v4700
  %4746 = vmatpush.bf16.msra.mxu0 %v4698
  %4747 = vmatpush.bf16.msra.mxu0 %v4696
  %4748 = vmatpush.bf16.msra.mxu0 %v4694
  %4749 = vmatpush.bf16.msra.mxu0 %v4692
  %4750 = vmatpush.bf16.msra.mxu0 %v4690
  %4751 = vmatpush.bf16.msra.mxu0 %v4688
  %4752 = vmatmul.bf16.gmra.mxu0 %v4619
  %v4753 = vpop.f32.mrf.mxu0
  %v4754 = vadd.f32 0.0, %v4753
  %v4755 = vpop.f32.mrf.mxu0
  %v4756 = vadd.f32 0.0, %v4755
  %4757 = vmatmul.bf16.gmra.mxu0 %v4620
  %v4758 = vpop.f32.mrf.mxu0
  %v4759 = vpop.f32.mrf.mxu0
  %4760 = vmatmul.bf16.gmra.mxu0 %v4621
  %v4761 = vpop.f32.mrf.mxu0
  %v4762 = vadd.f32 0.0, %v4761
  %v4763 = vpop.f32.mrf.mxu0
  %4764 = vmatmul.bf16.gmra.mxu0 %v4622
  %v4765 = vpop.f32.mrf.mxu0
  %v4766 = vadd.f32 0.0, %v4765
  %v4767 = vpop.f32.mrf.mxu0
  %4768 = vdwg.mxu0
  %v4769 = vadd.f32 %v4604, %v4729
  %v4770 = vadd.f32 %v4605, %v4754
  %v4771 = vadd.f32 %v4606, %v4731
  %v4772 = vadd.f32 %v4607, %v4756
  %v4773 = vadd.f32 %v4608, %v4737
  %v4774 = vadd.f32 %v4609, %v4762
  %v4775 = vadd.f32 %v4610, %v4741
  %v4776 = vadd.f32 %v4611, %v4766
  %v4777 = vld [vmem:[#allocation2 + $0x15] sm:$0xff]
  %v4778 = vld [vmem:[#allocation2 + $0x1d] sm:$0xff]
  %v4779 = vld [vmem:[#allocation2 + $0x25] sm:$0xff]
  %v4780 = vld [vmem:[#allocation2 + $0x2d] sm:$0xff]
  %v4781 = vld [vmem:[#allocation2 + $0x35] sm:$0xff]
  %v4782 = vld [vmem:[#allocation2 + $0x3d] sm:$0xff]
  %v4783 = vld [vmem:[#allocation2 + $0x45] sm:$0x7]
  %v4784 = vpack.c.bf16 %v4778, %v4777
  %v4785 = vpack.c.bf16 %v4780, %v4779
  %v4786 = vpack.c.bf16 %v4782, %v4781
  %v4787 = vpack.c.bf16 %v4783, %v4783
  %v4788 = vld [vmem:[%s4 + $0x780] sm:$0xff]
  %v4789 = vld [vmem:[%s4 + $0x788] sm:$0xff]
  %v4790 = vld [vmem:[%s4 + $0x790] sm:$0xff]
  %v4791 = vld [vmem:[%s4 + $0x798] sm:$0xff]
  %v4792 = vld [vmem:[%s4 + $0x7a0] sm:$0xff]
  %v4793 = vld [vmem:[%s4 + $0x7a8] sm:$0xff]
  %v4794 = vld [vmem:[%s4 + $0x7b0] sm:$0xff]
  %v4795 = vld [vmem:[%s4 + $0x7b8] sm:$0xff]
  %v4796 = vld [vmem:[%s4 + $0x7c0] sm:$0xff]
  %v4797 = vld [vmem:[%s4 + $0x7c8] sm:$0xff]
  %v4798 = vld [vmem:[%s4 + $0x7d0] sm:$0xff]
  %v4799 = vld [vmem:[%s4 + $0x7d8] sm:$0xff]
  %v4800 = vld [vmem:[%s4 + $0x7e0] sm:$0xff]
  %v4801 = vld [vmem:[%s4 + $0x7e8] sm:$0xff]
  %v4802 = vld [vmem:[%s4 + $0x7f0] sm:$0xff]
  %v4803 = vld [vmem:[%s4 + $0x7f8] sm:$0xff]
  %v4820 = vunpack.c.l.b16 %v4788
  %v4821 = vunpack.c.h.b16 %v4788
  %v4822 = vunpack.c.l.b16 %v4789
  %v4823 = vunpack.c.h.b16 %v4789
  %v4824 = vunpack.c.l.b16 %v4790
  %v4825 = vunpack.c.h.b16 %v4790
  %v4826 = vunpack.c.l.b16 %v4791
  %v4827 = vunpack.c.h.b16 %v4791
  %v4828 = vunpack.c.l.b16 %v4792
  %v4829 = vunpack.c.h.b16 %v4792
  %v4830 = vunpack.c.l.b16 %v4793
  %v4831 = vunpack.c.h.b16 %v4793
  %v4832 = vunpack.c.l.b16 %v4794
  %v4833 = vunpack.c.h.b16 %v4794
  %v4834 = vunpack.c.l.b16 %v4795
  %v4835 = vunpack.c.h.b16 %v4795
  %v4836 = vunpack.c.l.b16 %v4796
  %v4837 = vunpack.c.h.b16 %v4796
  %v4838 = vunpack.c.l.b16 %v4797
  %v4839 = vunpack.c.h.b16 %v4797
  %v4840 = vunpack.c.l.b16 %v4798
  %v4841 = vunpack.c.h.b16 %v4798
  %v4842 = vunpack.c.l.b16 %v4799
  %v4843 = vunpack.c.h.b16 %v4799
  %v4844 = vunpack.c.l.b16 %v4800
  %v4845 = vunpack.c.h.b16 %v4800
  %v4846 = vunpack.c.l.b16 %v4801
  %v4847 = vunpack.c.h.b16 %v4801
  %v4848 = vunpack.c.l.b16 %v4802
  %v4849 = vunpack.c.h.b16 %v4802
  %v4850 = vunpack.c.l.b16 %v4803
  %v4851 = vunpack.c.h.b16 %v4803
  %v4852 = vpack.c.b16 %v4822, %v4820
  %v4853 = vpack.c.b16 %v4823, %v4821
  %v4854 = vpack.c.b16 %v4826, %v4824
  %v4855 = vpack.c.b16 %v4827, %v4825
  %v4856 = vpack.c.b16 %v4830, %v4828
  %v4857 = vpack.c.b16 %v4831, %v4829
  %v4858 = vpack.c.b16 %v4834, %v4832
  %v4859 = vpack.c.b16 %v4835, %v4833
  %v4860 = vpack.c.b16 %v4838, %v4836
  %v4861 = vpack.c.b16 %v4839, %v4837
  %v4862 = vpack.c.b16 %v4842, %v4840
  %v4863 = vpack.c.b16 %v4843, %v4841
  %v4864 = vpack.c.b16 %v4846, %v4844
  %v4865 = vpack.c.b16 %v4847, %v4845
  %v4866 = vpack.c.b16 %v4850, %v4848
  %v4867 = vpack.c.b16 %v4851, %v4849
  %4884 = vmatpush.bf16.msra.mxu0 %v4866
  %4885 = vmatpush.bf16.msra.mxu0 %v4864
  %4886 = vmatpush.bf16.msra.mxu0 %v4862
  %4887 = vmatpush.bf16.msra.mxu0 %v4860
  %4888 = vmatpush.bf16.msra.mxu0 %v4858
  %4889 = vmatpush.bf16.msra.mxu0 %v4856
  %4890 = vmatpush.bf16.msra.mxu0 %v4854
  %4891 = vmatpush.bf16.msra.mxu0 %v4852
  %4892 = vmatmul.bf16.gmra.mxu0 %v4784
  %v4893 = vpop.f32.mrf.mxu0
  %v4894 = vadd.f32 0.0, %v4893
  %v4895 = vpop.f32.mrf.mxu0
  %v4896 = vadd.f32 0.0, %v4895
  %4897 = vmatmul.bf16.gmra.mxu0 %v4785
  %v4898 = vpop.f32.mrf.mxu0
  %v4899 = vpop.f32.mrf.mxu0
  %4900 = vmatmul.bf16.gmra.mxu0 %v4786
  %v4901 = vpop.f32.mrf.mxu0
  %v4902 = vadd.f32 0.0, %v4901
  %v4903 = vpop.f32.mrf.mxu0
  %4904 = vmatmul.bf16.gmra.mxu0 %v4787
  %v4905 = vpop.f32.mrf.mxu0
  %v4906 = vadd.f32 0.0, %v4905
  %v4907 = vpop.f32.mrf.mxu0
  %4908 = vdwg.mxu0
  %4909 = vmatpush.bf16.msra.mxu0 %v4867
  %4910 = vmatpush.bf16.msra.mxu0 %v4865
  %4911 = vmatpush.bf16.msra.mxu0 %v4863
  %4912 = vmatpush.bf16.msra.mxu0 %v4861
  %4913 = vmatpush.bf16.msra.mxu0 %v4859
  %4914 = vmatpush.bf16.msra.mxu0 %v4857
  %4915 = vmatpush.bf16.msra.mxu0 %v4855
  %4916 = vmatpush.bf16.msra.mxu0 %v4853
  %4917 = vmatmul.bf16.gmra.mxu0 %v4784
  %v4918 = vpop.f32.mrf.mxu0
  %v4919 = vadd.f32 0.0, %v4918
  %v4920 = vpop.f32.mrf.mxu0
  %v4921 = vadd.f32 0.0, %v4920
  %4922 = vmatmul.bf16.gmra.mxu0 %v4785
  %v4923 = vpop.f32.mrf.mxu0
  %v4924 = vpop.f32.mrf.mxu0
  %4925 = vmatmul.bf16.gmra.mxu0 %v4786
  %v4926 = vpop.f32.mrf.mxu0
  %v4927 = vadd.f32 0.0, %v4926
  %v4928 = vpop.f32.mrf.mxu0
  %4929 = vmatmul.bf16.gmra.mxu0 %v4787
  %v4930 = vpop.f32.mrf.mxu0
  %v4931 = vadd.f32 0.0, %v4930
  %v4932 = vpop.f32.mrf.mxu0
  %4933 = vdwg.mxu0
  %v4934 = vadd.f32 %v4769, %v4894
  %v4935 = vadd.f32 %v4770, %v4919
  %v4936 = vadd.f32 %v4771, %v4896
  %v4937 = vadd.f32 %v4772, %v4921
  %v4938 = vadd.f32 %v4773, %v4902
  %v4939 = vadd.f32 %v4774, %v4927
  %v4940 = vadd.f32 %v4775, %v4906
  %v4941 = vadd.f32 %v4776, %v4931
  %v4942 = vld [vmem:[%s10 + $0x3] sm:$0x3]
  %v4944 = vperm.slane %v4942, 0
  %v4945 = vperm.slane %v4942, 1
  %v4948 = vadd.f32 %v4934, %v4944
  %v4949 = vadd.f32 %v4935, %v4945
  %v4950 = vadd.f32 %v4936, %v4944
  %v4951 = vadd.f32 %v4937, %v4945
  %v4952 = vadd.f32 %v4938, %v4944
  %v4953 = vadd.f32 %v4939, %v4945
  %v4954 = vadd.f32 %v4940, %v4944
  %v4955 = vadd.f32 %v4941, %v4945
  %v4956 = vmax.f32 %v4948, 0.0
  %v4957 = vmax.f32 %v4949, 0.0
  %v4958 = vmax.f32 %v4950, 0.0
  %v4959 = vmax.f32 %v4951, 0.0
  %v4960 = vmax.f32 %v4952, 0.0
  %v4961 = vmax.f32 %v4953, 0.0
  %v4962 = vmax.f32 %v4954, 0.0
  %v4963 = vmax.f32 %v4955, 0.0
  %v4966 = vrot.slane %v4957, 7
  %vm4967 = vcmask 1040384
  %v4968 = vsel %vm4967, %v4956, %v4966
  %v4970 = vlaneseq
  %vm4971 = vcmp.ge.s32.totalorder %v4970, 0
  %vm4972 = vcmp.lt.s32.totalorder %v4970, 256
  %vm4973 = vmand %vm4971, %vm4972
  %s4974 = scalar_lea.vmem [#allocation4], 5
  %4975 = vst.msk [vmem:[%s4974] ss:$8 sm:$0x3] %vm4973, %v4968
  %4976 = vst.msk [vmem:[%s4974] ss:$8 sm:$0x0] %vm4973, %v4968
  %4977 = vst [vmem:[#allocation1] sm:$0xff] %v4956
  %4978 = vst [vmem:[#allocation1 + $0x9] sm:$0xff] %v4957
  %s4979 = scalar_lea.vmem [#allocation1], 2
  %v4980 = vld [vmem:[%s4979] ss:$9 sm:$0xff]
  %s4982 = scalar_lea.vmem [#allocation4], 6
  %4983 = vst.msk [vmem:[%s4982] ss:$8 sm:$0x3] %vm4973, %v4980
  %4984 = vst.msk [vmem:[%s4982] ss:$8 sm:$0x0] %vm4973, %v4980
  %4987 = vst [vmem:[#allocation1] sm:$0xff] %v4958
  %4988 = vst [vmem:[#allocation1 + $0x9] sm:$0xff] %v4959
  %s4989 = scalar_lea.vmem [#allocation1], 4
  %v4990 = vld [vmem:[%s4989] ss:$9 sm:$0xff]
  %s4992 = scalar_lea.vmem [#allocation4], 17
  %4993 = vst.msk [vmem:[%s4992] ss:$8 sm:$0x3] %vm4973, %v4990
  %4994 = vst.msk [vmem:[%s4992] ss:$8 sm:$0x0] %vm4973, %v4990
  %4995 = vst [vmem:[#allocation1] sm:$0xff] %v4958
  %4996 = vst [vmem:[#allocation1 + $0x9] sm:$0xff] %v4959
  %s4997 = scalar_lea.vmem [#allocation1], 6
  %v4998 = vld [vmem:[%s4997] ss:$9 sm:$0xff]
  %s5000 = scalar_lea.vmem [#allocation4], 18
  %5001 = vst.msk [vmem:[%s5000] ss:$8 sm:$0x3] %vm4973, %v4998
  %5002 = vst.msk [vmem:[%s5000] ss:$8 sm:$0x0] %vm4973, %v4998
  %5005 = vst [vmem:[#allocation1] sm:$0xff] %v4960
  %5006 = vst [vmem:[#allocation1 + $0x9] sm:$0xff] %v4961
  %s5007 = scalar_lea.vmem [#allocation1], 4
  %v5008 = vld [vmem:[%s5007] ss:$9 sm:$0xff]
  %s5010 = scalar_lea.vmem [#allocation4], 37
  %5011 = vst.msk [vmem:[%s5010] ss:$8 sm:$0x3] %vm4973, %v5008
  %5012 = vst.msk [vmem:[%s5010] ss:$8 sm:$0x0] %vm4973, %v5008
  %5013 = vst [vmem:[#allocation1] sm:$0xff] %v4960
  %5014 = vst [vmem:[#allocation1 + $0x9] sm:$0xff] %v4961
  %s5015 = scalar_lea.vmem [#allocation1], 6
  %v5016 = vld [vmem:[%s5015] ss:$9 sm:$0xff]
  %s5018 = scalar_lea.vmem [#allocation4], 38
  %5019 = vst.msk [vmem:[%s5018] ss:$8 sm:$0x3] %vm4973, %v5016
  %5020 = vst.msk [vmem:[%s5018] ss:$8 sm:$0x0] %vm4973, %v5016
  %v5023 = vrot.slane %v4963, 7
  %v5024 = vsel %vm4967, %v4962, %v5023
  %s5026 = scalar_lea.vmem [#allocation4], 49
  %5027 = vst.msk [vmem:[%s5026] ss:$8 sm:$0x3] %vm4973, %v5024
  %5028 = vst.msk [vmem:[%s5026] ss:$8 sm:$0x0] %vm4973, %v5024
  %5029 = vst [vmem:[#allocation1] sm:$0xff] %v4962
  %5030 = vst [vmem:[#allocation1 + $0x9] sm:$0xff] %v4963
  %s5031 = scalar_lea.vmem [#allocation1], 2
  %v5032 = vld [vmem:[%s5031] ss:$9 sm:$0xff]
  %s5034 = scalar_lea.vmem [#allocation4], 50
  %5035 = vst.msk [vmem:[%s5034] ss:$8 sm:$0x3] %vm4973, %v5032
  %5036 = vst.msk [vmem:[%s5034] ss:$8 sm:$0x0] %vm4973, %v5032
  %v5037 = vld [vmem:[#allocation4] sm:$0xff]
  %v5038 = vld [vmem:[#allocation4 + $0x8] sm:$0xff]
  %v5039 = vld [vmem:[#allocation4 + $0x10] sm:$0xff]
  %v5040 = vld [vmem:[#allocation4 + $0x18] sm:$0xff]
  %v5041 = vld [vmem:[#allocation4 + $0x20] sm:$0x3f]
  %v5042 = vld [vmem:[#allocation4 + $0x28] sm:$0x3f]
  %v5043 = vpack.c.bf16 %v5039, %v5037
  %v5044 = vpack.c.bf16 %v5040, %v5038
  %v5045 = vpack.c.bf16 %v5041, %v5041
  %v5046 = vpack.c.bf16 %v5042, %v5042
  %v5047 = vld [vmem:[%s5] sm:$0xf]
  %v5048 = vld [vmem:[%s5 + $0x4] sm:$0xf]
  %v5049 = vld [vmem:[%s5 + $0x8] sm:$0xf]
  %v5050 = vld [vmem:[%s5 + $0xc] sm:$0xf]
  %v5051 = vld [vmem:[%s5 + $0x10] sm:$0xf]
  %v5052 = vld [vmem:[%s5 + $0x14] sm:$0xf]
  %v5053 = vld [vmem:[%s5 + $0x18] sm:$0xf]
  %v5054 = vld [vmem:[%s5 + $0x1c] sm:$0xf]
  %v5055 = vld [vmem:[%s5 + $0x20] sm:$0xf]
  %v5056 = vld [vmem:[%s5 + $0x24] sm:$0xf]
  %v5057 = vld [vmem:[%s5 + $0x28] sm:$0xf]
  %v5058 = vld [vmem:[%s5 + $0x2c] sm:$0xf]
  %v5059 = vld [vmem:[%s5 + $0x30] sm:$0xf]
  %v5060 = vld [vmem:[%s5 + $0x34] sm:$0xf]
  %v5061 = vld [vmem:[%s5 + $0x38] sm:$0xf]
  %v5062 = vld [vmem:[%s5 + $0x3c] sm:$0xf]
  %v5063 = vld [vmem:[%s5 + $0x40] sm:$0xf]
  %v5064 = vld [vmem:[%s5 + $0x44] sm:$0xf]
  %v5065 = vld [vmem:[%s5 + $0x48] sm:$0xf]
  %v5066 = vld [vmem:[%s5 + $0x4c] sm:$0xf]
  %v5067 = vld [vmem:[%s5 + $0x50] sm:$0xf]
  %v5068 = vld [vmem:[%s5 + $0x54] sm:$0xf]
  %v5069 = vld [vmem:[%s5 + $0x58] sm:$0xf]
  %v5070 = vld [vmem:[%s5 + $0x5c] sm:$0xf]
  %v5071 = vld [vmem:[%s5 + $0x60] sm:$0xf]
  %v5072 = vld [vmem:[%s5 + $0x64] sm:$0xf]
  %v5073 = vld [vmem:[%s5 + $0x68] sm:$0xf]
  %v5074 = vld [vmem:[%s5 + $0x6c] sm:$0xf]
  %v5075 = vld [vmem:[%s5 + $0x70] sm:$0xf]
  %v5076 = vld [vmem:[%s5 + $0x74] sm:$0xf]
  %v5077 = vld [vmem:[%s5 + $0x78] sm:$0xf]
  %v5078 = vld [vmem:[%s5 + $0x7c] sm:$0xf]
  %v5079 = vld [vmem:[#allocation4] sm:$0xfe]
  %v5080 = vld [vmem:[#allocation4 + $0x8] sm:$0xfe]
  %v5081 = vld [vmem:[#allocation4 + $0x20] sm:$0x7f]
  %v5082 = vld [vmem:[#allocation4 + $0x28] sm:$0x7f]
  %v5083 = vpack.c.bf16 %v5039, %v5079
  %v5084 = vpack.c.bf16 %v5040, %v5080
  %v5085 = vpack.c.bf16 %v5081, %v5081
  %v5086 = vpack.c.bf16 %v5082, %v5082
  %v5087 = vld [vmem:[%s5 + $0x80] sm:$0xf]
  %v5088 = vld [vmem:[%s5 + $0x84] sm:$0xf]
  %v5089 = vld [vmem:[%s5 + $0x88] sm:$0xf]
  %v5090 = vld [vmem:[%s5 + $0x8c] sm:$0xf]
  %v5091 = vld [vmem:[%s5 + $0x90] sm:$0xf]
  %v5092 = vld [vmem:[%s5 + $0x94] sm:$0xf]
  %v5093 = vld [vmem:[%s5 + $0x98] sm:$0xf]
  %v5094 = vld [vmem:[%s5 + $0x9c] sm:$0xf]
  %v5095 = vld [vmem:[%s5 + $0xa0] sm:$0xf]
  %v5096 = vld [vmem:[%s5 + $0xa4] sm:$0xf]
  %v5097 = vld [vmem:[%s5 + $0xa8] sm:$0xf]
  %v5098 = vld [vmem:[%s5 + $0xac] sm:$0xf]
  %v5099 = vld [vmem:[%s5 + $0xb0] sm:$0xf]
  %v5100 = vld [vmem:[%s5 + $0xb4] sm:$0xf]
  %v5101 = vld [vmem:[%s5 + $0xb8] sm:$0xf]
  %v5102 = vld [vmem:[%s5 + $0xbc] sm:$0xf]
  %v5103 = vld [vmem:[%s5 + $0xc0] sm:$0xf]
  %v5104 = vld [vmem:[%s5 + $0xc4] sm:$0xf]
  %v5105 = vld [vmem:[%s5 + $0xc8] sm:$0xf]
  %v5106 = vld [vmem:[%s5 + $0xcc] sm:$0xf]
  %v5107 = vld [vmem:[%s5 + $0xd0] sm:$0xf]
  %v5108 = vld [vmem:[%s5 + $0xd4] sm:$0xf]
  %v5109 = vld [vmem:[%s5 + $0xd8] sm:$0xf]
  %v5110 = vld [vmem:[%s5 + $0xdc] sm:$0xf]
  %v5111 = vld [vmem:[%s5 + $0xe0] sm:$0xf]
  %v5112 = vld [vmem:[%s5 + $0xe4] sm:$0xf]
  %v5113 = vld [vmem:[%s5 + $0xe8] sm:$0xf]
  %v5114 = vld [vmem:[%s5 + $0xec] sm:$0xf]
  %v5115 = vld [vmem:[%s5 + $0xf0] sm:$0xf]
  %v5116 = vld [vmem:[%s5 + $0xf4] sm:$0xf]
  %v5117 = vld [vmem:[%s5 + $0xf8] sm:$0xf]
  %v5118 = vld [vmem:[%s5 + $0xfc] sm:$0xf]
  %vm5119 = vsmask.f32 7424
  %v5121 = vshrl.u32 %v5083, 16
  %v5123 = vshll.u32 %v5083, 16
  %v5125 = vrot.slane %v5123, 1
  %v5126 = vor.u32 %v5121, %v5125
  %v5128 = vshll.u32 %v5085, 16
  %v5130 = vrot.slane %v5128, 1
  %v5131 = vsel %vm5119, %v5126, %v5130
  %v5133 = vshrl.u32 %v5084, 16
  %v5135 = vshll.u32 %v5084, 16
  %v5137 = vrot.slane %v5135, 1
  %v5138 = vor.u32 %v5133, %v5137
  %v5140 = vshll.u32 %v5086, 16
  %v5142 = vrot.slane %v5140, 1
  %v5143 = vsel %vm5119, %v5138, %v5142
  %v5144 = vshrl.u32 %v5085, 16
  %v5146 = vor.u32 %v5144, %v5130
  %v5147 = vshrl.u32 %v5086, 16
  %v5149 = vor.u32 %v5147, %v5142
  %v5186 = vunpack.c.l.b16 %v5087
  %v5187 = vunpack.c.l.b16 %v5088
  %v5188 = vunpack.c.l.b16 %v5089
  %v5189 = vunpack.c.l.b16 %v5090
  %v5190 = vunpack.c.l.b16 %v5091
  %v5191 = vunpack.c.l.b16 %v5092
  %v5192 = vunpack.c.l.b16 %v5093
  %v5193 = vunpack.c.l.b16 %v5094
  %v5194 = vunpack.c.l.b16 %v5095
  %v5195 = vunpack.c.l.b16 %v5096
  %v5196 = vunpack.c.l.b16 %v5097
  %v5197 = vunpack.c.l.b16 %v5098
  %v5198 = vunpack.c.l.b16 %v5099
  %v5199 = vunpack.c.l.b16 %v5100
  %v5200 = vunpack.c.l.b16 %v5101
  %v5201 = vunpack.c.l.b16 %v5102
  %v5202 = vunpack.c.l.b16 %v5103
  %v5203 = vunpack.c.l.b16 %v5104
  %v5204 = vunpack.c.l.b16 %v5105
  %v5205 = vunpack.c.l.b16 %v5106
  %v5206 = vunpack.c.l.b16 %v5107
  %v5207 = vunpack.c.l.b16 %v5108
  %v5208 = vunpack.c.l.b16 %v5109
  %v5209 = vunpack.c.l.b16 %v5110
  %v5210 = vunpack.c.l.b16 %v5111
  %v5211 = vunpack.c.l.b16 %v5112
  %v5212 = vunpack.c.l.b16 %v5113
  %v5213 = vunpack.c.l.b16 %v5114
  %v5214 = vunpack.c.l.b16 %v5115
  %v5215 = vunpack.c.l.b16 %v5116
  %v5216 = vunpack.c.l.b16 %v5117
  %v5217 = vunpack.c.l.b16 %v5118
  %v5218 = vpack.c.b16 %v5187, %v5186
  %v5219 = vpack.c.b16 %v5189, %v5188
  %v5220 = vpack.c.b16 %v5191, %v5190
  %v5221 = vpack.c.b16 %v5193, %v5192
  %v5222 = vpack.c.b16 %v5195, %v5194
  %v5223 = vpack.c.b16 %v5197, %v5196
  %v5224 = vpack.c.b16 %v5199, %v5198
  %v5225 = vpack.c.b16 %v5201, %v5200
  %v5226 = vpack.c.b16 %v5203, %v5202
  %v5227 = vpack.c.b16 %v5205, %v5204
  %v5228 = vpack.c.b16 %v5207, %v5206
  %v5229 = vpack.c.b16 %v5209, %v5208
  %v5230 = vpack.c.b16 %v5211, %v5210
  %v5231 = vpack.c.b16 %v5213, %v5212
  %v5232 = vpack.c.b16 %v5215, %v5214
  %v5233 = vpack.c.b16 %v5217, %v5216
  %5250 = vmatpush.bf16.msra.mxu0 %v5225
  %5251 = vmatpush.bf16.msra.mxu0 %v5224
  %5252 = vmatpush.bf16.msra.mxu0 %v5223
  %5253 = vmatpush.bf16.msra.mxu0 %v5222
  %5254 = vmatpush.bf16.msra.mxu0 %v5221
  %5255 = vmatpush.bf16.msra.mxu0 %v5220
  %5256 = vmatpush.bf16.msra.mxu0 %v5219
  %5257 = vmatpush.bf16.msra.mxu0 %v5218
  %5258 = vmatmul.bf16.gmra.mxu0 %v5131
  %v5259 = vpop.f32.mrf.mxu0
  %v5260 = vadd.f32 0.0, %v5259
  %v5261 = vpop.f32.mrf.mxu0
  %5262 = vmatmul.bf16.gmra.mxu0 %v5146
  %v5263 = vpop.f32.mrf.mxu0
  %v5264 = vadd.f32 0.0, %v5263
  %v5265 = vpop.f32.mrf.mxu0
  %5266 = vdwg.mxu0
  %5267 = vmatpush.bf16.msra.mxu0 %v5233
  %5268 = vmatpush.bf16.msra.mxu0 %v5232
  %5269 = vmatpush.bf16.msra.mxu0 %v5231
  %5270 = vmatpush.bf16.msra.mxu0 %v5230
  %5271 = vmatpush.bf16.msra.mxu0 %v5229
  %5272 = vmatpush.bf16.msra.mxu0 %v5228
  %5273 = vmatpush.bf16.msra.mxu0 %v5227
  %5274 = vmatpush.bf16.msra.mxu0 %v5226
  %5275 = vmatmul.bf16.gmra.mxu0 %v5143
  %v5276 = vpop.f32.mrf.mxu0
  %v5277 = vadd.f32 %v5260, %v5276
  %v5278 = vpop.f32.mrf.mxu0
  %5279 = vmatmul.bf16.gmra.mxu0 %v5149
  %v5280 = vpop.f32.mrf.mxu0
  %v5281 = vadd.f32 %v5264, %v5280
  %v5282 = vpop.f32.mrf.mxu0
  %5283 = vdwg.mxu0
  %v5316 = vunpack.c.l.b16 %v5047
  %v5317 = vunpack.c.l.b16 %v5048
  %v5318 = vunpack.c.l.b16 %v5049
  %v5319 = vunpack.c.l.b16 %v5050
  %v5320 = vunpack.c.l.b16 %v5051
  %v5321 = vunpack.c.l.b16 %v5052
  %v5322 = vunpack.c.l.b16 %v5053
  %v5323 = vunpack.c.l.b16 %v5054
  %v5324 = vunpack.c.l.b16 %v5055
  %v5325 = vunpack.c.l.b16 %v5056
  %v5326 = vunpack.c.l.b16 %v5057
  %v5327 = vunpack.c.l.b16 %v5058
  %v5328 = vunpack.c.l.b16 %v5059
  %v5329 = vunpack.c.l.b16 %v5060
  %v5330 = vunpack.c.l.b16 %v5061
  %v5331 = vunpack.c.l.b16 %v5062
  %v5332 = vunpack.c.l.b16 %v5063
  %v5333 = vunpack.c.l.b16 %v5064
  %v5334 = vunpack.c.l.b16 %v5065
  %v5335 = vunpack.c.l.b16 %v5066
  %v5336 = vunpack.c.l.b16 %v5067
  %v5337 = vunpack.c.l.b16 %v5068
  %v5338 = vunpack.c.l.b16 %v5069
  %v5339 = vunpack.c.l.b16 %v5070
  %v5340 = vunpack.c.l.b16 %v5071
  %v5341 = vunpack.c.l.b16 %v5072
  %v5342 = vunpack.c.l.b16 %v5073
  %v5343 = vunpack.c.l.b16 %v5074
  %v5344 = vunpack.c.l.b16 %v5075
  %v5345 = vunpack.c.l.b16 %v5076
  %v5346 = vunpack.c.l.b16 %v5077
  %v5347 = vunpack.c.l.b16 %v5078
  %v5348 = vpack.c.b16 %v5317, %v5316
  %v5349 = vpack.c.b16 %v5319, %v5318
  %v5350 = vpack.c.b16 %v5321, %v5320
  %v5351 = vpack.c.b16 %v5323, %v5322
  %v5352 = vpack.c.b16 %v5325, %v5324
  %v5353 = vpack.c.b16 %v5327, %v5326
  %v5354 = vpack.c.b16 %v5329, %v5328
  %v5355 = vpack.c.b16 %v5331, %v5330
  %v5356 = vpack.c.b16 %v5333, %v5332
  %v5357 = vpack.c.b16 %v5335, %v5334
  %v5358 = vpack.c.b16 %v5337, %v5336
  %v5359 = vpack.c.b16 %v5339, %v5338
  %v5360 = vpack.c.b16 %v5341, %v5340
  %v5361 = vpack.c.b16 %v5343, %v5342
  %v5362 = vpack.c.b16 %v5345, %v5344
  %v5363 = vpack.c.b16 %v5347, %v5346
  %5380 = vmatpush.bf16.msra.mxu0 %v5355
  %5381 = vmatpush.bf16.msra.mxu0 %v5354
  %5382 = vmatpush.bf16.msra.mxu0 %v5353
  %5383 = vmatpush.bf16.msra.mxu0 %v5352
  %5384 = vmatpush.bf16.msra.mxu0 %v5351
  %5385 = vmatpush.bf16.msra.mxu0 %v5350
  %5386 = vmatpush.bf16.msra.mxu0 %v5349
  %5387 = vmatpush.bf16.msra.mxu0 %v5348
  %5388 = vmatmul.bf16.gmra.mxu0 %v5043
  %v5389 = vpop.f32.mrf.mxu0
  %v5390 = vadd.f32 %v5277, %v5389
  %v5391 = vpop.f32.mrf.mxu0
  %5392 = vmatmul.bf16.gmra.mxu0 %v5045
  %v5393 = vpop.f32.mrf.mxu0
  %v5394 = vadd.f32 %v5281, %v5393
  %v5395 = vpop.f32.mrf.mxu0
  %5396 = vdwg.mxu0
  %5397 = vmatpush.bf16.msra.mxu0 %v5363
  %5398 = vmatpush.bf16.msra.mxu0 %v5362
  %5399 = vmatpush.bf16.msra.mxu0 %v5361
  %5400 = vmatpush.bf16.msra.mxu0 %v5360
  %5401 = vmatpush.bf16.msra.mxu0 %v5359
  %5402 = vmatpush.bf16.msra.mxu0 %v5358
  %5403 = vmatpush.bf16.msra.mxu0 %v5357
  %5404 = vmatpush.bf16.msra.mxu0 %v5356
  %5405 = vmatmul.bf16.gmra.mxu0 %v5044
  %v5406 = vpop.f32.mrf.mxu0
  %v5407 = vadd.f32 %v5390, %v5406
  %v5408 = vpop.f32.mrf.mxu0
  %5409 = vmatmul.bf16.gmra.mxu0 %v5046
  %v5410 = vpop.f32.mrf.mxu0
  %v5411 = vadd.f32 %v5394, %v5410
  %v5412 = vpop.f32.mrf.mxu0
  %5413 = vdwg.mxu0
  %v5414 = vld [vmem:[#allocation4] sm:$0xfc]
  %v5415 = vld [vmem:[#allocation4 + $0x8] sm:$0xfc]
  %v5416 = vld [vmem:[#allocation4 + $0x20] sm:$0xff]
  %v5417 = vld [vmem:[#allocation4 + $0x28] sm:$0xff]
  %v5418 = vpack.c.bf16 %v5039, %v5414
  %v5419 = vpack.c.bf16 %v5040, %v5415
  %v5420 = vpack.c.bf16 %v5416, %v5416
  %v5421 = vpack.c.bf16 %v5417, %v5417
  %v5422 = vld [vmem:[%s5 + $0x100] sm:$0xf]
  %v5423 = vld [vmem:[%s5 + $0x104] sm:$0xf]
  %v5424 = vld [vmem:[%s5 + $0x108] sm:$0xf]
  %v5425 = vld [vmem:[%s5 + $0x10c] sm:$0xf]
  %v5426 = vld [vmem:[%s5 + $0x110] sm:$0xf]
  %v5427 = vld [vmem:[%s5 + $0x114] sm:$0xf]
  %v5428 = vld [vmem:[%s5 + $0x118] sm:$0xf]
  %v5429 = vld [vmem:[%s5 + $0x11c] sm:$0xf]
  %v5430 = vld [vmem:[%s5 + $0x120] sm:$0xf]
  %v5431 = vld [vmem:[%s5 + $0x124] sm:$0xf]
  %v5432 = vld [vmem:[%s5 + $0x128] sm:$0xf]
  %v5433 = vld [vmem:[%s5 + $0x12c] sm:$0xf]
  %v5434 = vld [vmem:[%s5 + $0x130] sm:$0xf]
  %v5435 = vld [vmem:[%s5 + $0x134] sm:$0xf]
  %v5436 = vld [vmem:[%s5 + $0x138] sm:$0xf]
  %v5437 = vld [vmem:[%s5 + $0x13c] sm:$0xf]
  %v5438 = vld [vmem:[%s5 + $0x140] sm:$0xf]
  %v5439 = vld [vmem:[%s5 + $0x144] sm:$0xf]
  %v5440 = vld [vmem:[%s5 + $0x148] sm:$0xf]
  %v5441 = vld [vmem:[%s5 + $0x14c] sm:$0xf]
  %v5442 = vld [vmem:[%s5 + $0x150] sm:$0xf]
  %v5443 = vld [vmem:[%s5 + $0x154] sm:$0xf]
  %v5444 = vld [vmem:[%s5 + $0x158] sm:$0xf]
  %v5445 = vld [vmem:[%s5 + $0x15c] sm:$0xf]
  %v5446 = vld [vmem:[%s5 + $0x160] sm:$0xf]
  %v5447 = vld [vmem:[%s5 + $0x164] sm:$0xf]
  %v5448 = vld [vmem:[%s5 + $0x168] sm:$0xf]
  %v5449 = vld [vmem:[%s5 + $0x16c] sm:$0xf]
  %v5450 = vld [vmem:[%s5 + $0x170] sm:$0xf]
  %v5451 = vld [vmem:[%s5 + $0x174] sm:$0xf]
  %v5452 = vld [vmem:[%s5 + $0x178] sm:$0xf]
  %v5453 = vld [vmem:[%s5 + $0x17c] sm:$0xf]
  %vm5458 = vcmask 1046528
  %v5459 = vrot.slane %v5418, 1
  %v5460 = vrot.slane %v5420, 1
  %v5461 = vsel %vm5458, %v5459, %v5460
  %v5462 = vrot.slane %v5419, 1
  %v5463 = vrot.slane %v5421, 1
  %v5464 = vsel %vm5458, %v5462, %v5463
  %v5501 = vunpack.c.l.b16 %v5422
  %v5502 = vunpack.c.l.b16 %v5423
  %v5503 = vunpack.c.l.b16 %v5424
  %v5504 = vunpack.c.l.b16 %v5425
  %v5505 = vunpack.c.l.b16 %v5426
  %v5506 = vunpack.c.l.b16 %v5427
  %v5507 = vunpack.c.l.b16 %v5428
  %v5508 = vunpack.c.l.b16 %v5429
  %v5509 = vunpack.c.l.b16 %v5430
  %v5510 = vunpack.c.l.b16 %v5431
  %v5511 = vunpack.c.l.b16 %v5432
  %v5512 = vunpack.c.l.b16 %v5433
  %v5513 = vunpack.c.l.b16 %v5434
  %v5514 = vunpack.c.l.b16 %v5435
  %v5515 = vunpack.c.l.b16 %v5436
  %v5516 = vunpack.c.l.b16 %v5437
  %v5517 = vunpack.c.l.b16 %v5438
  %v5518 = vunpack.c.l.b16 %v5439
  %v5519 = vunpack.c.l.b16 %v5440
  %v5520 = vunpack.c.l.b16 %v5441
  %v5521 = vunpack.c.l.b16 %v5442
  %v5522 = vunpack.c.l.b16 %v5443
  %v5523 = vunpack.c.l.b16 %v5444
  %v5524 = vunpack.c.l.b16 %v5445
  %v5525 = vunpack.c.l.b16 %v5446
  %v5526 = vunpack.c.l.b16 %v5447
  %v5527 = vunpack.c.l.b16 %v5448
  %v5528 = vunpack.c.l.b16 %v5449
  %v5529 = vunpack.c.l.b16 %v5450
  %v5530 = vunpack.c.l.b16 %v5451
  %v5531 = vunpack.c.l.b16 %v5452
  %v5532 = vunpack.c.l.b16 %v5453
  %v5533 = vpack.c.b16 %v5502, %v5501
  %v5534 = vpack.c.b16 %v5504, %v5503
  %v5535 = vpack.c.b16 %v5506, %v5505
  %v5536 = vpack.c.b16 %v5508, %v5507
  %v5537 = vpack.c.b16 %v5510, %v5509
  %v5538 = vpack.c.b16 %v5512, %v5511
  %v5539 = vpack.c.b16 %v5514, %v5513
  %v5540 = vpack.c.b16 %v5516, %v5515
  %v5541 = vpack.c.b16 %v5518, %v5517
  %v5542 = vpack.c.b16 %v5520, %v5519
  %v5543 = vpack.c.b16 %v5522, %v5521
  %v5544 = vpack.c.b16 %v5524, %v5523
  %v5545 = vpack.c.b16 %v5526, %v5525
  %v5546 = vpack.c.b16 %v5528, %v5527
  %v5547 = vpack.c.b16 %v5530, %v5529
  %v5548 = vpack.c.b16 %v5532, %v5531
  %5565 = vmatpush.bf16.msra.mxu0 %v5540
  %5566 = vmatpush.bf16.msra.mxu0 %v5539
  %5567 = vmatpush.bf16.msra.mxu0 %v5538
  %5568 = vmatpush.bf16.msra.mxu0 %v5537
  %5569 = vmatpush.bf16.msra.mxu0 %v5536
  %5570 = vmatpush.bf16.msra.mxu0 %v5535
  %5571 = vmatpush.bf16.msra.mxu0 %v5534
  %5572 = vmatpush.bf16.msra.mxu0 %v5533
  %5573 = vmatmul.bf16.gmra.mxu0 %v5461
  %v5574 = vpop.f32.mrf.mxu0
  %v5575 = vadd.f32 0.0, %v5574
  %v5576 = vpop.f32.mrf.mxu0
  %5577 = vmatmul.bf16.gmra.mxu0 %v5460
  %v5578 = vpop.f32.mrf.mxu0
  %v5579 = vadd.f32 0.0, %v5578
  %v5580 = vpop.f32.mrf.mxu0
  %5581 = vdwg.mxu0
  %5582 = vmatpush.bf16.msra.mxu0 %v5548
  %5583 = vmatpush.bf16.msra.mxu0 %v5547
  %5584 = vmatpush.bf16.msra.mxu0 %v5546
  %5585 = vmatpush.bf16.msra.mxu0 %v5545
  %5586 = vmatpush.bf16.msra.mxu0 %v5544
  %5587 = vmatpush.bf16.msra.mxu0 %v5543
  %5588 = vmatpush.bf16.msra.mxu0 %v5542
  %5589 = vmatpush.bf16.msra.mxu0 %v5541
  %5590 = vmatmul.bf16.gmra.mxu0 %v5464
  %v5591 = vpop.f32.mrf.mxu0
  %v5592 = vadd.f32 %v5575, %v5591
  %v5593 = vpop.f32.mrf.mxu0
  %5594 = vmatmul.bf16.gmra.mxu0 %v5463
  %v5595 = vpop.f32.mrf.mxu0
  %v5596 = vadd.f32 %v5579, %v5595
  %v5597 = vpop.f32.mrf.mxu0
  %5598 = vdwg.mxu0
  %v5599 = vadd.f32 %v5407, %v5592
  %v5600 = vadd.f32 %v5411, %v5596
  %v5601 = vld [vmem:[#allocation4] sm:$0xf0]
  %v5602 = vld [vmem:[#allocation4 + $0x8] sm:$0xf0]
  %v5603 = vld [vmem:[#allocation4 + $0x10] sm:$0xff]
  %v5604 = vld [vmem:[#allocation4 + $0x18] sm:$0xff]
  %v5605 = vld [vmem:[#allocation4 + $0x20] sm:$0xff]
  %v5606 = vld [vmem:[#allocation4 + $0x28] sm:$0xff]
  %v5607 = vld [vmem:[#allocation4 + $0x30] sm:$0x3]
  %v5608 = vld [vmem:[#allocation4 + $0x38] sm:$0x3]
  %v5609 = vpack.c.bf16 %v5603, %v5601
  %v5610 = vpack.c.bf16 %v5604, %v5602
  %v5611 = vpack.c.bf16 %v5607, %v5605
  %v5612 = vpack.c.bf16 %v5608, %v5606
  %v5613 = vld [vmem:[%s5 + $0x180] sm:$0xf]
  %v5614 = vld [vmem:[%s5 + $0x184] sm:$0xf]
  %v5615 = vld [vmem:[%s5 + $0x188] sm:$0xf]
  %v5616 = vld [vmem:[%s5 + $0x18c] sm:$0xf]
  %v5617 = vld [vmem:[%s5 + $0x190] sm:$0xf]
  %v5618 = vld [vmem:[%s5 + $0x194] sm:$0xf]
  %v5619 = vld [vmem:[%s5 + $0x198] sm:$0xf]
  %v5620 = vld [vmem:[%s5 + $0x19c] sm:$0xf]
  %v5621 = vld [vmem:[%s5 + $0x1a0] sm:$0xf]
  %v5622 = vld [vmem:[%s5 + $0x1a4] sm:$0xf]
  %v5623 = vld [vmem:[%s5 + $0x1a8] sm:$0xf]
  %v5624 = vld [vmem:[%s5 + $0x1ac] sm:$0xf]
  %v5625 = vld [vmem:[%s5 + $0x1b0] sm:$0xf]
  %v5626 = vld [vmem:[%s5 + $0x1b4] sm:$0xf]
  %v5627 = vld [vmem:[%s5 + $0x1b8] sm:$0xf]
  %v5628 = vld [vmem:[%s5 + $0x1bc] sm:$0xf]
  %v5629 = vld [vmem:[%s5 + $0x1c0] sm:$0xf]
  %v5630 = vld [vmem:[%s5 + $0x1c4] sm:$0xf]
  %v5631 = vld [vmem:[%s5 + $0x1c8] sm:$0xf]
  %v5632 = vld [vmem:[%s5 + $0x1cc] sm:$0xf]
  %v5633 = vld [vmem:[%s5 + $0x1d0] sm:$0xf]
  %v5634 = vld [vmem:[%s5 + $0x1d4] sm:$0xf]
  %v5635 = vld [vmem:[%s5 + $0x1d8] sm:$0xf]
  %v5636 = vld [vmem:[%s5 + $0x1dc] sm:$0xf]
  %v5637 = vld [vmem:[%s5 + $0x1e0] sm:$0xf]
  %v5638 = vld [vmem:[%s5 + $0x1e4] sm:$0xf]
  %v5639 = vld [vmem:[%s5 + $0x1e8] sm:$0xf]
  %v5640 = vld [vmem:[%s5 + $0x1ec] sm:$0xf]
  %v5641 = vld [vmem:[%s5 + $0x1f0] sm:$0xf]
  %v5642 = vld [vmem:[%s5 + $0x1f4] sm:$0xf]
  %v5643 = vld [vmem:[%s5 + $0x1f8] sm:$0xf]
  %v5644 = vld [vmem:[%s5 + $0x1fc] sm:$0xf]
  %vm5649 = vcmask 1045504
  %v5650 = vrot.slane %v5609, 2
  %v5651 = vrot.slane %v5611, 2
  %v5652 = vsel %vm5649, %v5650, %v5651
  %v5653 = vrot.slane %v5610, 2
  %v5654 = vrot.slane %v5612, 2
  %v5655 = vsel %vm5649, %v5653, %v5654
  %v5692 = vunpack.c.l.b16 %v5613
  %v5693 = vunpack.c.l.b16 %v5614
  %v5694 = vunpack.c.l.b16 %v5615
  %v5695 = vunpack.c.l.b16 %v5616
  %v5696 = vunpack.c.l.b16 %v5617
  %v5697 = vunpack.c.l.b16 %v5618
  %v5698 = vunpack.c.l.b16 %v5619
  %v5699 = vunpack.c.l.b16 %v5620
  %v5700 = vunpack.c.l.b16 %v5621
  %v5701 = vunpack.c.l.b16 %v5622
  %v5702 = vunpack.c.l.b16 %v5623
  %v5703 = vunpack.c.l.b16 %v5624
  %v5704 = vunpack.c.l.b16 %v5625
  %v5705 = vunpack.c.l.b16 %v5626
  %v5706 = vunpack.c.l.b16 %v5627
  %v5707 = vunpack.c.l.b16 %v5628
  %v5708 = vunpack.c.l.b16 %v5629
  %v5709 = vunpack.c.l.b16 %v5630
  %v5710 = vunpack.c.l.b16 %v5631
  %v5711 = vunpack.c.l.b16 %v5632
  %v5712 = vunpack.c.l.b16 %v5633
  %v5713 = vunpack.c.l.b16 %v5634
  %v5714 = vunpack.c.l.b16 %v5635
  %v5715 = vunpack.c.l.b16 %v5636
  %v5716 = vunpack.c.l.b16 %v5637
  %v5717 = vunpack.c.l.b16 %v5638
  %v5718 = vunpack.c.l.b16 %v5639
  %v5719 = vunpack.c.l.b16 %v5640
  %v5720 = vunpack.c.l.b16 %v5641
  %v5721 = vunpack.c.l.b16 %v5642
  %v5722 = vunpack.c.l.b16 %v5643
  %v5723 = vunpack.c.l.b16 %v5644
  %v5724 = vpack.c.b16 %v5693, %v5692
  %v5725 = vpack.c.b16 %v5695, %v5694
  %v5726 = vpack.c.b16 %v5697, %v5696
  %v5727 = vpack.c.b16 %v5699, %v5698
  %v5728 = vpack.c.b16 %v5701, %v5700
  %v5729 = vpack.c.b16 %v5703, %v5702
  %v5730 = vpack.c.b16 %v5705, %v5704
  %v5731 = vpack.c.b16 %v5707, %v5706
  %v5732 = vpack.c.b16 %v5709, %v5708
  %v5733 = vpack.c.b16 %v5711, %v5710
  %v5734 = vpack.c.b16 %v5713, %v5712
  %v5735 = vpack.c.b16 %v5715, %v5714
  %v5736 = vpack.c.b16 %v5717, %v5716
  %v5737 = vpack.c.b16 %v5719, %v5718
  %v5738 = vpack.c.b16 %v5721, %v5720
  %v5739 = vpack.c.b16 %v5723, %v5722
  %5756 = vmatpush.bf16.msra.mxu0 %v5731
  %5757 = vmatpush.bf16.msra.mxu0 %v5730
  %5758 = vmatpush.bf16.msra.mxu0 %v5729
  %5759 = vmatpush.bf16.msra.mxu0 %v5728
  %5760 = vmatpush.bf16.msra.mxu0 %v5727
  %5761 = vmatpush.bf16.msra.mxu0 %v5726
  %5762 = vmatpush.bf16.msra.mxu0 %v5725
  %5763 = vmatpush.bf16.msra.mxu0 %v5724
  %5764 = vmatmul.bf16.gmra.mxu0 %v5652
  %v5765 = vpop.f32.mrf.mxu0
  %v5766 = vadd.f32 0.0, %v5765
  %v5767 = vpop.f32.mrf.mxu0
  %5768 = vmatmul.bf16.gmra.mxu0 %v5651
  %v5769 = vpop.f32.mrf.mxu0
  %v5770 = vadd.f32 0.0, %v5769
  %v5771 = vpop.f32.mrf.mxu0
  %5772 = vdwg.mxu0
  %5773 = vmatpush.bf16.msra.mxu0 %v5739
  %5774 = vmatpush.bf16.msra.mxu0 %v5738
  %5775 = vmatpush.bf16.msra.mxu0 %v5737
  %5776 = vmatpush.bf16.msra.mxu0 %v5736
  %5777 = vmatpush.bf16.msra.mxu0 %v5735
  %5778 = vmatpush.bf16.msra.mxu0 %v5734
  %5779 = vmatpush.bf16.msra.mxu0 %v5733
  %5780 = vmatpush.bf16.msra.mxu0 %v5732
  %5781 = vmatmul.bf16.gmra.mxu0 %v5655
  %v5782 = vpop.f32.mrf.mxu0
  %v5783 = vadd.f32 %v5766, %v5782
  %v5784 = vpop.f32.mrf.mxu0
  %5785 = vmatmul.bf16.gmra.mxu0 %v5654
  %v5786 = vpop.f32.mrf.mxu0
  %v5787 = vadd.f32 %v5770, %v5786
  %v5788 = vpop.f32.mrf.mxu0
  %5789 = vdwg.mxu0
  %v5790 = vadd.f32 %v5599, %v5783
  %v5791 = vadd.f32 %v5600, %v5787
  %v5792 = vld [vmem:[#allocation4] sm:$0xe0]
  %v5793 = vld [vmem:[#allocation4 + $0x8] sm:$0xe0]
  %v5794 = vld [vmem:[#allocation4 + $0x30] sm:$0x7]
  %v5795 = vld [vmem:[#allocation4 + $0x38] sm:$0x7]
  %v5796 = vpack.c.bf16 %v5603, %v5792
  %v5797 = vpack.c.bf16 %v5604, %v5793
  %v5798 = vpack.c.bf16 %v5794, %v5605
  %v5799 = vpack.c.bf16 %v5795, %v5606
  %v5800 = vld [vmem:[%s5 + $0x200] sm:$0xf]
  %v5801 = vld [vmem:[%s5 + $0x204] sm:$0xf]
  %v5802 = vld [vmem:[%s5 + $0x208] sm:$0xf]
  %v5803 = vld [vmem:[%s5 + $0x20c] sm:$0xf]
  %v5804 = vld [vmem:[%s5 + $0x210] sm:$0xf]
  %v5805 = vld [vmem:[%s5 + $0x214] sm:$0xf]
  %v5806 = vld [vmem:[%s5 + $0x218] sm:$0xf]
  %v5807 = vld [vmem:[%s5 + $0x21c] sm:$0xf]
  %v5808 = vld [vmem:[%s5 + $0x220] sm:$0xf]
  %v5809 = vld [vmem:[%s5 + $0x224] sm:$0xf]
  %v5810 = vld [vmem:[%s5 + $0x228] sm:$0xf]
  %v5811 = vld [vmem:[%s5 + $0x22c] sm:$0xf]
  %v5812 = vld [vmem:[%s5 + $0x230] sm:$0xf]
  %v5813 = vld [vmem:[%s5 + $0x234] sm:$0xf]
  %v5814 = vld [vmem:[%s5 + $0x238] sm:$0xf]
  %v5815 = vld [vmem:[%s5 + $0x23c] sm:$0xf]
  %v5816 = vld [vmem:[%s5 + $0x240] sm:$0xf]
  %v5817 = vld [vmem:[%s5 + $0x244] sm:$0xf]
  %v5818 = vld [vmem:[%s5 + $0x248] sm:$0xf]
  %v5819 = vld [vmem:[%s5 + $0x24c] sm:$0xf]
  %v5820 = vld [vmem:[%s5 + $0x250] sm:$0xf]
  %v5821 = vld [vmem:[%s5 + $0x254] sm:$0xf]
  %v5822 = vld [vmem:[%s5 + $0x258] sm:$0xf]
  %v5823 = vld [vmem:[%s5 + $0x25c] sm:$0xf]
  %v5824 = vld [vmem:[%s5 + $0x260] sm:$0xf]
  %v5825 = vld [vmem:[%s5 + $0x264] sm:$0xf]
  %v5826 = vld [vmem:[%s5 + $0x268] sm:$0xf]
  %v5827 = vld [vmem:[%s5 + $0x26c] sm:$0xf]
  %v5828 = vld [vmem:[%s5 + $0x270] sm:$0xf]
  %v5829 = vld [vmem:[%s5 + $0x274] sm:$0xf]
  %v5830 = vld [vmem:[%s5 + $0x278] sm:$0xf]
  %v5831 = vld [vmem:[%s5 + $0x27c] sm:$0xf]
  %vm5832 = vsmask.f32 5376
  %v5834 = vshrl.u32 %v5796, 16
  %v5836 = vrot.slane %v5834, 2
  %v5837 = vshll.u32 %v5796, 16
  %v5839 = vrot.slane %v5837, 3
  %v5840 = vor.u32 %v5836, %v5839
  %v5842 = vshrl.u32 %v5798, 16
  %v5844 = vrot.slane %v5842, 2
  %v5845 = vshll.u32 %v5798, 16
  %v5847 = vrot.slane %v5845, 3
  %v5848 = vor.u32 %v5844, %v5847
  %v5849 = vsel %vm5832, %v5840, %v5848
  %v5851 = vshrl.u32 %v5797, 16
  %v5853 = vrot.slane %v5851, 2
  %v5854 = vshll.u32 %v5797, 16
  %v5856 = vrot.slane %v5854, 3
  %v5857 = vor.u32 %v5853, %v5856
  %v5859 = vshrl.u32 %v5799, 16
  %v5861 = vrot.slane %v5859, 2
  %v5862 = vshll.u32 %v5799, 16
  %v5864 = vrot.slane %v5862, 3
  %v5865 = vor.u32 %v5861, %v5864
  %v5866 = vsel %vm5832, %v5857, %v5865
  %v5903 = vunpack.c.l.b16 %v5800
  %v5904 = vunpack.c.l.b16 %v5801
  %v5905 = vunpack.c.l.b16 %v5802
  %v5906 = vunpack.c.l.b16 %v5803
  %v5907 = vunpack.c.l.b16 %v5804
  %v5908 = vunpack.c.l.b16 %v5805
  %v5909 = vunpack.c.l.b16 %v5806
  %v5910 = vunpack.c.l.b16 %v5807
  %v5911 = vunpack.c.l.b16 %v5808
  %v5912 = vunpack.c.l.b16 %v5809
  %v5913 = vunpack.c.l.b16 %v5810
  %v5914 = vunpack.c.l.b16 %v5811
  %v5915 = vunpack.c.l.b16 %v5812
  %v5916 = vunpack.c.l.b16 %v5813
  %v5917 = vunpack.c.l.b16 %v5814
  %v5918 = vunpack.c.l.b16 %v5815
  %v5919 = vunpack.c.l.b16 %v5816
  %v5920 = vunpack.c.l.b16 %v5817
  %v5921 = vunpack.c.l.b16 %v5818
  %v5922 = vunpack.c.l.b16 %v5819
  %v5923 = vunpack.c.l.b16 %v5820
  %v5924 = vunpack.c.l.b16 %v5821
  %v5925 = vunpack.c.l.b16 %v5822
  %v5926 = vunpack.c.l.b16 %v5823
  %v5927 = vunpack.c.l.b16 %v5824
  %v5928 = vunpack.c.l.b16 %v5825
  %v5929 = vunpack.c.l.b16 %v5826
  %v5930 = vunpack.c.l.b16 %v5827
  %v5931 = vunpack.c.l.b16 %v5828
  %v5932 = vunpack.c.l.b16 %v5829
  %v5933 = vunpack.c.l.b16 %v5830
  %v5934 = vunpack.c.l.b16 %v5831
  %v5935 = vpack.c.b16 %v5904, %v5903
  %v5936 = vpack.c.b16 %v5906, %v5905
  %v5937 = vpack.c.b16 %v5908, %v5907
  %v5938 = vpack.c.b16 %v5910, %v5909
  %v5939 = vpack.c.b16 %v5912, %v5911
  %v5940 = vpack.c.b16 %v5914, %v5913
  %v5941 = vpack.c.b16 %v5916, %v5915
  %v5942 = vpack.c.b16 %v5918, %v5917
  %v5943 = vpack.c.b16 %v5920, %v5919
  %v5944 = vpack.c.b16 %v5922, %v5921
  %v5945 = vpack.c.b16 %v5924, %v5923
  %v5946 = vpack.c.b16 %v5926, %v5925
  %v5947 = vpack.c.b16 %v5928, %v5927
  %v5948 = vpack.c.b16 %v5930, %v5929
  %v5949 = vpack.c.b16 %v5932, %v5931
  %v5950 = vpack.c.b16 %v5934, %v5933
  %5967 = vmatpush.bf16.msra.mxu0 %v5942
  %5968 = vmatpush.bf16.msra.mxu0 %v5941
  %5969 = vmatpush.bf16.msra.mxu0 %v5940
  %5970 = vmatpush.bf16.msra.mxu0 %v5939
  %5971 = vmatpush.bf16.msra.mxu0 %v5938
  %5972 = vmatpush.bf16.msra.mxu0 %v5937
  %5973 = vmatpush.bf16.msra.mxu0 %v5936
  %5974 = vmatpush.bf16.msra.mxu0 %v5935
  %5975 = vmatmul.bf16.gmra.mxu0 %v5849
  %v5976 = vpop.f32.mrf.mxu0
  %v5977 = vadd.f32 0.0, %v5976
  %v5978 = vpop.f32.mrf.mxu0
  %5979 = vmatmul.bf16.gmra.mxu0 %v5848
  %v5980 = vpop.f32.mrf.mxu0
  %v5981 = vadd.f32 0.0, %v5980
  %v5982 = vpop.f32.mrf.mxu0
  %5983 = vdwg.mxu0
  %5984 = vmatpush.bf16.msra.mxu0 %v5950
  %5985 = vmatpush.bf16.msra.mxu0 %v5949
  %5986 = vmatpush.bf16.msra.mxu0 %v5948
  %5987 = vmatpush.bf16.msra.mxu0 %v5947
  %5988 = vmatpush.bf16.msra.mxu0 %v5946
  %5989 = vmatpush.bf16.msra.mxu0 %v5945
  %5990 = vmatpush.bf16.msra.mxu0 %v5944
  %5991 = vmatpush.bf16.msra.mxu0 %v5943
  %5992 = vmatmul.bf16.gmra.mxu0 %v5866
  %v5993 = vpop.f32.mrf.mxu0
  %v5994 = vadd.f32 %v5977, %v5993
  %v5995 = vpop.f32.mrf.mxu0
  %5996 = vmatmul.bf16.gmra.mxu0 %v5865
  %v5997 = vpop.f32.mrf.mxu0
  %v5998 = vadd.f32 %v5981, %v5997
  %v5999 = vpop.f32.mrf.mxu0
  %6000 = vdwg.mxu0
  %v6001 = vadd.f32 %v5790, %v5994
  %v6002 = vadd.f32 %v5791, %v5998
  %v6003 = vld [vmem:[#allocation4] sm:$0xc0]
  %v6004 = vld [vmem:[#allocation4 + $0x8] sm:$0xc0]
  %v6005 = vld [vmem:[#allocation4 + $0x30] sm:$0xf]
  %v6006 = vld [vmem:[#allocation4 + $0x38] sm:$0xf]
  %v6007 = vpack.c.bf16 %v5603, %v6003
  %v6008 = vpack.c.bf16 %v5604, %v6004
  %v6009 = vpack.c.bf16 %v6005, %v5605
  %v6010 = vpack.c.bf16 %v6006, %v5606
  %v6011 = vld [vmem:[%s5 + $0x280] sm:$0xf]
  %v6012 = vld [vmem:[%s5 + $0x284] sm:$0xf]
  %v6013 = vld [vmem:[%s5 + $0x288] sm:$0xf]
  %v6014 = vld [vmem:[%s5 + $0x28c] sm:$0xf]
  %v6015 = vld [vmem:[%s5 + $0x290] sm:$0xf]
  %v6016 = vld [vmem:[%s5 + $0x294] sm:$0xf]
  %v6017 = vld [vmem:[%s5 + $0x298] sm:$0xf]
  %v6018 = vld [vmem:[%s5 + $0x29c] sm:$0xf]
  %v6019 = vld [vmem:[%s5 + $0x2a0] sm:$0xf]
  %v6020 = vld [vmem:[%s5 + $0x2a4] sm:$0xf]
  %v6021 = vld [vmem:[%s5 + $0x2a8] sm:$0xf]
  %v6022 = vld [vmem:[%s5 + $0x2ac] sm:$0xf]
  %v6023 = vld [vmem:[%s5 + $0x2b0] sm:$0xf]
  %v6024 = vld [vmem:[%s5 + $0x2b4] sm:$0xf]
  %v6025 = vld [vmem:[%s5 + $0x2b8] sm:$0xf]
  %v6026 = vld [vmem:[%s5 + $0x2bc] sm:$0xf]
  %v6027 = vld [vmem:[%s5 + $0x2c0] sm:$0xf]
  %v6028 = vld [vmem:[%s5 + $0x2c4] sm:$0xf]
  %v6029 = vld [vmem:[%s5 + $0x2c8] sm:$0xf]
  %v6030 = vld [vmem:[%s5 + $0x2cc] sm:$0xf]
  %v6031 = vld [vmem:[%s5 + $0x2d0] sm:$0xf]
  %v6032 = vld [vmem:[%s5 + $0x2d4] sm:$0xf]
  %v6033 = vld [vmem:[%s5 + $0x2d8] sm:$0xf]
  %v6034 = vld [vmem:[%s5 + $0x2dc] sm:$0xf]
  %v6035 = vld [vmem:[%s5 + $0x2e0] sm:$0xf]
  %v6036 = vld [vmem:[%s5 + $0x2e4] sm:$0xf]
  %v6037 = vld [vmem:[%s5 + $0x2e8] sm:$0xf]
  %v6038 = vld [vmem:[%s5 + $0x2ec] sm:$0xf]
  %v6039 = vld [vmem:[%s5 + $0x2f0] sm:$0xf]
  %v6040 = vld [vmem:[%s5 + $0x2f4] sm:$0xf]
  %v6041 = vld [vmem:[%s5 + $0x2f8] sm:$0xf]
  %v6042 = vld [vmem:[%s5 + $0x2fc] sm:$0xf]
  %vm6047 = vcmask 1044480
  %v6048 = vrot.slane %v6007, 3
  %v6049 = vrot.slane %v6009, 3
  %v6050 = vsel %vm6047, %v6048, %v6049
  %v6051 = vrot.slane %v6008, 3
  %v6052 = vrot.slane %v6010, 3
  %v6053 = vsel %vm6047, %v6051, %v6052
  %v6090 = vunpack.c.l.b16 %v6011
  %v6091 = vunpack.c.l.b16 %v6012
  %v6092 = vunpack.c.l.b16 %v6013
  %v6093 = vunpack.c.l.b16 %v6014
  %v6094 = vunpack.c.l.b16 %v6015
  %v6095 = vunpack.c.l.b16 %v6016
  %v6096 = vunpack.c.l.b16 %v6017
  %v6097 = vunpack.c.l.b16 %v6018
  %v6098 = vunpack.c.l.b16 %v6019
  %v6099 = vunpack.c.l.b16 %v6020
  %v6100 = vunpack.c.l.b16 %v6021
  %v6101 = vunpack.c.l.b16 %v6022
  %v6102 = vunpack.c.l.b16 %v6023
  %v6103 = vunpack.c.l.b16 %v6024
  %v6104 = vunpack.c.l.b16 %v6025
  %v6105 = vunpack.c.l.b16 %v6026
  %v6106 = vunpack.c.l.b16 %v6027
  %v6107 = vunpack.c.l.b16 %v6028
  %v6108 = vunpack.c.l.b16 %v6029
  %v6109 = vunpack.c.l.b16 %v6030
  %v6110 = vunpack.c.l.b16 %v6031
  %v6111 = vunpack.c.l.b16 %v6032
  %v6112 = vunpack.c.l.b16 %v6033
  %v6113 = vunpack.c.l.b16 %v6034
  %v6114 = vunpack.c.l.b16 %v6035
  %v6115 = vunpack.c.l.b16 %v6036
  %v6116 = vunpack.c.l.b16 %v6037
  %v6117 = vunpack.c.l.b16 %v6038
  %v6118 = vunpack.c.l.b16 %v6039
  %v6119 = vunpack.c.l.b16 %v6040
  %v6120 = vunpack.c.l.b16 %v6041
  %v6121 = vunpack.c.l.b16 %v6042
  %v6122 = vpack.c.b16 %v6091, %v6090
  %v6123 = vpack.c.b16 %v6093, %v6092
  %v6124 = vpack.c.b16 %v6095, %v6094
  %v6125 = vpack.c.b16 %v6097, %v6096
  %v6126 = vpack.c.b16 %v6099, %v6098
  %v6127 = vpack.c.b16 %v6101, %v6100
  %v6128 = vpack.c.b16 %v6103, %v6102
  %v6129 = vpack.c.b16 %v6105, %v6104
  %v6130 = vpack.c.b16 %v6107, %v6106
  %v6131 = vpack.c.b16 %v6109, %v6108
  %v6132 = vpack.c.b16 %v6111, %v6110
  %v6133 = vpack.c.b16 %v6113, %v6112
  %v6134 = vpack.c.b16 %v6115, %v6114
  %v6135 = vpack.c.b16 %v6117, %v6116
  %v6136 = vpack.c.b16 %v6119, %v6118
  %v6137 = vpack.c.b16 %v6121, %v6120
  %6154 = vmatpush.bf16.msra.mxu0 %v6129
  %6155 = vmatpush.bf16.msra.mxu0 %v6128
  %6156 = vmatpush.bf16.msra.mxu0 %v6127
  %6157 = vmatpush.bf16.msra.mxu0 %v6126
  %6158 = vmatpush.bf16.msra.mxu0 %v6125
  %6159 = vmatpush.bf16.msra.mxu0 %v6124
  %6160 = vmatpush.bf16.msra.mxu0 %v6123
  %6161 = vmatpush.bf16.msra.mxu0 %v6122
  %6162 = vmatmul.bf16.gmra.mxu0 %v6050
  %v6163 = vpop.f32.mrf.mxu0
  %v6164 = vadd.f32 0.0, %v6163
  %v6165 = vpop.f32.mrf.mxu0
  %6166 = vmatmul.bf16.gmra.mxu0 %v6049
  %v6167 = vpop.f32.mrf.mxu0
  %v6168 = vadd.f32 0.0, %v6167
  %v6169 = vpop.f32.mrf.mxu0
  %6170 = vdwg.mxu0
  %6171 = vmatpush.bf16.msra.mxu0 %v6137
  %6172 = vmatpush.bf16.msra.mxu0 %v6136
  %6173 = vmatpush.bf16.msra.mxu0 %v6135
  %6174 = vmatpush.bf16.msra.mxu0 %v6134
  %6175 = vmatpush.bf16.msra.mxu0 %v6133
  %6176 = vmatpush.bf16.msra.mxu0 %v6132
  %6177 = vmatpush.bf16.msra.mxu0 %v6131
  %6178 = vmatpush.bf16.msra.mxu0 %v6130
  %6179 = vmatmul.bf16.gmra.mxu0 %v6053
  %v6180 = vpop.f32.mrf.mxu0
  %v6181 = vadd.f32 %v6164, %v6180
  %v6182 = vpop.f32.mrf.mxu0
  %6183 = vmatmul.bf16.gmra.mxu0 %v6052
  %v6184 = vpop.f32.mrf.mxu0
  %v6185 = vadd.f32 %v6168, %v6184
  %v6186 = vpop.f32.mrf.mxu0
  %6187 = vdwg.mxu0
  %v6188 = vadd.f32 %v6001, %v6181
  %v6189 = vadd.f32 %v6002, %v6185
  %v6190 = vld [vmem:[#allocation4 + $0x30] sm:$0x3f]
  %v6191 = vld [vmem:[#allocation4 + $0x38] sm:$0x3f]
  %v6192 = vpack.c.bf16 %v5605, %v5603
  %v6193 = vpack.c.bf16 %v5606, %v5604
  %v6194 = vpack.c.bf16 %v6190, %v6190
  %v6195 = vpack.c.bf16 %v6191, %v6191
  %v6196 = vld [vmem:[%s5 + $0x300] sm:$0xf]
  %v6197 = vld [vmem:[%s5 + $0x304] sm:$0xf]
  %v6198 = vld [vmem:[%s5 + $0x308] sm:$0xf]
  %v6199 = vld [vmem:[%s5 + $0x30c] sm:$0xf]
  %v6200 = vld [vmem:[%s5 + $0x310] sm:$0xf]
  %v6201 = vld [vmem:[%s5 + $0x314] sm:$0xf]
  %v6202 = vld [vmem:[%s5 + $0x318] sm:$0xf]
  %v6203 = vld [vmem:[%s5 + $0x31c] sm:$0xf]
  %v6204 = vld [vmem:[%s5 + $0x320] sm:$0xf]
  %v6205 = vld [vmem:[%s5 + $0x324] sm:$0xf]
  %v6206 = vld [vmem:[%s5 + $0x328] sm:$0xf]
  %v6207 = vld [vmem:[%s5 + $0x32c] sm:$0xf]
  %v6208 = vld [vmem:[%s5 + $0x330] sm:$0xf]
  %v6209 = vld [vmem:[%s5 + $0x334] sm:$0xf]
  %v6210 = vld [vmem:[%s5 + $0x338] sm:$0xf]
  %v6211 = vld [vmem:[%s5 + $0x33c] sm:$0xf]
  %v6212 = vld [vmem:[%s5 + $0x340] sm:$0xf]
  %v6213 = vld [vmem:[%s5 + $0x344] sm:$0xf]
  %v6214 = vld [vmem:[%s5 + $0x348] sm:$0xf]
  %v6215 = vld [vmem:[%s5 + $0x34c] sm:$0xf]
  %v6216 = vld [vmem:[%s5 + $0x350] sm:$0xf]
  %v6217 = vld [vmem:[%s5 + $0x354] sm:$0xf]
  %v6218 = vld [vmem:[%s5 + $0x358] sm:$0xf]
  %v6219 = vld [vmem:[%s5 + $0x35c] sm:$0xf]
  %v6220 = vld [vmem:[%s5 + $0x360] sm:$0xf]
  %v6221 = vld [vmem:[%s5 + $0x364] sm:$0xf]
  %v6222 = vld [vmem:[%s5 + $0x368] sm:$0xf]
  %v6223 = vld [vmem:[%s5 + $0x36c] sm:$0xf]
  %v6224 = vld [vmem:[%s5 + $0x370] sm:$0xf]
  %v6225 = vld [vmem:[%s5 + $0x374] sm:$0xf]
  %v6226 = vld [vmem:[%s5 + $0x378] sm:$0xf]
  %v6227 = vld [vmem:[%s5 + $0x37c] sm:$0xf]
  %v6260 = vunpack.c.l.b16 %v6196
  %v6261 = vunpack.c.l.b16 %v6197
  %v6262 = vunpack.c.l.b16 %v6198
  %v6263 = vunpack.c.l.b16 %v6199
  %v6264 = vunpack.c.l.b16 %v6200
  %v6265 = vunpack.c.l.b16 %v6201
  %v6266 = vunpack.c.l.b16 %v6202
  %v6267 = vunpack.c.l.b16 %v6203
  %v6268 = vunpack.c.l.b16 %v6204
  %v6269 = vunpack.c.l.b16 %v6205
  %v6270 = vunpack.c.l.b16 %v6206
  %v6271 = vunpack.c.l.b16 %v6207
  %v6272 = vunpack.c.l.b16 %v6208
  %v6273 = vunpack.c.l.b16 %v6209
  %v6274 = vunpack.c.l.b16 %v6210
  %v6275 = vunpack.c.l.b16 %v6211
  %v6276 = vunpack.c.l.b16 %v6212
  %v6277 = vunpack.c.l.b16 %v6213
  %v6278 = vunpack.c.l.b16 %v6214
  %v6279 = vunpack.c.l.b16 %v6215
  %v6280 = vunpack.c.l.b16 %v6216
  %v6281 = vunpack.c.l.b16 %v6217
  %v6282 = vunpack.c.l.b16 %v6218
  %v6283 = vunpack.c.l.b16 %v6219
  %v6284 = vunpack.c.l.b16 %v6220
  %v6285 = vunpack.c.l.b16 %v6221
  %v6286 = vunpack.c.l.b16 %v6222
  %v6287 = vunpack.c.l.b16 %v6223
  %v6288 = vunpack.c.l.b16 %v6224
  %v6289 = vunpack.c.l.b16 %v6225
  %v6290 = vunpack.c.l.b16 %v6226
  %v6291 = vunpack.c.l.b16 %v6227
  %v6292 = vpack.c.b16 %v6261, %v6260
  %v6293 = vpack.c.b16 %v6263, %v6262
  %v6294 = vpack.c.b16 %v6265, %v6264
  %v6295 = vpack.c.b16 %v6267, %v6266
  %v6296 = vpack.c.b16 %v6269, %v6268
  %v6297 = vpack.c.b16 %v6271, %v6270
  %v6298 = vpack.c.b16 %v6273, %v6272
  %v6299 = vpack.c.b16 %v6275, %v6274
  %v6300 = vpack.c.b16 %v6277, %v6276
  %v6301 = vpack.c.b16 %v6279, %v6278
  %v6302 = vpack.c.b16 %v6281, %v6280
  %v6303 = vpack.c.b16 %v6283, %v6282
  %v6304 = vpack.c.b16 %v6285, %v6284
  %v6305 = vpack.c.b16 %v6287, %v6286
  %v6306 = vpack.c.b16 %v6289, %v6288
  %v6307 = vpack.c.b16 %v6291, %v6290
  %6324 = vmatpush.bf16.msra.mxu0 %v6299
  %6325 = vmatpush.bf16.msra.mxu0 %v6298
  %6326 = vmatpush.bf16.msra.mxu0 %v6297
  %6327 = vmatpush.bf16.msra.mxu0 %v6296
  %6328 = vmatpush.bf16.msra.mxu0 %v6295
  %6329 = vmatpush.bf16.msra.mxu0 %v6294
  %6330 = vmatpush.bf16.msra.mxu0 %v6293
  %6331 = vmatpush.bf16.msra.mxu0 %v6292
  %6332 = vmatmul.bf16.gmra.mxu0 %v6192
  %v6333 = vpop.f32.mrf.mxu0
  %v6334 = vadd.f32 0.0, %v6333
  %v6335 = vpop.f32.mrf.mxu0
  %6336 = vmatmul.bf16.gmra.mxu0 %v6194
  %v6337 = vpop.f32.mrf.mxu0
  %v6338 = vadd.f32 0.0, %v6337
  %v6339 = vpop.f32.mrf.mxu0
  %6340 = vdwg.mxu0
  %6341 = vmatpush.bf16.msra.mxu0 %v6307
  %6342 = vmatpush.bf16.msra.mxu0 %v6306
  %6343 = vmatpush.bf16.msra.mxu0 %v6305
  %6344 = vmatpush.bf16.msra.mxu0 %v6304
  %6345 = vmatpush.bf16.msra.mxu0 %v6303
  %6346 = vmatpush.bf16.msra.mxu0 %v6302
  %6347 = vmatpush.bf16.msra.mxu0 %v6301
  %6348 = vmatpush.bf16.msra.mxu0 %v6300
  %6349 = vmatmul.bf16.gmra.mxu0 %v6193
  %v6350 = vpop.f32.mrf.mxu0
  %v6351 = vadd.f32 %v6334, %v6350
  %v6352 = vpop.f32.mrf.mxu0
  %6353 = vmatmul.bf16.gmra.mxu0 %v6195
  %v6354 = vpop.f32.mrf.mxu0
  %v6355 = vadd.f32 %v6338, %v6354
  %v6356 = vpop.f32.mrf.mxu0
  %6357 = vdwg.mxu0
  %v6358 = vadd.f32 %v6188, %v6351
  %v6359 = vadd.f32 %v6189, %v6355
  %v6360 = vld [vmem:[#allocation4 + $0x10] sm:$0xfe]
  %v6361 = vld [vmem:[#allocation4 + $0x18] sm:$0xfe]
  %v6362 = vld [vmem:[#allocation4 + $0x30] sm:$0x7f]
  %v6363 = vld [vmem:[#allocation4 + $0x38] sm:$0x7f]
  %v6364 = vpack.c.bf16 %v5605, %v6360
  %v6365 = vpack.c.bf16 %v5606, %v6361
  %v6366 = vpack.c.bf16 %v6362, %v6362
  %v6367 = vpack.c.bf16 %v6363, %v6363
  %v6368 = vld [vmem:[%s5 + $0x380] sm:$0xf]
  %v6369 = vld [vmem:[%s5 + $0x384] sm:$0xf]
  %v6370 = vld [vmem:[%s5 + $0x388] sm:$0xf]
  %v6371 = vld [vmem:[%s5 + $0x38c] sm:$0xf]
  %v6372 = vld [vmem:[%s5 + $0x390] sm:$0xf]
  %v6373 = vld [vmem:[%s5 + $0x394] sm:$0xf]
  %v6374 = vld [vmem:[%s5 + $0x398] sm:$0xf]
  %v6375 = vld [vmem:[%s5 + $0x39c] sm:$0xf]
  %v6376 = vld [vmem:[%s5 + $0x3a0] sm:$0xf]
  %v6377 = vld [vmem:[%s5 + $0x3a4] sm:$0xf]
  %v6378 = vld [vmem:[%s5 + $0x3a8] sm:$0xf]
  %v6379 = vld [vmem:[%s5 + $0x3ac] sm:$0xf]
  %v6380 = vld [vmem:[%s5 + $0x3b0] sm:$0xf]
  %v6381 = vld [vmem:[%s5 + $0x3b4] sm:$0xf]
  %v6382 = vld [vmem:[%s5 + $0x3b8] sm:$0xf]
  %v6383 = vld [vmem:[%s5 + $0x3bc] sm:$0xf]
  %v6384 = vld [vmem:[%s5 + $0x3c0] sm:$0xf]
  %v6385 = vld [vmem:[%s5 + $0x3c4] sm:$0xf]
  %v6386 = vld [vmem:[%s5 + $0x3c8] sm:$0xf]
  %v6387 = vld [vmem:[%s5 + $0x3cc] sm:$0xf]
  %v6388 = vld [vmem:[%s5 + $0x3d0] sm:$0xf]
  %v6389 = vld [vmem:[%s5 + $0x3d4] sm:$0xf]
  %v6390 = vld [vmem:[%s5 + $0x3d8] sm:$0xf]
  %v6391 = vld [vmem:[%s5 + $0x3dc] sm:$0xf]
  %v6392 = vld [vmem:[%s5 + $0x3e0] sm:$0xf]
  %v6393 = vld [vmem:[%s5 + $0x3e4] sm:$0xf]
  %v6394 = vld [vmem:[%s5 + $0x3e8] sm:$0xf]
  %v6395 = vld [vmem:[%s5 + $0x3ec] sm:$0xf]
  %v6396 = vld [vmem:[%s5 + $0x3f0] sm:$0xf]
  %v6397 = vld [vmem:[%s5 + $0x3f4] sm:$0xf]
  %v6398 = vld [vmem:[%s5 + $0x3f8] sm:$0xf]
  %v6399 = vld [vmem:[%s5 + $0x3fc] sm:$0xf]
  %v6401 = vshrl.u32 %v6364, 16
  %v6403 = vshll.u32 %v6364, 16
  %v6405 = vrot.slane %v6403, 1
  %v6406 = vor.u32 %v6401, %v6405
  %v6408 = vshll.u32 %v6366, 16
  %v6410 = vrot.slane %v6408, 1
  %v6411 = vsel %vm5119, %v6406, %v6410
  %v6413 = vshrl.u32 %v6365, 16
  %v6415 = vshll.u32 %v6365, 16
  %v6417 = vrot.slane %v6415, 1
  %v6418 = vor.u32 %v6413, %v6417
  %v6420 = vshll.u32 %v6367, 16
  %v6422 = vrot.slane %v6420, 1
  %v6423 = vsel %vm5119, %v6418, %v6422
  %v6424 = vshrl.u32 %v6366, 16
  %v6426 = vor.u32 %v6424, %v6410
  %v6427 = vshrl.u32 %v6367, 16
  %v6429 = vor.u32 %v6427, %v6422
  %v6466 = vunpack.c.l.b16 %v6368
  %v6467 = vunpack.c.l.b16 %v6369
  %v6468 = vunpack.c.l.b16 %v6370
  %v6469 = vunpack.c.l.b16 %v6371
  %v6470 = vunpack.c.l.b16 %v6372
  %v6471 = vunpack.c.l.b16 %v6373
  %v6472 = vunpack.c.l.b16 %v6374
  %v6473 = vunpack.c.l.b16 %v6375
  %v6474 = vunpack.c.l.b16 %v6376
  %v6475 = vunpack.c.l.b16 %v6377
  %v6476 = vunpack.c.l.b16 %v6378
  %v6477 = vunpack.c.l.b16 %v6379
  %v6478 = vunpack.c.l.b16 %v6380
  %v6479 = vunpack.c.l.b16 %v6381
  %v6480 = vunpack.c.l.b16 %v6382
  %v6481 = vunpack.c.l.b16 %v6383
  %v6482 = vunpack.c.l.b16 %v6384
  %v6483 = vunpack.c.l.b16 %v6385
  %v6484 = vunpack.c.l.b16 %v6386
  %v6485 = vunpack.c.l.b16 %v6387
  %v6486 = vunpack.c.l.b16 %v6388
  %v6487 = vunpack.c.l.b16 %v6389
  %v6488 = vunpack.c.l.b16 %v6390
  %v6489 = vunpack.c.l.b16 %v6391
  %v6490 = vunpack.c.l.b16 %v6392
  %v6491 = vunpack.c.l.b16 %v6393
  %v6492 = vunpack.c.l.b16 %v6394
  %v6493 = vunpack.c.l.b16 %v6395
  %v6494 = vunpack.c.l.b16 %v6396
  %v6495 = vunpack.c.l.b16 %v6397
  %v6496 = vunpack.c.l.b16 %v6398
  %v6497 = vunpack.c.l.b16 %v6399
  %v6498 = vpack.c.b16 %v6467, %v6466
  %v6499 = vpack.c.b16 %v6469, %v6468
  %v6500 = vpack.c.b16 %v6471, %v6470
  %v6501 = vpack.c.b16 %v6473, %v6472
  %v6502 = vpack.c.b16 %v6475, %v6474
  %v6503 = vpack.c.b16 %v6477, %v6476
  %v6504 = vpack.c.b16 %v6479, %v6478
  %v6505 = vpack.c.b16 %v6481, %v6480
  %v6506 = vpack.c.b16 %v6483, %v6482
  %v6507 = vpack.c.b16 %v6485, %v6484
  %v6508 = vpack.c.b16 %v6487, %v6486
  %v6509 = vpack.c.b16 %v6489, %v6488
  %v6510 = vpack.c.b16 %v6491, %v6490
  %v6511 = vpack.c.b16 %v6493, %v6492
  %v6512 = vpack.c.b16 %v6495, %v6494
  %v6513 = vpack.c.b16 %v6497, %v6496
  %6530 = vmatpush.bf16.msra.mxu0 %v6505
  %6531 = vmatpush.bf16.msra.mxu0 %v6504
  %6532 = vmatpush.bf16.msra.mxu0 %v6503
  %6533 = vmatpush.bf16.msra.mxu0 %v6502
  %6534 = vmatpush.bf16.msra.mxu0 %v6501
  %6535 = vmatpush.bf16.msra.mxu0 %v6500
  %6536 = vmatpush.bf16.msra.mxu0 %v6499
  %6537 = vmatpush.bf16.msra.mxu0 %v6498
  %6538 = vmatmul.bf16.gmra.mxu0 %v6411
  %v6539 = vpop.f32.mrf.mxu0
  %v6540 = vadd.f32 0.0, %v6539
  %v6541 = vpop.f32.mrf.mxu0
  %6542 = vmatmul.bf16.gmra.mxu0 %v6426
  %v6543 = vpop.f32.mrf.mxu0
  %v6544 = vadd.f32 0.0, %v6543
  %v6545 = vpop.f32.mrf.mxu0
  %6546 = vdwg.mxu0
  %6547 = vmatpush.bf16.msra.mxu0 %v6513
  %6548 = vmatpush.bf16.msra.mxu0 %v6512
  %6549 = vmatpush.bf16.msra.mxu0 %v6511
  %6550 = vmatpush.bf16.msra.mxu0 %v6510
  %6551 = vmatpush.bf16.msra.mxu0 %v6509
  %6552 = vmatpush.bf16.msra.mxu0 %v6508
  %6553 = vmatpush.bf16.msra.mxu0 %v6507
  %6554 = vmatpush.bf16.msra.mxu0 %v6506
  %6555 = vmatmul.bf16.gmra.mxu0 %v6423
  %v6556 = vpop.f32.mrf.mxu0
  %v6557 = vadd.f32 %v6540, %v6556
  %v6558 = vpop.f32.mrf.mxu0
  %6559 = vmatmul.bf16.gmra.mxu0 %v6429
  %v6560 = vpop.f32.mrf.mxu0
  %v6561 = vadd.f32 %v6544, %v6560
  %v6562 = vpop.f32.mrf.mxu0
  %6563 = vdwg.mxu0
  %v6564 = vadd.f32 %v6358, %v6557
  %v6565 = vadd.f32 %v6359, %v6561
  %v6566 = vld [vmem:[#allocation4 + $0x10] sm:$0xfc]
  %v6567 = vld [vmem:[#allocation4 + $0x18] sm:$0xfc]
  %v6568 = vld [vmem:[#allocation4 + $0x30] sm:$0xff]
  %v6569 = vld [vmem:[#allocation4 + $0x38] sm:$0xff]
  %v6570 = vpack.c.bf16 %v5605, %v6566
  %v6571 = vpack.c.bf16 %v5606, %v6567
  %v6572 = vpack.c.bf16 %v6568, %v6568
  %v6573 = vpack.c.bf16 %v6569, %v6569
  %v6574 = vld [vmem:[%s5 + $0x400] sm:$0xf]
  %v6575 = vld [vmem:[%s5 + $0x404] sm:$0xf]
  %v6576 = vld [vmem:[%s5 + $0x408] sm:$0xf]
  %v6577 = vld [vmem:[%s5 + $0x40c] sm:$0xf]
  %v6578 = vld [vmem:[%s5 + $0x410] sm:$0xf]
  %v6579 = vld [vmem:[%s5 + $0x414] sm:$0xf]
  %v6580 = vld [vmem:[%s5 + $0x418] sm:$0xf]
  %v6581 = vld [vmem:[%s5 + $0x41c] sm:$0xf]
  %v6582 = vld [vmem:[%s5 + $0x420] sm:$0xf]
  %v6583 = vld [vmem:[%s5 + $0x424] sm:$0xf]
  %v6584 = vld [vmem:[%s5 + $0x428] sm:$0xf]
  %v6585 = vld [vmem:[%s5 + $0x42c] sm:$0xf]
  %v6586 = vld [vmem:[%s5 + $0x430] sm:$0xf]
  %v6587 = vld [vmem:[%s5 + $0x434] sm:$0xf]
  %v6588 = vld [vmem:[%s5 + $0x438] sm:$0xf]
  %v6589 = vld [vmem:[%s5 + $0x43c] sm:$0xf]
  %v6590 = vld [vmem:[%s5 + $0x440] sm:$0xf]
  %v6591 = vld [vmem:[%s5 + $0x444] sm:$0xf]
  %v6592 = vld [vmem:[%s5 + $0x448] sm:$0xf]
  %v6593 = vld [vmem:[%s5 + $0x44c] sm:$0xf]
  %v6594 = vld [vmem:[%s5 + $0x450] sm:$0xf]
  %v6595 = vld [vmem:[%s5 + $0x454] sm:$0xf]
  %v6596 = vld [vmem:[%s5 + $0x458] sm:$0xf]
  %v6597 = vld [vmem:[%s5 + $0x45c] sm:$0xf]
  %v6598 = vld [vmem:[%s5 + $0x460] sm:$0xf]
  %v6599 = vld [vmem:[%s5 + $0x464] sm:$0xf]
  %v6600 = vld [vmem:[%s5 + $0x468] sm:$0xf]
  %v6601 = vld [vmem:[%s5 + $0x46c] sm:$0xf]
  %v6602 = vld [vmem:[%s5 + $0x470] sm:$0xf]
  %v6603 = vld [vmem:[%s5 + $0x474] sm:$0xf]
  %v6604 = vld [vmem:[%s5 + $0x478] sm:$0xf]
  %v6605 = vld [vmem:[%s5 + $0x47c] sm:$0xf]
  %v6610 = vrot.slane %v6570, 1
  %v6611 = vrot.slane %v6572, 1
  %v6612 = vsel %vm5458, %v6610, %v6611
  %v6613 = vrot.slane %v6571, 1
  %v6614 = vrot.slane %v6573, 1
  %v6615 = vsel %vm5458, %v6613, %v6614
  %v6652 = vunpack.c.l.b16 %v6574
  %v6653 = vunpack.c.l.b16 %v6575
  %v6654 = vunpack.c.l.b16 %v6576
  %v6655 = vunpack.c.l.b16 %v6577
  %v6656 = vunpack.c.l.b16 %v6578
  %v6657 = vunpack.c.l.b16 %v6579
  %v6658 = vunpack.c.l.b16 %v6580
  %v6659 = vunpack.c.l.b16 %v6581
  %v6660 = vunpack.c.l.b16 %v6582
  %v6661 = vunpack.c.l.b16 %v6583
  %v6662 = vunpack.c.l.b16 %v6584
  %v6663 = vunpack.c.l.b16 %v6585
  %v6664 = vunpack.c.l.b16 %v6586
  %v6665 = vunpack.c.l.b16 %v6587
  %v6666 = vunpack.c.l.b16 %v6588
  %v6667 = vunpack.c.l.b16 %v6589
  %v6668 = vunpack.c.l.b16 %v6590
  %v6669 = vunpack.c.l.b16 %v6591
  %v6670 = vunpack.c.l.b16 %v6592
  %v6671 = vunpack.c.l.b16 %v6593
  %v6672 = vunpack.c.l.b16 %v6594
  %v6673 = vunpack.c.l.b16 %v6595
  %v6674 = vunpack.c.l.b16 %v6596
  %v6675 = vunpack.c.l.b16 %v6597
  %v6676 = vunpack.c.l.b16 %v6598
  %v6677 = vunpack.c.l.b16 %v6599
  %v6678 = vunpack.c.l.b16 %v6600
  %v6679 = vunpack.c.l.b16 %v6601
  %v6680 = vunpack.c.l.b16 %v6602
  %v6681 = vunpack.c.l.b16 %v6603
  %v6682 = vunpack.c.l.b16 %v6604
  %v6683 = vunpack.c.l.b16 %v6605
  %v6684 = vpack.c.b16 %v6653, %v6652
  %v6685 = vpack.c.b16 %v6655, %v6654
  %v6686 = vpack.c.b16 %v6657, %v6656
  %v6687 = vpack.c.b16 %v6659, %v6658
  %v6688 = vpack.c.b16 %v6661, %v6660
  %v6689 = vpack.c.b16 %v6663, %v6662
  %v6690 = vpack.c.b16 %v6665, %v6664
  %v6691 = vpack.c.b16 %v6667, %v6666
  %v6692 = vpack.c.b16 %v6669, %v6668
  %v6693 = vpack.c.b16 %v6671, %v6670
  %v6694 = vpack.c.b16 %v6673, %v6672
  %v6695 = vpack.c.b16 %v6675, %v6674
  %v6696 = vpack.c.b16 %v6677, %v6676
  %v6697 = vpack.c.b16 %v6679, %v6678
  %v6698 = vpack.c.b16 %v6681, %v6680
  %v6699 = vpack.c.b16 %v6683, %v6682
  %6716 = vmatpush.bf16.msra.mxu0 %v6691
  %6717 = vmatpush.bf16.msra.mxu0 %v6690
  %6718 = vmatpush.bf16.msra.mxu0 %v6689
  %6719 = vmatpush.bf16.msra.mxu0 %v6688
  %6720 = vmatpush.bf16.msra.mxu0 %v6687
  %6721 = vmatpush.bf16.msra.mxu0 %v6686
  %6722 = vmatpush.bf16.msra.mxu0 %v6685
  %6723 = vmatpush.bf16.msra.mxu0 %v6684
  %6724 = vmatmul.bf16.gmra.mxu0 %v6612
  %v6725 = vpop.f32.mrf.mxu0
  %v6726 = vadd.f32 0.0, %v6725
  %v6727 = vpop.f32.mrf.mxu0
  %6728 = vmatmul.bf16.gmra.mxu0 %v6611
  %v6729 = vpop.f32.mrf.mxu0
  %v6730 = vadd.f32 0.0, %v6729
  %v6731 = vpop.f32.mrf.mxu0
  %6732 = vdwg.mxu0
  %6733 = vmatpush.bf16.msra.mxu0 %v6699
  %6734 = vmatpush.bf16.msra.mxu0 %v6698
  %6735 = vmatpush.bf16.msra.mxu0 %v6697
  %6736 = vmatpush.bf16.msra.mxu0 %v6696
  %6737 = vmatpush.bf16.msra.mxu0 %v6695
  %6738 = vmatpush.bf16.msra.mxu0 %v6694
  %6739 = vmatpush.bf16.msra.mxu0 %v6693
  %6740 = vmatpush.bf16.msra.mxu0 %v6692
  %6741 = vmatmul.bf16.gmra.mxu0 %v6615
  %v6742 = vpop.f32.mrf.mxu0
  %v6743 = vadd.f32 %v6726, %v6742
  %v6744 = vpop.f32.mrf.mxu0
  %6745 = vmatmul.bf16.gmra.mxu0 %v6614
  %v6746 = vpop.f32.mrf.mxu0
  %v6747 = vadd.f32 %v6730, %v6746
  %v6748 = vpop.f32.mrf.mxu0
  %6749 = vdwg.mxu0
  %v6750 = vadd.f32 %v6564, %v6743
  %v6751 = vadd.f32 %v6565, %v6747
  %v6752 = vld [vmem:[%s10 + $0x5] sm:$0x1]
  %v6754 = vperm.slane %v6752, 0
  %v6756 = vadd.f32 %v6750, %v6754
  %v6757 = vadd.f32 %v6751, %v6754
  %v6758 = vmax.f32 %v6756, 0.0
  %v6759 = vmax.f32 %v6757, 0.0
  %6760 = vst [vmem:[#allocation5 + $0x5] sm:$0x3] %v6758
  %6761 = vst [vmem:[#allocation5 + $0x5] sm:$0x30] %v6758
  %6762 = vst [vmem:[#allocation5 + $0x15] sm:$0x3] %v6759
  %6763 = vst [vmem:[#allocation5 + $0x15] sm:$0x30] %v6759
  %v6764 = vld [vmem:[#allocation5] sm:$0xff]
  %v6765 = vld [vmem:[#allocation5 + $0x8] sm:$0xff]
  %v6766 = vld [vmem:[#allocation5 + $0x10] sm:$0x3f]
  %v6767 = vpack.c.bf16 %v6765, %v6764
  %v6768 = vpack.c.bf16 %v6766, %v6766
  %v6769 = vld [vmem:[%s6] sm:$0xff]
  %v6770 = vld [vmem:[%s6 + $0x8] sm:$0xff]
  %v6771 = vld [vmem:[%s6 + $0x10] sm:$0xff]
  %v6772 = vld [vmem:[%s6 + $0x18] sm:$0xff]
  %v6773 = vld [vmem:[%s6 + $0x20] sm:$0xff]
  %v6774 = vld [vmem:[%s6 + $0x28] sm:$0xff]
  %v6775 = vld [vmem:[%s6 + $0x30] sm:$0xff]
  %v6776 = vld [vmem:[%s6 + $0x38] sm:$0xff]
  %v6777 = vld [vmem:[%s6 + $0x40] sm:$0xff]
  %v6778 = vld [vmem:[%s6 + $0x48] sm:$0xff]
  %v6779 = vld [vmem:[%s6 + $0x50] sm:$0xff]
  %v6780 = vld [vmem:[%s6 + $0x58] sm:$0xff]
  %v6781 = vld [vmem:[%s6 + $0x60] sm:$0xff]
  %v6782 = vld [vmem:[%s6 + $0x68] sm:$0xff]
  %v6783 = vld [vmem:[%s6 + $0x70] sm:$0xff]
  %v6784 = vld [vmem:[%s6 + $0x78] sm:$0xff]
  %v6785 = vld [vmem:[#allocation5 + $0x1] sm:$0xff]
  %v6786 = vld [vmem:[#allocation5 + $0x9] sm:$0xff]
  %v6787 = vld [vmem:[#allocation5 + $0x11] sm:$0x3f]
  %v6788 = vpack.c.bf16 %v6786, %v6785
  %v6789 = vpack.c.bf16 %v6787, %v6787
  %v6790 = vld [vmem:[%s6 + $0x80] sm:$0xff]
  %v6791 = vld [vmem:[%s6 + $0x88] sm:$0xff]
  %v6792 = vld [vmem:[%s6 + $0x90] sm:$0xff]
  %v6793 = vld [vmem:[%s6 + $0x98] sm:$0xff]
  %v6794 = vld [vmem:[%s6 + $0xa0] sm:$0xff]
  %v6795 = vld [vmem:[%s6 + $0xa8] sm:$0xff]
  %v6796 = vld [vmem:[%s6 + $0xb0] sm:$0xff]
  %v6797 = vld [vmem:[%s6 + $0xb8] sm:$0xff]
  %v6798 = vld [vmem:[%s6 + $0xc0] sm:$0xff]
  %v6799 = vld [vmem:[%s6 + $0xc8] sm:$0xff]
  %v6800 = vld [vmem:[%s6 + $0xd0] sm:$0xff]
  %v6801 = vld [vmem:[%s6 + $0xd8] sm:$0xff]
  %v6802 = vld [vmem:[%s6 + $0xe0] sm:$0xff]
  %v6803 = vld [vmem:[%s6 + $0xe8] sm:$0xff]
  %v6804 = vld [vmem:[%s6 + $0xf0] sm:$0xff]
  %v6805 = vld [vmem:[%s6 + $0xf8] sm:$0xff]
  %v6822 = vunpack.c.l.b16 %v6790
  %v6823 = vunpack.c.h.b16 %v6790
  %v6824 = vunpack.c.l.b16 %v6791
  %v6825 = vunpack.c.h.b16 %v6791
  %v6826 = vunpack.c.l.b16 %v6792
  %v6827 = vunpack.c.h.b16 %v6792
  %v6828 = vunpack.c.l.b16 %v6793
  %v6829 = vunpack.c.h.b16 %v6793
  %v6830 = vunpack.c.l.b16 %v6794
  %v6831 = vunpack.c.h.b16 %v6794
  %v6832 = vunpack.c.l.b16 %v6795
  %v6833 = vunpack.c.h.b16 %v6795
  %v6834 = vunpack.c.l.b16 %v6796
  %v6835 = vunpack.c.h.b16 %v6796
  %v6836 = vunpack.c.l.b16 %v6797
  %v6837 = vunpack.c.h.b16 %v6797
  %v6838 = vunpack.c.l.b16 %v6798
  %v6839 = vunpack.c.h.b16 %v6798
  %v6840 = vunpack.c.l.b16 %v6799
  %v6841 = vunpack.c.h.b16 %v6799
  %v6842 = vunpack.c.l.b16 %v6800
  %v6843 = vunpack.c.h.b16 %v6800
  %v6844 = vunpack.c.l.b16 %v6801
  %v6845 = vunpack.c.h.b16 %v6801
  %v6846 = vunpack.c.l.b16 %v6802
  %v6847 = vunpack.c.h.b16 %v6802
  %v6848 = vunpack.c.l.b16 %v6803
  %v6849 = vunpack.c.h.b16 %v6803
  %v6850 = vunpack.c.l.b16 %v6804
  %v6851 = vunpack.c.h.b16 %v6804
  %v6852 = vunpack.c.l.b16 %v6805
  %v6853 = vunpack.c.h.b16 %v6805
  %v6854 = vpack.c.b16 %v6824, %v6822
  %v6855 = vpack.c.b16 %v6825, %v6823
  %v6856 = vpack.c.b16 %v6828, %v6826
  %v6857 = vpack.c.b16 %v6829, %v6827
  %v6858 = vpack.c.b16 %v6832, %v6830
  %v6859 = vpack.c.b16 %v6833, %v6831
  %v6860 = vpack.c.b16 %v6836, %v6834
  %v6861 = vpack.c.b16 %v6837, %v6835
  %v6862 = vpack.c.b16 %v6840, %v6838
  %v6863 = vpack.c.b16 %v6841, %v6839
  %v6864 = vpack.c.b16 %v6844, %v6842
  %v6865 = vpack.c.b16 %v6845, %v6843
  %v6866 = vpack.c.b16 %v6848, %v6846
  %v6867 = vpack.c.b16 %v6849, %v6847
  %v6868 = vpack.c.b16 %v6852, %v6850
  %v6869 = vpack.c.b16 %v6853, %v6851
  %6886 = vmatpush.bf16.msra.mxu0 %v6868
  %6887 = vmatpush.bf16.msra.mxu0 %v6866
  %6888 = vmatpush.bf16.msra.mxu0 %v6864
  %6889 = vmatpush.bf16.msra.mxu0 %v6862
  %6890 = vmatpush.bf16.msra.mxu0 %v6860
  %6891 = vmatpush.bf16.msra.mxu0 %v6858
  %6892 = vmatpush.bf16.msra.mxu0 %v6856
  %6893 = vmatpush.bf16.msra.mxu0 %v6854
  %6894 = vmatmul.bf16.gmra.mxu0 %v6788
  %v6895 = vpop.f32.mrf.mxu0
  %v6896 = vadd.f32 0.0, %v6895
  %v6897 = vpop.f32.mrf.mxu0
  %v6898 = vadd.f32 0.0, %v6897
  %6899 = vmatmul.bf16.gmra.mxu0 %v6789
  %v6900 = vpop.f32.mrf.mxu0
  %v6901 = vadd.f32 0.0, %v6900
  %v6902 = vpop.f32.mrf.mxu0
  %6903 = vdwg.mxu0
  %6904 = vmatpush.bf16.msra.mxu0 %v6869
  %6905 = vmatpush.bf16.msra.mxu0 %v6867
  %6906 = vmatpush.bf16.msra.mxu0 %v6865
  %6907 = vmatpush.bf16.msra.mxu0 %v6863
  %6908 = vmatpush.bf16.msra.mxu0 %v6861
  %6909 = vmatpush.bf16.msra.mxu0 %v6859
  %6910 = vmatpush.bf16.msra.mxu0 %v6857
  %6911 = vmatpush.bf16.msra.mxu0 %v6855
  %6912 = vmatmul.bf16.gmra.mxu0 %v6788
  %v6913 = vpop.f32.mrf.mxu0
  %v6914 = vadd.f32 0.0, %v6913
  %v6915 = vpop.f32.mrf.mxu0
  %v6916 = vadd.f32 0.0, %v6915
  %6917 = vmatmul.bf16.gmra.mxu0 %v6789
  %v6918 = vpop.f32.mrf.mxu0
  %v6919 = vadd.f32 0.0, %v6918
  %v6920 = vpop.f32.mrf.mxu0
  %6921 = vdwg.mxu0
  %v6938 = vunpack.c.l.b16 %v6769
  %v6939 = vunpack.c.h.b16 %v6769
  %v6940 = vunpack.c.l.b16 %v6770
  %v6941 = vunpack.c.h.b16 %v6770
  %v6942 = vunpack.c.l.b16 %v6771
  %v6943 = vunpack.c.h.b16 %v6771
  %v6944 = vunpack.c.l.b16 %v6772
  %v6945 = vunpack.c.h.b16 %v6772
  %v6946 = vunpack.c.l.b16 %v6773
  %v6947 = vunpack.c.h.b16 %v6773
  %v6948 = vunpack.c.l.b16 %v6774
  %v6949 = vunpack.c.h.b16 %v6774
  %v6950 = vunpack.c.l.b16 %v6775
  %v6951 = vunpack.c.h.b16 %v6775
  %v6952 = vunpack.c.l.b16 %v6776
  %v6953 = vunpack.c.h.b16 %v6776
  %v6954 = vunpack.c.l.b16 %v6777
  %v6955 = vunpack.c.h.b16 %v6777
  %v6956 = vunpack.c.l.b16 %v6778
  %v6957 = vunpack.c.h.b16 %v6778
  %v6958 = vunpack.c.l.b16 %v6779
  %v6959 = vunpack.c.h.b16 %v6779
  %v6960 = vunpack.c.l.b16 %v6780
  %v6961 = vunpack.c.h.b16 %v6780
  %v6962 = vunpack.c.l.b16 %v6781
  %v6963 = vunpack.c.h.b16 %v6781
  %v6964 = vunpack.c.l.b16 %v6782
  %v6965 = vunpack.c.h.b16 %v6782
  %v6966 = vunpack.c.l.b16 %v6783
  %v6967 = vunpack.c.h.b16 %v6783
  %v6968 = vunpack.c.l.b16 %v6784
  %v6969 = vunpack.c.h.b16 %v6784
  %v6970 = vpack.c.b16 %v6940, %v6938
  %v6971 = vpack.c.b16 %v6941, %v6939
  %v6972 = vpack.c.b16 %v6944, %v6942
  %v6973 = vpack.c.b16 %v6945, %v6943
  %v6974 = vpack.c.b16 %v6948, %v6946
  %v6975 = vpack.c.b16 %v6949, %v6947
  %v6976 = vpack.c.b16 %v6952, %v6950
  %v6977 = vpack.c.b16 %v6953, %v6951
  %v6978 = vpack.c.b16 %v6956, %v6954
  %v6979 = vpack.c.b16 %v6957, %v6955
  %v6980 = vpack.c.b16 %v6960, %v6958
  %v6981 = vpack.c.b16 %v6961, %v6959
  %v6982 = vpack.c.b16 %v6964, %v6962
  %v6983 = vpack.c.b16 %v6965, %v6963
  %v6984 = vpack.c.b16 %v6968, %v6966
  %v6985 = vpack.c.b16 %v6969, %v6967
  %7002 = vmatpush.bf16.msra.mxu0 %v6984
  %7003 = vmatpush.bf16.msra.mxu0 %v6982
  %7004 = vmatpush.bf16.msra.mxu0 %v6980
  %7005 = vmatpush.bf16.msra.mxu0 %v6978
  %7006 = vmatpush.bf16.msra.mxu0 %v6976
  %7007 = vmatpush.bf16.msra.mxu0 %v6974
  %7008 = vmatpush.bf16.msra.mxu0 %v6972
  %7009 = vmatpush.bf16.msra.mxu0 %v6970
  %7010 = vmatmul.bf16.gmra.mxu0 %v6767
  %v7011 = vpop.f32.mrf.mxu0
  %v7012 = vadd.f32 %v6896, %v7011
  %v7013 = vpop.f32.mrf.mxu0
  %v7014 = vadd.f32 %v6898, %v7013
  %7015 = vmatmul.bf16.gmra.mxu0 %v6768
  %v7016 = vpop.f32.mrf.mxu0
  %v7017 = vadd.f32 %v6901, %v7016
  %v7018 = vpop.f32.mrf.mxu0
  %7019 = vdwg.mxu0
  %7020 = vmatpush.bf16.msra.mxu0 %v6985
  %7021 = vmatpush.bf16.msra.mxu0 %v6983
  %7022 = vmatpush.bf16.msra.mxu0 %v6981
  %7023 = vmatpush.bf16.msra.mxu0 %v6979
  %7024 = vmatpush.bf16.msra.mxu0 %v6977
  %7025 = vmatpush.bf16.msra.mxu0 %v6975
  %7026 = vmatpush.bf16.msra.mxu0 %v6973
  %7027 = vmatpush.bf16.msra.mxu0 %v6971
  %7028 = vmatmul.bf16.gmra.mxu0 %v6767
  %v7029 = vpop.f32.mrf.mxu0
  %v7030 = vadd.f32 %v6914, %v7029
  %v7031 = vpop.f32.mrf.mxu0
  %v7032 = vadd.f32 %v6916, %v7031
  %7033 = vmatmul.bf16.gmra.mxu0 %v6768
  %v7034 = vpop.f32.mrf.mxu0
  %v7035 = vadd.f32 %v6919, %v7034
  %v7036 = vpop.f32.mrf.mxu0
  %7037 = vdwg.mxu0
  %v7038 = vld [vmem:[#allocation5 + $0x2] sm:$0xff]
  %v7039 = vld [vmem:[#allocation5 + $0xa] sm:$0xff]
  %v7040 = vld [vmem:[#allocation5 + $0x12] sm:$0x3f]
  %v7041 = vpack.c.bf16 %v7039, %v7038
  %v7042 = vpack.c.bf16 %v7040, %v7040
  %v7043 = vld [vmem:[%s6 + $0x100] sm:$0xff]
  %v7044 = vld [vmem:[%s6 + $0x108] sm:$0xff]
  %v7045 = vld [vmem:[%s6 + $0x110] sm:$0xff]
  %v7046 = vld [vmem:[%s6 + $0x118] sm:$0xff]
  %v7047 = vld [vmem:[%s6 + $0x120] sm:$0xff]
  %v7048 = vld [vmem:[%s6 + $0x128] sm:$0xff]
  %v7049 = vld [vmem:[%s6 + $0x130] sm:$0xff]
  %v7050 = vld [vmem:[%s6 + $0x138] sm:$0xff]
  %v7051 = vld [vmem:[%s6 + $0x140] sm:$0xff]
  %v7052 = vld [vmem:[%s6 + $0x148] sm:$0xff]
  %v7053 = vld [vmem:[%s6 + $0x150] sm:$0xff]
  %v7054 = vld [vmem:[%s6 + $0x158] sm:$0xff]
  %v7055 = vld [vmem:[%s6 + $0x160] sm:$0xff]
  %v7056 = vld [vmem:[%s6 + $0x168] sm:$0xff]
  %v7057 = vld [vmem:[%s6 + $0x170] sm:$0xff]
  %v7058 = vld [vmem:[%s6 + $0x178] sm:$0xff]
  %v7075 = vunpack.c.l.b16 %v7043
  %v7076 = vunpack.c.h.b16 %v7043
  %v7077 = vunpack.c.l.b16 %v7044
  %v7078 = vunpack.c.h.b16 %v7044
  %v7079 = vunpack.c.l.b16 %v7045
  %v7080 = vunpack.c.h.b16 %v7045
  %v7081 = vunpack.c.l.b16 %v7046
  %v7082 = vunpack.c.h.b16 %v7046
  %v7083 = vunpack.c.l.b16 %v7047
  %v7084 = vunpack.c.h.b16 %v7047
  %v7085 = vunpack.c.l.b16 %v7048
  %v7086 = vunpack.c.h.b16 %v7048
  %v7087 = vunpack.c.l.b16 %v7049
  %v7088 = vunpack.c.h.b16 %v7049
  %v7089 = vunpack.c.l.b16 %v7050
  %v7090 = vunpack.c.h.b16 %v7050
  %v7091 = vunpack.c.l.b16 %v7051
  %v7092 = vunpack.c.h.b16 %v7051
  %v7093 = vunpack.c.l.b16 %v7052
  %v7094 = vunpack.c.h.b16 %v7052
  %v7095 = vunpack.c.l.b16 %v7053
  %v7096 = vunpack.c.h.b16 %v7053
  %v7097 = vunpack.c.l.b16 %v7054
  %v7098 = vunpack.c.h.b16 %v7054
  %v7099 = vunpack.c.l.b16 %v7055
  %v7100 = vunpack.c.h.b16 %v7055
  %v7101 = vunpack.c.l.b16 %v7056
  %v7102 = vunpack.c.h.b16 %v7056
  %v7103 = vunpack.c.l.b16 %v7057
  %v7104 = vunpack.c.h.b16 %v7057
  %v7105 = vunpack.c.l.b16 %v7058
  %v7106 = vunpack.c.h.b16 %v7058
  %v7107 = vpack.c.b16 %v7077, %v7075
  %v7108 = vpack.c.b16 %v7078, %v7076
  %v7109 = vpack.c.b16 %v7081, %v7079
  %v7110 = vpack.c.b16 %v7082, %v7080
  %v7111 = vpack.c.b16 %v7085, %v7083
  %v7112 = vpack.c.b16 %v7086, %v7084
  %v7113 = vpack.c.b16 %v7089, %v7087
  %v7114 = vpack.c.b16 %v7090, %v7088
  %v7115 = vpack.c.b16 %v7093, %v7091
  %v7116 = vpack.c.b16 %v7094, %v7092
  %v7117 = vpack.c.b16 %v7097, %v7095
  %v7118 = vpack.c.b16 %v7098, %v7096
  %v7119 = vpack.c.b16 %v7101, %v7099
  %v7120 = vpack.c.b16 %v7102, %v7100
  %v7121 = vpack.c.b16 %v7105, %v7103
  %v7122 = vpack.c.b16 %v7106, %v7104
  %7139 = vmatpush.bf16.msra.mxu0 %v7121
  %7140 = vmatpush.bf16.msra.mxu0 %v7119
  %7141 = vmatpush.bf16.msra.mxu0 %v7117
  %7142 = vmatpush.bf16.msra.mxu0 %v7115
  %7143 = vmatpush.bf16.msra.mxu0 %v7113
  %7144 = vmatpush.bf16.msra.mxu0 %v7111
  %7145 = vmatpush.bf16.msra.mxu0 %v7109
  %7146 = vmatpush.bf16.msra.mxu0 %v7107
  %7147 = vmatmul.bf16.gmra.mxu0 %v7041
  %v7148 = vpop.f32.mrf.mxu0
  %v7149 = vadd.f32 0.0, %v7148
  %v7150 = vpop.f32.mrf.mxu0
  %v7151 = vadd.f32 0.0, %v7150
  %7152 = vmatmul.bf16.gmra.mxu0 %v7042
  %v7153 = vpop.f32.mrf.mxu0
  %v7154 = vadd.f32 0.0, %v7153
  %v7155 = vpop.f32.mrf.mxu0
  %7156 = vdwg.mxu0
  %7157 = vmatpush.bf16.msra.mxu0 %v7122
  %7158 = vmatpush.bf16.msra.mxu0 %v7120
  %7159 = vmatpush.bf16.msra.mxu0 %v7118
  %7160 = vmatpush.bf16.msra.mxu0 %v7116
  %7161 = vmatpush.bf16.msra.mxu0 %v7114
  %7162 = vmatpush.bf16.msra.mxu0 %v7112
  %7163 = vmatpush.bf16.msra.mxu0 %v7110
  %7164 = vmatpush.bf16.msra.mxu0 %v7108
  %7165 = vmatmul.bf16.gmra.mxu0 %v7041
  %v7166 = vpop.f32.mrf.mxu0
  %v7167 = vadd.f32 0.0, %v7166
  %v7168 = vpop.f32.mrf.mxu0
  %v7169 = vadd.f32 0.0, %v7168
  %7170 = vmatmul.bf16.gmra.mxu0 %v7042
  %v7171 = vpop.f32.mrf.mxu0
  %v7172 = vadd.f32 0.0, %v7171
  %v7173 = vpop.f32.mrf.mxu0
  %7174 = vdwg.mxu0
  %v7175 = vadd.f32 %v7012, %v7149
  %v7176 = vadd.f32 %v7030, %v7167
  %v7177 = vadd.f32 %v7014, %v7151
  %v7178 = vadd.f32 %v7032, %v7169
  %v7179 = vadd.f32 %v7017, %v7154
  %v7180 = vadd.f32 %v7035, %v7172
  %v7181 = vld [vmem:[#allocation5 + $0x4] sm:$0xff]
  %v7182 = vld [vmem:[#allocation5 + $0xc] sm:$0xff]
  %v7183 = vld [vmem:[#allocation5 + $0x14] sm:$0x3f]
  %v7184 = vpack.c.bf16 %v7182, %v7181
  %v7185 = vpack.c.bf16 %v7183, %v7183
  %v7186 = vld [vmem:[%s6 + $0x180] sm:$0xff]
  %v7187 = vld [vmem:[%s6 + $0x188] sm:$0xff]
  %v7188 = vld [vmem:[%s6 + $0x190] sm:$0xff]
  %v7189 = vld [vmem:[%s6 + $0x198] sm:$0xff]
  %v7190 = vld [vmem:[%s6 + $0x1a0] sm:$0xff]
  %v7191 = vld [vmem:[%s6 + $0x1a8] sm:$0xff]
  %v7192 = vld [vmem:[%s6 + $0x1b0] sm:$0xff]
  %v7193 = vld [vmem:[%s6 + $0x1b8] sm:$0xff]
  %v7194 = vld [vmem:[%s6 + $0x1c0] sm:$0xff]
  %v7195 = vld [vmem:[%s6 + $0x1c8] sm:$0xff]
  %v7196 = vld [vmem:[%s6 + $0x1d0] sm:$0xff]
  %v7197 = vld [vmem:[%s6 + $0x1d8] sm:$0xff]
  %v7198 = vld [vmem:[%s6 + $0x1e0] sm:$0xff]
  %v7199 = vld [vmem:[%s6 + $0x1e8] sm:$0xff]
  %v7200 = vld [vmem:[%s6 + $0x1f0] sm:$0xff]
  %v7201 = vld [vmem:[%s6 + $0x1f8] sm:$0xff]
  %v7218 = vunpack.c.l.b16 %v7186
  %v7219 = vunpack.c.h.b16 %v7186
  %v7220 = vunpack.c.l.b16 %v7187
  %v7221 = vunpack.c.h.b16 %v7187
  %v7222 = vunpack.c.l.b16 %v7188
  %v7223 = vunpack.c.h.b16 %v7188
  %v7224 = vunpack.c.l.b16 %v7189
  %v7225 = vunpack.c.h.b16 %v7189
  %v7226 = vunpack.c.l.b16 %v7190
  %v7227 = vunpack.c.h.b16 %v7190
  %v7228 = vunpack.c.l.b16 %v7191
  %v7229 = vunpack.c.h.b16 %v7191
  %v7230 = vunpack.c.l.b16 %v7192
  %v7231 = vunpack.c.h.b16 %v7192
  %v7232 = vunpack.c.l.b16 %v7193
  %v7233 = vunpack.c.h.b16 %v7193
  %v7234 = vunpack.c.l.b16 %v7194
  %v7235 = vunpack.c.h.b16 %v7194
  %v7236 = vunpack.c.l.b16 %v7195
  %v7237 = vunpack.c.h.b16 %v7195
  %v7238 = vunpack.c.l.b16 %v7196
  %v7239 = vunpack.c.h.b16 %v7196
  %v7240 = vunpack.c.l.b16 %v7197
  %v7241 = vunpack.c.h.b16 %v7197
  %v7242 = vunpack.c.l.b16 %v7198
  %v7243 = vunpack.c.h.b16 %v7198
  %v7244 = vunpack.c.l.b16 %v7199
  %v7245 = vunpack.c.h.b16 %v7199
  %v7246 = vunpack.c.l.b16 %v7200
  %v7247 = vunpack.c.h.b16 %v7200
  %v7248 = vunpack.c.l.b16 %v7201
  %v7249 = vunpack.c.h.b16 %v7201
  %v7250 = vpack.c.b16 %v7220, %v7218
  %v7251 = vpack.c.b16 %v7221, %v7219
  %v7252 = vpack.c.b16 %v7224, %v7222
  %v7253 = vpack.c.b16 %v7225, %v7223
  %v7254 = vpack.c.b16 %v7228, %v7226
  %v7255 = vpack.c.b16 %v7229, %v7227
  %v7256 = vpack.c.b16 %v7232, %v7230
  %v7257 = vpack.c.b16 %v7233, %v7231
  %v7258 = vpack.c.b16 %v7236, %v7234
  %v7259 = vpack.c.b16 %v7237, %v7235
  %v7260 = vpack.c.b16 %v7240, %v7238
  %v7261 = vpack.c.b16 %v7241, %v7239
  %v7262 = vpack.c.b16 %v7244, %v7242
  %v7263 = vpack.c.b16 %v7245, %v7243
  %v7264 = vpack.c.b16 %v7248, %v7246
  %v7265 = vpack.c.b16 %v7249, %v7247
  %7282 = vmatpush.bf16.msra.mxu0 %v7264
  %7283 = vmatpush.bf16.msra.mxu0 %v7262
  %7284 = vmatpush.bf16.msra.mxu0 %v7260
  %7285 = vmatpush.bf16.msra.mxu0 %v7258
  %7286 = vmatpush.bf16.msra.mxu0 %v7256
  %7287 = vmatpush.bf16.msra.mxu0 %v7254
  %7288 = vmatpush.bf16.msra.mxu0 %v7252
  %7289 = vmatpush.bf16.msra.mxu0 %v7250
  %7290 = vmatmul.bf16.gmra.mxu0 %v7184
  %v7291 = vpop.f32.mrf.mxu0
  %v7292 = vadd.f32 0.0, %v7291
  %v7293 = vpop.f32.mrf.mxu0
  %v7294 = vadd.f32 0.0, %v7293
  %7295 = vmatmul.bf16.gmra.mxu0 %v7185
  %v7296 = vpop.f32.mrf.mxu0
  %v7297 = vadd.f32 0.0, %v7296
  %v7298 = vpop.f32.mrf.mxu0
  %7299 = vdwg.mxu0
  %7300 = vmatpush.bf16.msra.mxu0 %v7265
  %7301 = vmatpush.bf16.msra.mxu0 %v7263
  %7302 = vmatpush.bf16.msra.mxu0 %v7261
  %7303 = vmatpush.bf16.msra.mxu0 %v7259
  %7304 = vmatpush.bf16.msra.mxu0 %v7257
  %7305 = vmatpush.bf16.msra.mxu0 %v7255
  %7306 = vmatpush.bf16.msra.mxu0 %v7253
  %7307 = vmatpush.bf16.msra.mxu0 %v7251
  %7308 = vmatmul.bf16.gmra.mxu0 %v7184
  %v7309 = vpop.f32.mrf.mxu0
  %v7310 = vadd.f32 0.0, %v7309
  %v7311 = vpop.f32.mrf.mxu0
  %v7312 = vadd.f32 0.0, %v7311
  %7313 = vmatmul.bf16.gmra.mxu0 %v7185
  %v7314 = vpop.f32.mrf.mxu0
  %v7315 = vadd.f32 0.0, %v7314
  %v7316 = vpop.f32.mrf.mxu0
  %7317 = vdwg.mxu0
  %v7318 = vadd.f32 %v7175, %v7292
  %v7319 = vadd.f32 %v7176, %v7310
  %v7320 = vadd.f32 %v7177, %v7294
  %v7321 = vadd.f32 %v7178, %v7312
  %v7322 = vadd.f32 %v7179, %v7297
  %v7323 = vadd.f32 %v7180, %v7315
  %v7324 = vld [vmem:[#allocation5 + $0x5] sm:$0xff]
  %v7325 = vld [vmem:[#allocation5 + $0xd] sm:$0xff]
  %v7326 = vld [vmem:[#allocation5 + $0x15] sm:$0x3f]
  %v7327 = vpack.c.bf16 %v7325, %v7324
  %v7328 = vpack.c.bf16 %v7326, %v7326
  %v7329 = vld [vmem:[%s6 + $0x200] sm:$0xff]
  %v7330 = vld [vmem:[%s6 + $0x208] sm:$0xff]
  %v7331 = vld [vmem:[%s6 + $0x210] sm:$0xff]
  %v7332 = vld [vmem:[%s6 + $0x218] sm:$0xff]
  %v7333 = vld [vmem:[%s6 + $0x220] sm:$0xff]
  %v7334 = vld [vmem:[%s6 + $0x228] sm:$0xff]
  %v7335 = vld [vmem:[%s6 + $0x230] sm:$0xff]
  %v7336 = vld [vmem:[%s6 + $0x238] sm:$0xff]
  %v7337 = vld [vmem:[%s6 + $0x240] sm:$0xff]
  %v7338 = vld [vmem:[%s6 + $0x248] sm:$0xff]
  %v7339 = vld [vmem:[%s6 + $0x250] sm:$0xff]
  %v7340 = vld [vmem:[%s6 + $0x258] sm:$0xff]
  %v7341 = vld [vmem:[%s6 + $0x260] sm:$0xff]
  %v7342 = vld [vmem:[%s6 + $0x268] sm:$0xff]
  %v7343 = vld [vmem:[%s6 + $0x270] sm:$0xff]
  %v7344 = vld [vmem:[%s6 + $0x278] sm:$0xff]
  %v7361 = vunpack.c.l.b16 %v7329
  %v7362 = vunpack.c.h.b16 %v7329
  %v7363 = vunpack.c.l.b16 %v7330
  %v7364 = vunpack.c.h.b16 %v7330
  %v7365 = vunpack.c.l.b16 %v7331
  %v7366 = vunpack.c.h.b16 %v7331
  %v7367 = vunpack.c.l.b16 %v7332
  %v7368 = vunpack.c.h.b16 %v7332
  %v7369 = vunpack.c.l.b16 %v7333
  %v7370 = vunpack.c.h.b16 %v7333
  %v7371 = vunpack.c.l.b16 %v7334
  %v7372 = vunpack.c.h.b16 %v7334
  %v7373 = vunpack.c.l.b16 %v7335
  %v7374 = vunpack.c.h.b16 %v7335
  %v7375 = vunpack.c.l.b16 %v7336
  %v7376 = vunpack.c.h.b16 %v7336
  %v7377 = vunpack.c.l.b16 %v7337
  %v7378 = vunpack.c.h.b16 %v7337
  %v7379 = vunpack.c.l.b16 %v7338
  %v7380 = vunpack.c.h.b16 %v7338
  %v7381 = vunpack.c.l.b16 %v7339
  %v7382 = vunpack.c.h.b16 %v7339
  %v7383 = vunpack.c.l.b16 %v7340
  %v7384 = vunpack.c.h.b16 %v7340
  %v7385 = vunpack.c.l.b16 %v7341
  %v7386 = vunpack.c.h.b16 %v7341
  %v7387 = vunpack.c.l.b16 %v7342
  %v7388 = vunpack.c.h.b16 %v7342
  %v7389 = vunpack.c.l.b16 %v7343
  %v7390 = vunpack.c.h.b16 %v7343
  %v7391 = vunpack.c.l.b16 %v7344
  %v7392 = vunpack.c.h.b16 %v7344
  %v7393 = vpack.c.b16 %v7363, %v7361
  %v7394 = vpack.c.b16 %v7364, %v7362
  %v7395 = vpack.c.b16 %v7367, %v7365
  %v7396 = vpack.c.b16 %v7368, %v7366
  %v7397 = vpack.c.b16 %v7371, %v7369
  %v7398 = vpack.c.b16 %v7372, %v7370
  %v7399 = vpack.c.b16 %v7375, %v7373
  %v7400 = vpack.c.b16 %v7376, %v7374
  %v7401 = vpack.c.b16 %v7379, %v7377
  %v7402 = vpack.c.b16 %v7380, %v7378
  %v7403 = vpack.c.b16 %v7383, %v7381
  %v7404 = vpack.c.b16 %v7384, %v7382
  %v7405 = vpack.c.b16 %v7387, %v7385
  %v7406 = vpack.c.b16 %v7388, %v7386
  %v7407 = vpack.c.b16 %v7391, %v7389
  %v7408 = vpack.c.b16 %v7392, %v7390
  %7425 = vmatpush.bf16.msra.mxu0 %v7407
  %7426 = vmatpush.bf16.msra.mxu0 %v7405
  %7427 = vmatpush.bf16.msra.mxu0 %v7403
  %7428 = vmatpush.bf16.msra.mxu0 %v7401
  %7429 = vmatpush.bf16.msra.mxu0 %v7399
  %7430 = vmatpush.bf16.msra.mxu0 %v7397
  %7431 = vmatpush.bf16.msra.mxu0 %v7395
  %7432 = vmatpush.bf16.msra.mxu0 %v7393
  %7433 = vmatmul.bf16.gmra.mxu0 %v7327
  %v7434 = vpop.f32.mrf.mxu0
  %v7435 = vadd.f32 0.0, %v7434
  %v7436 = vpop.f32.mrf.mxu0
  %v7437 = vadd.f32 0.0, %v7436
  %7438 = vmatmul.bf16.gmra.mxu0 %v7328
  %v7439 = vpop.f32.mrf.mxu0
  %v7440 = vadd.f32 0.0, %v7439
  %v7441 = vpop.f32.mrf.mxu0
  %7442 = vdwg.mxu0
  %7443 = vmatpush.bf16.msra.mxu0 %v7408
  %7444 = vmatpush.bf16.msra.mxu0 %v7406
  %7445 = vmatpush.bf16.msra.mxu0 %v7404
  %7446 = vmatpush.bf16.msra.mxu0 %v7402
  %7447 = vmatpush.bf16.msra.mxu0 %v7400
  %7448 = vmatpush.bf16.msra.mxu0 %v7398
  %7449 = vmatpush.bf16.msra.mxu0 %v7396
  %7450 = vmatpush.bf16.msra.mxu0 %v7394
  %7451 = vmatmul.bf16.gmra.mxu0 %v7327
  %v7452 = vpop.f32.mrf.mxu0
  %v7453 = vadd.f32 0.0, %v7452
  %v7454 = vpop.f32.mrf.mxu0
  %v7455 = vadd.f32 0.0, %v7454
  %7456 = vmatmul.bf16.gmra.mxu0 %v7328
  %v7457 = vpop.f32.mrf.mxu0
  %v7458 = vadd.f32 0.0, %v7457
  %v7459 = vpop.f32.mrf.mxu0
  %7460 = vdwg.mxu0
  %v7461 = vadd.f32 %v7318, %v7435
  %v7462 = vadd.f32 %v7319, %v7453
  %v7463 = vadd.f32 %v7320, %v7437
  %v7464 = vadd.f32 %v7321, %v7455
  %v7465 = vadd.f32 %v7322, %v7440
  %v7466 = vadd.f32 %v7323, %v7458
  %v7467 = vld [vmem:[#allocation5 + $0x6] sm:$0xff]
  %v7468 = vld [vmem:[#allocation5 + $0xe] sm:$0xff]
  %v7469 = vld [vmem:[#allocation5 + $0x16] sm:$0x3f]
  %v7470 = vpack.c.bf16 %v7468, %v7467
  %v7471 = vpack.c.bf16 %v7469, %v7469
  %v7472 = vld [vmem:[%s6 + $0x280] sm:$0xff]
  %v7473 = vld [vmem:[%s6 + $0x288] sm:$0xff]
  %v7474 = vld [vmem:[%s6 + $0x290] sm:$0xff]
  %v7475 = vld [vmem:[%s6 + $0x298] sm:$0xff]
  %v7476 = vld [vmem:[%s6 + $0x2a0] sm:$0xff]
  %v7477 = vld [vmem:[%s6 + $0x2a8] sm:$0xff]
  %v7478 = vld [vmem:[%s6 + $0x2b0] sm:$0xff]
  %v7479 = vld [vmem:[%s6 + $0x2b8] sm:$0xff]
  %v7480 = vld [vmem:[%s6 + $0x2c0] sm:$0xff]
  %v7481 = vld [vmem:[%s6 + $0x2c8] sm:$0xff]
  %v7482 = vld [vmem:[%s6 + $0x2d0] sm:$0xff]
  %v7483 = vld [vmem:[%s6 + $0x2d8] sm:$0xff]
  %v7484 = vld [vmem:[%s6 + $0x2e0] sm:$0xff]
  %v7485 = vld [vmem:[%s6 + $0x2e8] sm:$0xff]
  %v7486 = vld [vmem:[%s6 + $0x2f0] sm:$0xff]
  %v7487 = vld [vmem:[%s6 + $0x2f8] sm:$0xff]
  %v7504 = vunpack.c.l.b16 %v7472
  %v7505 = vunpack.c.h.b16 %v7472
  %v7506 = vunpack.c.l.b16 %v7473
  %v7507 = vunpack.c.h.b16 %v7473
  %v7508 = vunpack.c.l.b16 %v7474
  %v7509 = vunpack.c.h.b16 %v7474
  %v7510 = vunpack.c.l.b16 %v7475
  %v7511 = vunpack.c.h.b16 %v7475
  %v7512 = vunpack.c.l.b16 %v7476
  %v7513 = vunpack.c.h.b16 %v7476
  %v7514 = vunpack.c.l.b16 %v7477
  %v7515 = vunpack.c.h.b16 %v7477
  %v7516 = vunpack.c.l.b16 %v7478
  %v7517 = vunpack.c.h.b16 %v7478
  %v7518 = vunpack.c.l.b16 %v7479
  %v7519 = vunpack.c.h.b16 %v7479
  %v7520 = vunpack.c.l.b16 %v7480
  %v7521 = vunpack.c.h.b16 %v7480
  %v7522 = vunpack.c.l.b16 %v7481
  %v7523 = vunpack.c.h.b16 %v7481
  %v7524 = vunpack.c.l.b16 %v7482
  %v7525 = vunpack.c.h.b16 %v7482
  %v7526 = vunpack.c.l.b16 %v7483
  %v7527 = vunpack.c.h.b16 %v7483
  %v7528 = vunpack.c.l.b16 %v7484
  %v7529 = vunpack.c.h.b16 %v7484
  %v7530 = vunpack.c.l.b16 %v7485
  %v7531 = vunpack.c.h.b16 %v7485
  %v7532 = vunpack.c.l.b16 %v7486
  %v7533 = vunpack.c.h.b16 %v7486
  %v7534 = vunpack.c.l.b16 %v7487
  %v7535 = vunpack.c.h.b16 %v7487
  %v7536 = vpack.c.b16 %v7506, %v7504
  %v7537 = vpack.c.b16 %v7507, %v7505
  %v7538 = vpack.c.b16 %v7510, %v7508
  %v7539 = vpack.c.b16 %v7511, %v7509
  %v7540 = vpack.c.b16 %v7514, %v7512
  %v7541 = vpack.c.b16 %v7515, %v7513
  %v7542 = vpack.c.b16 %v7518, %v7516
  %v7543 = vpack.c.b16 %v7519, %v7517
  %v7544 = vpack.c.b16 %v7522, %v7520
  %v7545 = vpack.c.b16 %v7523, %v7521
  %v7546 = vpack.c.b16 %v7526, %v7524
  %v7547 = vpack.c.b16 %v7527, %v7525
  %v7548 = vpack.c.b16 %v7530, %v7528
  %v7549 = vpack.c.b16 %v7531, %v7529
  %v7550 = vpack.c.b16 %v7534, %v7532
  %v7551 = vpack.c.b16 %v7535, %v7533
  %7568 = vmatpush.bf16.msra.mxu0 %v7550
  %7569 = vmatpush.bf16.msra.mxu0 %v7548
  %7570 = vmatpush.bf16.msra.mxu0 %v7546
  %7571 = vmatpush.bf16.msra.mxu0 %v7544
  %7572 = vmatpush.bf16.msra.mxu0 %v7542
  %7573 = vmatpush.bf16.msra.mxu0 %v7540
  %7574 = vmatpush.bf16.msra.mxu0 %v7538
  %7575 = vmatpush.bf16.msra.mxu0 %v7536
  %7576 = vmatmul.bf16.gmra.mxu0 %v7470
  %v7577 = vpop.f32.mrf.mxu0
  %v7578 = vadd.f32 0.0, %v7577
  %v7579 = vpop.f32.mrf.mxu0
  %v7580 = vadd.f32 0.0, %v7579
  %7581 = vmatmul.bf16.gmra.mxu0 %v7471
  %v7582 = vpop.f32.mrf.mxu0
  %v7583 = vadd.f32 0.0, %v7582
  %v7584 = vpop.f32.mrf.mxu0
  %7585 = vdwg.mxu0
  %7586 = vmatpush.bf16.msra.mxu0 %v7551
  %7587 = vmatpush.bf16.msra.mxu0 %v7549
  %7588 = vmatpush.bf16.msra.mxu0 %v7547
  %7589 = vmatpush.bf16.msra.mxu0 %v7545
  %7590 = vmatpush.bf16.msra.mxu0 %v7543
  %7591 = vmatpush.bf16.msra.mxu0 %v7541
  %7592 = vmatpush.bf16.msra.mxu0 %v7539
  %7593 = vmatpush.bf16.msra.mxu0 %v7537
  %7594 = vmatmul.bf16.gmra.mxu0 %v7470
  %v7595 = vpop.f32.mrf.mxu0
  %v7596 = vadd.f32 0.0, %v7595
  %v7597 = vpop.f32.mrf.mxu0
  %v7598 = vadd.f32 0.0, %v7597
  %7599 = vmatmul.bf16.gmra.mxu0 %v7471
  %v7600 = vpop.f32.mrf.mxu0
  %v7601 = vadd.f32 0.0, %v7600
  %v7602 = vpop.f32.mrf.mxu0
  %7603 = vdwg.mxu0
  %v7604 = vadd.f32 %v7461, %v7578
  %v7605 = vadd.f32 %v7462, %v7596
  %v7606 = vadd.f32 %v7463, %v7580
  %v7607 = vadd.f32 %v7464, %v7598
  %v7608 = vadd.f32 %v7465, %v7583
  %v7609 = vadd.f32 %v7466, %v7601
  %v7610 = vld [vmem:[#allocation5 + $0x8] sm:$0xff]
  %v7611 = vld [vmem:[#allocation5 + $0x10] sm:$0xff]
  %v7612 = vld [vmem:[#allocation5 + $0x18] sm:$0x3f]
  %v7613 = vpack.c.bf16 %v7611, %v7610
  %v7614 = vpack.c.bf16 %v7612, %v7612
  %v7615 = vld [vmem:[%s6 + $0x300] sm:$0xff]
  %v7616 = vld [vmem:[%s6 + $0x308] sm:$0xff]
  %v7617 = vld [vmem:[%s6 + $0x310] sm:$0xff]
  %v7618 = vld [vmem:[%s6 + $0x318] sm:$0xff]
  %v7619 = vld [vmem:[%s6 + $0x320] sm:$0xff]
  %v7620 = vld [vmem:[%s6 + $0x328] sm:$0xff]
  %v7621 = vld [vmem:[%s6 + $0x330] sm:$0xff]
  %v7622 = vld [vmem:[%s6 + $0x338] sm:$0xff]
  %v7623 = vld [vmem:[%s6 + $0x340] sm:$0xff]
  %v7624 = vld [vmem:[%s6 + $0x348] sm:$0xff]
  %v7625 = vld [vmem:[%s6 + $0x350] sm:$0xff]
  %v7626 = vld [vmem:[%s6 + $0x358] sm:$0xff]
  %v7627 = vld [vmem:[%s6 + $0x360] sm:$0xff]
  %v7628 = vld [vmem:[%s6 + $0x368] sm:$0xff]
  %v7629 = vld [vmem:[%s6 + $0x370] sm:$0xff]
  %v7630 = vld [vmem:[%s6 + $0x378] sm:$0xff]
  %v7647 = vunpack.c.l.b16 %v7615
  %v7648 = vunpack.c.h.b16 %v7615
  %v7649 = vunpack.c.l.b16 %v7616
  %v7650 = vunpack.c.h.b16 %v7616
  %v7651 = vunpack.c.l.b16 %v7617
  %v7652 = vunpack.c.h.b16 %v7617
  %v7653 = vunpack.c.l.b16 %v7618
  %v7654 = vunpack.c.h.b16 %v7618
  %v7655 = vunpack.c.l.b16 %v7619
  %v7656 = vunpack.c.h.b16 %v7619
  %v7657 = vunpack.c.l.b16 %v7620
  %v7658 = vunpack.c.h.b16 %v7620
  %v7659 = vunpack.c.l.b16 %v7621
  %v7660 = vunpack.c.h.b16 %v7621
  %v7661 = vunpack.c.l.b16 %v7622
  %v7662 = vunpack.c.h.b16 %v7622
  %v7663 = vunpack.c.l.b16 %v7623
  %v7664 = vunpack.c.h.b16 %v7623
  %v7665 = vunpack.c.l.b16 %v7624
  %v7666 = vunpack.c.h.b16 %v7624
  %v7667 = vunpack.c.l.b16 %v7625
  %v7668 = vunpack.c.h.b16 %v7625
  %v7669 = vunpack.c.l.b16 %v7626
  %v7670 = vunpack.c.h.b16 %v7626
  %v7671 = vunpack.c.l.b16 %v7627
  %v7672 = vunpack.c.h.b16 %v7627
  %v7673 = vunpack.c.l.b16 %v7628
  %v7674 = vunpack.c.h.b16 %v7628
  %v7675 = vunpack.c.l.b16 %v7629
  %v7676 = vunpack.c.h.b16 %v7629
  %v7677 = vunpack.c.l.b16 %v7630
  %v7678 = vunpack.c.h.b16 %v7630
  %v7679 = vpack.c.b16 %v7649, %v7647
  %v7680 = vpack.c.b16 %v7650, %v7648
  %v7681 = vpack.c.b16 %v7653, %v7651
  %v7682 = vpack.c.b16 %v7654, %v7652
  %v7683 = vpack.c.b16 %v7657, %v7655
  %v7684 = vpack.c.b16 %v7658, %v7656
  %v7685 = vpack.c.b16 %v7661, %v7659
  %v7686 = vpack.c.b16 %v7662, %v7660
  %v7687 = vpack.c.b16 %v7665, %v7663
  %v7688 = vpack.c.b16 %v7666, %v7664
  %v7689 = vpack.c.b16 %v7669, %v7667
  %v7690 = vpack.c.b16 %v7670, %v7668
  %v7691 = vpack.c.b16 %v7673, %v7671
  %v7692 = vpack.c.b16 %v7674, %v7672
  %v7693 = vpack.c.b16 %v7677, %v7675
  %v7694 = vpack.c.b16 %v7678, %v7676
  %7711 = vmatpush.bf16.msra.mxu0 %v7693
  %7712 = vmatpush.bf16.msra.mxu0 %v7691
  %7713 = vmatpush.bf16.msra.mxu0 %v7689
  %7714 = vmatpush.bf16.msra.mxu0 %v7687
  %7715 = vmatpush.bf16.msra.mxu0 %v7685
  %7716 = vmatpush.bf16.msra.mxu0 %v7683
  %7717 = vmatpush.bf16.msra.mxu0 %v7681
  %7718 = vmatpush.bf16.msra.mxu0 %v7679
  %7719 = vmatmul.bf16.gmra.mxu0 %v7613
  %v7720 = vpop.f32.mrf.mxu0
  %v7721 = vadd.f32 0.0, %v7720
  %v7722 = vpop.f32.mrf.mxu0
  %v7723 = vadd.f32 0.0, %v7722
  %7724 = vmatmul.bf16.gmra.mxu0 %v7614
  %v7725 = vpop.f32.mrf.mxu0
  %v7726 = vadd.f32 0.0, %v7725
  %v7727 = vpop.f32.mrf.mxu0
  %7728 = vdwg.mxu0
  %7729 = vmatpush.bf16.msra.mxu0 %v7694
  %7730 = vmatpush.bf16.msra.mxu0 %v7692
  %7731 = vmatpush.bf16.msra.mxu0 %v7690
  %7732 = vmatpush.bf16.msra.mxu0 %v7688
  %7733 = vmatpush.bf16.msra.mxu0 %v7686
  %7734 = vmatpush.bf16.msra.mxu0 %v7684
  %7735 = vmatpush.bf16.msra.mxu0 %v7682
  %7736 = vmatpush.bf16.msra.mxu0 %v7680
  %7737 = vmatmul.bf16.gmra.mxu0 %v7613
  %v7738 = vpop.f32.mrf.mxu0
  %v7739 = vadd.f32 0.0, %v7738
  %v7740 = vpop.f32.mrf.mxu0
  %v7741 = vadd.f32 0.0, %v7740
  %7742 = vmatmul.bf16.gmra.mxu0 %v7614
  %v7743 = vpop.f32.mrf.mxu0
  %v7744 = vadd.f32 0.0, %v7743
  %v7745 = vpop.f32.mrf.mxu0
  %7746 = vdwg.mxu0
  %v7747 = vadd.f32 %v7604, %v7721
  %v7748 = vadd.f32 %v7605, %v7739
  %v7749 = vadd.f32 %v7606, %v7723
  %v7750 = vadd.f32 %v7607, %v7741
  %v7751 = vadd.f32 %v7608, %v7726
  %v7752 = vadd.f32 %v7609, %v7744
  %v7753 = vld [vmem:[#allocation5 + $0x9] sm:$0xff]
  %v7754 = vld [vmem:[#allocation5 + $0x11] sm:$0xff]
  %v7755 = vld [vmem:[#allocation5 + $0x19] sm:$0x3f]
  %v7756 = vpack.c.bf16 %v7754, %v7753
  %v7757 = vpack.c.bf16 %v7755, %v7755
  %v7758 = vld [vmem:[%s6 + $0x380] sm:$0xff]
  %v7759 = vld [vmem:[%s6 + $0x388] sm:$0xff]
  %v7760 = vld [vmem:[%s6 + $0x390] sm:$0xff]
  %v7761 = vld [vmem:[%s6 + $0x398] sm:$0xff]
  %v7762 = vld [vmem:[%s6 + $0x3a0] sm:$0xff]
  %v7763 = vld [vmem:[%s6 + $0x3a8] sm:$0xff]
  %v7764 = vld [vmem:[%s6 + $0x3b0] sm:$0xff]
  %v7765 = vld [vmem:[%s6 + $0x3b8] sm:$0xff]
  %v7766 = vld [vmem:[%s6 + $0x3c0] sm:$0xff]
  %v7767 = vld [vmem:[%s6 + $0x3c8] sm:$0xff]
  %v7768 = vld [vmem:[%s6 + $0x3d0] sm:$0xff]
  %v7769 = vld [vmem:[%s6 + $0x3d8] sm:$0xff]
  %v7770 = vld [vmem:[%s6 + $0x3e0] sm:$0xff]
  %v7771 = vld [vmem:[%s6 + $0x3e8] sm:$0xff]
  %v7772 = vld [vmem:[%s6 + $0x3f0] sm:$0xff]
  %v7773 = vld [vmem:[%s6 + $0x3f8] sm:$0xff]
  %v7790 = vunpack.c.l.b16 %v7758
  %v7791 = vunpack.c.h.b16 %v7758
  %v7792 = vunpack.c.l.b16 %v7759
  %v7793 = vunpack.c.h.b16 %v7759
  %v7794 = vunpack.c.l.b16 %v7760
  %v7795 = vunpack.c.h.b16 %v7760
  %v7796 = vunpack.c.l.b16 %v7761
  %v7797 = vunpack.c.h.b16 %v7761
  %v7798 = vunpack.c.l.b16 %v7762
  %v7799 = vunpack.c.h.b16 %v7762
  %v7800 = vunpack.c.l.b16 %v7763
  %v7801 = vunpack.c.h.b16 %v7763
  %v7802 = vunpack.c.l.b16 %v7764
  %v7803 = vunpack.c.h.b16 %v7764
  %v7804 = vunpack.c.l.b16 %v7765
  %v7805 = vunpack.c.h.b16 %v7765
  %v7806 = vunpack.c.l.b16 %v7766
  %v7807 = vunpack.c.h.b16 %v7766
  %v7808 = vunpack.c.l.b16 %v7767
  %v7809 = vunpack.c.h.b16 %v7767
  %v7810 = vunpack.c.l.b16 %v7768
  %v7811 = vunpack.c.h.b16 %v7768
  %v7812 = vunpack.c.l.b16 %v7769
  %v7813 = vunpack.c.h.b16 %v7769
  %v7814 = vunpack.c.l.b16 %v7770
  %v7815 = vunpack.c.h.b16 %v7770
  %v7816 = vunpack.c.l.b16 %v7771
  %v7817 = vunpack.c.h.b16 %v7771
  %v7818 = vunpack.c.l.b16 %v7772
  %v7819 = vunpack.c.h.b16 %v7772
  %v7820 = vunpack.c.l.b16 %v7773
  %v7821 = vunpack.c.h.b16 %v7773
  %v7822 = vpack.c.b16 %v7792, %v7790
  %v7823 = vpack.c.b16 %v7793, %v7791
  %v7824 = vpack.c.b16 %v7796, %v7794
  %v7825 = vpack.c.b16 %v7797, %v7795
  %v7826 = vpack.c.b16 %v7800, %v7798
  %v7827 = vpack.c.b16 %v7801, %v7799
  %v7828 = vpack.c.b16 %v7804, %v7802
  %v7829 = vpack.c.b16 %v7805, %v7803
  %v7830 = vpack.c.b16 %v7808, %v7806
  %v7831 = vpack.c.b16 %v7809, %v7807
  %v7832 = vpack.c.b16 %v7812, %v7810
  %v7833 = vpack.c.b16 %v7813, %v7811
  %v7834 = vpack.c.b16 %v7816, %v7814
  %v7835 = vpack.c.b16 %v7817, %v7815
  %v7836 = vpack.c.b16 %v7820, %v7818
  %v7837 = vpack.c.b16 %v7821, %v7819
  %7854 = vmatpush.bf16.msra.mxu0 %v7836
  %7855 = vmatpush.bf16.msra.mxu0 %v7834
  %7856 = vmatpush.bf16.msra.mxu0 %v7832
  %7857 = vmatpush.bf16.msra.mxu0 %v7830
  %7858 = vmatpush.bf16.msra.mxu0 %v7828
  %7859 = vmatpush.bf16.msra.mxu0 %v7826
  %7860 = vmatpush.bf16.msra.mxu0 %v7824
  %7861 = vmatpush.bf16.msra.mxu0 %v7822
  %7862 = vmatmul.bf16.gmra.mxu0 %v7756
  %v7863 = vpop.f32.mrf.mxu0
  %v7864 = vadd.f32 0.0, %v7863
  %v7865 = vpop.f32.mrf.mxu0
  %v7866 = vadd.f32 0.0, %v7865
  %7867 = vmatmul.bf16.gmra.mxu0 %v7757
  %v7868 = vpop.f32.mrf.mxu0
  %v7869 = vadd.f32 0.0, %v7868
  %v7870 = vpop.f32.mrf.mxu0
  %7871 = vdwg.mxu0
  %7872 = vmatpush.bf16.msra.mxu0 %v7837
  %7873 = vmatpush.bf16.msra.mxu0 %v7835
  %7874 = vmatpush.bf16.msra.mxu0 %v7833
  %7875 = vmatpush.bf16.msra.mxu0 %v7831
  %7876 = vmatpush.bf16.msra.mxu0 %v7829
  %7877 = vmatpush.bf16.msra.mxu0 %v7827
  %7878 = vmatpush.bf16.msra.mxu0 %v7825
  %7879 = vmatpush.bf16.msra.mxu0 %v7823
  %7880 = vmatmul.bf16.gmra.mxu0 %v7756
  %v7881 = vpop.f32.mrf.mxu0
  %v7882 = vadd.f32 0.0, %v7881
  %v7883 = vpop.f32.mrf.mxu0
  %v7884 = vadd.f32 0.0, %v7883
  %7885 = vmatmul.bf16.gmra.mxu0 %v7757
  %v7886 = vpop.f32.mrf.mxu0
  %v7887 = vadd.f32 0.0, %v7886
  %v7888 = vpop.f32.mrf.mxu0
  %7889 = vdwg.mxu0
  %v7890 = vadd.f32 %v7747, %v7864
  %v7891 = vadd.f32 %v7748, %v7882
  %v7892 = vadd.f32 %v7749, %v7866
  %v7893 = vadd.f32 %v7750, %v7884
  %v7894 = vadd.f32 %v7751, %v7869
  %v7895 = vadd.f32 %v7752, %v7887
  %v7896 = vld [vmem:[#allocation5 + $0xa] sm:$0xff]
  %v7897 = vld [vmem:[#allocation5 + $0x12] sm:$0xff]
  %v7898 = vld [vmem:[#allocation5 + $0x1a] sm:$0x3f]
  %v7899 = vpack.c.bf16 %v7897, %v7896
  %v7900 = vpack.c.bf16 %v7898, %v7898
  %v7901 = vld [vmem:[%s6 + $0x400] sm:$0xff]
  %v7902 = vld [vmem:[%s6 + $0x408] sm:$0xff]
  %v7903 = vld [vmem:[%s6 + $0x410] sm:$0xff]
  %v7904 = vld [vmem:[%s6 + $0x418] sm:$0xff]
  %v7905 = vld [vmem:[%s6 + $0x420] sm:$0xff]
  %v7906 = vld [vmem:[%s6 + $0x428] sm:$0xff]
  %v7907 = vld [vmem:[%s6 + $0x430] sm:$0xff]
  %v7908 = vld [vmem:[%s6 + $0x438] sm:$0xff]
  %v7909 = vld [vmem:[%s6 + $0x440] sm:$0xff]
  %v7910 = vld [vmem:[%s6 + $0x448] sm:$0xff]
  %v7911 = vld [vmem:[%s6 + $0x450] sm:$0xff]
  %v7912 = vld [vmem:[%s6 + $0x458] sm:$0xff]
  %v7913 = vld [vmem:[%s6 + $0x460] sm:$0xff]
  %v7914 = vld [vmem:[%s6 + $0x468] sm:$0xff]
  %v7915 = vld [vmem:[%s6 + $0x470] sm:$0xff]
  %v7916 = vld [vmem:[%s6 + $0x478] sm:$0xff]
  %v7933 = vunpack.c.l.b16 %v7901
  %v7934 = vunpack.c.h.b16 %v7901
  %v7935 = vunpack.c.l.b16 %v7902
  %v7936 = vunpack.c.h.b16 %v7902
  %v7937 = vunpack.c.l.b16 %v7903
  %v7938 = vunpack.c.h.b16 %v7903
  %v7939 = vunpack.c.l.b16 %v7904
  %v7940 = vunpack.c.h.b16 %v7904
  %v7941 = vunpack.c.l.b16 %v7905
  %v7942 = vunpack.c.h.b16 %v7905
  %v7943 = vunpack.c.l.b16 %v7906
  %v7944 = vunpack.c.h.b16 %v7906
  %v7945 = vunpack.c.l.b16 %v7907
  %v7946 = vunpack.c.h.b16 %v7907
  %v7947 = vunpack.c.l.b16 %v7908
  %v7948 = vunpack.c.h.b16 %v7908
  %v7949 = vunpack.c.l.b16 %v7909
  %v7950 = vunpack.c.h.b16 %v7909
  %v7951 = vunpack.c.l.b16 %v7910
  %v7952 = vunpack.c.h.b16 %v7910
  %v7953 = vunpack.c.l.b16 %v7911
  %v7954 = vunpack.c.h.b16 %v7911
  %v7955 = vunpack.c.l.b16 %v7912
  %v7956 = vunpack.c.h.b16 %v7912
  %v7957 = vunpack.c.l.b16 %v7913
  %v7958 = vunpack.c.h.b16 %v7913
  %v7959 = vunpack.c.l.b16 %v7914
  %v7960 = vunpack.c.h.b16 %v7914
  %v7961 = vunpack.c.l.b16 %v7915
  %v7962 = vunpack.c.h.b16 %v7915
  %v7963 = vunpack.c.l.b16 %v7916
  %v7964 = vunpack.c.h.b16 %v7916
  %v7965 = vpack.c.b16 %v7935, %v7933
  %v7966 = vpack.c.b16 %v7936, %v7934
  %v7967 = vpack.c.b16 %v7939, %v7937
  %v7968 = vpack.c.b16 %v7940, %v7938
  %v7969 = vpack.c.b16 %v7943, %v7941
  %v7970 = vpack.c.b16 %v7944, %v7942
  %v7971 = vpack.c.b16 %v7947, %v7945
  %v7972 = vpack.c.b16 %v7948, %v7946
  %v7973 = vpack.c.b16 %v7951, %v7949
  %v7974 = vpack.c.b16 %v7952, %v7950
  %v7975 = vpack.c.b16 %v7955, %v7953
  %v7976 = vpack.c.b16 %v7956, %v7954
  %v7977 = vpack.c.b16 %v7959, %v7957
  %v7978 = vpack.c.b16 %v7960, %v7958
  %v7979 = vpack.c.b16 %v7963, %v7961
  %v7980 = vpack.c.b16 %v7964, %v7962
  %7997 = vmatpush.bf16.msra.mxu0 %v7979
  %7998 = vmatpush.bf16.msra.mxu0 %v7977
  %7999 = vmatpush.bf16.msra.mxu0 %v7975
  %8000 = vmatpush.bf16.msra.mxu0 %v7973
  %8001 = vmatpush.bf16.msra.mxu0 %v7971
  %8002 = vmatpush.bf16.msra.mxu0 %v7969
  %8003 = vmatpush.bf16.msra.mxu0 %v7967
  %8004 = vmatpush.bf16.msra.mxu0 %v7965
  %8005 = vmatmul.bf16.gmra.mxu0 %v7899
  %v8006 = vpop.f32.mrf.mxu0
  %v8007 = vadd.f32 0.0, %v8006
  %v8008 = vpop.f32.mrf.mxu0
  %v8009 = vadd.f32 0.0, %v8008
  %8010 = vmatmul.bf16.gmra.mxu0 %v7900
  %v8011 = vpop.f32.mrf.mxu0
  %v8012 = vadd.f32 0.0, %v8011
  %v8013 = vpop.f32.mrf.mxu0
  %8014 = vdwg.mxu0
  %8015 = vmatpush.bf16.msra.mxu0 %v7980
  %8016 = vmatpush.bf16.msra.mxu0 %v7978
  %8017 = vmatpush.bf16.msra.mxu0 %v7976
  %8018 = vmatpush.bf16.msra.mxu0 %v7974
  %8019 = vmatpush.bf16.msra.mxu0 %v7972
  %8020 = vmatpush.bf16.msra.mxu0 %v7970
  %8021 = vmatpush.bf16.msra.mxu0 %v7968
  %8022 = vmatpush.bf16.msra.mxu0 %v7966
  %8023 = vmatmul.bf16.gmra.mxu0 %v7899
  %v8024 = vpop.f32.mrf.mxu0
  %v8025 = vadd.f32 0.0, %v8024
  %v8026 = vpop.f32.mrf.mxu0
  %v8027 = vadd.f32 0.0, %v8026
  %8028 = vmatmul.bf16.gmra.mxu0 %v7900
  %v8029 = vpop.f32.mrf.mxu0
  %v8030 = vadd.f32 0.0, %v8029
  %v8031 = vpop.f32.mrf.mxu0
  %8032 = vdwg.mxu0
  %v8033 = vadd.f32 %v7890, %v8007
  %v8034 = vadd.f32 %v7891, %v8025
  %v8035 = vadd.f32 %v7892, %v8009
  %v8036 = vadd.f32 %v7893, %v8027
  %v8037 = vadd.f32 %v7894, %v8012
  %v8038 = vadd.f32 %v7895, %v8030
  %v8039 = vld [vmem:[#allocation4] sm:$0xe0]
  %v8040 = vld [vmem:[#allocation4 + $0x8] sm:$0xe0]
  %v8041 = vld [vmem:[#allocation4 + $0x10] sm:$0xff]
  %v8042 = vld [vmem:[#allocation4 + $0x18] sm:$0xff]
  %v8043 = vld [vmem:[#allocation4 + $0x20] sm:$0xff]
  %v8044 = vld [vmem:[#allocation4 + $0x28] sm:$0xff]
  %v8045 = vld [vmem:[#allocation4 + $0x30] sm:$0x7]
  %v8046 = vld [vmem:[#allocation4 + $0x38] sm:$0x7]
  %vm8053 = vcmask 1044480
  %v8054 = vrot.slane %v8033, 3
  %v8055 = vrot.slane %v8034, 3
  %v8056 = vrot.slane %v8035, 3
  %v8057 = vsel %vm8053, %v8054, %v8056
  %v8058 = vrot.slane %v8036, 3
  %v8059 = vsel %vm8053, %v8055, %v8058
  %v8060 = vrot.slane %v8037, 3
  %v8061 = vsel %vm8053, %v8056, %v8060
  %v8062 = vrot.slane %v8038, 3
  %v8063 = vsel %vm8053, %v8058, %v8062
  %v8072 = vadd.f32 %v8039, %v8054
  %v8073 = vadd.f32 %v8040, %v8055
  %v8074 = vadd.f32 %v8041, %v8057
  %v8075 = vadd.f32 %v8042, %v8059
  %v8076 = vadd.f32 %v8043, %v8061
  %v8077 = vadd.f32 %v8044, %v8063
  %v8078 = vadd.f32 %v8045, %v8060
  %v8079 = vadd.f32 %v8046, %v8062
  %v8080 = vld [vmem:[%s10 + $0x6] sm:$0x3]
  %v8082 = vperm.slane %v8080, 0
  %v8083 = vperm.slane %v8080, 1
  %v8086 = vadd.f32 %v8072, %v8082
  %v8087 = vadd.f32 %v8073, %v8083
  %v8088 = vadd.f32 %v8074, %v8082
  %v8089 = vadd.f32 %v8075, %v8083
  %v8090 = vadd.f32 %v8076, %v8082
  %v8091 = vadd.f32 %v8077, %v8083
  %v8092 = vadd.f32 %v8078, %v8082
  %v8093 = vadd.f32 %v8079, %v8083
  %v8094 = vmax.f32 %v8086, 0.0
  %v8095 = vmax.f32 %v8087, 0.0
  %v8096 = vmax.f32 %v8088, 0.0
  %v8097 = vmax.f32 %v8089, 0.0
  %v8098 = vmax.f32 %v8090, 0.0
  %v8099 = vmax.f32 %v8091, 0.0
  %v8100 = vmax.f32 %v8092, 0.0
  %v8101 = vmax.f32 %v8093, 0.0
  %8102 = vst [vmem:[#allocation4] sm:$0x60] %v8094
  %8103 = vst [vmem:[#allocation4 + $0x8] sm:$0x60] %v8095
  %8104 = vst [vmem:[#allocation4 + $0x10] sm:$0x6] %v8096
  %8105 = vst [vmem:[#allocation4 + $0x18] sm:$0x6] %v8097
  %8106 = vst [vmem:[#allocation4 + $0x20] sm:$0x60] %v8098
  %8107 = vst [vmem:[#allocation4 + $0x28] sm:$0x60] %v8099
  %8108 = vst [vmem:[#allocation4 + $0x30] sm:$0x6] %v8100
  %8109 = vst [vmem:[#allocation4 + $0x38] sm:$0x6] %v8101
  %v8110 = vld [vmem:[#allocation4] sm:$0xff]
  %v8111 = vld [vmem:[#allocation4 + $0x8] sm:$0xff]
  %v8112 = vld [vmem:[#allocation4 + $0x10] sm:$0xff]
  %v8113 = vld [vmem:[#allocation4 + $0x18] sm:$0xff]
  %v8114 = vld [vmem:[#allocation4 + $0x20] sm:$0x3f]
  %v8115 = vld [vmem:[#allocation4 + $0x28] sm:$0x3f]
  %v8116 = vpack.c.bf16 %v8112, %v8110
  %v8117 = vpack.c.bf16 %v8113, %v8111
  %v8118 = vpack.c.bf16 %v8114, %v8114
  %v8119 = vpack.c.bf16 %v8115, %v8115
  %v8120 = vld [vmem:[%s7] sm:$0xf]
  %v8121 = vld [vmem:[%s7 + $0x4] sm:$0xf]
  %v8122 = vld [vmem:[%s7 + $0x8] sm:$0xf]
  %v8123 = vld [vmem:[%s7 + $0xc] sm:$0xf]
  %v8124 = vld [vmem:[%s7 + $0x10] sm:$0xf]
  %v8125 = vld [vmem:[%s7 + $0x14] sm:$0xf]
  %v8126 = vld [vmem:[%s7 + $0x18] sm:$0xf]
  %v8127 = vld [vmem:[%s7 + $0x1c] sm:$0xf]
  %v8128 = vld [vmem:[%s7 + $0x20] sm:$0xf]
  %v8129 = vld [vmem:[%s7 + $0x24] sm:$0xf]
  %v8130 = vld [vmem:[%s7 + $0x28] sm:$0xf]
  %v8131 = vld [vmem:[%s7 + $0x2c] sm:$0xf]
  %v8132 = vld [vmem:[%s7 + $0x30] sm:$0xf]
  %v8133 = vld [vmem:[%s7 + $0x34] sm:$0xf]
  %v8134 = vld [vmem:[%s7 + $0x38] sm:$0xf]
  %v8135 = vld [vmem:[%s7 + $0x3c] sm:$0xf]
  %v8136 = vld [vmem:[%s7 + $0x40] sm:$0xf]
  %v8137 = vld [vmem:[%s7 + $0x44] sm:$0xf]
  %v8138 = vld [vmem:[%s7 + $0x48] sm:$0xf]
  %v8139 = vld [vmem:[%s7 + $0x4c] sm:$0xf]
  %v8140 = vld [vmem:[%s7 + $0x50] sm:$0xf]
  %v8141 = vld [vmem:[%s7 + $0x54] sm:$0xf]
  %v8142 = vld [vmem:[%s7 + $0x58] sm:$0xf]
  %v8143 = vld [vmem:[%s7 + $0x5c] sm:$0xf]
  %v8144 = vld [vmem:[%s7 + $0x60] sm:$0xf]
  %v8145 = vld [vmem:[%s7 + $0x64] sm:$0xf]
  %v8146 = vld [vmem:[%s7 + $0x68] sm:$0xf]
  %v8147 = vld [vmem:[%s7 + $0x6c] sm:$0xf]
  %v8148 = vld [vmem:[%s7 + $0x70] sm:$0xf]
  %v8149 = vld [vmem:[%s7 + $0x74] sm:$0xf]
  %v8150 = vld [vmem:[%s7 + $0x78] sm:$0xf]
  %v8151 = vld [vmem:[%s7 + $0x7c] sm:$0xf]
  %v8152 = vld [vmem:[#allocation4] sm:$0xfe]
  %v8153 = vld [vmem:[#allocation4 + $0x8] sm:$0xfe]
  %v8154 = vld [vmem:[#allocation4 + $0x20] sm:$0x7f]
  %v8155 = vld [vmem:[#allocation4 + $0x28] sm:$0x7f]
  %v8156 = vpack.c.bf16 %v8112, %v8152
  %v8157 = vpack.c.bf16 %v8113, %v8153
  %v8158 = vpack.c.bf16 %v8154, %v8154
  %v8159 = vpack.c.bf16 %v8155, %v8155
  %v8160 = vld [vmem:[%s7 + $0x80] sm:$0xf]
  %v8161 = vld [vmem:[%s7 + $0x84] sm:$0xf]
  %v8162 = vld [vmem:[%s7 + $0x88] sm:$0xf]
  %v8163 = vld [vmem:[%s7 + $0x8c] sm:$0xf]
  %v8164 = vld [vmem:[%s7 + $0x90] sm:$0xf]
  %v8165 = vld [vmem:[%s7 + $0x94] sm:$0xf]
  %v8166 = vld [vmem:[%s7 + $0x98] sm:$0xf]
  %v8167 = vld [vmem:[%s7 + $0x9c] sm:$0xf]
  %v8168 = vld [vmem:[%s7 + $0xa0] sm:$0xf]
  %v8169 = vld [vmem:[%s7 + $0xa4] sm:$0xf]
  %v8170 = vld [vmem:[%s7 + $0xa8] sm:$0xf]
  %v8171 = vld [vmem:[%s7 + $0xac] sm:$0xf]
  %v8172 = vld [vmem:[%s7 + $0xb0] sm:$0xf]
  %v8173 = vld [vmem:[%s7 + $0xb4] sm:$0xf]
  %v8174 = vld [vmem:[%s7 + $0xb8] sm:$0xf]
  %v8175 = vld [vmem:[%s7 + $0xbc] sm:$0xf]
  %v8176 = vld [vmem:[%s7 + $0xc0] sm:$0xf]
  %v8177 = vld [vmem:[%s7 + $0xc4] sm:$0xf]
  %v8178 = vld [vmem:[%s7 + $0xc8] sm:$0xf]
  %v8179 = vld [vmem:[%s7 + $0xcc] sm:$0xf]
  %v8180 = vld [vmem:[%s7 + $0xd0] sm:$0xf]
  %v8181 = vld [vmem:[%s7 + $0xd4] sm:$0xf]
  %v8182 = vld [vmem:[%s7 + $0xd8] sm:$0xf]
  %v8183 = vld [vmem:[%s7 + $0xdc] sm:$0xf]
  %v8184 = vld [vmem:[%s7 + $0xe0] sm:$0xf]
  %v8185 = vld [vmem:[%s7 + $0xe4] sm:$0xf]
  %v8186 = vld [vmem:[%s7 + $0xe8] sm:$0xf]
  %v8187 = vld [vmem:[%s7 + $0xec] sm:$0xf]
  %v8188 = vld [vmem:[%s7 + $0xf0] sm:$0xf]
  %v8189 = vld [vmem:[%s7 + $0xf4] sm:$0xf]
  %v8190 = vld [vmem:[%s7 + $0xf8] sm:$0xf]
  %v8191 = vld [vmem:[%s7 + $0xfc] sm:$0xf]
  %v8193 = vshrl.u32 %v8156, 16
  %v8195 = vshll.u32 %v8156, 16
  %v8197 = vrot.slane %v8195, 1
  %v8198 = vor.u32 %v8193, %v8197
  %v8200 = vshll.u32 %v8158, 16
  %v8202 = vrot.slane %v8200, 1
  %v8203 = vsel %vm5119, %v8198, %v8202
  %v8205 = vshrl.u32 %v8157, 16
  %v8207 = vshll.u32 %v8157, 16
  %v8209 = vrot.slane %v8207, 1
  %v8210 = vor.u32 %v8205, %v8209
  %v8212 = vshll.u32 %v8159, 16
  %v8214 = vrot.slane %v8212, 1
  %v8215 = vsel %vm5119, %v8210, %v8214
  %v8216 = vshrl.u32 %v8158, 16
  %v8218 = vor.u32 %v8216, %v8202
  %v8219 = vshrl.u32 %v8159, 16
  %v8221 = vor.u32 %v8219, %v8214
  %v8258 = vunpack.c.l.b16 %v8160
  %v8259 = vunpack.c.l.b16 %v8161
  %v8260 = vunpack.c.l.b16 %v8162
  %v8261 = vunpack.c.l.b16 %v8163
  %v8262 = vunpack.c.l.b16 %v8164
  %v8263 = vunpack.c.l.b16 %v8165
  %v8264 = vunpack.c.l.b16 %v8166
  %v8265 = vunpack.c.l.b16 %v8167
  %v8266 = vunpack.c.l.b16 %v8168
  %v8267 = vunpack.c.l.b16 %v8169
  %v8268 = vunpack.c.l.b16 %v8170
  %v8269 = vunpack.c.l.b16 %v8171
  %v8270 = vunpack.c.l.b16 %v8172
  %v8271 = vunpack.c.l.b16 %v8173
  %v8272 = vunpack.c.l.b16 %v8174
  %v8273 = vunpack.c.l.b16 %v8175
  %v8274 = vunpack.c.l.b16 %v8176
  %v8275 = vunpack.c.l.b16 %v8177
  %v8276 = vunpack.c.l.b16 %v8178
  %v8277 = vunpack.c.l.b16 %v8179
  %v8278 = vunpack.c.l.b16 %v8180
  %v8279 = vunpack.c.l.b16 %v8181
  %v8280 = vunpack.c.l.b16 %v8182
  %v8281 = vunpack.c.l.b16 %v8183
  %v8282 = vunpack.c.l.b16 %v8184
  %v8283 = vunpack.c.l.b16 %v8185
  %v8284 = vunpack.c.l.b16 %v8186
  %v8285 = vunpack.c.l.b16 %v8187
  %v8286 = vunpack.c.l.b16 %v8188
  %v8287 = vunpack.c.l.b16 %v8189
  %v8288 = vunpack.c.l.b16 %v8190
  %v8289 = vunpack.c.l.b16 %v8191
  %v8290 = vpack.c.b16 %v8259, %v8258
  %v8291 = vpack.c.b16 %v8261, %v8260
  %v8292 = vpack.c.b16 %v8263, %v8262
  %v8293 = vpack.c.b16 %v8265, %v8264
  %v8294 = vpack.c.b16 %v8267, %v8266
  %v8295 = vpack.c.b16 %v8269, %v8268
  %v8296 = vpack.c.b16 %v8271, %v8270
  %v8297 = vpack.c.b16 %v8273, %v8272
  %v8298 = vpack.c.b16 %v8275, %v8274
  %v8299 = vpack.c.b16 %v8277, %v8276
  %v8300 = vpack.c.b16 %v8279, %v8278
  %v8301 = vpack.c.b16 %v8281, %v8280
  %v8302 = vpack.c.b16 %v8283, %v8282
  %v8303 = vpack.c.b16 %v8285, %v8284
  %v8304 = vpack.c.b16 %v8287, %v8286
  %v8305 = vpack.c.b16 %v8289, %v8288
  %8322 = vmatpush.bf16.msra.mxu0 %v8297
  %8323 = vmatpush.bf16.msra.mxu0 %v8296
  %8324 = vmatpush.bf16.msra.mxu0 %v8295
  %8325 = vmatpush.bf16.msra.mxu0 %v8294
  %8326 = vmatpush.bf16.msra.mxu0 %v8293
  %8327 = vmatpush.bf16.msra.mxu0 %v8292
  %8328 = vmatpush.bf16.msra.mxu0 %v8291
  %8329 = vmatpush.bf16.msra.mxu0 %v8290
  %8330 = vmatmul.bf16.gmra.mxu0 %v8203
  %v8331 = vpop.f32.mrf.mxu0
  %v8332 = vadd.f32 0.0, %v8331
  %v8333 = vpop.f32.mrf.mxu0
  %8334 = vmatmul.bf16.gmra.mxu0 %v8218
  %v8335 = vpop.f32.mrf.mxu0
  %v8336 = vadd.f32 0.0, %v8335
  %v8337 = vpop.f32.mrf.mxu0
  %8338 = vdwg.mxu0
  %8339 = vmatpush.bf16.msra.mxu0 %v8305
  %8340 = vmatpush.bf16.msra.mxu0 %v8304
  %8341 = vmatpush.bf16.msra.mxu0 %v8303
  %8342 = vmatpush.bf16.msra.mxu0 %v8302
  %8343 = vmatpush.bf16.msra.mxu0 %v8301
  %8344 = vmatpush.bf16.msra.mxu0 %v8300
  %8345 = vmatpush.bf16.msra.mxu0 %v8299
  %8346 = vmatpush.bf16.msra.mxu0 %v8298
  %8347 = vmatmul.bf16.gmra.mxu0 %v8215
  %v8348 = vpop.f32.mrf.mxu0
  %v8349 = vadd.f32 %v8332, %v8348
  %v8350 = vpop.f32.mrf.mxu0
  %8351 = vmatmul.bf16.gmra.mxu0 %v8221
  %v8352 = vpop.f32.mrf.mxu0
  %v8353 = vadd.f32 %v8336, %v8352
  %v8354 = vpop.f32.mrf.mxu0
  %8355 = vdwg.mxu0
  %v8388 = vunpack.c.l.b16 %v8120
  %v8389 = vunpack.c.l.b16 %v8121
  %v8390 = vunpack.c.l.b16 %v8122
  %v8391 = vunpack.c.l.b16 %v8123
  %v8392 = vunpack.c.l.b16 %v8124
  %v8393 = vunpack.c.l.b16 %v8125
  %v8394 = vunpack.c.l.b16 %v8126
  %v8395 = vunpack.c.l.b16 %v8127
  %v8396 = vunpack.c.l.b16 %v8128
  %v8397 = vunpack.c.l.b16 %v8129
  %v8398 = vunpack.c.l.b16 %v8130
  %v8399 = vunpack.c.l.b16 %v8131
  %v8400 = vunpack.c.l.b16 %v8132
  %v8401 = vunpack.c.l.b16 %v8133
  %v8402 = vunpack.c.l.b16 %v8134
  %v8403 = vunpack.c.l.b16 %v8135
  %v8404 = vunpack.c.l.b16 %v8136
  %v8405 = vunpack.c.l.b16 %v8137
  %v8406 = vunpack.c.l.b16 %v8138
  %v8407 = vunpack.c.l.b16 %v8139
  %v8408 = vunpack.c.l.b16 %v8140
  %v8409 = vunpack.c.l.b16 %v8141
  %v8410 = vunpack.c.l.b16 %v8142
  %v8411 = vunpack.c.l.b16 %v8143
  %v8412 = vunpack.c.l.b16 %v8144
  %v8413 = vunpack.c.l.b16 %v8145
  %v8414 = vunpack.c.l.b16 %v8146
  %v8415 = vunpack.c.l.b16 %v8147
  %v8416 = vunpack.c.l.b16 %v8148
  %v8417 = vunpack.c.l.b16 %v8149
  %v8418 = vunpack.c.l.b16 %v8150
  %v8419 = vunpack.c.l.b16 %v8151
  %v8420 = vpack.c.b16 %v8389, %v8388
  %v8421 = vpack.c.b16 %v8391, %v8390
  %v8422 = vpack.c.b16 %v8393, %v8392
  %v8423 = vpack.c.b16 %v8395, %v8394
  %v8424 = vpack.c.b16 %v8397, %v8396
  %v8425 = vpack.c.b16 %v8399, %v8398
  %v8426 = vpack.c.b16 %v8401, %v8400
  %v8427 = vpack.c.b16 %v8403, %v8402
  %v8428 = vpack.c.b16 %v8405, %v8404
  %v8429 = vpack.c.b16 %v8407, %v8406
  %v8430 = vpack.c.b16 %v8409, %v8408
  %v8431 = vpack.c.b16 %v8411, %v8410
  %v8432 = vpack.c.b16 %v8413, %v8412
  %v8433 = vpack.c.b16 %v8415, %v8414
  %v8434 = vpack.c.b16 %v8417, %v8416
  %v8435 = vpack.c.b16 %v8419, %v8418
  %8452 = vmatpush.bf16.msra.mxu0 %v8427
  %8453 = vmatpush.bf16.msra.mxu0 %v8426
  %8454 = vmatpush.bf16.msra.mxu0 %v8425
  %8455 = vmatpush.bf16.msra.mxu0 %v8424
  %8456 = vmatpush.bf16.msra.mxu0 %v8423
  %8457 = vmatpush.bf16.msra.mxu0 %v8422
  %8458 = vmatpush.bf16.msra.mxu0 %v8421
  %8459 = vmatpush.bf16.msra.mxu0 %v8420
  %8460 = vmatmul.bf16.gmra.mxu0 %v8116
  %v8461 = vpop.f32.mrf.mxu0
  %v8462 = vadd.f32 %v8349, %v8461
  %v8463 = vpop.f32.mrf.mxu0
  %8464 = vmatmul.bf16.gmra.mxu0 %v8118
  %v8465 = vpop.f32.mrf.mxu0
  %v8466 = vadd.f32 %v8353, %v8465
  %v8467 = vpop.f32.mrf.mxu0
  %8468 = vdwg.mxu0
  %8469 = vmatpush.bf16.msra.mxu0 %v8435
  %8470 = vmatpush.bf16.msra.mxu0 %v8434
  %8471 = vmatpush.bf16.msra.mxu0 %v8433
  %8472 = vmatpush.bf16.msra.mxu0 %v8432
  %8473 = vmatpush.bf16.msra.mxu0 %v8431
  %8474 = vmatpush.bf16.msra.mxu0 %v8430
  %8475 = vmatpush.bf16.msra.mxu0 %v8429
  %8476 = vmatpush.bf16.msra.mxu0 %v8428
  %8477 = vmatmul.bf16.gmra.mxu0 %v8117
  %v8478 = vpop.f32.mrf.mxu0
  %v8479 = vadd.f32 %v8462, %v8478
  %v8480 = vpop.f32.mrf.mxu0
  %8481 = vmatmul.bf16.gmra.mxu0 %v8119
  %v8482 = vpop.f32.mrf.mxu0
  %v8483 = vadd.f32 %v8466, %v8482
  %v8484 = vpop.f32.mrf.mxu0
  %8485 = vdwg.mxu0
  %v8486 = vld [vmem:[#allocation4] sm:$0xfc]
  %v8487 = vld [vmem:[#allocation4 + $0x8] sm:$0xfc]
  %v8488 = vld [vmem:[#allocation4 + $0x20] sm:$0xff]
  %v8489 = vld [vmem:[#allocation4 + $0x28] sm:$0xff]
  %v8490 = vpack.c.bf16 %v8112, %v8486
  %v8491 = vpack.c.bf16 %v8113, %v8487
  %v8492 = vpack.c.bf16 %v8488, %v8488
  %v8493 = vpack.c.bf16 %v8489, %v8489
  %v8494 = vld [vmem:[%s7 + $0x100] sm:$0xf]
  %v8495 = vld [vmem:[%s7 + $0x104] sm:$0xf]
  %v8496 = vld [vmem:[%s7 + $0x108] sm:$0xf]
  %v8497 = vld [vmem:[%s7 + $0x10c] sm:$0xf]
  %v8498 = vld [vmem:[%s7 + $0x110] sm:$0xf]
  %v8499 = vld [vmem:[%s7 + $0x114] sm:$0xf]
  %v8500 = vld [vmem:[%s7 + $0x118] sm:$0xf]
  %v8501 = vld [vmem:[%s7 + $0x11c] sm:$0xf]
  %v8502 = vld [vmem:[%s7 + $0x120] sm:$0xf]
  %v8503 = vld [vmem:[%s7 + $0x124] sm:$0xf]
  %v8504 = vld [vmem:[%s7 + $0x128] sm:$0xf]
  %v8505 = vld [vmem:[%s7 + $0x12c] sm:$0xf]
  %v8506 = vld [vmem:[%s7 + $0x130] sm:$0xf]
  %v8507 = vld [vmem:[%s7 + $0x134] sm:$0xf]
  %v8508 = vld [vmem:[%s7 + $0x138] sm:$0xf]
  %v8509 = vld [vmem:[%s7 + $0x13c] sm:$0xf]
  %v8510 = vld [vmem:[%s7 + $0x140] sm:$0xf]
  %v8511 = vld [vmem:[%s7 + $0x144] sm:$0xf]
  %v8512 = vld [vmem:[%s7 + $0x148] sm:$0xf]
  %v8513 = vld [vmem:[%s7 + $0x14c] sm:$0xf]
  %v8514 = vld [vmem:[%s7 + $0x150] sm:$0xf]
  %v8515 = vld [vmem:[%s7 + $0x154] sm:$0xf]
  %v8516 = vld [vmem:[%s7 + $0x158] sm:$0xf]
  %v8517 = vld [vmem:[%s7 + $0x15c] sm:$0xf]
  %v8518 = vld [vmem:[%s7 + $0x160] sm:$0xf]
  %v8519 = vld [vmem:[%s7 + $0x164] sm:$0xf]
  %v8520 = vld [vmem:[%s7 + $0x168] sm:$0xf]
  %v8521 = vld [vmem:[%s7 + $0x16c] sm:$0xf]
  %v8522 = vld [vmem:[%s7 + $0x170] sm:$0xf]
  %v8523 = vld [vmem:[%s7 + $0x174] sm:$0xf]
  %v8524 = vld [vmem:[%s7 + $0x178] sm:$0xf]
  %v8525 = vld [vmem:[%s7 + $0x17c] sm:$0xf]
  %v8530 = vrot.slane %v8490, 1
  %v8531 = vrot.slane %v8492, 1
  %v8532 = vsel %vm5458, %v8530, %v8531
  %v8533 = vrot.slane %v8491, 1
  %v8534 = vrot.slane %v8493, 1
  %v8535 = vsel %vm5458, %v8533, %v8534
  %v8572 = vunpack.c.l.b16 %v8494
  %v8573 = vunpack.c.l.b16 %v8495
  %v8574 = vunpack.c.l.b16 %v8496
  %v8575 = vunpack.c.l.b16 %v8497
  %v8576 = vunpack.c.l.b16 %v8498
  %v8577 = vunpack.c.l.b16 %v8499
  %v8578 = vunpack.c.l.b16 %v8500
  %v8579 = vunpack.c.l.b16 %v8501
  %v8580 = vunpack.c.l.b16 %v8502
  %v8581 = vunpack.c.l.b16 %v8503
  %v8582 = vunpack.c.l.b16 %v8504
  %v8583 = vunpack.c.l.b16 %v8505
  %v8584 = vunpack.c.l.b16 %v8506
  %v8585 = vunpack.c.l.b16 %v8507
  %v8586 = vunpack.c.l.b16 %v8508
  %v8587 = vunpack.c.l.b16 %v8509
  %v8588 = vunpack.c.l.b16 %v8510
  %v8589 = vunpack.c.l.b16 %v8511
  %v8590 = vunpack.c.l.b16 %v8512
  %v8591 = vunpack.c.l.b16 %v8513
  %v8592 = vunpack.c.l.b16 %v8514
  %v8593 = vunpack.c.l.b16 %v8515
  %v8594 = vunpack.c.l.b16 %v8516
  %v8595 = vunpack.c.l.b16 %v8517
  %v8596 = vunpack.c.l.b16 %v8518
  %v8597 = vunpack.c.l.b16 %v8519
  %v8598 = vunpack.c.l.b16 %v8520
  %v8599 = vunpack.c.l.b16 %v8521
  %v8600 = vunpack.c.l.b16 %v8522
  %v8601 = vunpack.c.l.b16 %v8523
  %v8602 = vunpack.c.l.b16 %v8524
  %v8603 = vunpack.c.l.b16 %v8525
  %v8604 = vpack.c.b16 %v8573, %v8572
  %v8605 = vpack.c.b16 %v8575, %v8574
  %v8606 = vpack.c.b16 %v8577, %v8576
  %v8607 = vpack.c.b16 %v8579, %v8578
  %v8608 = vpack.c.b16 %v8581, %v8580
  %v8609 = vpack.c.b16 %v8583, %v8582
  %v8610 = vpack.c.b16 %v8585, %v8584
  %v8611 = vpack.c.b16 %v8587, %v8586
  %v8612 = vpack.c.b16 %v8589, %v8588
  %v8613 = vpack.c.b16 %v8591, %v8590
  %v8614 = vpack.c.b16 %v8593, %v8592
  %v8615 = vpack.c.b16 %v8595, %v8594
  %v8616 = vpack.c.b16 %v8597, %v8596
  %v8617 = vpack.c.b16 %v8599, %v8598
  %v8618 = vpack.c.b16 %v8601, %v8600
  %v8619 = vpack.c.b16 %v8603, %v8602
  %8636 = vmatpush.bf16.msra.mxu0 %v8611
  %8637 = vmatpush.bf16.msra.mxu0 %v8610
  %8638 = vmatpush.bf16.msra.mxu0 %v8609
  %8639 = vmatpush.bf16.msra.mxu0 %v8608
  %8640 = vmatpush.bf16.msra.mxu0 %v8607
  %8641 = vmatpush.bf16.msra.mxu0 %v8606
  %8642 = vmatpush.bf16.msra.mxu0 %v8605
  %8643 = vmatpush.bf16.msra.mxu0 %v8604
  %8644 = vmatmul.bf16.gmra.mxu0 %v8532
  %v8645 = vpop.f32.mrf.mxu0
  %v8646 = vadd.f32 0.0, %v8645
  %v8647 = vpop.f32.mrf.mxu0
  %8648 = vmatmul.bf16.gmra.mxu0 %v8531
  %v8649 = vpop.f32.mrf.mxu0
  %v8650 = vadd.f32 0.0, %v8649
  %v8651 = vpop.f32.mrf.mxu0
  %8652 = vdwg.mxu0
  %8653 = vmatpush.bf16.msra.mxu0 %v8619
  %8654 = vmatpush.bf16.msra.mxu0 %v8618
  %8655 = vmatpush.bf16.msra.mxu0 %v8617
  %8656 = vmatpush.bf16.msra.mxu0 %v8616
  %8657 = vmatpush.bf16.msra.mxu0 %v8615
  %8658 = vmatpush.bf16.msra.mxu0 %v8614
  %8659 = vmatpush.bf16.msra.mxu0 %v8613
  %8660 = vmatpush.bf16.msra.mxu0 %v8612
  %8661 = vmatmul.bf16.gmra.mxu0 %v8535
  %v8662 = vpop.f32.mrf.mxu0
  %v8663 = vadd.f32 %v8646, %v8662
  %v8664 = vpop.f32.mrf.mxu0
  %8665 = vmatmul.bf16.gmra.mxu0 %v8534
  %v8666 = vpop.f32.mrf.mxu0
  %v8667 = vadd.f32 %v8650, %v8666
  %v8668 = vpop.f32.mrf.mxu0
  %8669 = vdwg.mxu0
  %v8670 = vadd.f32 %v8479, %v8663
  %v8671 = vadd.f32 %v8483, %v8667
  %v8672 = vld [vmem:[#allocation4] sm:$0xf0]
  %v8673 = vld [vmem:[#allocation4 + $0x8] sm:$0xf0]
  %v8674 = vld [vmem:[#allocation4 + $0x10] sm:$0xff]
  %v8675 = vld [vmem:[#allocation4 + $0x18] sm:$0xff]
  %v8676 = vld [vmem:[#allocation4 + $0x20] sm:$0xff]
  %v8677 = vld [vmem:[#allocation4 + $0x28] sm:$0xff]
  %v8678 = vld [vmem:[#allocation4 + $0x30] sm:$0x3]
  %v8679 = vld [vmem:[#allocation4 + $0x38] sm:$0x3]
  %v8680 = vpack.c.bf16 %v8674, %v8672
  %v8681 = vpack.c.bf16 %v8675, %v8673
  %v8682 = vpack.c.bf16 %v8678, %v8676
  %v8683 = vpack.c.bf16 %v8679, %v8677
  %v8684 = vld [vmem:[%s7 + $0x180] sm:$0xf]
  %v8685 = vld [vmem:[%s7 + $0x184] sm:$0xf]
  %v8686 = vld [vmem:[%s7 + $0x188] sm:$0xf]
  %v8687 = vld [vmem:[%s7 + $0x18c] sm:$0xf]
  %v8688 = vld [vmem:[%s7 + $0x190] sm:$0xf]
  %v8689 = vld [vmem:[%s7 + $0x194] sm:$0xf]
  %v8690 = vld [vmem:[%s7 + $0x198] sm:$0xf]
  %v8691 = vld [vmem:[%s7 + $0x19c] sm:$0xf]
  %v8692 = vld [vmem:[%s7 + $0x1a0] sm:$0xf]
  %v8693 = vld [vmem:[%s7 + $0x1a4] sm:$0xf]
  %v8694 = vld [vmem:[%s7 + $0x1a8] sm:$0xf]
  %v8695 = vld [vmem:[%s7 + $0x1ac] sm:$0xf]
  %v8696 = vld [vmem:[%s7 + $0x1b0] sm:$0xf]
  %v8697 = vld [vmem:[%s7 + $0x1b4] sm:$0xf]
  %v8698 = vld [vmem:[%s7 + $0x1b8] sm:$0xf]
  %v8699 = vld [vmem:[%s7 + $0x1bc] sm:$0xf]
  %v8700 = vld [vmem:[%s7 + $0x1c0] sm:$0xf]
  %v8701 = vld [vmem:[%s7 + $0x1c4] sm:$0xf]
  %v8702 = vld [vmem:[%s7 + $0x1c8] sm:$0xf]
  %v8703 = vld [vmem:[%s7 + $0x1cc] sm:$0xf]
  %v8704 = vld [vmem:[%s7 + $0x1d0] sm:$0xf]
  %v8705 = vld [vmem:[%s7 + $0x1d4] sm:$0xf]
  %v8706 = vld [vmem:[%s7 + $0x1d8] sm:$0xf]
  %v8707 = vld [vmem:[%s7 + $0x1dc] sm:$0xf]
  %v8708 = vld [vmem:[%s7 + $0x1e0] sm:$0xf]
  %v8709 = vld [vmem:[%s7 + $0x1e4] sm:$0xf]
  %v8710 = vld [vmem:[%s7 + $0x1e8] sm:$0xf]
  %v8711 = vld [vmem:[%s7 + $0x1ec] sm:$0xf]
  %v8712 = vld [vmem:[%s7 + $0x1f0] sm:$0xf]
  %v8713 = vld [vmem:[%s7 + $0x1f4] sm:$0xf]
  %v8714 = vld [vmem:[%s7 + $0x1f8] sm:$0xf]
  %v8715 = vld [vmem:[%s7 + $0x1fc] sm:$0xf]
  %v8720 = vrot.slane %v8680, 2
  %v8721 = vrot.slane %v8682, 2
  %v8722 = vsel %vm5649, %v8720, %v8721
  %v8723 = vrot.slane %v8681, 2
  %v8724 = vrot.slane %v8683, 2
  %v8725 = vsel %vm5649, %v8723, %v8724
  %v8762 = vunpack.c.l.b16 %v8684
  %v8763 = vunpack.c.l.b16 %v8685
  %v8764 = vunpack.c.l.b16 %v8686
  %v8765 = vunpack.c.l.b16 %v8687
  %v8766 = vunpack.c.l.b16 %v8688
  %v8767 = vunpack.c.l.b16 %v8689
  %v8768 = vunpack.c.l.b16 %v8690
  %v8769 = vunpack.c.l.b16 %v8691
  %v8770 = vunpack.c.l.b16 %v8692
  %v8771 = vunpack.c.l.b16 %v8693
  %v8772 = vunpack.c.l.b16 %v8694
  %v8773 = vunpack.c.l.b16 %v8695
  %v8774 = vunpack.c.l.b16 %v8696
  %v8775 = vunpack.c.l.b16 %v8697
  %v8776 = vunpack.c.l.b16 %v8698
  %v8777 = vunpack.c.l.b16 %v8699
  %v8778 = vunpack.c.l.b16 %v8700
  %v8779 = vunpack.c.l.b16 %v8701
  %v8780 = vunpack.c.l.b16 %v8702
  %v8781 = vunpack.c.l.b16 %v8703
  %v8782 = vunpack.c.l.b16 %v8704
  %v8783 = vunpack.c.l.b16 %v8705
  %v8784 = vunpack.c.l.b16 %v8706
  %v8785 = vunpack.c.l.b16 %v8707
  %v8786 = vunpack.c.l.b16 %v8708
  %v8787 = vunpack.c.l.b16 %v8709
  %v8788 = vunpack.c.l.b16 %v8710
  %v8789 = vunpack.c.l.b16 %v8711
  %v8790 = vunpack.c.l.b16 %v8712
  %v8791 = vunpack.c.l.b16 %v8713
  %v8792 = vunpack.c.l.b16 %v8714
  %v8793 = vunpack.c.l.b16 %v8715
  %v8794 = vpack.c.b16 %v8763, %v8762
  %v8795 = vpack.c.b16 %v8765, %v8764
  %v8796 = vpack.c.b16 %v8767, %v8766
  %v8797 = vpack.c.b16 %v8769, %v8768
  %v8798 = vpack.c.b16 %v8771, %v8770
  %v8799 = vpack.c.b16 %v8773, %v8772
  %v8800 = vpack.c.b16 %v8775, %v8774
  %v8801 = vpack.c.b16 %v8777, %v8776
  %v8802 = vpack.c.b16 %v8779, %v8778
  %v8803 = vpack.c.b16 %v8781, %v8780
  %v8804 = vpack.c.b16 %v8783, %v8782
  %v8805 = vpack.c.b16 %v8785, %v8784
  %v8806 = vpack.c.b16 %v8787, %v8786
  %v8807 = vpack.c.b16 %v8789, %v8788
  %v8808 = vpack.c.b16 %v8791, %v8790
  %v8809 = vpack.c.b16 %v8793, %v8792
  %8826 = vmatpush.bf16.msra.mxu0 %v8801
  %8827 = vmatpush.bf16.msra.mxu0 %v8800
  %8828 = vmatpush.bf16.msra.mxu0 %v8799
  %8829 = vmatpush.bf16.msra.mxu0 %v8798
  %8830 = vmatpush.bf16.msra.mxu0 %v8797
  %8831 = vmatpush.bf16.msra.mxu0 %v8796
  %8832 = vmatpush.bf16.msra.mxu0 %v8795
  %8833 = vmatpush.bf16.msra.mxu0 %v8794
  %8834 = vmatmul.bf16.gmra.mxu0 %v8722
  %v8835 = vpop.f32.mrf.mxu0
  %v8836 = vadd.f32 0.0, %v8835
  %v8837 = vpop.f32.mrf.mxu0
  %8838 = vmatmul.bf16.gmra.mxu0 %v8721
  %v8839 = vpop.f32.mrf.mxu0
  %v8840 = vadd.f32 0.0, %v8839
  %v8841 = vpop.f32.mrf.mxu0
  %8842 = vdwg.mxu0
  %8843 = vmatpush.bf16.msra.mxu0 %v8809
  %8844 = vmatpush.bf16.msra.mxu0 %v8808
  %8845 = vmatpush.bf16.msra.mxu0 %v8807
  %8846 = vmatpush.bf16.msra.mxu0 %v8806
  %8847 = vmatpush.bf16.msra.mxu0 %v8805
  %8848 = vmatpush.bf16.msra.mxu0 %v8804
  %8849 = vmatpush.bf16.msra.mxu0 %v8803
  %8850 = vmatpush.bf16.msra.mxu0 %v8802
  %8851 = vmatmul.bf16.gmra.mxu0 %v8725
  %v8852 = vpop.f32.mrf.mxu0
  %v8853 = vadd.f32 %v8836, %v8852
  %v8854 = vpop.f32.mrf.mxu0
  %8855 = vmatmul.bf16.gmra.mxu0 %v8724
  %v8856 = vpop.f32.mrf.mxu0
  %v8857 = vadd.f32 %v8840, %v8856
  %v8858 = vpop.f32.mrf.mxu0
  %8859 = vdwg.mxu0
  %v8860 = vadd.f32 %v8670, %v8853
  %v8861 = vadd.f32 %v8671, %v8857
  %v8862 = vld [vmem:[#allocation4] sm:$0xe0]
  %v8863 = vld [vmem:[#allocation4 + $0x8] sm:$0xe0]
  %v8864 = vld [vmem:[#allocation4 + $0x30] sm:$0x7]
  %v8865 = vld [vmem:[#allocation4 + $0x38] sm:$0x7]
  %v8866 = vpack.c.bf16 %v8674, %v8862
  %v8867 = vpack.c.bf16 %v8675, %v8863
  %v8868 = vpack.c.bf16 %v8864, %v8676
  %v8869 = vpack.c.bf16 %v8865, %v8677
  %v8870 = vld [vmem:[%s7 + $0x200] sm:$0xf]
  %v8871 = vld [vmem:[%s7 + $0x204] sm:$0xf]
  %v8872 = vld [vmem:[%s7 + $0x208] sm:$0xf]
  %v8873 = vld [vmem:[%s7 + $0x20c] sm:$0xf]
  %v8874 = vld [vmem:[%s7 + $0x210] sm:$0xf]
  %v8875 = vld [vmem:[%s7 + $0x214] sm:$0xf]
  %v8876 = vld [vmem:[%s7 + $0x218] sm:$0xf]
  %v8877 = vld [vmem:[%s7 + $0x21c] sm:$0xf]
  %v8878 = vld [vmem:[%s7 + $0x220] sm:$0xf]
  %v8879 = vld [vmem:[%s7 + $0x224] sm:$0xf]
  %v8880 = vld [vmem:[%s7 + $0x228] sm:$0xf]
  %v8881 = vld [vmem:[%s7 + $0x22c] sm:$0xf]
  %v8882 = vld [vmem:[%s7 + $0x230] sm:$0xf]
  %v8883 = vld [vmem:[%s7 + $0x234] sm:$0xf]
  %v8884 = vld [vmem:[%s7 + $0x238] sm:$0xf]
  %v8885 = vld [vmem:[%s7 + $0x23c] sm:$0xf]
  %v8886 = vld [vmem:[%s7 + $0x240] sm:$0xf]
  %v8887 = vld [vmem:[%s7 + $0x244] sm:$0xf]
  %v8888 = vld [vmem:[%s7 + $0x248] sm:$0xf]
  %v8889 = vld [vmem:[%s7 + $0x24c] sm:$0xf]
  %v8890 = vld [vmem:[%s7 + $0x250] sm:$0xf]
  %v8891 = vld [vmem:[%s7 + $0x254] sm:$0xf]
  %v8892 = vld [vmem:[%s7 + $0x258] sm:$0xf]
  %v8893 = vld [vmem:[%s7 + $0x25c] sm:$0xf]
  %v8894 = vld [vmem:[%s7 + $0x260] sm:$0xf]
  %v8895 = vld [vmem:[%s7 + $0x264] sm:$0xf]
  %v8896 = vld [vmem:[%s7 + $0x268] sm:$0xf]
  %v8897 = vld [vmem:[%s7 + $0x26c] sm:$0xf]
  %v8898 = vld [vmem:[%s7 + $0x270] sm:$0xf]
  %v8899 = vld [vmem:[%s7 + $0x274] sm:$0xf]
  %v8900 = vld [vmem:[%s7 + $0x278] sm:$0xf]
  %v8901 = vld [vmem:[%s7 + $0x27c] sm:$0xf]
  %v8903 = vshrl.u32 %v8866, 16
  %v8905 = vrot.slane %v8903, 2
  %v8906 = vshll.u32 %v8866, 16
  %v8908 = vrot.slane %v8906, 3
  %v8909 = vor.u32 %v8905, %v8908
  %v8911 = vshrl.u32 %v8868, 16
  %v8913 = vrot.slane %v8911, 2
  %v8914 = vshll.u32 %v8868, 16
  %v8916 = vrot.slane %v8914, 3
  %v8917 = vor.u32 %v8913, %v8916
  %v8918 = vsel %vm5832, %v8909, %v8917
  %v8920 = vshrl.u32 %v8867, 16
  %v8922 = vrot.slane %v8920, 2
  %v8923 = vshll.u32 %v8867, 16
  %v8925 = vrot.slane %v8923, 3
  %v8926 = vor.u32 %v8922, %v8925
  %v8928 = vshrl.u32 %v8869, 16
  %v8930 = vrot.slane %v8928, 2
  %v8931 = vshll.u32 %v8869, 16
  %v8933 = vrot.slane %v8931, 3
  %v8934 = vor.u32 %v8930, %v8933
  %v8935 = vsel %vm5832, %v8926, %v8934
  %v8972 = vunpack.c.l.b16 %v8870
  %v8973 = vunpack.c.l.b16 %v8871
  %v8974 = vunpack.c.l.b16 %v8872
  %v8975 = vunpack.c.l.b16 %v8873
  %v8976 = vunpack.c.l.b16 %v8874
  %v8977 = vunpack.c.l.b16 %v8875
  %v8978 = vunpack.c.l.b16 %v8876
  %v8979 = vunpack.c.l.b16 %v8877
  %v8980 = vunpack.c.l.b16 %v8878
  %v8981 = vunpack.c.l.b16 %v8879
  %v8982 = vunpack.c.l.b16 %v8880
  %v8983 = vunpack.c.l.b16 %v8881
  %v8984 = vunpack.c.l.b16 %v8882
  %v8985 = vunpack.c.l.b16 %v8883
  %v8986 = vunpack.c.l.b16 %v8884
  %v8987 = vunpack.c.l.b16 %v8885
  %v8988 = vunpack.c.l.b16 %v8886
  %v8989 = vunpack.c.l.b16 %v8887
  %v8990 = vunpack.c.l.b16 %v8888
  %v8991 = vunpack.c.l.b16 %v8889
  %v8992 = vunpack.c.l.b16 %v8890
  %v8993 = vunpack.c.l.b16 %v8891
  %v8994 = vunpack.c.l.b16 %v8892
  %v8995 = vunpack.c.l.b16 %v8893
  %v8996 = vunpack.c.l.b16 %v8894
  %v8997 = vunpack.c.l.b16 %v8895
  %v8998 = vunpack.c.l.b16 %v8896
  %v8999 = vunpack.c.l.b16 %v8897
  %v9000 = vunpack.c.l.b16 %v8898
  %v9001 = vunpack.c.l.b16 %v8899
  %v9002 = vunpack.c.l.b16 %v8900
  %v9003 = vunpack.c.l.b16 %v8901
  %v9004 = vpack.c.b16 %v8973, %v8972
  %v9005 = vpack.c.b16 %v8975, %v8974
  %v9006 = vpack.c.b16 %v8977, %v8976
  %v9007 = vpack.c.b16 %v8979, %v8978
  %v9008 = vpack.c.b16 %v8981, %v8980
  %v9009 = vpack.c.b16 %v8983, %v8982
  %v9010 = vpack.c.b16 %v8985, %v8984
  %v9011 = vpack.c.b16 %v8987, %v8986
  %v9012 = vpack.c.b16 %v8989, %v8988
  %v9013 = vpack.c.b16 %v8991, %v8990
  %v9014 = vpack.c.b16 %v8993, %v8992
  %v9015 = vpack.c.b16 %v8995, %v8994
  %v9016 = vpack.c.b16 %v8997, %v8996
  %v9017 = vpack.c.b16 %v8999, %v8998
  %v9018 = vpack.c.b16 %v9001, %v9000
  %v9019 = vpack.c.b16 %v9003, %v9002
  %9036 = vmatpush.bf16.msra.mxu0 %v9011
  %9037 = vmatpush.bf16.msra.mxu0 %v9010
  %9038 = vmatpush.bf16.msra.mxu0 %v9009
  %9039 = vmatpush.bf16.msra.mxu0 %v9008
  %9040 = vmatpush.bf16.msra.mxu0 %v9007
  %9041 = vmatpush.bf16.msra.mxu0 %v9006
  %9042 = vmatpush.bf16.msra.mxu0 %v9005
  %9043 = vmatpush.bf16.msra.mxu0 %v9004
  %9044 = vmatmul.bf16.gmra.mxu0 %v8918
  %v9045 = vpop.f32.mrf.mxu0
  %v9046 = vadd.f32 0.0, %v9045
  %v9047 = vpop.f32.mrf.mxu0
  %9048 = vmatmul.bf16.gmra.mxu0 %v8917
  %v9049 = vpop.f32.mrf.mxu0
  %v9050 = vadd.f32 0.0, %v9049
  %v9051 = vpop.f32.mrf.mxu0
  %9052 = vdwg.mxu0
  %9053 = vmatpush.bf16.msra.mxu0 %v9019
  %9054 = vmatpush.bf16.msra.mxu0 %v9018
  %9055 = vmatpush.bf16.msra.mxu0 %v9017
  %9056 = vmatpush.bf16.msra.mxu0 %v9016
  %9057 = vmatpush.bf16.msra.mxu0 %v9015
  %9058 = vmatpush.bf16.msra.mxu0 %v9014
  %9059 = vmatpush.bf16.msra.mxu0 %v9013
  %9060 = vmatpush.bf16.msra.mxu0 %v9012
  %9061 = vmatmul.bf16.gmra.mxu0 %v8935
  %v9062 = vpop.f32.mrf.mxu0
  %v9063 = vadd.f32 %v9046, %v9062
  %v9064 = vpop.f32.mrf.mxu0
  %9065 = vmatmul.bf16.gmra.mxu0 %v8934
  %v9066 = vpop.f32.mrf.mxu0
  %v9067 = vadd.f32 %v9050, %v9066
  %v9068 = vpop.f32.mrf.mxu0
  %9069 = vdwg.mxu0
  %v9070 = vadd.f32 %v8860, %v9063
  %v9071 = vadd.f32 %v8861, %v9067
  %v9072 = vld [vmem:[#allocation4] sm:$0xc0]
  %v9073 = vld [vmem:[#allocation4 + $0x8] sm:$0xc0]
  %v9074 = vld [vmem:[#allocation4 + $0x30] sm:$0xf]
  %v9075 = vld [vmem:[#allocation4 + $0x38] sm:$0xf]
  %v9076 = vpack.c.bf16 %v8674, %v9072
  %v9077 = vpack.c.bf16 %v8675, %v9073
  %v9078 = vpack.c.bf16 %v9074, %v8676
  %v9079 = vpack.c.bf16 %v9075, %v8677
  %v9080 = vld [vmem:[%s7 + $0x280] sm:$0xf]
  %v9081 = vld [vmem:[%s7 + $0x284] sm:$0xf]
  %v9082 = vld [vmem:[%s7 + $0x288] sm:$0xf]
  %v9083 = vld [vmem:[%s7 + $0x28c] sm:$0xf]
  %v9084 = vld [vmem:[%s7 + $0x290] sm:$0xf]
  %v9085 = vld [vmem:[%s7 + $0x294] sm:$0xf]
  %v9086 = vld [vmem:[%s7 + $0x298] sm:$0xf]
  %v9087 = vld [vmem:[%s7 + $0x29c] sm:$0xf]
  %v9088 = vld [vmem:[%s7 + $0x2a0] sm:$0xf]
  %v9089 = vld [vmem:[%s7 + $0x2a4] sm:$0xf]
  %v9090 = vld [vmem:[%s7 + $0x2a8] sm:$0xf]
  %v9091 = vld [vmem:[%s7 + $0x2ac] sm:$0xf]
  %v9092 = vld [vmem:[%s7 + $0x2b0] sm:$0xf]
  %v9093 = vld [vmem:[%s7 + $0x2b4] sm:$0xf]
  %v9094 = vld [vmem:[%s7 + $0x2b8] sm:$0xf]
  %v9095 = vld [vmem:[%s7 + $0x2bc] sm:$0xf]
  %v9096 = vld [vmem:[%s7 + $0x2c0] sm:$0xf]
  %v9097 = vld [vmem:[%s7 + $0x2c4] sm:$0xf]
  %v9098 = vld [vmem:[%s7 + $0x2c8] sm:$0xf]
  %v9099 = vld [vmem:[%s7 + $0x2cc] sm:$0xf]
  %v9100 = vld [vmem:[%s7 + $0x2d0] sm:$0xf]
  %v9101 = vld [vmem:[%s7 + $0x2d4] sm:$0xf]
  %v9102 = vld [vmem:[%s7 + $0x2d8] sm:$0xf]
  %v9103 = vld [vmem:[%s7 + $0x2dc] sm:$0xf]
  %v9104 = vld [vmem:[%s7 + $0x2e0] sm:$0xf]
  %v9105 = vld [vmem:[%s7 + $0x2e4] sm:$0xf]
  %v9106 = vld [vmem:[%s7 + $0x2e8] sm:$0xf]
  %v9107 = vld [vmem:[%s7 + $0x2ec] sm:$0xf]
  %v9108 = vld [vmem:[%s7 + $0x2f0] sm:$0xf]
  %v9109 = vld [vmem:[%s7 + $0x2f4] sm:$0xf]
  %v9110 = vld [vmem:[%s7 + $0x2f8] sm:$0xf]
  %v9111 = vld [vmem:[%s7 + $0x2fc] sm:$0xf]
  %v9116 = vrot.slane %v9076, 3
  %v9117 = vrot.slane %v9078, 3
  %v9118 = vsel %vm6047, %v9116, %v9117
  %v9119 = vrot.slane %v9077, 3
  %v9120 = vrot.slane %v9079, 3
  %v9121 = vsel %vm6047, %v9119, %v9120
  %v9158 = vunpack.c.l.b16 %v9080
  %v9159 = vunpack.c.l.b16 %v9081
  %v9160 = vunpack.c.l.b16 %v9082
  %v9161 = vunpack.c.l.b16 %v9083
  %v9162 = vunpack.c.l.b16 %v9084
  %v9163 = vunpack.c.l.b16 %v9085
  %v9164 = vunpack.c.l.b16 %v9086
  %v9165 = vunpack.c.l.b16 %v9087
  %v9166 = vunpack.c.l.b16 %v9088
  %v9167 = vunpack.c.l.b16 %v9089
  %v9168 = vunpack.c.l.b16 %v9090
  %v9169 = vunpack.c.l.b16 %v9091
  %v9170 = vunpack.c.l.b16 %v9092
  %v9171 = vunpack.c.l.b16 %v9093
  %v9172 = vunpack.c.l.b16 %v9094
  %v9173 = vunpack.c.l.b16 %v9095
  %v9174 = vunpack.c.l.b16 %v9096
  %v9175 = vunpack.c.l.b16 %v9097
  %v9176 = vunpack.c.l.b16 %v9098
  %v9177 = vunpack.c.l.b16 %v9099
  %v9178 = vunpack.c.l.b16 %v9100
  %v9179 = vunpack.c.l.b16 %v9101
  %v9180 = vunpack.c.l.b16 %v9102
  %v9181 = vunpack.c.l.b16 %v9103
  %v9182 = vunpack.c.l.b16 %v9104
  %v9183 = vunpack.c.l.b16 %v9105
  %v9184 = vunpack.c.l.b16 %v9106
  %v9185 = vunpack.c.l.b16 %v9107
  %v9186 = vunpack.c.l.b16 %v9108
  %v9187 = vunpack.c.l.b16 %v9109
  %v9188 = vunpack.c.l.b16 %v9110
  %v9189 = vunpack.c.l.b16 %v9111
  %v9190 = vpack.c.b16 %v9159, %v9158
  %v9191 = vpack.c.b16 %v9161, %v9160
  %v9192 = vpack.c.b16 %v9163, %v9162
  %v9193 = vpack.c.b16 %v9165, %v9164
  %v9194 = vpack.c.b16 %v9167, %v9166
  %v9195 = vpack.c.b16 %v9169, %v9168
  %v9196 = vpack.c.b16 %v9171, %v9170
  %v9197 = vpack.c.b16 %v9173, %v9172
  %v9198 = vpack.c.b16 %v9175, %v9174
  %v9199 = vpack.c.b16 %v9177, %v9176
  %v9200 = vpack.c.b16 %v9179, %v9178
  %v9201 = vpack.c.b16 %v9181, %v9180
  %v9202 = vpack.c.b16 %v9183, %v9182
  %v9203 = vpack.c.b16 %v9185, %v9184
  %v9204 = vpack.c.b16 %v9187, %v9186
  %v9205 = vpack.c.b16 %v9189, %v9188
  %9222 = vmatpush.bf16.msra.mxu0 %v9197
  %9223 = vmatpush.bf16.msra.mxu0 %v9196
  %9224 = vmatpush.bf16.msra.mxu0 %v9195
  %9225 = vmatpush.bf16.msra.mxu0 %v9194
  %9226 = vmatpush.bf16.msra.mxu0 %v9193
  %9227 = vmatpush.bf16.msra.mxu0 %v9192
  %9228 = vmatpush.bf16.msra.mxu0 %v9191
  %9229 = vmatpush.bf16.msra.mxu0 %v9190
  %9230 = vmatmul.bf16.gmra.mxu0 %v9118
  %v9231 = vpop.f32.mrf.mxu0
  %v9232 = vadd.f32 0.0, %v9231
  %v9233 = vpop.f32.mrf.mxu0
  %9234 = vmatmul.bf16.gmra.mxu0 %v9117
  %v9235 = vpop.f32.mrf.mxu0
  %v9236 = vadd.f32 0.0, %v9235
  %v9237 = vpop.f32.mrf.mxu0
  %9238 = vdwg.mxu0
  %9239 = vmatpush.bf16.msra.mxu0 %v9205
  %9240 = vmatpush.bf16.msra.mxu0 %v9204
  %9241 = vmatpush.bf16.msra.mxu0 %v9203
  %9242 = vmatpush.bf16.msra.mxu0 %v9202
  %9243 = vmatpush.bf16.msra.mxu0 %v9201
  %9244 = vmatpush.bf16.msra.mxu0 %v9200
  %9245 = vmatpush.bf16.msra.mxu0 %v9199
  %9246 = vmatpush.bf16.msra.mxu0 %v9198
  %9247 = vmatmul.bf16.gmra.mxu0 %v9121
  %v9248 = vpop.f32.mrf.mxu0
  %v9249 = vadd.f32 %v9232, %v9248
  %v9250 = vpop.f32.mrf.mxu0
  %9251 = vmatmul.bf16.gmra.mxu0 %v9120
  %v9252 = vpop.f32.mrf.mxu0
  %v9253 = vadd.f32 %v9236, %v9252
  %v9254 = vpop.f32.mrf.mxu0
  %9255 = vdwg.mxu0
  %v9256 = vadd.f32 %v9070, %v9249
  %v9257 = vadd.f32 %v9071, %v9253
  %v9258 = vld [vmem:[#allocation4 + $0x30] sm:$0x3f]
  %v9259 = vld [vmem:[#allocation4 + $0x38] sm:$0x3f]
  %v9260 = vpack.c.bf16 %v8676, %v8674
  %v9261 = vpack.c.bf16 %v8677, %v8675
  %v9262 = vpack.c.bf16 %v9258, %v9258
  %v9263 = vpack.c.bf16 %v9259, %v9259
  %v9264 = vld [vmem:[%s7 + $0x300] sm:$0xf]
  %v9265 = vld [vmem:[%s7 + $0x304] sm:$0xf]
  %v9266 = vld [vmem:[%s7 + $0x308] sm:$0xf]
  %v9267 = vld [vmem:[%s7 + $0x30c] sm:$0xf]
  %v9268 = vld [vmem:[%s7 + $0x310] sm:$0xf]
  %v9269 = vld [vmem:[%s7 + $0x314] sm:$0xf]
  %v9270 = vld [vmem:[%s7 + $0x318] sm:$0xf]
  %v9271 = vld [vmem:[%s7 + $0x31c] sm:$0xf]
  %v9272 = vld [vmem:[%s7 + $0x320] sm:$0xf]
  %v9273 = vld [vmem:[%s7 + $0x324] sm:$0xf]
  %v9274 = vld [vmem:[%s7 + $0x328] sm:$0xf]
  %v9275 = vld [vmem:[%s7 + $0x32c] sm:$0xf]
  %v9276 = vld [vmem:[%s7 + $0x330] sm:$0xf]
  %v9277 = vld [vmem:[%s7 + $0x334] sm:$0xf]
  %v9278 = vld [vmem:[%s7 + $0x338] sm:$0xf]
  %v9279 = vld [vmem:[%s7 + $0x33c] sm:$0xf]
  %v9280 = vld [vmem:[%s7 + $0x340] sm:$0xf]
  %v9281 = vld [vmem:[%s7 + $0x344] sm:$0xf]
  %v9282 = vld [vmem:[%s7 + $0x348] sm:$0xf]
  %v9283 = vld [vmem:[%s7 + $0x34c] sm:$0xf]
  %v9284 = vld [vmem:[%s7 + $0x350] sm:$0xf]
  %v9285 = vld [vmem:[%s7 + $0x354] sm:$0xf]
  %v9286 = vld [vmem:[%s7 + $0x358] sm:$0xf]
  %v9287 = vld [vmem:[%s7 + $0x35c] sm:$0xf]
  %v9288 = vld [vmem:[%s7 + $0x360] sm:$0xf]
  %v9289 = vld [vmem:[%s7 + $0x364] sm:$0xf]
  %v9290 = vld [vmem:[%s7 + $0x368] sm:$0xf]
  %v9291 = vld [vmem:[%s7 + $0x36c] sm:$0xf]
  %v9292 = vld [vmem:[%s7 + $0x370] sm:$0xf]
  %v9293 = vld [vmem:[%s7 + $0x374] sm:$0xf]
  %v9294 = vld [vmem:[%s7 + $0x378] sm:$0xf]
  %v9295 = vld [vmem:[%s7 + $0x37c] sm:$0xf]
  %v9328 = vunpack.c.l.b16 %v9264
  %v9329 = vunpack.c.l.b16 %v9265
  %v9330 = vunpack.c.l.b16 %v9266
  %v9331 = vunpack.c.l.b16 %v9267
  %v9332 = vunpack.c.l.b16 %v9268
  %v9333 = vunpack.c.l.b16 %v9269
  %v9334 = vunpack.c.l.b16 %v9270
  %v9335 = vunpack.c.l.b16 %v9271
  %v9336 = vunpack.c.l.b16 %v9272
  %v9337 = vunpack.c.l.b16 %v9273
  %v9338 = vunpack.c.l.b16 %v9274
  %v9339 = vunpack.c.l.b16 %v9275
  %v9340 = vunpack.c.l.b16 %v9276
  %v9341 = vunpack.c.l.b16 %v9277
  %v9342 = vunpack.c.l.b16 %v9278
  %v9343 = vunpack.c.l.b16 %v9279
  %v9344 = vunpack.c.l.b16 %v9280
  %v9345 = vunpack.c.l.b16 %v9281
  %v9346 = vunpack.c.l.b16 %v9282
  %v9347 = vunpack.c.l.b16 %v9283
  %v9348 = vunpack.c.l.b16 %v9284
  %v9349 = vunpack.c.l.b16 %v9285
  %v9350 = vunpack.c.l.b16 %v9286
  %v9351 = vunpack.c.l.b16 %v9287
  %v9352 = vunpack.c.l.b16 %v9288
  %v9353 = vunpack.c.l.b16 %v9289
  %v9354 = vunpack.c.l.b16 %v9290
  %v9355 = vunpack.c.l.b16 %v9291
  %v9356 = vunpack.c.l.b16 %v9292
  %v9357 = vunpack.c.l.b16 %v9293
  %v9358 = vunpack.c.l.b16 %v9294
  %v9359 = vunpack.c.l.b16 %v9295
  %v9360 = vpack.c.b16 %v9329, %v9328
  %v9361 = vpack.c.b16 %v9331, %v9330
  %v9362 = vpack.c.b16 %v9333, %v9332
  %v9363 = vpack.c.b16 %v9335, %v9334
  %v9364 = vpack.c.b16 %v9337, %v9336
  %v9365 = vpack.c.b16 %v9339, %v9338
  %v9366 = vpack.c.b16 %v9341, %v9340
  %v9367 = vpack.c.b16 %v9343, %v9342
  %v9368 = vpack.c.b16 %v9345, %v9344
  %v9369 = vpack.c.b16 %v9347, %v9346
  %v9370 = vpack.c.b16 %v9349, %v9348
  %v9371 = vpack.c.b16 %v9351, %v9350
  %v9372 = vpack.c.b16 %v9353, %v9352
  %v9373 = vpack.c.b16 %v9355, %v9354
  %v9374 = vpack.c.b16 %v9357, %v9356
  %v9375 = vpack.c.b16 %v9359, %v9358
  %9392 = vmatpush.bf16.msra.mxu0 %v9367
  %9393 = vmatpush.bf16.msra.mxu0 %v9366
  %9394 = vmatpush.bf16.msra.mxu0 %v9365
  %9395 = vmatpush.bf16.msra.mxu0 %v9364
  %9396 = vmatpush.bf16.msra.mxu0 %v9363
  %9397 = vmatpush.bf16.msra.mxu0 %v9362
  %9398 = vmatpush.bf16.msra.mxu0 %v9361
  %9399 = vmatpush.bf16.msra.mxu0 %v9360
  %9400 = vmatmul.bf16.gmra.mxu0 %v9260
  %v9401 = vpop.f32.mrf.mxu0
  %v9402 = vadd.f32 0.0, %v9401
  %v9403 = vpop.f32.mrf.mxu0
  %9404 = vmatmul.bf16.gmra.mxu0 %v9262
  %v9405 = vpop.f32.mrf.mxu0
  %v9406 = vadd.f32 0.0, %v9405
  %v9407 = vpop.f32.mrf.mxu0
  %9408 = vdwg.mxu0
  %9409 = vmatpush.bf16.msra.mxu0 %v9375
  %9410 = vmatpush.bf16.msra.mxu0 %v9374
  %9411 = vmatpush.bf16.msra.mxu0 %v9373
  %9412 = vmatpush.bf16.msra.mxu0 %v9372
  %9413 = vmatpush.bf16.msra.mxu0 %v9371
  %9414 = vmatpush.bf16.msra.mxu0 %v9370
  %9415 = vmatpush.bf16.msra.mxu0 %v9369
  %9416 = vmatpush.bf16.msra.mxu0 %v9368
  %9417 = vmatmul.bf16.gmra.mxu0 %v9261
  %v9418 = vpop.f32.mrf.mxu0
  %v9419 = vadd.f32 %v9402, %v9418
  %v9420 = vpop.f32.mrf.mxu0
  %9421 = vmatmul.bf16.gmra.mxu0 %v9263
  %v9422 = vpop.f32.mrf.mxu0
  %v9423 = vadd.f32 %v9406, %v9422
  %v9424 = vpop.f32.mrf.mxu0
  %9425 = vdwg.mxu0
  %v9426 = vadd.f32 %v9256, %v9419
  %v9427 = vadd.f32 %v9257, %v9423
  %v9428 = vld [vmem:[#allocation4 + $0x10] sm:$0xfe]
  %v9429 = vld [vmem:[#allocation4 + $0x18] sm:$0xfe]
  %v9430 = vld [vmem:[#allocation4 + $0x30] sm:$0x7f]
  %v9431 = vld [vmem:[#allocation4 + $0x38] sm:$0x7f]
  %v9432 = vpack.c.bf16 %v8676, %v9428
  %v9433 = vpack.c.bf16 %v8677, %v9429
  %v9434 = vpack.c.bf16 %v9430, %v9430
  %v9435 = vpack.c.bf16 %v9431, %v9431
  %v9436 = vld [vmem:[%s7 + $0x380] sm:$0xf]
  %v9437 = vld [vmem:[%s7 + $0x384] sm:$0xf]
  %v9438 = vld [vmem:[%s7 + $0x388] sm:$0xf]
  %v9439 = vld [vmem:[%s7 + $0x38c] sm:$0xf]
  %v9440 = vld [vmem:[%s7 + $0x390] sm:$0xf]
  %v9441 = vld [vmem:[%s7 + $0x394] sm:$0xf]
  %v9442 = vld [vmem:[%s7 + $0x398] sm:$0xf]
  %v9443 = vld [vmem:[%s7 + $0x39c] sm:$0xf]
  %v9444 = vld [vmem:[%s7 + $0x3a0] sm:$0xf]
  %v9445 = vld [vmem:[%s7 + $0x3a4] sm:$0xf]
  %v9446 = vld [vmem:[%s7 + $0x3a8] sm:$0xf]
  %v9447 = vld [vmem:[%s7 + $0x3ac] sm:$0xf]
  %v9448 = vld [vmem:[%s7 + $0x3b0] sm:$0xf]
  %v9449 = vld [vmem:[%s7 + $0x3b4] sm:$0xf]
  %v9450 = vld [vmem:[%s7 + $0x3b8] sm:$0xf]
  %v9451 = vld [vmem:[%s7 + $0x3bc] sm:$0xf]
  %v9452 = vld [vmem:[%s7 + $0x3c0] sm:$0xf]
  %v9453 = vld [vmem:[%s7 + $0x3c4] sm:$0xf]
  %v9454 = vld [vmem:[%s7 + $0x3c8] sm:$0xf]
  %v9455 = vld [vmem:[%s7 + $0x3cc] sm:$0xf]
  %v9456 = vld [vmem:[%s7 + $0x3d0] sm:$0xf]
  %v9457 = vld [vmem:[%s7 + $0x3d4] sm:$0xf]
  %v9458 = vld [vmem:[%s7 + $0x3d8] sm:$0xf]
  %v9459 = vld [vmem:[%s7 + $0x3dc] sm:$0xf]
  %v9460 = vld [vmem:[%s7 + $0x3e0] sm:$0xf]
  %v9461 = vld [vmem:[%s7 + $0x3e4] sm:$0xf]
  %v9462 = vld [vmem:[%s7 + $0x3e8] sm:$0xf]
  %v9463 = vld [vmem:[%s7 + $0x3ec] sm:$0xf]
  %v9464 = vld [vmem:[%s7 + $0x3f0] sm:$0xf]
  %v9465 = vld [vmem:[%s7 + $0x3f4] sm:$0xf]
  %v9466 = vld [vmem:[%s7 + $0x3f8] sm:$0xf]
  %v9467 = vld [vmem:[%s7 + $0x3fc] sm:$0xf]
  %v9469 = vshrl.u32 %v9432, 16
  %v9471 = vshll.u32 %v9432, 16
  %v9473 = vrot.slane %v9471, 1
  %v9474 = vor.u32 %v9469, %v9473
  %v9476 = vshll.u32 %v9434, 16
  %v9478 = vrot.slane %v9476, 1
  %v9479 = vsel %vm5119, %v9474, %v9478
  %v9481 = vshrl.u32 %v9433, 16
  %v9483 = vshll.u32 %v9433, 16
  %v9485 = vrot.slane %v9483, 1
  %v9486 = vor.u32 %v9481, %v9485
  %v9488 = vshll.u32 %v9435, 16
  %v9490 = vrot.slane %v9488, 1
  %v9491 = vsel %vm5119, %v9486, %v9490
  %v9492 = vshrl.u32 %v9434, 16
  %v9494 = vor.u32 %v9492, %v9478
  %v9495 = vshrl.u32 %v9435, 16
  %v9497 = vor.u32 %v9495, %v9490
  %v9534 = vunpack.c.l.b16 %v9436
  %v9535 = vunpack.c.l.b16 %v9437
  %v9536 = vunpack.c.l.b16 %v9438
  %v9537 = vunpack.c.l.b16 %v9439
  %v9538 = vunpack.c.l.b16 %v9440
  %v9539 = vunpack.c.l.b16 %v9441
  %v9540 = vunpack.c.l.b16 %v9442
  %v9541 = vunpack.c.l.b16 %v9443
  %v9542 = vunpack.c.l.b16 %v9444
  %v9543 = vunpack.c.l.b16 %v9445
  %v9544 = vunpack.c.l.b16 %v9446
  %v9545 = vunpack.c.l.b16 %v9447
  %v9546 = vunpack.c.l.b16 %v9448
  %v9547 = vunpack.c.l.b16 %v9449
  %v9548 = vunpack.c.l.b16 %v9450
  %v9549 = vunpack.c.l.b16 %v9451
  %v9550 = vunpack.c.l.b16 %v9452
  %v9551 = vunpack.c.l.b16 %v9453
  %v9552 = vunpack.c.l.b16 %v9454
  %v9553 = vunpack.c.l.b16 %v9455
  %v9554 = vunpack.c.l.b16 %v9456
  %v9555 = vunpack.c.l.b16 %v9457
  %v9556 = vunpack.c.l.b16 %v9458
  %v9557 = vunpack.c.l.b16 %v9459
  %v9558 = vunpack.c.l.b16 %v9460
  %v9559 = vunpack.c.l.b16 %v9461
  %v9560 = vunpack.c.l.b16 %v9462
  %v9561 = vunpack.c.l.b16 %v9463
  %v9562 = vunpack.c.l.b16 %v9464
  %v9563 = vunpack.c.l.b16 %v9465
  %v9564 = vunpack.c.l.b16 %v9466
  %v9565 = vunpack.c.l.b16 %v9467
  %v9566 = vpack.c.b16 %v9535, %v9534
  %v9567 = vpack.c.b16 %v9537, %v9536
  %v9568 = vpack.c.b16 %v9539, %v9538
  %v9569 = vpack.c.b16 %v9541, %v9540
  %v9570 = vpack.c.b16 %v9543, %v9542
  %v9571 = vpack.c.b16 %v9545, %v9544
  %v9572 = vpack.c.b16 %v9547, %v9546
  %v9573 = vpack.c.b16 %v9549, %v9548
  %v9574 = vpack.c.b16 %v9551, %v9550
  %v9575 = vpack.c.b16 %v9553, %v9552
  %v9576 = vpack.c.b16 %v9555, %v9554
  %v9577 = vpack.c.b16 %v9557, %v9556
  %v9578 = vpack.c.b16 %v9559, %v9558
  %v9579 = vpack.c.b16 %v9561, %v9560
  %v9580 = vpack.c.b16 %v9563, %v9562
  %v9581 = vpack.c.b16 %v9565, %v9564
  %9598 = vmatpush.bf16.msra.mxu0 %v9573
  %9599 = vmatpush.bf16.msra.mxu0 %v9572
  %9600 = vmatpush.bf16.msra.mxu0 %v9571
  %9601 = vmatpush.bf16.msra.mxu0 %v9570
  %9602 = vmatpush.bf16.msra.mxu0 %v9569
  %9603 = vmatpush.bf16.msra.mxu0 %v9568
  %9604 = vmatpush.bf16.msra.mxu0 %v9567
  %9605 = vmatpush.bf16.msra.mxu0 %v9566
  %9606 = vmatmul.bf16.gmra.mxu0 %v9479
  %v9607 = vpop.f32.mrf.mxu0
  %v9608 = vadd.f32 0.0, %v9607
  %v9609 = vpop.f32.mrf.mxu0
  %9610 = vmatmul.bf16.gmra.mxu0 %v9494
  %v9611 = vpop.f32.mrf.mxu0
  %v9612 = vadd.f32 0.0, %v9611
  %v9613 = vpop.f32.mrf.mxu0
  %9614 = vdwg.mxu0
  %9615 = vmatpush.bf16.msra.mxu0 %v9581
  %9616 = vmatpush.bf16.msra.mxu0 %v9580
  %9617 = vmatpush.bf16.msra.mxu0 %v9579
  %9618 = vmatpush.bf16.msra.mxu0 %v9578
  %9619 = vmatpush.bf16.msra.mxu0 %v9577
  %9620 = vmatpush.bf16.msra.mxu0 %v9576
  %9621 = vmatpush.bf16.msra.mxu0 %v9575
  %9622 = vmatpush.bf16.msra.mxu0 %v9574
  %9623 = vmatmul.bf16.gmra.mxu0 %v9491
  %v9624 = vpop.f32.mrf.mxu0
  %v9625 = vadd.f32 %v9608, %v9624
  %v9626 = vpop.f32.mrf.mxu0
  %9627 = vmatmul.bf16.gmra.mxu0 %v9497
  %v9628 = vpop.f32.mrf.mxu0
  %v9629 = vadd.f32 %v9612, %v9628
  %v9630 = vpop.f32.mrf.mxu0
  %9631 = vdwg.mxu0
  %v9632 = vadd.f32 %v9426, %v9625
  %v9633 = vadd.f32 %v9427, %v9629
  %v9634 = vld [vmem:[#allocation4 + $0x10] sm:$0xfc]
  %v9635 = vld [vmem:[#allocation4 + $0x18] sm:$0xfc]
  %v9636 = vld [vmem:[#allocation4 + $0x30] sm:$0xff]
  %v9637 = vld [vmem:[#allocation4 + $0x38] sm:$0xff]
  %v9638 = vpack.c.bf16 %v8676, %v9634
  %v9639 = vpack.c.bf16 %v8677, %v9635
  %v9640 = vpack.c.bf16 %v9636, %v9636
  %v9641 = vpack.c.bf16 %v9637, %v9637
  %v9642 = vld [vmem:[%s7 + $0x400] sm:$0xf]
  %v9643 = vld [vmem:[%s7 + $0x404] sm:$0xf]
  %v9644 = vld [vmem:[%s7 + $0x408] sm:$0xf]
  %v9645 = vld [vmem:[%s7 + $0x40c] sm:$0xf]
  %v9646 = vld [vmem:[%s7 + $0x410] sm:$0xf]
  %v9647 = vld [vmem:[%s7 + $0x414] sm:$0xf]
  %v9648 = vld [vmem:[%s7 + $0x418] sm:$0xf]
  %v9649 = vld [vmem:[%s7 + $0x41c] sm:$0xf]
  %v9650 = vld [vmem:[%s7 + $0x420] sm:$0xf]
  %v9651 = vld [vmem:[%s7 + $0x424] sm:$0xf]
  %v9652 = vld [vmem:[%s7 + $0x428] sm:$0xf]
  %v9653 = vld [vmem:[%s7 + $0x42c] sm:$0xf]
  %v9654 = vld [vmem:[%s7 + $0x430] sm:$0xf]
  %v9655 = vld [vmem:[%s7 + $0x434] sm:$0xf]
  %v9656 = vld [vmem:[%s7 + $0x438] sm:$0xf]
  %v9657 = vld [vmem:[%s7 + $0x43c] sm:$0xf]
  %v9658 = vld [vmem:[%s7 + $0x440] sm:$0xf]
  %v9659 = vld [vmem:[%s7 + $0x444] sm:$0xf]
  %v9660 = vld [vmem:[%s7 + $0x448] sm:$0xf]
  %v9661 = vld [vmem:[%s7 + $0x44c] sm:$0xf]
  %v9662 = vld [vmem:[%s7 + $0x450] sm:$0xf]
  %v9663 = vld [vmem:[%s7 + $0x454] sm:$0xf]
  %v9664 = vld [vmem:[%s7 + $0x458] sm:$0xf]
  %v9665 = vld [vmem:[%s7 + $0x45c] sm:$0xf]
  %v9666 = vld [vmem:[%s7 + $0x460] sm:$0xf]
  %v9667 = vld [vmem:[%s7 + $0x464] sm:$0xf]
  %v9668 = vld [vmem:[%s7 + $0x468] sm:$0xf]
  %v9669 = vld [vmem:[%s7 + $0x46c] sm:$0xf]
  %v9670 = vld [vmem:[%s7 + $0x470] sm:$0xf]
  %v9671 = vld [vmem:[%s7 + $0x474] sm:$0xf]
  %v9672 = vld [vmem:[%s7 + $0x478] sm:$0xf]
  %v9673 = vld [vmem:[%s7 + $0x47c] sm:$0xf]
  %v9678 = vrot.slane %v9638, 1
  %v9679 = vrot.slane %v9640, 1
  %v9680 = vsel %vm5458, %v9678, %v9679
  %v9681 = vrot.slane %v9639, 1
  %v9682 = vrot.slane %v9641, 1
  %v9683 = vsel %vm5458, %v9681, %v9682
  %v9720 = vunpack.c.l.b16 %v9642
  %v9721 = vunpack.c.l.b16 %v9643
  %v9722 = vunpack.c.l.b16 %v9644
  %v9723 = vunpack.c.l.b16 %v9645
  %v9724 = vunpack.c.l.b16 %v9646
  %v9725 = vunpack.c.l.b16 %v9647
  %v9726 = vunpack.c.l.b16 %v9648
  %v9727 = vunpack.c.l.b16 %v9649
  %v9728 = vunpack.c.l.b16 %v9650
  %v9729 = vunpack.c.l.b16 %v9651
  %v9730 = vunpack.c.l.b16 %v9652
  %v9731 = vunpack.c.l.b16 %v9653
  %v9732 = vunpack.c.l.b16 %v9654
  %v9733 = vunpack.c.l.b16 %v9655
  %v9734 = vunpack.c.l.b16 %v9656
  %v9735 = vunpack.c.l.b16 %v9657
  %v9736 = vunpack.c.l.b16 %v9658
  %v9737 = vunpack.c.l.b16 %v9659
  %v9738 = vunpack.c.l.b16 %v9660
  %v9739 = vunpack.c.l.b16 %v9661
  %v9740 = vunpack.c.l.b16 %v9662
  %v9741 = vunpack.c.l.b16 %v9663
  %v9742 = vunpack.c.l.b16 %v9664
  %v9743 = vunpack.c.l.b16 %v9665
  %v9744 = vunpack.c.l.b16 %v9666
  %v9745 = vunpack.c.l.b16 %v9667
  %v9746 = vunpack.c.l.b16 %v9668
  %v9747 = vunpack.c.l.b16 %v9669
  %v9748 = vunpack.c.l.b16 %v9670
  %v9749 = vunpack.c.l.b16 %v9671
  %v9750 = vunpack.c.l.b16 %v9672
  %v9751 = vunpack.c.l.b16 %v9673
  %v9752 = vpack.c.b16 %v9721, %v9720
  %v9753 = vpack.c.b16 %v9723, %v9722
  %v9754 = vpack.c.b16 %v9725, %v9724
  %v9755 = vpack.c.b16 %v9727, %v9726
  %v9756 = vpack.c.b16 %v9729, %v9728
  %v9757 = vpack.c.b16 %v9731, %v9730
  %v9758 = vpack.c.b16 %v9733, %v9732
  %v9759 = vpack.c.b16 %v9735, %v9734
  %v9760 = vpack.c.b16 %v9737, %v9736
  %v9761 = vpack.c.b16 %v9739, %v9738
  %v9762 = vpack.c.b16 %v9741, %v9740
  %v9763 = vpack.c.b16 %v9743, %v9742
  %v9764 = vpack.c.b16 %v9745, %v9744
  %v9765 = vpack.c.b16 %v9747, %v9746
  %v9766 = vpack.c.b16 %v9749, %v9748
  %v9767 = vpack.c.b16 %v9751, %v9750
  %9784 = vmatpush.bf16.msra.mxu0 %v9759
  %9785 = vmatpush.bf16.msra.mxu0 %v9758
  %9786 = vmatpush.bf16.msra.mxu0 %v9757
  %9787 = vmatpush.bf16.msra.mxu0 %v9756
  %9788 = vmatpush.bf16.msra.mxu0 %v9755
  %9789 = vmatpush.bf16.msra.mxu0 %v9754
  %9790 = vmatpush.bf16.msra.mxu0 %v9753
  %9791 = vmatpush.bf16.msra.mxu0 %v9752
  %9792 = vmatmul.bf16.gmra.mxu0 %v9680
  %v9793 = vpop.f32.mrf.mxu0
  %v9794 = vadd.f32 0.0, %v9793
  %v9795 = vpop.f32.mrf.mxu0
  %9796 = vmatmul.bf16.gmra.mxu0 %v9679
  %v9797 = vpop.f32.mrf.mxu0
  %v9798 = vadd.f32 0.0, %v9797
  %v9799 = vpop.f32.mrf.mxu0
  %9800 = vdwg.mxu0
  %9801 = vmatpush.bf16.msra.mxu0 %v9767
  %9802 = vmatpush.bf16.msra.mxu0 %v9766
  %9803 = vmatpush.bf16.msra.mxu0 %v9765
  %9804 = vmatpush.bf16.msra.mxu0 %v9764
  %9805 = vmatpush.bf16.msra.mxu0 %v9763
  %9806 = vmatpush.bf16.msra.mxu0 %v9762
  %9807 = vmatpush.bf16.msra.mxu0 %v9761
  %9808 = vmatpush.bf16.msra.mxu0 %v9760
  %9809 = vmatmul.bf16.gmra.mxu0 %v9683
  %v9810 = vpop.f32.mrf.mxu0
  %v9811 = vadd.f32 %v9794, %v9810
  %v9812 = vpop.f32.mrf.mxu0
  %9813 = vmatmul.bf16.gmra.mxu0 %v9682
  %v9814 = vpop.f32.mrf.mxu0
  %v9815 = vadd.f32 %v9798, %v9814
  %v9816 = vpop.f32.mrf.mxu0
  %9817 = vdwg.mxu0
  %v9818 = vadd.f32 %v9632, %v9811
  %v9819 = vadd.f32 %v9633, %v9815
  %v9820 = vld [vmem:[%s10 + $0x8] sm:$0x1]
  %v9822 = vperm.slane %v9820, 0
  %v9824 = vadd.f32 %v9818, %v9822
  %v9825 = vadd.f32 %v9819, %v9822
  %v9826 = vmax.f32 %v9824, 0.0
  %v9827 = vmax.f32 %v9825, 0.0
  %9828 = vst [vmem:[#allocation5 + $0x5] sm:$0x3] %v9826
  %9829 = vst [vmem:[#allocation5 + $0x5] sm:$0x30] %v9826
  %9830 = vst [vmem:[#allocation5 + $0x15] sm:$0x3] %v9827
  %9831 = vst [vmem:[#allocation5 + $0x15] sm:$0x30] %v9827
  %v9832 = vld [vmem:[#allocation5] sm:$0xff]
  %v9833 = vld [vmem:[#allocation5 + $0x8] sm:$0xff]
  %v9834 = vld [vmem:[#allocation5 + $0x10] sm:$0x3f]
  %v9835 = vpack.c.bf16 %v9833, %v9832
  %v9836 = vpack.c.bf16 %v9834, %v9834
  %v9837 = vld [vmem:[%s8] sm:$0xff]
  %v9838 = vld [vmem:[%s8 + $0x8] sm:$0xff]
  %v9839 = vld [vmem:[%s8 + $0x10] sm:$0xff]
  %v9840 = vld [vmem:[%s8 + $0x18] sm:$0xff]
  %v9841 = vld [vmem:[%s8 + $0x20] sm:$0xff]
  %v9842 = vld [vmem:[%s8 + $0x28] sm:$0xff]
  %v9843 = vld [vmem:[%s8 + $0x30] sm:$0xff]
  %v9844 = vld [vmem:[%s8 + $0x38] sm:$0xff]
  %v9845 = vld [vmem:[%s8 + $0x40] sm:$0xff]
  %v9846 = vld [vmem:[%s8 + $0x48] sm:$0xff]
  %v9847 = vld [vmem:[%s8 + $0x50] sm:$0xff]
  %v9848 = vld [vmem:[%s8 + $0x58] sm:$0xff]
  %v9849 = vld [vmem:[%s8 + $0x60] sm:$0xff]
  %v9850 = vld [vmem:[%s8 + $0x68] sm:$0xff]
  %v9851 = vld [vmem:[%s8 + $0x70] sm:$0xff]
  %v9852 = vld [vmem:[%s8 + $0x78] sm:$0xff]
  %v9853 = vld [vmem:[#allocation5 + $0x1] sm:$0xff]
  %v9854 = vld [vmem:[#allocation5 + $0x9] sm:$0xff]
  %v9855 = vld [vmem:[#allocation5 + $0x11] sm:$0x3f]
  %v9856 = vpack.c.bf16 %v9854, %v9853
  %v9857 = vpack.c.bf16 %v9855, %v9855
  %v9858 = vld [vmem:[%s8 + $0x80] sm:$0xff]
  %v9859 = vld [vmem:[%s8 + $0x88] sm:$0xff]
  %v9860 = vld [vmem:[%s8 + $0x90] sm:$0xff]
  %v9861 = vld [vmem:[%s8 + $0x98] sm:$0xff]
  %v9862 = vld [vmem:[%s8 + $0xa0] sm:$0xff]
  %v9863 = vld [vmem:[%s8 + $0xa8] sm:$0xff]
  %v9864 = vld [vmem:[%s8 + $0xb0] sm:$0xff]
  %v9865 = vld [vmem:[%s8 + $0xb8] sm:$0xff]
  %v9866 = vld [vmem:[%s8 + $0xc0] sm:$0xff]
  %v9867 = vld [vmem:[%s8 + $0xc8] sm:$0xff]
  %v9868 = vld [vmem:[%s8 + $0xd0] sm:$0xff]
  %v9869 = vld [vmem:[%s8 + $0xd8] sm:$0xff]
  %v9870 = vld [vmem:[%s8 + $0xe0] sm:$0xff]
  %v9871 = vld [vmem:[%s8 + $0xe8] sm:$0xff]
  %v9872 = vld [vmem:[%s8 + $0xf0] sm:$0xff]
  %v9873 = vld [vmem:[%s8 + $0xf8] sm:$0xff]
  %v9890 = vunpack.c.l.b16 %v9858
  %v9891 = vunpack.c.h.b16 %v9858
  %v9892 = vunpack.c.l.b16 %v9859
  %v9893 = vunpack.c.h.b16 %v9859
  %v9894 = vunpack.c.l.b16 %v9860
  %v9895 = vunpack.c.h.b16 %v9860
  %v9896 = vunpack.c.l.b16 %v9861
  %v9897 = vunpack.c.h.b16 %v9861
  %v9898 = vunpack.c.l.b16 %v9862
  %v9899 = vunpack.c.h.b16 %v9862
  %v9900 = vunpack.c.l.b16 %v9863
  %v9901 = vunpack.c.h.b16 %v9863
  %v9902 = vunpack.c.l.b16 %v9864
  %v9903 = vunpack.c.h.b16 %v9864
  %v9904 = vunpack.c.l.b16 %v9865
  %v9905 = vunpack.c.h.b16 %v9865
  %v9906 = vunpack.c.l.b16 %v9866
  %v9907 = vunpack.c.h.b16 %v9866
  %v9908 = vunpack.c.l.b16 %v9867
  %v9909 = vunpack.c.h.b16 %v9867
  %v9910 = vunpack.c.l.b16 %v9868
  %v9911 = vunpack.c.h.b16 %v9868
  %v9912 = vunpack.c.l.b16 %v9869
  %v9913 = vunpack.c.h.b16 %v9869
  %v9914 = vunpack.c.l.b16 %v9870
  %v9915 = vunpack.c.h.b16 %v9870
  %v9916 = vunpack.c.l.b16 %v9871
  %v9917 = vunpack.c.h.b16 %v9871
  %v9918 = vunpack.c.l.b16 %v9872
  %v9919 = vunpack.c.h.b16 %v9872
  %v9920 = vunpack.c.l.b16 %v9873
  %v9921 = vunpack.c.h.b16 %v9873
  %v9922 = vpack.c.b16 %v9892, %v9890
  %v9923 = vpack.c.b16 %v9893, %v9891
  %v9924 = vpack.c.b16 %v9896, %v9894
  %v9925 = vpack.c.b16 %v9897, %v9895
  %v9926 = vpack.c.b16 %v9900, %v9898
  %v9927 = vpack.c.b16 %v9901, %v9899
  %v9928 = vpack.c.b16 %v9904, %v9902
  %v9929 = vpack.c.b16 %v9905, %v9903
  %v9930 = vpack.c.b16 %v9908, %v9906
  %v9931 = vpack.c.b16 %v9909, %v9907
  %v9932 = vpack.c.b16 %v9912, %v9910
  %v9933 = vpack.c.b16 %v9913, %v9911
  %v9934 = vpack.c.b16 %v9916, %v9914
  %v9935 = vpack.c.b16 %v9917, %v9915
  %v9936 = vpack.c.b16 %v9920, %v9918
  %v9937 = vpack.c.b16 %v9921, %v9919
  %9954 = vmatpush.bf16.msra.mxu0 %v9936
  %9955 = vmatpush.bf16.msra.mxu0 %v9934
  %9956 = vmatpush.bf16.msra.mxu0 %v9932
  %9957 = vmatpush.bf16.msra.mxu0 %v9930
  %9958 = vmatpush.bf16.msra.mxu0 %v9928
  %9959 = vmatpush.bf16.msra.mxu0 %v9926
  %9960 = vmatpush.bf16.msra.mxu0 %v9924
  %9961 = vmatpush.bf16.msra.mxu0 %v9922
  %9962 = vmatmul.bf16.gmra.mxu0 %v9856
  %v9963 = vpop.f32.mrf.mxu0
  %v9964 = vadd.f32 0.0, %v9963
  %v9965 = vpop.f32.mrf.mxu0
  %v9966 = vadd.f32 0.0, %v9965
  %9967 = vmatmul.bf16.gmra.mxu0 %v9857
  %v9968 = vpop.f32.mrf.mxu0
  %v9969 = vadd.f32 0.0, %v9968
  %v9970 = vpop.f32.mrf.mxu0
  %9971 = vdwg.mxu0
  %9972 = vmatpush.bf16.msra.mxu0 %v9937
  %9973 = vmatpush.bf16.msra.mxu0 %v9935
  %9974 = vmatpush.bf16.msra.mxu0 %v9933
  %9975 = vmatpush.bf16.msra.mxu0 %v9931
  %9976 = vmatpush.bf16.msra.mxu0 %v9929
  %9977 = vmatpush.bf16.msra.mxu0 %v9927
  %9978 = vmatpush.bf16.msra.mxu0 %v9925
  %9979 = vmatpush.bf16.msra.mxu0 %v9923
  %9980 = vmatmul.bf16.gmra.mxu0 %v9856
  %v9981 = vpop.f32.mrf.mxu0
  %v9982 = vadd.f32 0.0, %v9981
  %v9983 = vpop.f32.mrf.mxu0
  %v9984 = vadd.f32 0.0, %v9983
  %9985 = vmatmul.bf16.gmra.mxu0 %v9857
  %v9986 = vpop.f32.mrf.mxu0
  %v9987 = vadd.f32 0.0, %v9986
  %v9988 = vpop.f32.mrf.mxu0
  %9989 = vdwg.mxu0
  %v10006 = vunpack.c.l.b16 %v9837
  %v10007 = vunpack.c.h.b16 %v9837
  %v10008 = vunpack.c.l.b16 %v9838
  %v10009 = vunpack.c.h.b16 %v9838
  %v10010 = vunpack.c.l.b16 %v9839
  %v10011 = vunpack.c.h.b16 %v9839
  %v10012 = vunpack.c.l.b16 %v9840
  %v10013 = vunpack.c.h.b16 %v9840
  %v10014 = vunpack.c.l.b16 %v9841
  %v10015 = vunpack.c.h.b16 %v9841
  %v10016 = vunpack.c.l.b16 %v9842
  %v10017 = vunpack.c.h.b16 %v9842
  %v10018 = vunpack.c.l.b16 %v9843
  %v10019 = vunpack.c.h.b16 %v9843
  %v10020 = vunpack.c.l.b16 %v9844
  %v10021 = vunpack.c.h.b16 %v9844
  %v10022 = vunpack.c.l.b16 %v9845
  %v10023 = vunpack.c.h.b16 %v9845
  %v10024 = vunpack.c.l.b16 %v9846
  %v10025 = vunpack.c.h.b16 %v9846
  %v10026 = vunpack.c.l.b16 %v9847
  %v10027 = vunpack.c.h.b16 %v9847
  %v10028 = vunpack.c.l.b16 %v9848
  %v10029 = vunpack.c.h.b16 %v9848
  %v10030 = vunpack.c.l.b16 %v9849
  %v10031 = vunpack.c.h.b16 %v9849
  %v10032 = vunpack.c.l.b16 %v9850
  %v10033 = vunpack.c.h.b16 %v9850
  %v10034 = vunpack.c.l.b16 %v9851
  %v10035 = vunpack.c.h.b16 %v9851
  %v10036 = vunpack.c.l.b16 %v9852
  %v10037 = vunpack.c.h.b16 %v9852
  %v10038 = vpack.c.b16 %v10008, %v10006
  %v10039 = vpack.c.b16 %v10009, %v10007
  %v10040 = vpack.c.b16 %v10012, %v10010
  %v10041 = vpack.c.b16 %v10013, %v10011
  %v10042 = vpack.c.b16 %v10016, %v10014
  %v10043 = vpack.c.b16 %v10017, %v10015
  %v10044 = vpack.c.b16 %v10020, %v10018
  %v10045 = vpack.c.b16 %v10021, %v10019
  %v10046 = vpack.c.b16 %v10024, %v10022
  %v10047 = vpack.c.b16 %v10025, %v10023
  %v10048 = vpack.c.b16 %v10028, %v10026
  %v10049 = vpack.c.b16 %v10029, %v10027
  %v10050 = vpack.c.b16 %v10032, %v10030
  %v10051 = vpack.c.b16 %v10033, %v10031
  %v10052 = vpack.c.b16 %v10036, %v10034
  %v10053 = vpack.c.b16 %v10037, %v10035
  %10070 = vmatpush.bf16.msra.mxu0 %v10052
  %10071 = vmatpush.bf16.msra.mxu0 %v10050
  %10072 = vmatpush.bf16.msra.mxu0 %v10048
  %10073 = vmatpush.bf16.msra.mxu0 %v10046
  %10074 = vmatpush.bf16.msra.mxu0 %v10044
  %10075 = vmatpush.bf16.msra.mxu0 %v10042
  %10076 = vmatpush.bf16.msra.mxu0 %v10040
  %10077 = vmatpush.bf16.msra.mxu0 %v10038
  %10078 = vmatmul.bf16.gmra.mxu0 %v9835
  %v10079 = vpop.f32.mrf.mxu0
  %v10080 = vadd.f32 %v9964, %v10079
  %v10081 = vpop.f32.mrf.mxu0
  %v10082 = vadd.f32 %v9966, %v10081
  %10083 = vmatmul.bf16.gmra.mxu0 %v9836
  %v10084 = vpop.f32.mrf.mxu0
  %v10085 = vadd.f32 %v9969, %v10084
  %v10086 = vpop.f32.mrf.mxu0
  %10087 = vdwg.mxu0
  %10088 = vmatpush.bf16.msra.mxu0 %v10053
  %10089 = vmatpush.bf16.msra.mxu0 %v10051
  %10090 = vmatpush.bf16.msra.mxu0 %v10049
  %10091 = vmatpush.bf16.msra.mxu0 %v10047
  %10092 = vmatpush.bf16.msra.mxu0 %v10045
  %10093 = vmatpush.bf16.msra.mxu0 %v10043
  %10094 = vmatpush.bf16.msra.mxu0 %v10041
  %10095 = vmatpush.bf16.msra.mxu0 %v10039
  %10096 = vmatmul.bf16.gmra.mxu0 %v9835
  %v10097 = vpop.f32.mrf.mxu0
  %v10098 = vadd.f32 %v9982, %v10097
  %v10099 = vpop.f32.mrf.mxu0
  %v10100 = vadd.f32 %v9984, %v10099
  %10101 = vmatmul.bf16.gmra.mxu0 %v9836
  %v10102 = vpop.f32.mrf.mxu0
  %v10103 = vadd.f32 %v9987, %v10102
  %v10104 = vpop.f32.mrf.mxu0
  %10105 = vdwg.mxu0
  %v10106 = vld [vmem:[#allocation5 + $0x2] sm:$0xff]
  %v10107 = vld [vmem:[#allocation5 + $0xa] sm:$0xff]
  %v10108 = vld [vmem:[#allocation5 + $0x12] sm:$0x3f]
  %v10109 = vpack.c.bf16 %v10107, %v10106
  %v10110 = vpack.c.bf16 %v10108, %v10108
  %v10111 = vld [vmem:[%s8 + $0x100] sm:$0xff]
  %v10112 = vld [vmem:[%s8 + $0x108] sm:$0xff]
  %v10113 = vld [vmem:[%s8 + $0x110] sm:$0xff]
  %v10114 = vld [vmem:[%s8 + $0x118] sm:$0xff]
  %v10115 = vld [vmem:[%s8 + $0x120] sm:$0xff]
  %v10116 = vld [vmem:[%s8 + $0x128] sm:$0xff]
  %v10117 = vld [vmem:[%s8 + $0x130] sm:$0xff]
  %v10118 = vld [vmem:[%s8 + $0x138] sm:$0xff]
  %v10119 = vld [vmem:[%s8 + $0x140] sm:$0xff]
  %v10120 = vld [vmem:[%s8 + $0x148] sm:$0xff]
  %v10121 = vld [vmem:[%s8 + $0x150] sm:$0xff]
  %v10122 = vld [vmem:[%s8 + $0x158] sm:$0xff]
  %v10123 = vld [vmem:[%s8 + $0x160] sm:$0xff]
  %v10124 = vld [vmem:[%s8 + $0x168] sm:$0xff]
  %v10125 = vld [vmem:[%s8 + $0x170] sm:$0xff]
  %v10126 = vld [vmem:[%s8 + $0x178] sm:$0xff]
  %v10143 = vunpack.c.l.b16 %v10111
  %v10144 = vunpack.c.h.b16 %v10111
  %v10145 = vunpack.c.l.b16 %v10112
  %v10146 = vunpack.c.h.b16 %v10112
  %v10147 = vunpack.c.l.b16 %v10113
  %v10148 = vunpack.c.h.b16 %v10113
  %v10149 = vunpack.c.l.b16 %v10114
  %v10150 = vunpack.c.h.b16 %v10114
  %v10151 = vunpack.c.l.b16 %v10115
  %v10152 = vunpack.c.h.b16 %v10115
  %v10153 = vunpack.c.l.b16 %v10116
  %v10154 = vunpack.c.h.b16 %v10116
  %v10155 = vunpack.c.l.b16 %v10117
  %v10156 = vunpack.c.h.b16 %v10117
  %v10157 = vunpack.c.l.b16 %v10118
  %v10158 = vunpack.c.h.b16 %v10118
  %v10159 = vunpack.c.l.b16 %v10119
  %v10160 = vunpack.c.h.b16 %v10119
  %v10161 = vunpack.c.l.b16 %v10120
  %v10162 = vunpack.c.h.b16 %v10120
  %v10163 = vunpack.c.l.b16 %v10121
  %v10164 = vunpack.c.h.b16 %v10121
  %v10165 = vunpack.c.l.b16 %v10122
  %v10166 = vunpack.c.h.b16 %v10122
  %v10167 = vunpack.c.l.b16 %v10123
  %v10168 = vunpack.c.h.b16 %v10123
  %v10169 = vunpack.c.l.b16 %v10124
  %v10170 = vunpack.c.h.b16 %v10124
  %v10171 = vunpack.c.l.b16 %v10125
  %v10172 = vunpack.c.h.b16 %v10125
  %v10173 = vunpack.c.l.b16 %v10126
  %v10174 = vunpack.c.h.b16 %v10126
  %v10175 = vpack.c.b16 %v10145, %v10143
  %v10176 = vpack.c.b16 %v10146, %v10144
  %v10177 = vpack.c.b16 %v10149, %v10147
  %v10178 = vpack.c.b16 %v10150, %v10148
  %v10179 = vpack.c.b16 %v10153, %v10151
  %v10180 = vpack.c.b16 %v10154, %v10152
  %v10181 = vpack.c.b16 %v10157, %v10155
  %v10182 = vpack.c.b16 %v10158, %v10156
  %v10183 = vpack.c.b16 %v10161, %v10159
  %v10184 = vpack.c.b16 %v10162, %v10160
  %v10185 = vpack.c.b16 %v10165, %v10163
  %v10186 = vpack.c.b16 %v10166, %v10164
  %v10187 = vpack.c.b16 %v10169, %v10167
  %v10188 = vpack.c.b16 %v10170, %v10168
  %v10189 = vpack.c.b16 %v10173, %v10171
  %v10190 = vpack.c.b16 %v10174, %v10172
  %10207 = vmatpush.bf16.msra.mxu0 %v10189
  %10208 = vmatpush.bf16.msra.mxu0 %v10187
  %10209 = vmatpush.bf16.msra.mxu0 %v10185
  %10210 = vmatpush.bf16.msra.mxu0 %v10183
  %10211 = vmatpush.bf16.msra.mxu0 %v10181
  %10212 = vmatpush.bf16.msra.mxu0 %v10179
  %10213 = vmatpush.bf16.msra.mxu0 %v10177
  %10214 = vmatpush.bf16.msra.mxu0 %v10175
  %10215 = vmatmul.bf16.gmra.mxu0 %v10109
  %v10216 = vpop.f32.mrf.mxu0
  %v10217 = vadd.f32 0.0, %v10216
  %v10218 = vpop.f32.mrf.mxu0
  %v10219 = vadd.f32 0.0, %v10218
  %10220 = vmatmul.bf16.gmra.mxu0 %v10110
  %v10221 = vpop.f32.mrf.mxu0
  %v10222 = vadd.f32 0.0, %v10221
  %v10223 = vpop.f32.mrf.mxu0
  %10224 = vdwg.mxu0
  %10225 = vmatpush.bf16.msra.mxu0 %v10190
  %10226 = vmatpush.bf16.msra.mxu0 %v10188
  %10227 = vmatpush.bf16.msra.mxu0 %v10186
  %10228 = vmatpush.bf16.msra.mxu0 %v10184
  %10229 = vmatpush.bf16.msra.mxu0 %v10182
  %10230 = vmatpush.bf16.msra.mxu0 %v10180
  %10231 = vmatpush.bf16.msra.mxu0 %v10178
  %10232 = vmatpush.bf16.msra.mxu0 %v10176
  %10233 = vmatmul.bf16.gmra.mxu0 %v10109
  %v10234 = vpop.f32.mrf.mxu0
  %v10235 = vadd.f32 0.0, %v10234
  %v10236 = vpop.f32.mrf.mxu0
  %v10237 = vadd.f32 0.0, %v10236
  %10238 = vmatmul.bf16.gmra.mxu0 %v10110
  %v10239 = vpop.f32.mrf.mxu0
  %v10240 = vadd.f32 0.0, %v10239
  %v10241 = vpop.f32.mrf.mxu0
  %10242 = vdwg.mxu0
  %v10243 = vadd.f32 %v10080, %v10217
  %v10244 = vadd.f32 %v10098, %v10235
  %v10245 = vadd.f32 %v10082, %v10219
  %v10246 = vadd.f32 %v10100, %v10237
  %v10247 = vadd.f32 %v10085, %v10222
  %v10248 = vadd.f32 %v10103, %v10240
  %v10249 = vld [vmem:[#allocation5 + $0x4] sm:$0xff]
  %v10250 = vld [vmem:[#allocation5 + $0xc] sm:$0xff]
  %v10251 = vld [vmem:[#allocation5 + $0x14] sm:$0x3f]
  %v10252 = vpack.c.bf16 %v10250, %v10249
  %v10253 = vpack.c.bf16 %v10251, %v10251
  %v10254 = vld [vmem:[%s8 + $0x180] sm:$0xff]
  %v10255 = vld [vmem:[%s8 + $0x188] sm:$0xff]
  %v10256 = vld [vmem:[%s8 + $0x190] sm:$0xff]
  %v10257 = vld [vmem:[%s8 + $0x198] sm:$0xff]
  %v10258 = vld [vmem:[%s8 + $0x1a0] sm:$0xff]
  %v10259 = vld [vmem:[%s8 + $0x1a8] sm:$0xff]
  %v10260 = vld [vmem:[%s8 + $0x1b0] sm:$0xff]
  %v10261 = vld [vmem:[%s8 + $0x1b8] sm:$0xff]
  %v10262 = vld [vmem:[%s8 + $0x1c0] sm:$0xff]
  %v10263 = vld [vmem:[%s8 + $0x1c8] sm:$0xff]
  %v10264 = vld [vmem:[%s8 + $0x1d0] sm:$0xff]
  %v10265 = vld [vmem:[%s8 + $0x1d8] sm:$0xff]
  %v10266 = vld [vmem:[%s8 + $0x1e0] sm:$0xff]
  %v10267 = vld [vmem:[%s8 + $0x1e8] sm:$0xff]
  %v10268 = vld [vmem:[%s8 + $0x1f0] sm:$0xff]
  %v10269 = vld [vmem:[%s8 + $0x1f8] sm:$0xff]
  %v10286 = vunpack.c.l.b16 %v10254
  %v10287 = vunpack.c.h.b16 %v10254
  %v10288 = vunpack.c.l.b16 %v10255
  %v10289 = vunpack.c.h.b16 %v10255
  %v10290 = vunpack.c.l.b16 %v10256
  %v10291 = vunpack.c.h.b16 %v10256
  %v10292 = vunpack.c.l.b16 %v10257
  %v10293 = vunpack.c.h.b16 %v10257
  %v10294 = vunpack.c.l.b16 %v10258
  %v10295 = vunpack.c.h.b16 %v10258
  %v10296 = vunpack.c.l.b16 %v10259
  %v10297 = vunpack.c.h.b16 %v10259
  %v10298 = vunpack.c.l.b16 %v10260
  %v10299 = vunpack.c.h.b16 %v10260
  %v10300 = vunpack.c.l.b16 %v10261
  %v10301 = vunpack.c.h.b16 %v10261
  %v10302 = vunpack.c.l.b16 %v10262
  %v10303 = vunpack.c.h.b16 %v10262
  %v10304 = vunpack.c.l.b16 %v10263
  %v10305 = vunpack.c.h.b16 %v10263
  %v10306 = vunpack.c.l.b16 %v10264
  %v10307 = vunpack.c.h.b16 %v10264
  %v10308 = vunpack.c.l.b16 %v10265
  %v10309 = vunpack.c.h.b16 %v10265
  %v10310 = vunpack.c.l.b16 %v10266
  %v10311 = vunpack.c.h.b16 %v10266
  %v10312 = vunpack.c.l.b16 %v10267
  %v10313 = vunpack.c.h.b16 %v10267
  %v10314 = vunpack.c.l.b16 %v10268
  %v10315 = vunpack.c.h.b16 %v10268
  %v10316 = vunpack.c.l.b16 %v10269
  %v10317 = vunpack.c.h.b16 %v10269
  %v10318 = vpack.c.b16 %v10288, %v10286
  %v10319 = vpack.c.b16 %v10289, %v10287
  %v10320 = vpack.c.b16 %v10292, %v10290
  %v10321 = vpack.c.b16 %v10293, %v10291
  %v10322 = vpack.c.b16 %v10296, %v10294
  %v10323 = vpack.c.b16 %v10297, %v10295
  %v10324 = vpack.c.b16 %v10300, %v10298
  %v10325 = vpack.c.b16 %v10301, %v10299
  %v10326 = vpack.c.b16 %v10304, %v10302
  %v10327 = vpack.c.b16 %v10305, %v10303
  %v10328 = vpack.c.b16 %v10308, %v10306
  %v10329 = vpack.c.b16 %v10309, %v10307
  %v10330 = vpack.c.b16 %v10312, %v10310
  %v10331 = vpack.c.b16 %v10313, %v10311
  %v10332 = vpack.c.b16 %v10316, %v10314
  %v10333 = vpack.c.b16 %v10317, %v10315
  %10350 = vmatpush.bf16.msra.mxu0 %v10332
  %10351 = vmatpush.bf16.msra.mxu0 %v10330
  %10352 = vmatpush.bf16.msra.mxu0 %v10328
  %10353 = vmatpush.bf16.msra.mxu0 %v10326
  %10354 = vmatpush.bf16.msra.mxu0 %v10324
  %10355 = vmatpush.bf16.msra.mxu0 %v10322
  %10356 = vmatpush.bf16.msra.mxu0 %v10320
  %10357 = vmatpush.bf16.msra.mxu0 %v10318
  %10358 = vmatmul.bf16.gmra.mxu0 %v10252
  %v10359 = vpop.f32.mrf.mxu0
  %v10360 = vadd.f32 0.0, %v10359
  %v10361 = vpop.f32.mrf.mxu0
  %v10362 = vadd.f32 0.0, %v10361
  %10363 = vmatmul.bf16.gmra.mxu0 %v10253
  %v10364 = vpop.f32.mrf.mxu0
  %v10365 = vadd.f32 0.0, %v10364
  %v10366 = vpop.f32.mrf.mxu0
  %10367 = vdwg.mxu0
  %10368 = vmatpush.bf16.msra.mxu0 %v10333
  %10369 = vmatpush.bf16.msra.mxu0 %v10331
  %10370 = vmatpush.bf16.msra.mxu0 %v10329
  %10371 = vmatpush.bf16.msra.mxu0 %v10327
  %10372 = vmatpush.bf16.msra.mxu0 %v10325
  %10373 = vmatpush.bf16.msra.mxu0 %v10323
  %10374 = vmatpush.bf16.msra.mxu0 %v10321
  %10375 = vmatpush.bf16.msra.mxu0 %v10319
  %10376 = vmatmul.bf16.gmra.mxu0 %v10252
  %v10377 = vpop.f32.mrf.mxu0
  %v10378 = vadd.f32 0.0, %v10377
  %v10379 = vpop.f32.mrf.mxu0
  %v10380 = vadd.f32 0.0, %v10379
  %10381 = vmatmul.bf16.gmra.mxu0 %v10253
  %v10382 = vpop.f32.mrf.mxu0
  %v10383 = vadd.f32 0.0, %v10382
  %v10384 = vpop.f32.mrf.mxu0
  %10385 = vdwg.mxu0
  %v10386 = vadd.f32 %v10243, %v10360
  %v10387 = vadd.f32 %v10244, %v10378
  %v10388 = vadd.f32 %v10245, %v10362
  %v10389 = vadd.f32 %v10246, %v10380
  %v10390 = vadd.f32 %v10247, %v10365
  %v10391 = vadd.f32 %v10248, %v10383
  %v10392 = vld [vmem:[#allocation5 + $0x5] sm:$0xff]
  %v10393 = vld [vmem:[#allocation5 + $0xd] sm:$0xff]
  %v10394 = vld [vmem:[#allocation5 + $0x15] sm:$0x3f]
  %v10395 = vpack.c.bf16 %v10393, %v10392
  %v10396 = vpack.c.bf16 %v10394, %v10394
  %v10397 = vld [vmem:[%s8 + $0x200] sm:$0xff]
  %v10398 = vld [vmem:[%s8 + $0x208] sm:$0xff]
  %v10399 = vld [vmem:[%s8 + $0x210] sm:$0xff]
  %v10400 = vld [vmem:[%s8 + $0x218] sm:$0xff]
  %v10401 = vld [vmem:[%s8 + $0x220] sm:$0xff]
  %v10402 = vld [vmem:[%s8 + $0x228] sm:$0xff]
  %v10403 = vld [vmem:[%s8 + $0x230] sm:$0xff]
  %v10404 = vld [vmem:[%s8 + $0x238] sm:$0xff]
  %v10405 = vld [vmem:[%s8 + $0x240] sm:$0xff]
  %v10406 = vld [vmem:[%s8 + $0x248] sm:$0xff]
  %v10407 = vld [vmem:[%s8 + $0x250] sm:$0xff]
  %v10408 = vld [vmem:[%s8 + $0x258] sm:$0xff]
  %v10409 = vld [vmem:[%s8 + $0x260] sm:$0xff]
  %v10410 = vld [vmem:[%s8 + $0x268] sm:$0xff]
  %v10411 = vld [vmem:[%s8 + $0x270] sm:$0xff]
  %v10412 = vld [vmem:[%s8 + $0x278] sm:$0xff]
  %v10429 = vunpack.c.l.b16 %v10397
  %v10430 = vunpack.c.h.b16 %v10397
  %v10431 = vunpack.c.l.b16 %v10398
  %v10432 = vunpack.c.h.b16 %v10398
  %v10433 = vunpack.c.l.b16 %v10399
  %v10434 = vunpack.c.h.b16 %v10399
  %v10435 = vunpack.c.l.b16 %v10400
  %v10436 = vunpack.c.h.b16 %v10400
  %v10437 = vunpack.c.l.b16 %v10401
  %v10438 = vunpack.c.h.b16 %v10401
  %v10439 = vunpack.c.l.b16 %v10402
  %v10440 = vunpack.c.h.b16 %v10402
  %v10441 = vunpack.c.l.b16 %v10403
  %v10442 = vunpack.c.h.b16 %v10403
  %v10443 = vunpack.c.l.b16 %v10404
  %v10444 = vunpack.c.h.b16 %v10404
  %v10445 = vunpack.c.l.b16 %v10405
  %v10446 = vunpack.c.h.b16 %v10405
  %v10447 = vunpack.c.l.b16 %v10406
  %v10448 = vunpack.c.h.b16 %v10406
  %v10449 = vunpack.c.l.b16 %v10407
  %v10450 = vunpack.c.h.b16 %v10407
  %v10451 = vunpack.c.l.b16 %v10408
  %v10452 = vunpack.c.h.b16 %v10408
  %v10453 = vunpack.c.l.b16 %v10409
  %v10454 = vunpack.c.h.b16 %v10409
  %v10455 = vunpack.c.l.b16 %v10410
  %v10456 = vunpack.c.h.b16 %v10410
  %v10457 = vunpack.c.l.b16 %v10411
  %v10458 = vunpack.c.h.b16 %v10411
  %v10459 = vunpack.c.l.b16 %v10412
  %v10460 = vunpack.c.h.b16 %v10412
  %v10461 = vpack.c.b16 %v10431, %v10429
  %v10462 = vpack.c.b16 %v10432, %v10430
  %v10463 = vpack.c.b16 %v10435, %v10433
  %v10464 = vpack.c.b16 %v10436, %v10434
  %v10465 = vpack.c.b16 %v10439, %v10437
  %v10466 = vpack.c.b16 %v10440, %v10438
  %v10467 = vpack.c.b16 %v10443, %v10441
  %v10468 = vpack.c.b16 %v10444, %v10442
  %v10469 = vpack.c.b16 %v10447, %v10445
  %v10470 = vpack.c.b16 %v10448, %v10446
  %v10471 = vpack.c.b16 %v10451, %v10449
  %v10472 = vpack.c.b16 %v10452, %v10450
  %v10473 = vpack.c.b16 %v10455, %v10453
  %v10474 = vpack.c.b16 %v10456, %v10454
  %v10475 = vpack.c.b16 %v10459, %v10457
  %v10476 = vpack.c.b16 %v10460, %v10458
  %10493 = vmatpush.bf16.msra.mxu0 %v10475
  %10494 = vmatpush.bf16.msra.mxu0 %v10473
  %10495 = vmatpush.bf16.msra.mxu0 %v10471
  %10496 = vmatpush.bf16.msra.mxu0 %v10469
  %10497 = vmatpush.bf16.msra.mxu0 %v10467
  %10498 = vmatpush.bf16.msra.mxu0 %v10465
  %10499 = vmatpush.bf16.msra.mxu0 %v10463
  %10500 = vmatpush.bf16.msra.mxu0 %v10461
  %10501 = vmatmul.bf16.gmra.mxu0 %v10395
  %v10502 = vpop.f32.mrf.mxu0
  %v10503 = vadd.f32 0.0, %v10502
  %v10504 = vpop.f32.mrf.mxu0
  %v10505 = vadd.f32 0.0, %v10504
  %10506 = vmatmul.bf16.gmra.mxu0 %v10396
  %v10507 = vpop.f32.mrf.mxu0
  %v10508 = vadd.f32 0.0, %v10507
  %v10509 = vpop.f32.mrf.mxu0
  %10510 = vdwg.mxu0
  %10511 = vmatpush.bf16.msra.mxu0 %v10476
  %10512 = vmatpush.bf16.msra.mxu0 %v10474
  %10513 = vmatpush.bf16.msra.mxu0 %v10472
  %10514 = vmatpush.bf16.msra.mxu0 %v10470
  %10515 = vmatpush.bf16.msra.mxu0 %v10468
  %10516 = vmatpush.bf16.msra.mxu0 %v10466
  %10517 = vmatpush.bf16.msra.mxu0 %v10464
  %10518 = vmatpush.bf16.msra.mxu0 %v10462
  %10519 = vmatmul.bf16.gmra.mxu0 %v10395
  %v10520 = vpop.f32.mrf.mxu0
  %v10521 = vadd.f32 0.0, %v10520
  %v10522 = vpop.f32.mrf.mxu0
  %v10523 = vadd.f32 0.0, %v10522
  %10524 = vmatmul.bf16.gmra.mxu0 %v10396
  %v10525 = vpop.f32.mrf.mxu0
  %v10526 = vadd.f32 0.0, %v10525
  %v10527 = vpop.f32.mrf.mxu0
  %10528 = vdwg.mxu0
  %v10529 = vadd.f32 %v10386, %v10503
  %v10530 = vadd.f32 %v10387, %v10521
  %v10531 = vadd.f32 %v10388, %v10505
  %v10532 = vadd.f32 %v10389, %v10523
  %v10533 = vadd.f32 %v10390, %v10508
  %v10534 = vadd.f32 %v10391, %v10526
  %v10535 = vld [vmem:[#allocation5 + $0x6] sm:$0xff]
  %v10536 = vld [vmem:[#allocation5 + $0xe] sm:$0xff]
  %v10537 = vld [vmem:[#allocation5 + $0x16] sm:$0x3f]
  %v10538 = vpack.c.bf16 %v10536, %v10535
  %v10539 = vpack.c.bf16 %v10537, %v10537
  %v10540 = vld [vmem:[%s8 + $0x280] sm:$0xff]
  %v10541 = vld [vmem:[%s8 + $0x288] sm:$0xff]
  %v10542 = vld [vmem:[%s8 + $0x290] sm:$0xff]
  %v10543 = vld [vmem:[%s8 + $0x298] sm:$0xff]
  %v10544 = vld [vmem:[%s8 + $0x2a0] sm:$0xff]
  %v10545 = vld [vmem:[%s8 + $0x2a8] sm:$0xff]
  %v10546 = vld [vmem:[%s8 + $0x2b0] sm:$0xff]
  %v10547 = vld [vmem:[%s8 + $0x2b8] sm:$0xff]
  %v10548 = vld [vmem:[%s8 + $0x2c0] sm:$0xff]
  %v10549 = vld [vmem:[%s8 + $0x2c8] sm:$0xff]
  %v10550 = vld [vmem:[%s8 + $0x2d0] sm:$0xff]
  %v10551 = vld [vmem:[%s8 + $0x2d8] sm:$0xff]
  %v10552 = vld [vmem:[%s8 + $0x2e0] sm:$0xff]
  %v10553 = vld [vmem:[%s8 + $0x2e8] sm:$0xff]
  %v10554 = vld [vmem:[%s8 + $0x2f0] sm:$0xff]
  %v10555 = vld [vmem:[%s8 + $0x2f8] sm:$0xff]
  %v10572 = vunpack.c.l.b16 %v10540
  %v10573 = vunpack.c.h.b16 %v10540
  %v10574 = vunpack.c.l.b16 %v10541
  %v10575 = vunpack.c.h.b16 %v10541
  %v10576 = vunpack.c.l.b16 %v10542
  %v10577 = vunpack.c.h.b16 %v10542
  %v10578 = vunpack.c.l.b16 %v10543
  %v10579 = vunpack.c.h.b16 %v10543
  %v10580 = vunpack.c.l.b16 %v10544
  %v10581 = vunpack.c.h.b16 %v10544
  %v10582 = vunpack.c.l.b16 %v10545
  %v10583 = vunpack.c.h.b16 %v10545
  %v10584 = vunpack.c.l.b16 %v10546
  %v10585 = vunpack.c.h.b16 %v10546
  %v10586 = vunpack.c.l.b16 %v10547
  %v10587 = vunpack.c.h.b16 %v10547
  %v10588 = vunpack.c.l.b16 %v10548
  %v10589 = vunpack.c.h.b16 %v10548
  %v10590 = vunpack.c.l.b16 %v10549
  %v10591 = vunpack.c.h.b16 %v10549
  %v10592 = vunpack.c.l.b16 %v10550
  %v10593 = vunpack.c.h.b16 %v10550
  %v10594 = vunpack.c.l.b16 %v10551
  %v10595 = vunpack.c.h.b16 %v10551
  %v10596 = vunpack.c.l.b16 %v10552
  %v10597 = vunpack.c.h.b16 %v10552
  %v10598 = vunpack.c.l.b16 %v10553
  %v10599 = vunpack.c.h.b16 %v10553
  %v10600 = vunpack.c.l.b16 %v10554
  %v10601 = vunpack.c.h.b16 %v10554
  %v10602 = vunpack.c.l.b16 %v10555
  %v10603 = vunpack.c.h.b16 %v10555
  %v10604 = vpack.c.b16 %v10574, %v10572
  %v10605 = vpack.c.b16 %v10575, %v10573
  %v10606 = vpack.c.b16 %v10578, %v10576
  %v10607 = vpack.c.b16 %v10579, %v10577
  %v10608 = vpack.c.b16 %v10582, %v10580
  %v10609 = vpack.c.b16 %v10583, %v10581
  %v10610 = vpack.c.b16 %v10586, %v10584
  %v10611 = vpack.c.b16 %v10587, %v10585
  %v10612 = vpack.c.b16 %v10590, %v10588
  %v10613 = vpack.c.b16 %v10591, %v10589
  %v10614 = vpack.c.b16 %v10594, %v10592
  %v10615 = vpack.c.b16 %v10595, %v10593
  %v10616 = vpack.c.b16 %v10598, %v10596
  %v10617 = vpack.c.b16 %v10599, %v10597
  %v10618 = vpack.c.b16 %v10602, %v10600
  %v10619 = vpack.c.b16 %v10603, %v10601
  %10636 = vmatpush.bf16.msra.mxu0 %v10618
  %10637 = vmatpush.bf16.msra.mxu0 %v10616
  %10638 = vmatpush.bf16.msra.mxu0 %v10614
  %10639 = vmatpush.bf16.msra.mxu0 %v10612
  %10640 = vmatpush.bf16.msra.mxu0 %v10610
  %10641 = vmatpush.bf16.msra.mxu0 %v10608
  %10642 = vmatpush.bf16.msra.mxu0 %v10606
  %10643 = vmatpush.bf16.msra.mxu0 %v10604
  %10644 = vmatmul.bf16.gmra.mxu0 %v10538
  %v10645 = vpop.f32.mrf.mxu0
  %v10646 = vadd.f32 0.0, %v10645
  %v10647 = vpop.f32.mrf.mxu0
  %v10648 = vadd.f32 0.0, %v10647
  %10649 = vmatmul.bf16.gmra.mxu0 %v10539
  %v10650 = vpop.f32.mrf.mxu0
  %v10651 = vadd.f32 0.0, %v10650
  %v10652 = vpop.f32.mrf.mxu0
  %10653 = vdwg.mxu0
  %10654 = vmatpush.bf16.msra.mxu0 %v10619
  %10655 = vmatpush.bf16.msra.mxu0 %v10617
  %10656 = vmatpush.bf16.msra.mxu0 %v10615
  %10657 = vmatpush.bf16.msra.mxu0 %v10613
  %10658 = vmatpush.bf16.msra.mxu0 %v10611
  %10659 = vmatpush.bf16.msra.mxu0 %v10609
  %10660 = vmatpush.bf16.msra.mxu0 %v10607
  %10661 = vmatpush.bf16.msra.mxu0 %v10605
  %10662 = vmatmul.bf16.gmra.mxu0 %v10538
  %v10663 = vpop.f32.mrf.mxu0
  %v10664 = vadd.f32 0.0, %v10663
  %v10665 = vpop.f32.mrf.mxu0
  %v10666 = vadd.f32 0.0, %v10665
  %10667 = vmatmul.bf16.gmra.mxu0 %v10539
  %v10668 = vpop.f32.mrf.mxu0
  %v10669 = vadd.f32 0.0, %v10668
  %v10670 = vpop.f32.mrf.mxu0
  %10671 = vdwg.mxu0
  %v10672 = vadd.f32 %v10529, %v10646
  %v10673 = vadd.f32 %v10530, %v10664
  %v10674 = vadd.f32 %v10531, %v10648
  %v10675 = vadd.f32 %v10532, %v10666
  %v10676 = vadd.f32 %v10533, %v10651
  %v10677 = vadd.f32 %v10534, %v10669
  %v10678 = vld [vmem:[#allocation5 + $0x8] sm:$0xff]
  %v10679 = vld [vmem:[#allocation5 + $0x10] sm:$0xff]
  %v10680 = vld [vmem:[#allocation5 + $0x18] sm:$0x3f]
  %v10681 = vpack.c.bf16 %v10679, %v10678
  %v10682 = vpack.c.bf16 %v10680, %v10680
  %v10683 = vld [vmem:[%s8 + $0x300] sm:$0xff]
  %v10684 = vld [vmem:[%s8 + $0x308] sm:$0xff]
  %v10685 = vld [vmem:[%s8 + $0x310] sm:$0xff]
  %v10686 = vld [vmem:[%s8 + $0x318] sm:$0xff]
  %v10687 = vld [vmem:[%s8 + $0x320] sm:$0xff]
  %v10688 = vld [vmem:[%s8 + $0x328] sm:$0xff]
  %v10689 = vld [vmem:[%s8 + $0x330] sm:$0xff]
  %v10690 = vld [vmem:[%s8 + $0x338] sm:$0xff]
  %v10691 = vld [vmem:[%s8 + $0x340] sm:$0xff]
  %v10692 = vld [vmem:[%s8 + $0x348] sm:$0xff]
  %v10693 = vld [vmem:[%s8 + $0x350] sm:$0xff]
  %v10694 = vld [vmem:[%s8 + $0x358] sm:$0xff]
  %v10695 = vld [vmem:[%s8 + $0x360] sm:$0xff]
  %v10696 = vld [vmem:[%s8 + $0x368] sm:$0xff]
  %v10697 = vld [vmem:[%s8 + $0x370] sm:$0xff]
  %v10698 = vld [vmem:[%s8 + $0x378] sm:$0xff]
  %v10715 = vunpack.c.l.b16 %v10683
  %v10716 = vunpack.c.h.b16 %v10683
  %v10717 = vunpack.c.l.b16 %v10684
  %v10718 = vunpack.c.h.b16 %v10684
  %v10719 = vunpack.c.l.b16 %v10685
  %v10720 = vunpack.c.h.b16 %v10685
  %v10721 = vunpack.c.l.b16 %v10686
  %v10722 = vunpack.c.h.b16 %v10686
  %v10723 = vunpack.c.l.b16 %v10687
  %v10724 = vunpack.c.h.b16 %v10687
  %v10725 = vunpack.c.l.b16 %v10688
  %v10726 = vunpack.c.h.b16 %v10688
  %v10727 = vunpack.c.l.b16 %v10689
  %v10728 = vunpack.c.h.b16 %v10689
  %v10729 = vunpack.c.l.b16 %v10690
  %v10730 = vunpack.c.h.b16 %v10690
  %v10731 = vunpack.c.l.b16 %v10691
  %v10732 = vunpack.c.h.b16 %v10691
  %v10733 = vunpack.c.l.b16 %v10692
  %v10734 = vunpack.c.h.b16 %v10692
  %v10735 = vunpack.c.l.b16 %v10693
  %v10736 = vunpack.c.h.b16 %v10693
  %v10737 = vunpack.c.l.b16 %v10694
  %v10738 = vunpack.c.h.b16 %v10694
  %v10739 = vunpack.c.l.b16 %v10695
  %v10740 = vunpack.c.h.b16 %v10695
  %v10741 = vunpack.c.l.b16 %v10696
  %v10742 = vunpack.c.h.b16 %v10696
  %v10743 = vunpack.c.l.b16 %v10697
  %v10744 = vunpack.c.h.b16 %v10697
  %v10745 = vunpack.c.l.b16 %v10698
  %v10746 = vunpack.c.h.b16 %v10698
  %v10747 = vpack.c.b16 %v10717, %v10715
  %v10748 = vpack.c.b16 %v10718, %v10716
  %v10749 = vpack.c.b16 %v10721, %v10719
  %v10750 = vpack.c.b16 %v10722, %v10720
  %v10751 = vpack.c.b16 %v10725, %v10723
  %v10752 = vpack.c.b16 %v10726, %v10724
  %v10753 = vpack.c.b16 %v10729, %v10727
  %v10754 = vpack.c.b16 %v10730, %v10728
  %v10755 = vpack.c.b16 %v10733, %v10731
  %v10756 = vpack.c.b16 %v10734, %v10732
  %v10757 = vpack.c.b16 %v10737, %v10735
  %v10758 = vpack.c.b16 %v10738, %v10736
  %v10759 = vpack.c.b16 %v10741, %v10739
  %v10760 = vpack.c.b16 %v10742, %v10740
  %v10761 = vpack.c.b16 %v10745, %v10743
  %v10762 = vpack.c.b16 %v10746, %v10744
  %10779 = vmatpush.bf16.msra.mxu0 %v10761
  %10780 = vmatpush.bf16.msra.mxu0 %v10759
  %10781 = vmatpush.bf16.msra.mxu0 %v10757
  %10782 = vmatpush.bf16.msra.mxu0 %v10755
  %10783 = vmatpush.bf16.msra.mxu0 %v10753
  %10784 = vmatpush.bf16.msra.mxu0 %v10751
  %10785 = vmatpush.bf16.msra.mxu0 %v10749
  %10786 = vmatpush.bf16.msra.mxu0 %v10747
  %10787 = vmatmul.bf16.gmra.mxu0 %v10681
  %v10788 = vpop.f32.mrf.mxu0
  %v10789 = vadd.f32 0.0, %v10788
  %v10790 = vpop.f32.mrf.mxu0
  %v10791 = vadd.f32 0.0, %v10790
  %10792 = vmatmul.bf16.gmra.mxu0 %v10682
  %v10793 = vpop.f32.mrf.mxu0
  %v10794 = vadd.f32 0.0, %v10793
  %v10795 = vpop.f32.mrf.mxu0
  %10796 = vdwg.mxu0
  %10797 = vmatpush.bf16.msra.mxu0 %v10762
  %10798 = vmatpush.bf16.msra.mxu0 %v10760
  %10799 = vmatpush.bf16.msra.mxu0 %v10758
  %10800 = vmatpush.bf16.msra.mxu0 %v10756
  %10801 = vmatpush.bf16.msra.mxu0 %v10754
  %10802 = vmatpush.bf16.msra.mxu0 %v10752
  %10803 = vmatpush.bf16.msra.mxu0 %v10750
  %10804 = vmatpush.bf16.msra.mxu0 %v10748
  %10805 = vmatmul.bf16.gmra.mxu0 %v10681
  %v10806 = vpop.f32.mrf.mxu0
  %v10807 = vadd.f32 0.0, %v10806
  %v10808 = vpop.f32.mrf.mxu0
  %v10809 = vadd.f32 0.0, %v10808
  %10810 = vmatmul.bf16.gmra.mxu0 %v10682
  %v10811 = vpop.f32.mrf.mxu0
  %v10812 = vadd.f32 0.0, %v10811
  %v10813 = vpop.f32.mrf.mxu0
  %10814 = vdwg.mxu0
  %v10815 = vadd.f32 %v10672, %v10789
  %v10816 = vadd.f32 %v10673, %v10807
  %v10817 = vadd.f32 %v10674, %v10791
  %v10818 = vadd.f32 %v10675, %v10809
  %v10819 = vadd.f32 %v10676, %v10794
  %v10820 = vadd.f32 %v10677, %v10812
  %v10821 = vld [vmem:[#allocation5 + $0x9] sm:$0xff]
  %v10822 = vld [vmem:[#allocation5 + $0x11] sm:$0xff]
  %v10823 = vld [vmem:[#allocation5 + $0x19] sm:$0x3f]
  %v10824 = vpack.c.bf16 %v10822, %v10821
  %v10825 = vpack.c.bf16 %v10823, %v10823
  %v10826 = vld [vmem:[%s8 + $0x380] sm:$0xff]
  %v10827 = vld [vmem:[%s8 + $0x388] sm:$0xff]
  %v10828 = vld [vmem:[%s8 + $0x390] sm:$0xff]
  %v10829 = vld [vmem:[%s8 + $0x398] sm:$0xff]
  %v10830 = vld [vmem:[%s8 + $0x3a0] sm:$0xff]
  %v10831 = vld [vmem:[%s8 + $0x3a8] sm:$0xff]
  %v10832 = vld [vmem:[%s8 + $0x3b0] sm:$0xff]
  %v10833 = vld [vmem:[%s8 + $0x3b8] sm:$0xff]
  %v10834 = vld [vmem:[%s8 + $0x3c0] sm:$0xff]
  %v10835 = vld [vmem:[%s8 + $0x3c8] sm:$0xff]
  %v10836 = vld [vmem:[%s8 + $0x3d0] sm:$0xff]
  %v10837 = vld [vmem:[%s8 + $0x3d8] sm:$0xff]
  %v10838 = vld [vmem:[%s8 + $0x3e0] sm:$0xff]
  %v10839 = vld [vmem:[%s8 + $0x3e8] sm:$0xff]
  %v10840 = vld [vmem:[%s8 + $0x3f0] sm:$0xff]
  %v10841 = vld [vmem:[%s8 + $0x3f8] sm:$0xff]
  %v10858 = vunpack.c.l.b16 %v10826
  %v10859 = vunpack.c.h.b16 %v10826
  %v10860 = vunpack.c.l.b16 %v10827
  %v10861 = vunpack.c.h.b16 %v10827
  %v10862 = vunpack.c.l.b16 %v10828
  %v10863 = vunpack.c.h.b16 %v10828
  %v10864 = vunpack.c.l.b16 %v10829
  %v10865 = vunpack.c.h.b16 %v10829
  %v10866 = vunpack.c.l.b16 %v10830
  %v10867 = vunpack.c.h.b16 %v10830
  %v10868 = vunpack.c.l.b16 %v10831
  %v10869 = vunpack.c.h.b16 %v10831
  %v10870 = vunpack.c.l.b16 %v10832
  %v10871 = vunpack.c.h.b16 %v10832
  %v10872 = vunpack.c.l.b16 %v10833
  %v10873 = vunpack.c.h.b16 %v10833
  %v10874 = vunpack.c.l.b16 %v10834
  %v10875 = vunpack.c.h.b16 %v10834
  %v10876 = vunpack.c.l.b16 %v10835
  %v10877 = vunpack.c.h.b16 %v10835
  %v10878 = vunpack.c.l.b16 %v10836
  %v10879 = vunpack.c.h.b16 %v10836
  %v10880 = vunpack.c.l.b16 %v10837
  %v10881 = vunpack.c.h.b16 %v10837
  %v10882 = vunpack.c.l.b16 %v10838
  %v10883 = vunpack.c.h.b16 %v10838
  %v10884 = vunpack.c.l.b16 %v10839
  %v10885 = vunpack.c.h.b16 %v10839
  %v10886 = vunpack.c.l.b16 %v10840
  %v10887 = vunpack.c.h.b16 %v10840
  %v10888 = vunpack.c.l.b16 %v10841
  %v10889 = vunpack.c.h.b16 %v10841
  %v10890 = vpack.c.b16 %v10860, %v10858
  %v10891 = vpack.c.b16 %v10861, %v10859
  %v10892 = vpack.c.b16 %v10864, %v10862
  %v10893 = vpack.c.b16 %v10865, %v10863
  %v10894 = vpack.c.b16 %v10868, %v10866
  %v10895 = vpack.c.b16 %v10869, %v10867
  %v10896 = vpack.c.b16 %v10872, %v10870
  %v10897 = vpack.c.b16 %v10873, %v10871
  %v10898 = vpack.c.b16 %v10876, %v10874
  %v10899 = vpack.c.b16 %v10877, %v10875
  %v10900 = vpack.c.b16 %v10880, %v10878
  %v10901 = vpack.c.b16 %v10881, %v10879
  %v10902 = vpack.c.b16 %v10884, %v10882
  %v10903 = vpack.c.b16 %v10885, %v10883
  %v10904 = vpack.c.b16 %v10888, %v10886
  %v10905 = vpack.c.b16 %v10889, %v10887
  %10922 = vmatpush.bf16.msra.mxu0 %v10904
  %10923 = vmatpush.bf16.msra.mxu0 %v10902
  %10924 = vmatpush.bf16.msra.mxu0 %v10900
  %10925 = vmatpush.bf16.msra.mxu0 %v10898
  %10926 = vmatpush.bf16.msra.mxu0 %v10896
  %10927 = vmatpush.bf16.msra.mxu0 %v10894
  %10928 = vmatpush.bf16.msra.mxu0 %v10892
  %10929 = vmatpush.bf16.msra.mxu0 %v10890
  %10930 = vmatmul.bf16.gmra.mxu0 %v10824
  %v10931 = vpop.f32.mrf.mxu0
  %v10932 = vadd.f32 0.0, %v10931
  %v10933 = vpop.f32.mrf.mxu0
  %v10934 = vadd.f32 0.0, %v10933
  %10935 = vmatmul.bf16.gmra.mxu0 %v10825
  %v10936 = vpop.f32.mrf.mxu0
  %v10937 = vadd.f32 0.0, %v10936
  %v10938 = vpop.f32.mrf.mxu0
  %10939 = vdwg.mxu0
  %10940 = vmatpush.bf16.msra.mxu0 %v10905
  %10941 = vmatpush.bf16.msra.mxu0 %v10903
  %10942 = vmatpush.bf16.msra.mxu0 %v10901
  %10943 = vmatpush.bf16.msra.mxu0 %v10899
  %10944 = vmatpush.bf16.msra.mxu0 %v10897
  %10945 = vmatpush.bf16.msra.mxu0 %v10895
  %10946 = vmatpush.bf16.msra.mxu0 %v10893
  %10947 = vmatpush.bf16.msra.mxu0 %v10891
  %10948 = vmatmul.bf16.gmra.mxu0 %v10824
  %v10949 = vpop.f32.mrf.mxu0
  %v10950 = vadd.f32 0.0, %v10949
  %v10951 = vpop.f32.mrf.mxu0
  %v10952 = vadd.f32 0.0, %v10951
  %10953 = vmatmul.bf16.gmra.mxu0 %v10825
  %v10954 = vpop.f32.mrf.mxu0
  %v10955 = vadd.f32 0.0, %v10954
  %v10956 = vpop.f32.mrf.mxu0
  %10957 = vdwg.mxu0
  %v10958 = vadd.f32 %v10815, %v10932
  %v10959 = vadd.f32 %v10816, %v10950
  %v10960 = vadd.f32 %v10817, %v10934
  %v10961 = vadd.f32 %v10818, %v10952
  %v10962 = vadd.f32 %v10819, %v10937
  %v10963 = vadd.f32 %v10820, %v10955
  %v10964 = vld [vmem:[#allocation5 + $0xa] sm:$0xff]
  %v10965 = vld [vmem:[#allocation5 + $0x12] sm:$0xff]
  %v10966 = vld [vmem:[#allocation5 + $0x1a] sm:$0x3f]
  %v10967 = vpack.c.bf16 %v10965, %v10964
  %v10968 = vpack.c.bf16 %v10966, %v10966
  %v10969 = vld [vmem:[%s8 + $0x400] sm:$0xff]
  %v10970 = vld [vmem:[%s8 + $0x408] sm:$0xff]
  %v10971 = vld [vmem:[%s8 + $0x410] sm:$0xff]
  %v10972 = vld [vmem:[%s8 + $0x418] sm:$0xff]
  %v10973 = vld [vmem:[%s8 + $0x420] sm:$0xff]
  %v10974 = vld [vmem:[%s8 + $0x428] sm:$0xff]
  %v10975 = vld [vmem:[%s8 + $0x430] sm:$0xff]
  %v10976 = vld [vmem:[%s8 + $0x438] sm:$0xff]
  %v10977 = vld [vmem:[%s8 + $0x440] sm:$0xff]
  %v10978 = vld [vmem:[%s8 + $0x448] sm:$0xff]
  %v10979 = vld [vmem:[%s8 + $0x450] sm:$0xff]
  %v10980 = vld [vmem:[%s8 + $0x458] sm:$0xff]
  %v10981 = vld [vmem:[%s8 + $0x460] sm:$0xff]
  %v10982 = vld [vmem:[%s8 + $0x468] sm:$0xff]
  %v10983 = vld [vmem:[%s8 + $0x470] sm:$0xff]
  %v10984 = vld [vmem:[%s8 + $0x478] sm:$0xff]
  %v11001 = vunpack.c.l.b16 %v10969
  %v11002 = vunpack.c.h.b16 %v10969
  %v11003 = vunpack.c.l.b16 %v10970
  %v11004 = vunpack.c.h.b16 %v10970
  %v11005 = vunpack.c.l.b16 %v10971
  %v11006 = vunpack.c.h.b16 %v10971
  %v11007 = vunpack.c.l.b16 %v10972
  %v11008 = vunpack.c.h.b16 %v10972
  %v11009 = vunpack.c.l.b16 %v10973
  %v11010 = vunpack.c.h.b16 %v10973
  %v11011 = vunpack.c.l.b16 %v10974
  %v11012 = vunpack.c.h.b16 %v10974
  %v11013 = vunpack.c.l.b16 %v10975
  %v11014 = vunpack.c.h.b16 %v10975
  %v11015 = vunpack.c.l.b16 %v10976
  %v11016 = vunpack.c.h.b16 %v10976
  %v11017 = vunpack.c.l.b16 %v10977
  %v11018 = vunpack.c.h.b16 %v10977
  %v11019 = vunpack.c.l.b16 %v10978
  %v11020 = vunpack.c.h.b16 %v10978
  %v11021 = vunpack.c.l.b16 %v10979
  %v11022 = vunpack.c.h.b16 %v10979
  %v11023 = vunpack.c.l.b16 %v10980
  %v11024 = vunpack.c.h.b16 %v10980
  %v11025 = vunpack.c.l.b16 %v10981
  %v11026 = vunpack.c.h.b16 %v10981
  %v11027 = vunpack.c.l.b16 %v10982
  %v11028 = vunpack.c.h.b16 %v10982
  %v11029 = vunpack.c.l.b16 %v10983
  %v11030 = vunpack.c.h.b16 %v10983
  %v11031 = vunpack.c.l.b16 %v10984
  %v11032 = vunpack.c.h.b16 %v10984
  %v11033 = vpack.c.b16 %v11003, %v11001
  %v11034 = vpack.c.b16 %v11004, %v11002
  %v11035 = vpack.c.b16 %v11007, %v11005
  %v11036 = vpack.c.b16 %v11008, %v11006
  %v11037 = vpack.c.b16 %v11011, %v11009
  %v11038 = vpack.c.b16 %v11012, %v11010
  %v11039 = vpack.c.b16 %v11015, %v11013
  %v11040 = vpack.c.b16 %v11016, %v11014
  %v11041 = vpack.c.b16 %v11019, %v11017
  %v11042 = vpack.c.b16 %v11020, %v11018
  %v11043 = vpack.c.b16 %v11023, %v11021
  %v11044 = vpack.c.b16 %v11024, %v11022
  %v11045 = vpack.c.b16 %v11027, %v11025
  %v11046 = vpack.c.b16 %v11028, %v11026
  %v11047 = vpack.c.b16 %v11031, %v11029
  %v11048 = vpack.c.b16 %v11032, %v11030
  %11065 = vmatpush.bf16.msra.mxu0 %v11047
  %11066 = vmatpush.bf16.msra.mxu0 %v11045
  %11067 = vmatpush.bf16.msra.mxu0 %v11043
  %11068 = vmatpush.bf16.msra.mxu0 %v11041
  %11069 = vmatpush.bf16.msra.mxu0 %v11039
  %11070 = vmatpush.bf16.msra.mxu0 %v11037
  %11071 = vmatpush.bf16.msra.mxu0 %v11035
  %11072 = vmatpush.bf16.msra.mxu0 %v11033
  %11073 = vmatmul.bf16.gmra.mxu0 %v10967
  %v11074 = vpop.f32.mrf.mxu0
  %v11075 = vadd.f32 0.0, %v11074
  %v11076 = vpop.f32.mrf.mxu0
  %v11077 = vadd.f32 0.0, %v11076
  %11078 = vmatmul.bf16.gmra.mxu0 %v10968
  %v11079 = vpop.f32.mrf.mxu0
  %v11080 = vadd.f32 0.0, %v11079
  %v11081 = vpop.f32.mrf.mxu0
  %11082 = vdwg.mxu0
  %11083 = vmatpush.bf16.msra.mxu0 %v11048
  %11084 = vmatpush.bf16.msra.mxu0 %v11046
  %11085 = vmatpush.bf16.msra.mxu0 %v11044
  %11086 = vmatpush.bf16.msra.mxu0 %v11042
  %11087 = vmatpush.bf16.msra.mxu0 %v11040
  %11088 = vmatpush.bf16.msra.mxu0 %v11038
  %11089 = vmatpush.bf16.msra.mxu0 %v11036
  %11090 = vmatpush.bf16.msra.mxu0 %v11034
  %11091 = vmatmul.bf16.gmra.mxu0 %v10967
  %v11092 = vpop.f32.mrf.mxu0
  %v11093 = vadd.f32 0.0, %v11092
  %v11094 = vpop.f32.mrf.mxu0
  %v11095 = vadd.f32 0.0, %v11094
  %11096 = vmatmul.bf16.gmra.mxu0 %v10968
  %v11097 = vpop.f32.mrf.mxu0
  %v11098 = vadd.f32 0.0, %v11097
  %v11099 = vpop.f32.mrf.mxu0
  %11100 = vdwg.mxu0
  %v11101 = vadd.f32 %v10958, %v11075
  %v11102 = vadd.f32 %v10959, %v11093
  %v11103 = vadd.f32 %v10960, %v11077
  %v11104 = vadd.f32 %v10961, %v11095
  %v11105 = vadd.f32 %v10962, %v11080
  %v11106 = vadd.f32 %v10963, %v11098
  %v11107 = vld [vmem:[#allocation4] sm:$0xe0]
  %v11108 = vld [vmem:[#allocation4 + $0x8] sm:$0xe0]
  %v11109 = vld [vmem:[#allocation4 + $0x10] sm:$0xff]
  %v11110 = vld [vmem:[#allocation4 + $0x18] sm:$0xff]
  %v11111 = vld [vmem:[#allocation4 + $0x20] sm:$0xff]
  %v11112 = vld [vmem:[#allocation4 + $0x28] sm:$0xff]
  %v11113 = vld [vmem:[#allocation4 + $0x30] sm:$0x7]
  %v11114 = vld [vmem:[#allocation4 + $0x38] sm:$0x7]
  %v11121 = vrot.slane %v11101, 3
  %v11122 = vrot.slane %v11102, 3
  %v11123 = vrot.slane %v11103, 3
  %v11124 = vsel %vm8053, %v11121, %v11123
  %v11125 = vrot.slane %v11104, 3
  %v11126 = vsel %vm8053, %v11122, %v11125
  %v11127 = vrot.slane %v11105, 3
  %v11128 = vsel %vm8053, %v11123, %v11127
  %v11129 = vrot.slane %v11106, 3
  %v11130 = vsel %vm8053, %v11125, %v11129
  %v11139 = vadd.f32 %v11107, %v11121
  %v11140 = vadd.f32 %v11108, %v11122
  %v11141 = vadd.f32 %v11109, %v11124
  %v11142 = vadd.f32 %v11110, %v11126
  %v11143 = vadd.f32 %v11111, %v11128
  %v11144 = vadd.f32 %v11112, %v11130
  %v11145 = vadd.f32 %v11113, %v11127
  %v11146 = vadd.f32 %v11114, %v11129
  %v11147 = vld [vmem:[%s10 + $0x9] sm:$0x3]
  %v11149 = vperm.slane %v11147, 0
  %v11150 = vperm.slane %v11147, 1
  %v11153 = vadd.f32 %v11139, %v11149
  %v11154 = vadd.f32 %v11140, %v11150
  %v11155 = vadd.f32 %v11141, %v11149
  %v11156 = vadd.f32 %v11142, %v11150
  %v11157 = vadd.f32 %v11143, %v11149
  %v11158 = vadd.f32 %v11144, %v11150
  %v11159 = vadd.f32 %v11145, %v11149
  %v11160 = vadd.f32 %v11146, %v11150
  %v11161 = vmax.f32 %v11153, 0.0
  %v11162 = vmax.f32 %v11154, 0.0
  %v11163 = vmax.f32 %v11155, 0.0
  %v11164 = vmax.f32 %v11156, 0.0
  %v11165 = vmax.f32 %v11157, 0.0
  %v11166 = vmax.f32 %v11158, 0.0
  %v11167 = vmax.f32 %v11159, 0.0
  %v11168 = vmax.f32 %v11160, 0.0
  %11169 = vst [vmem:[#allocation4] sm:$0x60] %v11161
  %11170 = vst [vmem:[#allocation4 + $0x8] sm:$0x60] %v11162
  %11171 = vst [vmem:[#allocation4 + $0x10] sm:$0x6] %v11163
  %11172 = vst [vmem:[#allocation4 + $0x18] sm:$0x6] %v11164
  %11173 = vst [vmem:[#allocation4 + $0x20] sm:$0x60] %v11165
  %11174 = vst [vmem:[#allocation4 + $0x28] sm:$0x60] %v11166
  %11175 = vst [vmem:[#allocation4 + $0x30] sm:$0x6] %v11167
  %11176 = vst [vmem:[#allocation4 + $0x38] sm:$0x6] %v11168
  %v11177 = vld [vmem:[#allocation4] sm:$0xff]
  %v11178 = vld [vmem:[#allocation4 + $0x8] sm:$0xff]
  %v11179 = vld [vmem:[#allocation4 + $0x10] sm:$0xff]
  %v11180 = vld [vmem:[#allocation4 + $0x18] sm:$0xff]
  %v11181 = vld [vmem:[#allocation4 + $0x20] sm:$0x3f]
  %v11182 = vld [vmem:[#allocation4 + $0x28] sm:$0x3f]
  %v11183 = vpack.c.bf16 %v11179, %v11177
  %v11184 = vpack.c.bf16 %v11180, %v11178
  %v11185 = vpack.c.bf16 %v11181, %v11181
  %v11186 = vpack.c.bf16 %v11182, %v11182
  %v11187 = vld [vmem:[%s9] sm:$0xf]
  %v11188 = vld [vmem:[%s9 + $0x4] sm:$0xf]
  %v11189 = vld [vmem:[%s9 + $0x8] sm:$0xf]
  %v11190 = vld [vmem:[%s9 + $0xc] sm:$0xf]
  %v11191 = vld [vmem:[%s9 + $0x10] sm:$0xf]
  %v11192 = vld [vmem:[%s9 + $0x14] sm:$0xf]
  %v11193 = vld [vmem:[%s9 + $0x18] sm:$0xf]
  %v11194 = vld [vmem:[%s9 + $0x1c] sm:$0xf]
  %v11195 = vld [vmem:[%s9 + $0x20] sm:$0xf]
  %v11196 = vld [vmem:[%s9 + $0x24] sm:$0xf]
  %v11197 = vld [vmem:[%s9 + $0x28] sm:$0xf]
  %v11198 = vld [vmem:[%s9 + $0x2c] sm:$0xf]
  %v11199 = vld [vmem:[%s9 + $0x30] sm:$0xf]
  %v11200 = vld [vmem:[%s9 + $0x34] sm:$0xf]
  %v11201 = vld [vmem:[%s9 + $0x38] sm:$0xf]
  %v11202 = vld [vmem:[%s9 + $0x3c] sm:$0xf]
  %v11203 = vld [vmem:[%s9 + $0x40] sm:$0xf]
  %v11204 = vld [vmem:[%s9 + $0x44] sm:$0xf]
  %v11205 = vld [vmem:[%s9 + $0x48] sm:$0xf]
  %v11206 = vld [vmem:[%s9 + $0x4c] sm:$0xf]
  %v11207 = vld [vmem:[%s9 + $0x50] sm:$0xf]
  %v11208 = vld [vmem:[%s9 + $0x54] sm:$0xf]
  %v11209 = vld [vmem:[%s9 + $0x58] sm:$0xf]
  %v11210 = vld [vmem:[%s9 + $0x5c] sm:$0xf]
  %v11211 = vld [vmem:[%s9 + $0x60] sm:$0xf]
  %v11212 = vld [vmem:[%s9 + $0x64] sm:$0xf]
  %v11213 = vld [vmem:[%s9 + $0x68] sm:$0xf]
  %v11214 = vld [vmem:[%s9 + $0x6c] sm:$0xf]
  %v11215 = vld [vmem:[%s9 + $0x70] sm:$0xf]
  %v11216 = vld [vmem:[%s9 + $0x74] sm:$0xf]
  %v11217 = vld [vmem:[%s9 + $0x78] sm:$0xf]
  %v11218 = vld [vmem:[%s9 + $0x7c] sm:$0xf]
  %v11219 = vld [vmem:[#allocation4] sm:$0xfe]
  %v11220 = vld [vmem:[#allocation4 + $0x8] sm:$0xfe]
  %v11221 = vld [vmem:[#allocation4 + $0x20] sm:$0x7f]
  %v11222 = vld [vmem:[#allocation4 + $0x28] sm:$0x7f]
  %v11223 = vpack.c.bf16 %v11179, %v11219
  %v11224 = vpack.c.bf16 %v11180, %v11220
  %v11225 = vpack.c.bf16 %v11221, %v11221
  %v11226 = vpack.c.bf16 %v11222, %v11222
  %v11227 = vld [vmem:[%s9 + $0x80] sm:$0xf]
  %v11228 = vld [vmem:[%s9 + $0x84] sm:$0xf]
  %v11229 = vld [vmem:[%s9 + $0x88] sm:$0xf]
  %v11230 = vld [vmem:[%s9 + $0x8c] sm:$0xf]
  %v11231 = vld [vmem:[%s9 + $0x90] sm:$0xf]
  %v11232 = vld [vmem:[%s9 + $0x94] sm:$0xf]
  %v11233 = vld [vmem:[%s9 + $0x98] sm:$0xf]
  %v11234 = vld [vmem:[%s9 + $0x9c] sm:$0xf]
  %v11235 = vld [vmem:[%s9 + $0xa0] sm:$0xf]
  %v11236 = vld [vmem:[%s9 + $0xa4] sm:$0xf]
  %v11237 = vld [vmem:[%s9 + $0xa8] sm:$0xf]
  %v11238 = vld [vmem:[%s9 + $0xac] sm:$0xf]
  %v11239 = vld [vmem:[%s9 + $0xb0] sm:$0xf]
  %v11240 = vld [vmem:[%s9 + $0xb4] sm:$0xf]
  %v11241 = vld [vmem:[%s9 + $0xb8] sm:$0xf]
  %v11242 = vld [vmem:[%s9 + $0xbc] sm:$0xf]
  %v11243 = vld [vmem:[%s9 + $0xc0] sm:$0xf]
  %v11244 = vld [vmem:[%s9 + $0xc4] sm:$0xf]
  %v11245 = vld [vmem:[%s9 + $0xc8] sm:$0xf]
  %v11246 = vld [vmem:[%s9 + $0xcc] sm:$0xf]
  %v11247 = vld [vmem:[%s9 + $0xd0] sm:$0xf]
  %v11248 = vld [vmem:[%s9 + $0xd4] sm:$0xf]
  %v11249 = vld [vmem:[%s9 + $0xd8] sm:$0xf]
  %v11250 = vld [vmem:[%s9 + $0xdc] sm:$0xf]
  %v11251 = vld [vmem:[%s9 + $0xe0] sm:$0xf]
  %v11252 = vld [vmem:[%s9 + $0xe4] sm:$0xf]
  %v11253 = vld [vmem:[%s9 + $0xe8] sm:$0xf]
  %v11254 = vld [vmem:[%s9 + $0xec] sm:$0xf]
  %v11255 = vld [vmem:[%s9 + $0xf0] sm:$0xf]
  %v11256 = vld [vmem:[%s9 + $0xf4] sm:$0xf]
  %v11257 = vld [vmem:[%s9 + $0xf8] sm:$0xf]
  %v11258 = vld [vmem:[%s9 + $0xfc] sm:$0xf]
  %v11260 = vshrl.u32 %v11223, 16
  %v11262 = vshll.u32 %v11223, 16
  %v11264 = vrot.slane %v11262, 1
  %v11265 = vor.u32 %v11260, %v11264
  %v11267 = vshll.u32 %v11225, 16
  %v11269 = vrot.slane %v11267, 1
  %v11270 = vsel %vm5119, %v11265, %v11269
  %v11272 = vshrl.u32 %v11224, 16
  %v11274 = vshll.u32 %v11224, 16
  %v11276 = vrot.slane %v11274, 1
  %v11277 = vor.u32 %v11272, %v11276
  %v11279 = vshll.u32 %v11226, 16
  %v11281 = vrot.slane %v11279, 1
  %v11282 = vsel %vm5119, %v11277, %v11281
  %v11283 = vshrl.u32 %v11225, 16
  %v11285 = vor.u32 %v11283, %v11269
  %v11286 = vshrl.u32 %v11226, 16
  %v11288 = vor.u32 %v11286, %v11281
  %v11325 = vunpack.c.l.b16 %v11227
  %v11326 = vunpack.c.l.b16 %v11228
  %v11327 = vunpack.c.l.b16 %v11229
  %v11328 = vunpack.c.l.b16 %v11230
  %v11329 = vunpack.c.l.b16 %v11231
  %v11330 = vunpack.c.l.b16 %v11232
  %v11331 = vunpack.c.l.b16 %v11233
  %v11332 = vunpack.c.l.b16 %v11234
  %v11333 = vunpack.c.l.b16 %v11235
  %v11334 = vunpack.c.l.b16 %v11236
  %v11335 = vunpack.c.l.b16 %v11237
  %v11336 = vunpack.c.l.b16 %v11238
  %v11337 = vunpack.c.l.b16 %v11239
  %v11338 = vunpack.c.l.b16 %v11240
  %v11339 = vunpack.c.l.b16 %v11241
  %v11340 = vunpack.c.l.b16 %v11242
  %v11341 = vunpack.c.l.b16 %v11243
  %v11342 = vunpack.c.l.b16 %v11244
  %v11343 = vunpack.c.l.b16 %v11245
  %v11344 = vunpack.c.l.b16 %v11246
  %v11345 = vunpack.c.l.b16 %v11247
  %v11346 = vunpack.c.l.b16 %v11248
  %v11347 = vunpack.c.l.b16 %v11249
  %v11348 = vunpack.c.l.b16 %v11250
  %v11349 = vunpack.c.l.b16 %v11251
  %v11350 = vunpack.c.l.b16 %v11252
  %v11351 = vunpack.c.l.b16 %v11253
  %v11352 = vunpack.c.l.b16 %v11254
  %v11353 = vunpack.c.l.b16 %v11255
  %v11354 = vunpack.c.l.b16 %v11256
  %v11355 = vunpack.c.l.b16 %v11257
  %v11356 = vunpack.c.l.b16 %v11258
  %v11357 = vpack.c.b16 %v11326, %v11325
  %v11358 = vpack.c.b16 %v11328, %v11327
  %v11359 = vpack.c.b16 %v11330, %v11329
  %v11360 = vpack.c.b16 %v11332, %v11331
  %v11361 = vpack.c.b16 %v11334, %v11333
  %v11362 = vpack.c.b16 %v11336, %v11335
  %v11363 = vpack.c.b16 %v11338, %v11337
  %v11364 = vpack.c.b16 %v11340, %v11339
  %v11365 = vpack.c.b16 %v11342, %v11341
  %v11366 = vpack.c.b16 %v11344, %v11343
  %v11367 = vpack.c.b16 %v11346, %v11345
  %v11368 = vpack.c.b16 %v11348, %v11347
  %v11369 = vpack.c.b16 %v11350, %v11349
  %v11370 = vpack.c.b16 %v11352, %v11351
  %v11371 = vpack.c.b16 %v11354, %v11353
  %v11372 = vpack.c.b16 %v11356, %v11355
  %11389 = vmatpush.bf16.msra.mxu0 %v11364
  %11390 = vmatpush.bf16.msra.mxu0 %v11363
  %11391 = vmatpush.bf16.msra.mxu0 %v11362
  %11392 = vmatpush.bf16.msra.mxu0 %v11361
  %11393 = vmatpush.bf16.msra.mxu0 %v11360
  %11394 = vmatpush.bf16.msra.mxu0 %v11359
  %11395 = vmatpush.bf16.msra.mxu0 %v11358
  %11396 = vmatpush.bf16.msra.mxu0 %v11357
  %11397 = vmatmul.bf16.gmra.mxu0 %v11270
  %v11398 = vpop.f32.mrf.mxu0
  %v11399 = vadd.f32 0.0, %v11398
  %v11400 = vpop.f32.mrf.mxu0
  %11401 = vmatmul.bf16.gmra.mxu0 %v11285
  %v11402 = vpop.f32.mrf.mxu0
  %v11403 = vadd.f32 0.0, %v11402
  %v11404 = vpop.f32.mrf.mxu0
  %11405 = vdwg.mxu0
  %11406 = vmatpush.bf16.msra.mxu0 %v11372
  %11407 = vmatpush.bf16.msra.mxu0 %v11371
  %11408 = vmatpush.bf16.msra.mxu0 %v11370
  %11409 = vmatpush.bf16.msra.mxu0 %v11369
  %11410 = vmatpush.bf16.msra.mxu0 %v11368
  %11411 = vmatpush.bf16.msra.mxu0 %v11367
  %11412 = vmatpush.bf16.msra.mxu0 %v11366
  %11413 = vmatpush.bf16.msra.mxu0 %v11365
  %11414 = vmatmul.bf16.gmra.mxu0 %v11282
  %v11415 = vpop.f32.mrf.mxu0
  %v11416 = vadd.f32 %v11399, %v11415
  %v11417 = vpop.f32.mrf.mxu0
  %11418 = vmatmul.bf16.gmra.mxu0 %v11288
  %v11419 = vpop.f32.mrf.mxu0
  %v11420 = vadd.f32 %v11403, %v11419
  %v11421 = vpop.f32.mrf.mxu0
  %11422 = vdwg.mxu0
  %v11455 = vunpack.c.l.b16 %v11187
  %v11456 = vunpack.c.l.b16 %v11188
  %v11457 = vunpack.c.l.b16 %v11189
  %v11458 = vunpack.c.l.b16 %v11190
  %v11459 = vunpack.c.l.b16 %v11191
  %v11460 = vunpack.c.l.b16 %v11192
  %v11461 = vunpack.c.l.b16 %v11193
  %v11462 = vunpack.c.l.b16 %v11194
  %v11463 = vunpack.c.l.b16 %v11195
  %v11464 = vunpack.c.l.b16 %v11196
  %v11465 = vunpack.c.l.b16 %v11197
  %v11466 = vunpack.c.l.b16 %v11198
  %v11467 = vunpack.c.l.b16 %v11199
  %v11468 = vunpack.c.l.b16 %v11200
  %v11469 = vunpack.c.l.b16 %v11201
  %v11470 = vunpack.c.l.b16 %v11202
  %v11471 = vunpack.c.l.b16 %v11203
  %v11472 = vunpack.c.l.b16 %v11204
  %v11473 = vunpack.c.l.b16 %v11205
  %v11474 = vunpack.c.l.b16 %v11206
  %v11475 = vunpack.c.l.b16 %v11207
  %v11476 = vunpack.c.l.b16 %v11208
  %v11477 = vunpack.c.l.b16 %v11209
  %v11478 = vunpack.c.l.b16 %v11210
  %v11479 = vunpack.c.l.b16 %v11211
  %v11480 = vunpack.c.l.b16 %v11212
  %v11481 = vunpack.c.l.b16 %v11213
  %v11482 = vunpack.c.l.b16 %v11214
  %v11483 = vunpack.c.l.b16 %v11215
  %v11484 = vunpack.c.l.b16 %v11216
  %v11485 = vunpack.c.l.b16 %v11217
  %v11486 = vunpack.c.l.b16 %v11218
  %v11487 = vpack.c.b16 %v11456, %v11455
  %v11488 = vpack.c.b16 %v11458, %v11457
  %v11489 = vpack.c.b16 %v11460, %v11459
  %v11490 = vpack.c.b16 %v11462, %v11461
  %v11491 = vpack.c.b16 %v11464, %v11463
  %v11492 = vpack.c.b16 %v11466, %v11465
  %v11493 = vpack.c.b16 %v11468, %v11467
  %v11494 = vpack.c.b16 %v11470, %v11469
  %v11495 = vpack.c.b16 %v11472, %v11471
  %v11496 = vpack.c.b16 %v11474, %v11473
  %v11497 = vpack.c.b16 %v11476, %v11475
  %v11498 = vpack.c.b16 %v11478, %v11477
  %v11499 = vpack.c.b16 %v11480, %v11479
  %v11500 = vpack.c.b16 %v11482, %v11481
  %v11501 = vpack.c.b16 %v11484, %v11483
  %v11502 = vpack.c.b16 %v11486, %v11485
  %11519 = vmatpush.bf16.msra.mxu0 %v11494
  %11520 = vmatpush.bf16.msra.mxu0 %v11493
  %11521 = vmatpush.bf16.msra.mxu0 %v11492
  %11522 = vmatpush.bf16.msra.mxu0 %v11491
  %11523 = vmatpush.bf16.msra.mxu0 %v11490
  %11524 = vmatpush.bf16.msra.mxu0 %v11489
  %11525 = vmatpush.bf16.msra.mxu0 %v11488
  %11526 = vmatpush.bf16.msra.mxu0 %v11487
  %11527 = vmatmul.bf16.gmra.mxu0 %v11183
  %v11528 = vpop.f32.mrf.mxu0
  %v11529 = vadd.f32 %v11416, %v11528
  %v11530 = vpop.f32.mrf.mxu0
  %11531 = vmatmul.bf16.gmra.mxu0 %v11185
  %v11532 = vpop.f32.mrf.mxu0
  %v11533 = vadd.f32 %v11420, %v11532
  %v11534 = vpop.f32.mrf.mxu0
  %11535 = vdwg.mxu0
  %11536 = vmatpush.bf16.msra.mxu0 %v11502
  %11537 = vmatpush.bf16.msra.mxu0 %v11501
  %11538 = vmatpush.bf16.msra.mxu0 %v11500
  %11539 = vmatpush.bf16.msra.mxu0 %v11499
  %11540 = vmatpush.bf16.msra.mxu0 %v11498
  %11541 = vmatpush.bf16.msra.mxu0 %v11497
  %11542 = vmatpush.bf16.msra.mxu0 %v11496
  %11543 = vmatpush.bf16.msra.mxu0 %v11495
  %11544 = vmatmul.bf16.gmra.mxu0 %v11184
  %v11545 = vpop.f32.mrf.mxu0
  %v11546 = vadd.f32 %v11529, %v11545
  %v11547 = vpop.f32.mrf.mxu0
  %11548 = vmatmul.bf16.gmra.mxu0 %v11186
  %v11549 = vpop.f32.mrf.mxu0
  %v11550 = vadd.f32 %v11533, %v11549
  %v11551 = vpop.f32.mrf.mxu0
  %11552 = vdwg.mxu0
  %v11553 = vld [vmem:[#allocation4] sm:$0xfc]
  %v11554 = vld [vmem:[#allocation4 + $0x8] sm:$0xfc]
  %v11555 = vld [vmem:[#allocation4 + $0x20] sm:$0xff]
  %v11556 = vld [vmem:[#allocation4 + $0x28] sm:$0xff]
  %v11557 = vpack.c.bf16 %v11179, %v11553
  %v11558 = vpack.c.bf16 %v11180, %v11554
  %v11559 = vpack.c.bf16 %v11555, %v11555
  %v11560 = vpack.c.bf16 %v11556, %v11556
  %v11561 = vld [vmem:[%s9 + $0x100] sm:$0xf]
  %v11562 = vld [vmem:[%s9 + $0x104] sm:$0xf]
  %v11563 = vld [vmem:[%s9 + $0x108] sm:$0xf]
  %v11564 = vld [vmem:[%s9 + $0x10c] sm:$0xf]
  %v11565 = vld [vmem:[%s9 + $0x110] sm:$0xf]
  %v11566 = vld [vmem:[%s9 + $0x114] sm:$0xf]
  %v11567 = vld [vmem:[%s9 + $0x118] sm:$0xf]
  %v11568 = vld [vmem:[%s9 + $0x11c] sm:$0xf]
  %v11569 = vld [vmem:[%s9 + $0x120] sm:$0xf]
  %v11570 = vld [vmem:[%s9 + $0x124] sm:$0xf]
  %v11571 = vld [vmem:[%s9 + $0x128] sm:$0xf]
  %v11572 = vld [vmem:[%s9 + $0x12c] sm:$0xf]
  %v11573 = vld [vmem:[%s9 + $0x130] sm:$0xf]
  %v11574 = vld [vmem:[%s9 + $0x134] sm:$0xf]
  %v11575 = vld [vmem:[%s9 + $0x138] sm:$0xf]
  %v11576 = vld [vmem:[%s9 + $0x13c] sm:$0xf]
  %v11577 = vld [vmem:[%s9 + $0x140] sm:$0xf]
  %v11578 = vld [vmem:[%s9 + $0x144] sm:$0xf]
  %v11579 = vld [vmem:[%s9 + $0x148] sm:$0xf]
  %v11580 = vld [vmem:[%s9 + $0x14c] sm:$0xf]
  %v11581 = vld [vmem:[%s9 + $0x150] sm:$0xf]
  %v11582 = vld [vmem:[%s9 + $0x154] sm:$0xf]
  %v11583 = vld [vmem:[%s9 + $0x158] sm:$0xf]
  %v11584 = vld [vmem:[%s9 + $0x15c] sm:$0xf]
  %v11585 = vld [vmem:[%s9 + $0x160] sm:$0xf]
  %v11586 = vld [vmem:[%s9 + $0x164] sm:$0xf]
  %v11587 = vld [vmem:[%s9 + $0x168] sm:$0xf]
  %v11588 = vld [vmem:[%s9 + $0x16c] sm:$0xf]
  %v11589 = vld [vmem:[%s9 + $0x170] sm:$0xf]
  %v11590 = vld [vmem:[%s9 + $0x174] sm:$0xf]
  %v11591 = vld [vmem:[%s9 + $0x178] sm:$0xf]
  %v11592 = vld [vmem:[%s9 + $0x17c] sm:$0xf]
  %v11597 = vrot.slane %v11557, 1
  %v11598 = vrot.slane %v11559, 1
  %v11599 = vsel %vm5458, %v11597, %v11598
  %v11600 = vrot.slane %v11558, 1
  %v11601 = vrot.slane %v11560, 1
  %v11602 = vsel %vm5458, %v11600, %v11601
  %v11639 = vunpack.c.l.b16 %v11561
  %v11640 = vunpack.c.l.b16 %v11562
  %v11641 = vunpack.c.l.b16 %v11563
  %v11642 = vunpack.c.l.b16 %v11564
  %v11643 = vunpack.c.l.b16 %v11565
  %v11644 = vunpack.c.l.b16 %v11566
  %v11645 = vunpack.c.l.b16 %v11567
  %v11646 = vunpack.c.l.b16 %v11568
  %v11647 = vunpack.c.l.b16 %v11569
  %v11648 = vunpack.c.l.b16 %v11570
  %v11649 = vunpack.c.l.b16 %v11571
  %v11650 = vunpack.c.l.b16 %v11572
  %v11651 = vunpack.c.l.b16 %v11573
  %v11652 = vunpack.c.l.b16 %v11574
  %v11653 = vunpack.c.l.b16 %v11575
  %v11654 = vunpack.c.l.b16 %v11576
  %v11655 = vunpack.c.l.b16 %v11577
  %v11656 = vunpack.c.l.b16 %v11578
  %v11657 = vunpack.c.l.b16 %v11579
  %v11658 = vunpack.c.l.b16 %v11580
  %v11659 = vunpack.c.l.b16 %v11581
  %v11660 = vunpack.c.l.b16 %v11582
  %v11661 = vunpack.c.l.b16 %v11583
  %v11662 = vunpack.c.l.b16 %v11584
  %v11663 = vunpack.c.l.b16 %v11585
  %v11664 = vunpack.c.l.b16 %v11586
  %v11665 = vunpack.c.l.b16 %v11587
  %v11666 = vunpack.c.l.b16 %v11588
  %v11667 = vunpack.c.l.b16 %v11589
  %v11668 = vunpack.c.l.b16 %v11590
  %v11669 = vunpack.c.l.b16 %v11591
  %v11670 = vunpack.c.l.b16 %v11592
  %v11671 = vpack.c.b16 %v11640, %v11639
  %v11672 = vpack.c.b16 %v11642, %v11641
  %v11673 = vpack.c.b16 %v11644, %v11643
  %v11674 = vpack.c.b16 %v11646, %v11645
  %v11675 = vpack.c.b16 %v11648, %v11647
  %v11676 = vpack.c.b16 %v11650, %v11649
  %v11677 = vpack.c.b16 %v11652, %v11651
  %v11678 = vpack.c.b16 %v11654, %v11653
  %v11679 = vpack.c.b16 %v11656, %v11655
  %v11680 = vpack.c.b16 %v11658, %v11657
  %v11681 = vpack.c.b16 %v11660, %v11659
  %v11682 = vpack.c.b16 %v11662, %v11661
  %v11683 = vpack.c.b16 %v11664, %v11663
  %v11684 = vpack.c.b16 %v11666, %v11665
  %v11685 = vpack.c.b16 %v11668, %v11667
  %v11686 = vpack.c.b16 %v11670, %v11669
  %11703 = vmatpush.bf16.msra.mxu0 %v11678
  %11704 = vmatpush.bf16.msra.mxu0 %v11677
  %11705 = vmatpush.bf16.msra.mxu0 %v11676
  %11706 = vmatpush.bf16.msra.mxu0 %v11675
  %11707 = vmatpush.bf16.msra.mxu0 %v11674
  %11708 = vmatpush.bf16.msra.mxu0 %v11673
  %11709 = vmatpush.bf16.msra.mxu0 %v11672
  %11710 = vmatpush.bf16.msra.mxu0 %v11671
  %11711 = vmatmul.bf16.gmra.mxu0 %v11599
  %v11712 = vpop.f32.mrf.mxu0
  %v11713 = vadd.f32 0.0, %v11712
  %v11714 = vpop.f32.mrf.mxu0
  %11715 = vmatmul.bf16.gmra.mxu0 %v11598
  %v11716 = vpop.f32.mrf.mxu0
  %v11717 = vadd.f32 0.0, %v11716
  %v11718 = vpop.f32.mrf.mxu0
  %11719 = vdwg.mxu0
  %11720 = vmatpush.bf16.msra.mxu0 %v11686
  %11721 = vmatpush.bf16.msra.mxu0 %v11685
  %11722 = vmatpush.bf16.msra.mxu0 %v11684
  %11723 = vmatpush.bf16.msra.mxu0 %v11683
  %11724 = vmatpush.bf16.msra.mxu0 %v11682
  %11725 = vmatpush.bf16.msra.mxu0 %v11681
  %11726 = vmatpush.bf16.msra.mxu0 %v11680
  %11727 = vmatpush.bf16.msra.mxu0 %v11679
  %11728 = vmatmul.bf16.gmra.mxu0 %v11602
  %v11729 = vpop.f32.mrf.mxu0
  %v11730 = vadd.f32 %v11713, %v11729
  %v11731 = vpop.f32.mrf.mxu0
  %11732 = vmatmul.bf16.gmra.mxu0 %v11601
  %v11733 = vpop.f32.mrf.mxu0
  %v11734 = vadd.f32 %v11717, %v11733
  %v11735 = vpop.f32.mrf.mxu0
  %11736 = vdwg.mxu0
  %v11737 = vadd.f32 %v11546, %v11730
  %v11738 = vadd.f32 %v11550, %v11734
  %v11739 = vld [vmem:[#allocation4] sm:$0xf0]
  %v11740 = vld [vmem:[#allocation4 + $0x8] sm:$0xf0]
  %v11741 = vld [vmem:[#allocation4 + $0x10] sm:$0xff]
  %v11742 = vld [vmem:[#allocation4 + $0x18] sm:$0xff]
  %v11743 = vld [vmem:[#allocation4 + $0x20] sm:$0xff]
  %v11744 = vld [vmem:[#allocation4 + $0x28] sm:$0xff]
  %v11745 = vld [vmem:[#allocation4 + $0x30] sm:$0x3]
  %v11746 = vld [vmem:[#allocation4 + $0x38] sm:$0x3]
  %v11747 = vpack.c.bf16 %v11741, %v11739
  %v11748 = vpack.c.bf16 %v11742, %v11740
  %v11749 = vpack.c.bf16 %v11745, %v11743
  %v11750 = vpack.c.bf16 %v11746, %v11744
  %v11751 = vld [vmem:[%s9 + $0x180] sm:$0xf]
  %v11752 = vld [vmem:[%s9 + $0x184] sm:$0xf]
  %v11753 = vld [vmem:[%s9 + $0x188] sm:$0xf]
  %v11754 = vld [vmem:[%s9 + $0x18c] sm:$0xf]
  %v11755 = vld [vmem:[%s9 + $0x190] sm:$0xf]
  %v11756 = vld [vmem:[%s9 + $0x194] sm:$0xf]
  %v11757 = vld [vmem:[%s9 + $0x198] sm:$0xf]
  %v11758 = vld [vmem:[%s9 + $0x19c] sm:$0xf]
  %v11759 = vld [vmem:[%s9 + $0x1a0] sm:$0xf]
  %v11760 = vld [vmem:[%s9 + $0x1a4] sm:$0xf]
  %v11761 = vld [vmem:[%s9 + $0x1a8] sm:$0xf]
  %v11762 = vld [vmem:[%s9 + $0x1ac] sm:$0xf]
  %v11763 = vld [vmem:[%s9 + $0x1b0] sm:$0xf]
  %v11764 = vld [vmem:[%s9 + $0x1b4] sm:$0xf]
  %v11765 = vld [vmem:[%s9 + $0x1b8] sm:$0xf]
  %v11766 = vld [vmem:[%s9 + $0x1bc] sm:$0xf]
  %v11767 = vld [vmem:[%s9 + $0x1c0] sm:$0xf]
  %v11768 = vld [vmem:[%s9 + $0x1c4] sm:$0xf]
  %v11769 = vld [vmem:[%s9 + $0x1c8] sm:$0xf]
  %v11770 = vld [vmem:[%s9 + $0x1cc] sm:$0xf]
  %v11771 = vld [vmem:[%s9 + $0x1d0] sm:$0xf]
  %v11772 = vld [vmem:[%s9 + $0x1d4] sm:$0xf]
  %v11773 = vld [vmem:[%s9 + $0x1d8] sm:$0xf]
  %v11774 = vld [vmem:[%s9 + $0x1dc] sm:$0xf]
  %v11775 = vld [vmem:[%s9 + $0x1e0] sm:$0xf]
  %v11776 = vld [vmem:[%s9 + $0x1e4] sm:$0xf]
  %v11777 = vld [vmem:[%s9 + $0x1e8] sm:$0xf]
  %v11778 = vld [vmem:[%s9 + $0x1ec] sm:$0xf]
  %v11779 = vld [vmem:[%s9 + $0x1f0] sm:$0xf]
  %v11780 = vld [vmem:[%s9 + $0x1f4] sm:$0xf]
  %v11781 = vld [vmem:[%s9 + $0x1f8] sm:$0xf]
  %v11782 = vld [vmem:[%s9 + $0x1fc] sm:$0xf]
  %v11787 = vrot.slane %v11747, 2
  %v11788 = vrot.slane %v11749, 2
  %v11789 = vsel %vm5649, %v11787, %v11788
  %v11790 = vrot.slane %v11748, 2
  %v11791 = vrot.slane %v11750, 2
  %v11792 = vsel %vm5649, %v11790, %v11791
  %v11829 = vunpack.c.l.b16 %v11751
  %v11830 = vunpack.c.l.b16 %v11752
  %v11831 = vunpack.c.l.b16 %v11753
  %v11832 = vunpack.c.l.b16 %v11754
  %v11833 = vunpack.c.l.b16 %v11755
  %v11834 = vunpack.c.l.b16 %v11756
  %v11835 = vunpack.c.l.b16 %v11757
  %v11836 = vunpack.c.l.b16 %v11758
  %v11837 = vunpack.c.l.b16 %v11759
  %v11838 = vunpack.c.l.b16 %v11760
  %v11839 = vunpack.c.l.b16 %v11761
  %v11840 = vunpack.c.l.b16 %v11762
  %v11841 = vunpack.c.l.b16 %v11763
  %v11842 = vunpack.c.l.b16 %v11764
  %v11843 = vunpack.c.l.b16 %v11765
  %v11844 = vunpack.c.l.b16 %v11766
  %v11845 = vunpack.c.l.b16 %v11767
  %v11846 = vunpack.c.l.b16 %v11768
  %v11847 = vunpack.c.l.b16 %v11769
  %v11848 = vunpack.c.l.b16 %v11770
  %v11849 = vunpack.c.l.b16 %v11771
  %v11850 = vunpack.c.l.b16 %v11772
  %v11851 = vunpack.c.l.b16 %v11773
  %v11852 = vunpack.c.l.b16 %v11774
  %v11853 = vunpack.c.l.b16 %v11775
  %v11854 = vunpack.c.l.b16 %v11776
  %v11855 = vunpack.c.l.b16 %v11777
  %v11856 = vunpack.c.l.b16 %v11778
  %v11857 = vunpack.c.l.b16 %v11779
  %v11858 = vunpack.c.l.b16 %v11780
  %v11859 = vunpack.c.l.b16 %v11781
  %v11860 = vunpack.c.l.b16 %v11782
  %v11861 = vpack.c.b16 %v11830, %v11829
  %v11862 = vpack.c.b16 %v11832, %v11831
  %v11863 = vpack.c.b16 %v11834, %v11833
  %v11864 = vpack.c.b16 %v11836, %v11835
  %v11865 = vpack.c.b16 %v11838, %v11837
  %v11866 = vpack.c.b16 %v11840, %v11839
  %v11867 = vpack.c.b16 %v11842, %v11841
  %v11868 = vpack.c.b16 %v11844, %v11843
  %v11869 = vpack.c.b16 %v11846, %v11845
  %v11870 = vpack.c.b16 %v11848, %v11847
  %v11871 = vpack.c.b16 %v11850, %v11849
  %v11872 = vpack.c.b16 %v11852, %v11851
  %v11873 = vpack.c.b16 %v11854, %v11853
  %v11874 = vpack.c.b16 %v11856, %v11855
  %v11875 = vpack.c.b16 %v11858, %v11857
  %v11876 = vpack.c.b16 %v11860, %v11859
  %11893 = vmatpush.bf16.msra.mxu0 %v11868
  %11894 = vmatpush.bf16.msra.mxu0 %v11867
  %11895 = vmatpush.bf16.msra.mxu0 %v11866
  %11896 = vmatpush.bf16.msra.mxu0 %v11865
  %11897 = vmatpush.bf16.msra.mxu0 %v11864
  %11898 = vmatpush.bf16.msra.mxu0 %v11863
  %11899 = vmatpush.bf16.msra.mxu0 %v11862
  %11900 = vmatpush.bf16.msra.mxu0 %v11861
  %11901 = vmatmul.bf16.gmra.mxu0 %v11789
  %v11902 = vpop.f32.mrf.mxu0
  %v11903 = vadd.f32 0.0, %v11902
  %v11904 = vpop.f32.mrf.mxu0
  %11905 = vmatmul.bf16.gmra.mxu0 %v11788
  %v11906 = vpop.f32.mrf.mxu0
  %v11907 = vadd.f32 0.0, %v11906
  %v11908 = vpop.f32.mrf.mxu0
  %11909 = vdwg.mxu0
  %11910 = vmatpush.bf16.msra.mxu0 %v11876
  %11911 = vmatpush.bf16.msra.mxu0 %v11875
  %11912 = vmatpush.bf16.msra.mxu0 %v11874
  %11913 = vmatpush.bf16.msra.mxu0 %v11873
  %11914 = vmatpush.bf16.msra.mxu0 %v11872
  %11915 = vmatpush.bf16.msra.mxu0 %v11871
  %11916 = vmatpush.bf16.msra.mxu0 %v11870
  %11917 = vmatpush.bf16.msra.mxu0 %v11869
  %11918 = vmatmul.bf16.gmra.mxu0 %v11792
  %v11919 = vpop.f32.mrf.mxu0
  %v11920 = vadd.f32 %v11903, %v11919
  %v11921 = vpop.f32.mrf.mxu0
  %11922 = vmatmul.bf16.gmra.mxu0 %v11791
  %v11923 = vpop.f32.mrf.mxu0
  %v11924 = vadd.f32 %v11907, %v11923
  %v11925 = vpop.f32.mrf.mxu0
  %11926 = vdwg.mxu0
  %v11927 = vadd.f32 %v11737, %v11920
  %v11928 = vadd.f32 %v11738, %v11924
  %v11929 = vld [vmem:[#allocation4] sm:$0xe0]
  %v11930 = vld [vmem:[#allocation4 + $0x8] sm:$0xe0]
  %v11931 = vld [vmem:[#allocation4 + $0x30] sm:$0x7]
  %v11932 = vld [vmem:[#allocation4 + $0x38] sm:$0x7]
  %v11933 = vpack.c.bf16 %v11741, %v11929
  %v11934 = vpack.c.bf16 %v11742, %v11930
  %v11935 = vpack.c.bf16 %v11931, %v11743
  %v11936 = vpack.c.bf16 %v11932, %v11744
  %v11937 = vld [vmem:[%s9 + $0x200] sm:$0xf]
  %v11938 = vld [vmem:[%s9 + $0x204] sm:$0xf]
  %v11939 = vld [vmem:[%s9 + $0x208] sm:$0xf]
  %v11940 = vld [vmem:[%s9 + $0x20c] sm:$0xf]
  %v11941 = vld [vmem:[%s9 + $0x210] sm:$0xf]
  %v11942 = vld [vmem:[%s9 + $0x214] sm:$0xf]
  %v11943 = vld [vmem:[%s9 + $0x218] sm:$0xf]
  %v11944 = vld [vmem:[%s9 + $0x21c] sm:$0xf]
  %v11945 = vld [vmem:[%s9 + $0x220] sm:$0xf]
  %v11946 = vld [vmem:[%s9 + $0x224] sm:$0xf]
  %v11947 = vld [vmem:[%s9 + $0x228] sm:$0xf]
  %v11948 = vld [vmem:[%s9 + $0x22c] sm:$0xf]
  %v11949 = vld [vmem:[%s9 + $0x230] sm:$0xf]
  %v11950 = vld [vmem:[%s9 + $0x234] sm:$0xf]
  %v11951 = vld [vmem:[%s9 + $0x238] sm:$0xf]
  %v11952 = vld [vmem:[%s9 + $0x23c] sm:$0xf]
  %v11953 = vld [vmem:[%s9 + $0x240] sm:$0xf]
  %v11954 = vld [vmem:[%s9 + $0x244] sm:$0xf]
  %v11955 = vld [vmem:[%s9 + $0x248] sm:$0xf]
  %v11956 = vld [vmem:[%s9 + $0x24c] sm:$0xf]
  %v11957 = vld [vmem:[%s9 + $0x250] sm:$0xf]
  %v11958 = vld [vmem:[%s9 + $0x254] sm:$0xf]
  %v11959 = vld [vmem:[%s9 + $0x258] sm:$0xf]
  %v11960 = vld [vmem:[%s9 + $0x25c] sm:$0xf]
  %v11961 = vld [vmem:[%s9 + $0x260] sm:$0xf]
  %v11962 = vld [vmem:[%s9 + $0x264] sm:$0xf]
  %v11963 = vld [vmem:[%s9 + $0x268] sm:$0xf]
  %v11964 = vld [vmem:[%s9 + $0x26c] sm:$0xf]
  %v11965 = vld [vmem:[%s9 + $0x270] sm:$0xf]
  %v11966 = vld [vmem:[%s9 + $0x274] sm:$0xf]
  %v11967 = vld [vmem:[%s9 + $0x278] sm:$0xf]
  %v11968 = vld [vmem:[%s9 + $0x27c] sm:$0xf]
  %v11970 = vshrl.u32 %v11933, 16
  %v11972 = vrot.slane %v11970, 2
  %v11973 = vshll.u32 %v11933, 16
  %v11975 = vrot.slane %v11973, 3
  %v11976 = vor.u32 %v11972, %v11975
  %v11978 = vshrl.u32 %v11935, 16
  %v11980 = vrot.slane %v11978, 2
  %v11981 = vshll.u32 %v11935, 16
  %v11983 = vrot.slane %v11981, 3
  %v11984 = vor.u32 %v11980, %v11983
  %v11985 = vsel %vm5832, %v11976, %v11984
  %v11987 = vshrl.u32 %v11934, 16
  %v11989 = vrot.slane %v11987, 2
  %v11990 = vshll.u32 %v11934, 16
  %v11992 = vrot.slane %v11990, 3
  %v11993 = vor.u32 %v11989, %v11992
  %v11995 = vshrl.u32 %v11936, 16
  %v11997 = vrot.slane %v11995, 2
  %v11998 = vshll.u32 %v11936, 16
  %v12000 = vrot.slane %v11998, 3
  %v12001 = vor.u32 %v11997, %v12000
  %v12002 = vsel %vm5832, %v11993, %v12001
  %v12039 = vunpack.c.l.b16 %v11937
  %v12040 = vunpack.c.l.b16 %v11938
  %v12041 = vunpack.c.l.b16 %v11939
  %v12042 = vunpack.c.l.b16 %v11940
  %v12043 = vunpack.c.l.b16 %v11941
  %v12044 = vunpack.c.l.b16 %v11942
  %v12045 = vunpack.c.l.b16 %v11943
  %v12046 = vunpack.c.l.b16 %v11944
  %v12047 = vunpack.c.l.b16 %v11945
  %v12048 = vunpack.c.l.b16 %v11946
  %v12049 = vunpack.c.l.b16 %v11947
  %v12050 = vunpack.c.l.b16 %v11948
  %v12051 = vunpack.c.l.b16 %v11949
  %v12052 = vunpack.c.l.b16 %v11950
  %v12053 = vunpack.c.l.b16 %v11951
  %v12054 = vunpack.c.l.b16 %v11952
  %v12055 = vunpack.c.l.b16 %v11953
  %v12056 = vunpack.c.l.b16 %v11954
  %v12057 = vunpack.c.l.b16 %v11955
  %v12058 = vunpack.c.l.b16 %v11956
  %v12059 = vunpack.c.l.b16 %v11957
  %v12060 = vunpack.c.l.b16 %v11958
  %v12061 = vunpack.c.l.b16 %v11959
  %v12062 = vunpack.c.l.b16 %v11960
  %v12063 = vunpack.c.l.b16 %v11961
  %v12064 = vunpack.c.l.b16 %v11962
  %v12065 = vunpack.c.l.b16 %v11963
  %v12066 = vunpack.c.l.b16 %v11964
  %v12067 = vunpack.c.l.b16 %v11965
  %v12068 = vunpack.c.l.b16 %v11966
  %v12069 = vunpack.c.l.b16 %v11967
  %v12070 = vunpack.c.l.b16 %v11968
  %v12071 = vpack.c.b16 %v12040, %v12039
  %v12072 = vpack.c.b16 %v12042, %v12041
  %v12073 = vpack.c.b16 %v12044, %v12043
  %v12074 = vpack.c.b16 %v12046, %v12045
  %v12075 = vpack.c.b16 %v12048, %v12047
  %v12076 = vpack.c.b16 %v12050, %v12049
  %v12077 = vpack.c.b16 %v12052, %v12051
  %v12078 = vpack.c.b16 %v12054, %v12053
  %v12079 = vpack.c.b16 %v12056, %v12055
  %v12080 = vpack.c.b16 %v12058, %v12057
  %v12081 = vpack.c.b16 %v12060, %v12059
  %v12082 = vpack.c.b16 %v12062, %v12061
  %v12083 = vpack.c.b16 %v12064, %v12063
  %v12084 = vpack.c.b16 %v12066, %v12065
  %v12085 = vpack.c.b16 %v12068, %v12067
  %v12086 = vpack.c.b16 %v12070, %v12069
  %12103 = vmatpush.bf16.msra.mxu0 %v12078
  %12104 = vmatpush.bf16.msra.mxu0 %v12077
  %12105 = vmatpush.bf16.msra.mxu0 %v12076
  %12106 = vmatpush.bf16.msra.mxu0 %v12075
  %12107 = vmatpush.bf16.msra.mxu0 %v12074
  %12108 = vmatpush.bf16.msra.mxu0 %v12073
  %12109 = vmatpush.bf16.msra.mxu0 %v12072
  %12110 = vmatpush.bf16.msra.mxu0 %v12071
  %12111 = vmatmul.bf16.gmra.mxu0 %v11985
  %v12112 = vpop.f32.mrf.mxu0
  %v12113 = vadd.f32 0.0, %v12112
  %v12114 = vpop.f32.mrf.mxu0
  %12115 = vmatmul.bf16.gmra.mxu0 %v11984
  %v12116 = vpop.f32.mrf.mxu0
  %v12117 = vadd.f32 0.0, %v12116
  %v12118 = vpop.f32.mrf.mxu0
  %12119 = vdwg.mxu0
  %12120 = vmatpush.bf16.msra.mxu0 %v12086
  %12121 = vmatpush.bf16.msra.mxu0 %v12085
  %12122 = vmatpush.bf16.msra.mxu0 %v12084
  %12123 = vmatpush.bf16.msra.mxu0 %v12083
  %12124 = vmatpush.bf16.msra.mxu0 %v12082
  %12125 = vmatpush.bf16.msra.mxu0 %v12081
  %12126 = vmatpush.bf16.msra.mxu0 %v12080
  %12127 = vmatpush.bf16.msra.mxu0 %v12079
  %12128 = vmatmul.bf16.gmra.mxu0 %v12002
  %v12129 = vpop.f32.mrf.mxu0
  %v12130 = vadd.f32 %v12113, %v12129
  %v12131 = vpop.f32.mrf.mxu0
  %12132 = vmatmul.bf16.gmra.mxu0 %v12001
  %v12133 = vpop.f32.mrf.mxu0
  %v12134 = vadd.f32 %v12117, %v12133
  %v12135 = vpop.f32.mrf.mxu0
  %12136 = vdwg.mxu0
  %v12137 = vadd.f32 %v11927, %v12130
  %v12138 = vadd.f32 %v11928, %v12134
  %v12139 = vld [vmem:[#allocation4] sm:$0xc0]
  %v12140 = vld [vmem:[#allocation4 + $0x8] sm:$0xc0]
  %v12141 = vld [vmem:[#allocation4 + $0x30] sm:$0xf]
  %v12142 = vld [vmem:[#allocation4 + $0x38] sm:$0xf]
  %v12143 = vpack.c.bf16 %v11741, %v12139
  %v12144 = vpack.c.bf16 %v11742, %v12140
  %v12145 = vpack.c.bf16 %v12141, %v11743
  %v12146 = vpack.c.bf16 %v12142, %v11744
  %v12147 = vld [vmem:[%s9 + $0x280] sm:$0xf]
  %v12148 = vld [vmem:[%s9 + $0x284] sm:$0xf]
  %v12149 = vld [vmem:[%s9 + $0x288] sm:$0xf]
  %v12150 = vld [vmem:[%s9 + $0x28c] sm:$0xf]
  %v12151 = vld [vmem:[%s9 + $0x290] sm:$0xf]
  %v12152 = vld [vmem:[%s9 + $0x294] sm:$0xf]
  %v12153 = vld [vmem:[%s9 + $0x298] sm:$0xf]
  %v12154 = vld [vmem:[%s9 + $0x29c] sm:$0xf]
  %v12155 = vld [vmem:[%s9 + $0x2a0] sm:$0xf]
  %v12156 = vld [vmem:[%s9 + $0x2a4] sm:$0xf]
  %v12157 = vld [vmem:[%s9 + $0x2a8] sm:$0xf]
  %v12158 = vld [vmem:[%s9 + $0x2ac] sm:$0xf]
  %v12159 = vld [vmem:[%s9 + $0x2b0] sm:$0xf]
  %v12160 = vld [vmem:[%s9 + $0x2b4] sm:$0xf]
  %v12161 = vld [vmem:[%s9 + $0x2b8] sm:$0xf]
  %v12162 = vld [vmem:[%s9 + $0x2bc] sm:$0xf]
  %v12163 = vld [vmem:[%s9 + $0x2c0] sm:$0xf]
  %v12164 = vld [vmem:[%s9 + $0x2c4] sm:$0xf]
  %v12165 = vld [vmem:[%s9 + $0x2c8] sm:$0xf]
  %v12166 = vld [vmem:[%s9 + $0x2cc] sm:$0xf]
  %v12167 = vld [vmem:[%s9 + $0x2d0] sm:$0xf]
  %v12168 = vld [vmem:[%s9 + $0x2d4] sm:$0xf]
  %v12169 = vld [vmem:[%s9 + $0x2d8] sm:$0xf]
  %v12170 = vld [vmem:[%s9 + $0x2dc] sm:$0xf]
  %v12171 = vld [vmem:[%s9 + $0x2e0] sm:$0xf]
  %v12172 = vld [vmem:[%s9 + $0x2e4] sm:$0xf]
  %v12173 = vld [vmem:[%s9 + $0x2e8] sm:$0xf]
  %v12174 = vld [vmem:[%s9 + $0x2ec] sm:$0xf]
  %v12175 = vld [vmem:[%s9 + $0x2f0] sm:$0xf]
  %v12176 = vld [vmem:[%s9 + $0x2f4] sm:$0xf]
  %v12177 = vld [vmem:[%s9 + $0x2f8] sm:$0xf]
  %v12178 = vld [vmem:[%s9 + $0x2fc] sm:$0xf]
  %v12183 = vrot.slane %v12143, 3
  %v12184 = vrot.slane %v12145, 3
  %v12185 = vsel %vm6047, %v12183, %v12184
  %v12186 = vrot.slane %v12144, 3
  %v12187 = vrot.slane %v12146, 3
  %v12188 = vsel %vm6047, %v12186, %v12187
  %v12225 = vunpack.c.l.b16 %v12147
  %v12226 = vunpack.c.l.b16 %v12148
  %v12227 = vunpack.c.l.b16 %v12149
  %v12228 = vunpack.c.l.b16 %v12150
  %v12229 = vunpack.c.l.b16 %v12151
  %v12230 = vunpack.c.l.b16 %v12152
  %v12231 = vunpack.c.l.b16 %v12153
  %v12232 = vunpack.c.l.b16 %v12154
  %v12233 = vunpack.c.l.b16 %v12155
  %v12234 = vunpack.c.l.b16 %v12156
  %v12235 = vunpack.c.l.b16 %v12157
  %v12236 = vunpack.c.l.b16 %v12158
  %v12237 = vunpack.c.l.b16 %v12159
  %v12238 = vunpack.c.l.b16 %v12160
  %v12239 = vunpack.c.l.b16 %v12161
  %v12240 = vunpack.c.l.b16 %v12162
  %v12241 = vunpack.c.l.b16 %v12163
  %v12242 = vunpack.c.l.b16 %v12164
  %v12243 = vunpack.c.l.b16 %v12165
  %v12244 = vunpack.c.l.b16 %v12166
  %v12245 = vunpack.c.l.b16 %v12167
  %v12246 = vunpack.c.l.b16 %v12168
  %v12247 = vunpack.c.l.b16 %v12169
  %v12248 = vunpack.c.l.b16 %v12170
  %v12249 = vunpack.c.l.b16 %v12171
  %v12250 = vunpack.c.l.b16 %v12172
  %v12251 = vunpack.c.l.b16 %v12173
  %v12252 = vunpack.c.l.b16 %v12174
  %v12253 = vunpack.c.l.b16 %v12175
  %v12254 = vunpack.c.l.b16 %v12176
  %v12255 = vunpack.c.l.b16 %v12177
  %v12256 = vunpack.c.l.b16 %v12178
  %v12257 = vpack.c.b16 %v12226, %v12225
  %v12258 = vpack.c.b16 %v12228, %v12227
  %v12259 = vpack.c.b16 %v12230, %v12229
  %v12260 = vpack.c.b16 %v12232, %v12231
  %v12261 = vpack.c.b16 %v12234, %v12233
  %v12262 = vpack.c.b16 %v12236, %v12235
  %v12263 = vpack.c.b16 %v12238, %v12237
  %v12264 = vpack.c.b16 %v12240, %v12239
  %v12265 = vpack.c.b16 %v12242, %v12241
  %v12266 = vpack.c.b16 %v12244, %v12243
  %v12267 = vpack.c.b16 %v12246, %v12245
  %v12268 = vpack.c.b16 %v12248, %v12247
  %v12269 = vpack.c.b16 %v12250, %v12249
  %v12270 = vpack.c.b16 %v12252, %v12251
  %v12271 = vpack.c.b16 %v12254, %v12253
  %v12272 = vpack.c.b16 %v12256, %v12255
  %12289 = vmatpush.bf16.msra.mxu0 %v12264
  %12290 = vmatpush.bf16.msra.mxu0 %v12263
  %12291 = vmatpush.bf16.msra.mxu0 %v12262
  %12292 = vmatpush.bf16.msra.mxu0 %v12261
  %12293 = vmatpush.bf16.msra.mxu0 %v12260
  %12294 = vmatpush.bf16.msra.mxu0 %v12259
  %12295 = vmatpush.bf16.msra.mxu0 %v12258
  %12296 = vmatpush.bf16.msra.mxu0 %v12257
  %12297 = vmatmul.bf16.gmra.mxu0 %v12185
  %v12298 = vpop.f32.mrf.mxu0
  %v12299 = vadd.f32 0.0, %v12298
  %v12300 = vpop.f32.mrf.mxu0
  %12301 = vmatmul.bf16.gmra.mxu0 %v12184
  %v12302 = vpop.f32.mrf.mxu0
  %v12303 = vadd.f32 0.0, %v12302
  %v12304 = vpop.f32.mrf.mxu0
  %12305 = vdwg.mxu0
  %12306 = vmatpush.bf16.msra.mxu0 %v12272
  %12307 = vmatpush.bf16.msra.mxu0 %v12271
  %12308 = vmatpush.bf16.msra.mxu0 %v12270
  %12309 = vmatpush.bf16.msra.mxu0 %v12269
  %12310 = vmatpush.bf16.msra.mxu0 %v12268
  %12311 = vmatpush.bf16.msra.mxu0 %v12267
  %12312 = vmatpush.bf16.msra.mxu0 %v12266
  %12313 = vmatpush.bf16.msra.mxu0 %v12265
  %12314 = vmatmul.bf16.gmra.mxu0 %v12188
  %v12315 = vpop.f32.mrf.mxu0
  %v12316 = vadd.f32 %v12299, %v12315
  %v12317 = vpop.f32.mrf.mxu0
  %12318 = vmatmul.bf16.gmra.mxu0 %v12187
  %v12319 = vpop.f32.mrf.mxu0
  %v12320 = vadd.f32 %v12303, %v12319
  %v12321 = vpop.f32.mrf.mxu0
  %12322 = vdwg.mxu0
  %v12323 = vadd.f32 %v12137, %v12316
  %v12324 = vadd.f32 %v12138, %v12320
  %v12325 = vld [vmem:[#allocation4 + $0x30] sm:$0x3f]
  %v12326 = vld [vmem:[#allocation4 + $0x38] sm:$0x3f]
  %v12327 = vpack.c.bf16 %v11743, %v11741
  %v12328 = vpack.c.bf16 %v11744, %v11742
  %v12329 = vpack.c.bf16 %v12325, %v12325
  %v12330 = vpack.c.bf16 %v12326, %v12326
  %v12331 = vld [vmem:[%s9 + $0x300] sm:$0xf]
  %v12332 = vld [vmem:[%s9 + $0x304] sm:$0xf]
  %v12333 = vld [vmem:[%s9 + $0x308] sm:$0xf]
  %v12334 = vld [vmem:[%s9 + $0x30c] sm:$0xf]
  %v12335 = vld [vmem:[%s9 + $0x310] sm:$0xf]
  %v12336 = vld [vmem:[%s9 + $0x314] sm:$0xf]
  %v12337 = vld [vmem:[%s9 + $0x318] sm:$0xf]
  %v12338 = vld [vmem:[%s9 + $0x31c] sm:$0xf]
  %v12339 = vld [vmem:[%s9 + $0x320] sm:$0xf]
  %v12340 = vld [vmem:[%s9 + $0x324] sm:$0xf]
  %v12341 = vld [vmem:[%s9 + $0x328] sm:$0xf]
  %v12342 = vld [vmem:[%s9 + $0x32c] sm:$0xf]
  %v12343 = vld [vmem:[%s9 + $0x330] sm:$0xf]
  %v12344 = vld [vmem:[%s9 + $0x334] sm:$0xf]
  %v12345 = vld [vmem:[%s9 + $0x338] sm:$0xf]
  %v12346 = vld [vmem:[%s9 + $0x33c] sm:$0xf]
  %v12347 = vld [vmem:[%s9 + $0x340] sm:$0xf]
  %v12348 = vld [vmem:[%s9 + $0x344] sm:$0xf]
  %v12349 = vld [vmem:[%s9 + $0x348] sm:$0xf]
  %v12350 = vld [vmem:[%s9 + $0x34c] sm:$0xf]
  %v12351 = vld [vmem:[%s9 + $0x350] sm:$0xf]
  %v12352 = vld [vmem:[%s9 + $0x354] sm:$0xf]
  %v12353 = vld [vmem:[%s9 + $0x358] sm:$0xf]
  %v12354 = vld [vmem:[%s9 + $0x35c] sm:$0xf]
  %v12355 = vld [vmem:[%s9 + $0x360] sm:$0xf]
  %v12356 = vld [vmem:[%s9 + $0x364] sm:$0xf]
  %v12357 = vld [vmem:[%s9 + $0x368] sm:$0xf]
  %v12358 = vld [vmem:[%s9 + $0x36c] sm:$0xf]
  %v12359 = vld [vmem:[%s9 + $0x370] sm:$0xf]
  %v12360 = vld [vmem:[%s9 + $0x374] sm:$0xf]
  %v12361 = vld [vmem:[%s9 + $0x378] sm:$0xf]
  %v12362 = vld [vmem:[%s9 + $0x37c] sm:$0xf]
  %v12395 = vunpack.c.l.b16 %v12331
  %v12396 = vunpack.c.l.b16 %v12332
  %v12397 = vunpack.c.l.b16 %v12333
  %v12398 = vunpack.c.l.b16 %v12334
  %v12399 = vunpack.c.l.b16 %v12335
  %v12400 = vunpack.c.l.b16 %v12336
  %v12401 = vunpack.c.l.b16 %v12337
  %v12402 = vunpack.c.l.b16 %v12338
  %v12403 = vunpack.c.l.b16 %v12339
  %v12404 = vunpack.c.l.b16 %v12340
  %v12405 = vunpack.c.l.b16 %v12341
  %v12406 = vunpack.c.l.b16 %v12342
  %v12407 = vunpack.c.l.b16 %v12343
  %v12408 = vunpack.c.l.b16 %v12344
  %v12409 = vunpack.c.l.b16 %v12345
  %v12410 = vunpack.c.l.b16 %v12346
  %v12411 = vunpack.c.l.b16 %v12347
  %v12412 = vunpack.c.l.b16 %v12348
  %v12413 = vunpack.c.l.b16 %v12349
  %v12414 = vunpack.c.l.b16 %v12350
  %v12415 = vunpack.c.l.b16 %v12351
  %v12416 = vunpack.c.l.b16 %v12352
  %v12417 = vunpack.c.l.b16 %v12353
  %v12418 = vunpack.c.l.b16 %v12354
  %v12419 = vunpack.c.l.b16 %v12355
  %v12420 = vunpack.c.l.b16 %v12356
  %v12421 = vunpack.c.l.b16 %v12357
  %v12422 = vunpack.c.l.b16 %v12358
  %v12423 = vunpack.c.l.b16 %v12359
  %v12424 = vunpack.c.l.b16 %v12360
  %v12425 = vunpack.c.l.b16 %v12361
  %v12426 = vunpack.c.l.b16 %v12362
  %v12427 = vpack.c.b16 %v12396, %v12395
  %v12428 = vpack.c.b16 %v12398, %v12397
  %v12429 = vpack.c.b16 %v12400, %v12399
  %v12430 = vpack.c.b16 %v12402, %v12401
  %v12431 = vpack.c.b16 %v12404, %v12403
  %v12432 = vpack.c.b16 %v12406, %v12405
  %v12433 = vpack.c.b16 %v12408, %v12407
  %v12434 = vpack.c.b16 %v12410, %v12409
  %v12435 = vpack.c.b16 %v12412, %v12411
  %v12436 = vpack.c.b16 %v12414, %v12413
  %v12437 = vpack.c.b16 %v12416, %v12415
  %v12438 = vpack.c.b16 %v12418, %v12417
  %v12439 = vpack.c.b16 %v12420, %v12419
  %v12440 = vpack.c.b16 %v12422, %v12421
  %v12441 = vpack.c.b16 %v12424, %v12423
  %v12442 = vpack.c.b16 %v12426, %v12425
  %12459 = vmatpush.bf16.msra.mxu0 %v12434
  %12460 = vmatpush.bf16.msra.mxu0 %v12433
  %12461 = vmatpush.bf16.msra.mxu0 %v12432
  %12462 = vmatpush.bf16.msra.mxu0 %v12431
  %12463 = vmatpush.bf16.msra.mxu0 %v12430
  %12464 = vmatpush.bf16.msra.mxu0 %v12429
  %12465 = vmatpush.bf16.msra.mxu0 %v12428
  %12466 = vmatpush.bf16.msra.mxu0 %v12427
  %12467 = vmatmul.bf16.gmra.mxu0 %v12327
  %v12468 = vpop.f32.mrf.mxu0
  %v12469 = vadd.f32 0.0, %v12468
  %v12470 = vpop.f32.mrf.mxu0
  %12471 = vmatmul.bf16.gmra.mxu0 %v12329
  %v12472 = vpop.f32.mrf.mxu0
  %v12473 = vadd.f32 0.0, %v12472
  %v12474 = vpop.f32.mrf.mxu0
  %12475 = vdwg.mxu0
  %12476 = vmatpush.bf16.msra.mxu0 %v12442
  %12477 = vmatpush.bf16.msra.mxu0 %v12441
  %12478 = vmatpush.bf16.msra.mxu0 %v12440
  %12479 = vmatpush.bf16.msra.mxu0 %v12439
  %12480 = vmatpush.bf16.msra.mxu0 %v12438
  %12481 = vmatpush.bf16.msra.mxu0 %v12437
  %12482 = vmatpush.bf16.msra.mxu0 %v12436
  %12483 = vmatpush.bf16.msra.mxu0 %v12435
  %12484 = vmatmul.bf16.gmra.mxu0 %v12328
  %v12485 = vpop.f32.mrf.mxu0
  %v12486 = vadd.f32 %v12469, %v12485
  %v12487 = vpop.f32.mrf.mxu0
  %12488 = vmatmul.bf16.gmra.mxu0 %v12330
  %v12489 = vpop.f32.mrf.mxu0
  %v12490 = vadd.f32 %v12473, %v12489
  %v12491 = vpop.f32.mrf.mxu0
  %12492 = vdwg.mxu0
  %v12493 = vadd.f32 %v12323, %v12486
  %v12494 = vadd.f32 %v12324, %v12490
  %v12495 = vld [vmem:[#allocation4 + $0x10] sm:$0xfe]
  %v12496 = vld [vmem:[#allocation4 + $0x18] sm:$0xfe]
  %v12497 = vld [vmem:[#allocation4 + $0x30] sm:$0x7f]
  %v12498 = vld [vmem:[#allocation4 + $0x38] sm:$0x7f]
  %v12499 = vpack.c.bf16 %v11743, %v12495
  %v12500 = vpack.c.bf16 %v11744, %v12496
  %v12501 = vpack.c.bf16 %v12497, %v12497
  %v12502 = vpack.c.bf16 %v12498, %v12498
  %v12503 = vld [vmem:[%s9 + $0x380] sm:$0xf]
  %v12504 = vld [vmem:[%s9 + $0x384] sm:$0xf]
  %v12505 = vld [vmem:[%s9 + $0x388] sm:$0xf]
  %v12506 = vld [vmem:[%s9 + $0x38c] sm:$0xf]
  %v12507 = vld [vmem:[%s9 + $0x390] sm:$0xf]
  %v12508 = vld [vmem:[%s9 + $0x394] sm:$0xf]
  %v12509 = vld [vmem:[%s9 + $0x398] sm:$0xf]
  %v12510 = vld [vmem:[%s9 + $0x39c] sm:$0xf]
  %v12511 = vld [vmem:[%s9 + $0x3a0] sm:$0xf]
  %v12512 = vld [vmem:[%s9 + $0x3a4] sm:$0xf]
  %v12513 = vld [vmem:[%s9 + $0x3a8] sm:$0xf]
  %v12514 = vld [vmem:[%s9 + $0x3ac] sm:$0xf]
  %v12515 = vld [vmem:[%s9 + $0x3b0] sm:$0xf]
  %v12516 = vld [vmem:[%s9 + $0x3b4] sm:$0xf]
  %v12517 = vld [vmem:[%s9 + $0x3b8] sm:$0xf]
  %v12518 = vld [vmem:[%s9 + $0x3bc] sm:$0xf]
  %v12519 = vld [vmem:[%s9 + $0x3c0] sm:$0xf]
  %v12520 = vld [vmem:[%s9 + $0x3c4] sm:$0xf]
  %v12521 = vld [vmem:[%s9 + $0x3c8] sm:$0xf]
  %v12522 = vld [vmem:[%s9 + $0x3cc] sm:$0xf]
  %v12523 = vld [vmem:[%s9 + $0x3d0] sm:$0xf]
  %v12524 = vld [vmem:[%s9 + $0x3d4] sm:$0xf]
  %v12525 = vld [vmem:[%s9 + $0x3d8] sm:$0xf]
  %v12526 = vld [vmem:[%s9 + $0x3dc] sm:$0xf]
  %v12527 = vld [vmem:[%s9 + $0x3e0] sm:$0xf]
  %v12528 = vld [vmem:[%s9 + $0x3e4] sm:$0xf]
  %v12529 = vld [vmem:[%s9 + $0x3e8] sm:$0xf]
  %v12530 = vld [vmem:[%s9 + $0x3ec] sm:$0xf]
  %v12531 = vld [vmem:[%s9 + $0x3f0] sm:$0xf]
  %v12532 = vld [vmem:[%s9 + $0x3f4] sm:$0xf]
  %v12533 = vld [vmem:[%s9 + $0x3f8] sm:$0xf]
  %v12534 = vld [vmem:[%s9 + $0x3fc] sm:$0xf]
  %v12536 = vshrl.u32 %v12499, 16
  %v12538 = vshll.u32 %v12499, 16
  %v12540 = vrot.slane %v12538, 1
  %v12541 = vor.u32 %v12536, %v12540
  %v12543 = vshll.u32 %v12501, 16
  %v12545 = vrot.slane %v12543, 1
  %v12546 = vsel %vm5119, %v12541, %v12545
  %v12548 = vshrl.u32 %v12500, 16
  %v12550 = vshll.u32 %v12500, 16
  %v12552 = vrot.slane %v12550, 1
  %v12553 = vor.u32 %v12548, %v12552
  %v12555 = vshll.u32 %v12502, 16
  %v12557 = vrot.slane %v12555, 1
  %v12558 = vsel %vm5119, %v12553, %v12557
  %v12559 = vshrl.u32 %v12501, 16
  %v12561 = vor.u32 %v12559, %v12545
  %v12562 = vshrl.u32 %v12502, 16
  %v12564 = vor.u32 %v12562, %v12557
  %v12601 = vunpack.c.l.b16 %v12503
  %v12602 = vunpack.c.l.b16 %v12504
  %v12603 = vunpack.c.l.b16 %v12505
  %v12604 = vunpack.c.l.b16 %v12506
  %v12605 = vunpack.c.l.b16 %v12507
  %v12606 = vunpack.c.l.b16 %v12508
  %v12607 = vunpack.c.l.b16 %v12509
  %v12608 = vunpack.c.l.b16 %v12510
  %v12609 = vunpack.c.l.b16 %v12511
  %v12610 = vunpack.c.l.b16 %v12512
  %v12611 = vunpack.c.l.b16 %v12513
  %v12612 = vunpack.c.l.b16 %v12514
  %v12613 = vunpack.c.l.b16 %v12515
  %v12614 = vunpack.c.l.b16 %v12516
  %v12615 = vunpack.c.l.b16 %v12517
  %v12616 = vunpack.c.l.b16 %v12518
  %v12617 = vunpack.c.l.b16 %v12519
  %v12618 = vunpack.c.l.b16 %v12520
  %v12619 = vunpack.c.l.b16 %v12521
  %v12620 = vunpack.c.l.b16 %v12522
  %v12621 = vunpack.c.l.b16 %v12523
  %v12622 = vunpack.c.l.b16 %v12524
  %v12623 = vunpack.c.l.b16 %v12525
  %v12624 = vunpack.c.l.b16 %v12526
  %v12625 = vunpack.c.l.b16 %v12527
  %v12626 = vunpack.c.l.b16 %v12528
  %v12627 = vunpack.c.l.b16 %v12529
  %v12628 = vunpack.c.l.b16 %v12530
  %v12629 = vunpack.c.l.b16 %v12531
  %v12630 = vunpack.c.l.b16 %v12532
  %v12631 = vunpack.c.l.b16 %v12533
  %v12632 = vunpack.c.l.b16 %v12534
  %v12633 = vpack.c.b16 %v12602, %v12601
  %v12634 = vpack.c.b16 %v12604, %v12603
  %v12635 = vpack.c.b16 %v12606, %v12605
  %v12636 = vpack.c.b16 %v12608, %v12607
  %v12637 = vpack.c.b16 %v12610, %v12609
  %v12638 = vpack.c.b16 %v12612, %v12611
  %v12639 = vpack.c.b16 %v12614, %v12613
  %v12640 = vpack.c.b16 %v12616, %v12615
  %v12641 = vpack.c.b16 %v12618, %v12617
  %v12642 = vpack.c.b16 %v12620, %v12619
  %v12643 = vpack.c.b16 %v12622, %v12621
  %v12644 = vpack.c.b16 %v12624, %v12623
  %v12645 = vpack.c.b16 %v12626, %v12625
  %v12646 = vpack.c.b16 %v12628, %v12627
  %v12647 = vpack.c.b16 %v12630, %v12629
  %v12648 = vpack.c.b16 %v12632, %v12631
  %12665 = vmatpush.bf16.msra.mxu0 %v12640
  %12666 = vmatpush.bf16.msra.mxu0 %v12639
  %12667 = vmatpush.bf16.msra.mxu0 %v12638
  %12668 = vmatpush.bf16.msra.mxu0 %v12637
  %12669 = vmatpush.bf16.msra.mxu0 %v12636
  %12670 = vmatpush.bf16.msra.mxu0 %v12635
  %12671 = vmatpush.bf16.msra.mxu0 %v12634
  %12672 = vmatpush.bf16.msra.mxu0 %v12633
  %12673 = vmatmul.bf16.gmra.mxu0 %v12546
  %v12674 = vpop.f32.mrf.mxu0
  %v12675 = vadd.f32 0.0, %v12674
  %v12676 = vpop.f32.mrf.mxu0
  %12677 = vmatmul.bf16.gmra.mxu0 %v12561
  %v12678 = vpop.f32.mrf.mxu0
  %v12679 = vadd.f32 0.0, %v12678
  %v12680 = vpop.f32.mrf.mxu0
  %12681 = vdwg.mxu0
  %12682 = vmatpush.bf16.msra.mxu0 %v12648
  %12683 = vmatpush.bf16.msra.mxu0 %v12647
  %12684 = vmatpush.bf16.msra.mxu0 %v12646
  %12685 = vmatpush.bf16.msra.mxu0 %v12645
  %12686 = vmatpush.bf16.msra.mxu0 %v12644
  %12687 = vmatpush.bf16.msra.mxu0 %v12643
  %12688 = vmatpush.bf16.msra.mxu0 %v12642
  %12689 = vmatpush.bf16.msra.mxu0 %v12641
  %12690 = vmatmul.bf16.gmra.mxu0 %v12558
  %v12691 = vpop.f32.mrf.mxu0
  %v12692 = vadd.f32 %v12675, %v12691
  %v12693 = vpop.f32.mrf.mxu0
  %12694 = vmatmul.bf16.gmra.mxu0 %v12564
  %v12695 = vpop.f32.mrf.mxu0
  %v12696 = vadd.f32 %v12679, %v12695
  %v12697 = vpop.f32.mrf.mxu0
  %12698 = vdwg.mxu0
  %v12699 = vadd.f32 %v12493, %v12692
  %v12700 = vadd.f32 %v12494, %v12696
  %v12701 = vld [vmem:[#allocation4 + $0x10] sm:$0xfc]
  %v12702 = vld [vmem:[#allocation4 + $0x18] sm:$0xfc]
  %v12703 = vld [vmem:[#allocation4 + $0x30] sm:$0xff]
  %v12704 = vld [vmem:[#allocation4 + $0x38] sm:$0xff]
  %v12705 = vpack.c.bf16 %v11743, %v12701
  %v12706 = vpack.c.bf16 %v11744, %v12702
  %v12707 = vpack.c.bf16 %v12703, %v12703
  %v12708 = vpack.c.bf16 %v12704, %v12704
  %v12709 = vld [vmem:[%s9 + $0x400] sm:$0xf]
  %v12710 = vld [vmem:[%s9 + $0x404] sm:$0xf]
  %v12711 = vld [vmem:[%s9 + $0x408] sm:$0xf]
  %v12712 = vld [vmem:[%s9 + $0x40c] sm:$0xf]
  %v12713 = vld [vmem:[%s9 + $0x410] sm:$0xf]
  %v12714 = vld [vmem:[%s9 + $0x414] sm:$0xf]
  %v12715 = vld [vmem:[%s9 + $0x418] sm:$0xf]
  %v12716 = vld [vmem:[%s9 + $0x41c] sm:$0xf]
  %v12717 = vld [vmem:[%s9 + $0x420] sm:$0xf]
  %v12718 = vld [vmem:[%s9 + $0x424] sm:$0xf]
  %v12719 = vld [vmem:[%s9 + $0x428] sm:$0xf]
  %v12720 = vld [vmem:[%s9 + $0x42c] sm:$0xf]
  %v12721 = vld [vmem:[%s9 + $0x430] sm:$0xf]
  %v12722 = vld [vmem:[%s9 + $0x434] sm:$0xf]
  %v12723 = vld [vmem:[%s9 + $0x438] sm:$0xf]
  %v12724 = vld [vmem:[%s9 + $0x43c] sm:$0xf]
  %v12725 = vld [vmem:[%s9 + $0x440] sm:$0xf]
  %v12726 = vld [vmem:[%s9 + $0x444] sm:$0xf]
  %v12727 = vld [vmem:[%s9 + $0x448] sm:$0xf]
  %v12728 = vld [vmem:[%s9 + $0x44c] sm:$0xf]
  %v12729 = vld [vmem:[%s9 + $0x450] sm:$0xf]
  %v12730 = vld [vmem:[%s9 + $0x454] sm:$0xf]
  %v12731 = vld [vmem:[%s9 + $0x458] sm:$0xf]
  %v12732 = vld [vmem:[%s9 + $0x45c] sm:$0xf]
  %v12733 = vld [vmem:[%s9 + $0x460] sm:$0xf]
  %v12734 = vld [vmem:[%s9 + $0x464] sm:$0xf]
  %v12735 = vld [vmem:[%s9 + $0x468] sm:$0xf]
  %v12736 = vld [vmem:[%s9 + $0x46c] sm:$0xf]
  %v12737 = vld [vmem:[%s9 + $0x470] sm:$0xf]
  %v12738 = vld [vmem:[%s9 + $0x474] sm:$0xf]
  %v12739 = vld [vmem:[%s9 + $0x478] sm:$0xf]
  %v12740 = vld [vmem:[%s9 + $0x47c] sm:$0xf]
  %v12745 = vrot.slane %v12705, 1
  %v12746 = vrot.slane %v12707, 1
  %v12747 = vsel %vm5458, %v12745, %v12746
  %v12748 = vrot.slane %v12706, 1
  %v12749 = vrot.slane %v12708, 1
  %v12750 = vsel %vm5458, %v12748, %v12749
  %v12787 = vunpack.c.l.b16 %v12709
  %v12788 = vunpack.c.l.b16 %v12710
  %v12789 = vunpack.c.l.b16 %v12711
  %v12790 = vunpack.c.l.b16 %v12712
  %v12791 = vunpack.c.l.b16 %v12713
  %v12792 = vunpack.c.l.b16 %v12714
  %v12793 = vunpack.c.l.b16 %v12715
  %v12794 = vunpack.c.l.b16 %v12716
  %v12795 = vunpack.c.l.b16 %v12717
  %v12796 = vunpack.c.l.b16 %v12718
  %v12797 = vunpack.c.l.b16 %v12719
  %v12798 = vunpack.c.l.b16 %v12720
  %v12799 = vunpack.c.l.b16 %v12721
  %v12800 = vunpack.c.l.b16 %v12722
  %v12801 = vunpack.c.l.b16 %v12723
  %v12802 = vunpack.c.l.b16 %v12724
  %v12803 = vunpack.c.l.b16 %v12725
  %v12804 = vunpack.c.l.b16 %v12726
  %v12805 = vunpack.c.l.b16 %v12727
  %v12806 = vunpack.c.l.b16 %v12728
  %v12807 = vunpack.c.l.b16 %v12729
  %v12808 = vunpack.c.l.b16 %v12730
  %v12809 = vunpack.c.l.b16 %v12731
  %v12810 = vunpack.c.l.b16 %v12732
  %v12811 = vunpack.c.l.b16 %v12733
  %v12812 = vunpack.c.l.b16 %v12734
  %v12813 = vunpack.c.l.b16 %v12735
  %v12814 = vunpack.c.l.b16 %v12736
  %v12815 = vunpack.c.l.b16 %v12737
  %v12816 = vunpack.c.l.b16 %v12738
  %v12817 = vunpack.c.l.b16 %v12739
  %v12818 = vunpack.c.l.b16 %v12740
  %v12819 = vpack.c.b16 %v12788, %v12787
  %v12820 = vpack.c.b16 %v12790, %v12789
  %v12821 = vpack.c.b16 %v12792, %v12791
  %v12822 = vpack.c.b16 %v12794, %v12793
  %v12823 = vpack.c.b16 %v12796, %v12795
  %v12824 = vpack.c.b16 %v12798, %v12797
  %v12825 = vpack.c.b16 %v12800, %v12799
  %v12826 = vpack.c.b16 %v12802, %v12801
  %v12827 = vpack.c.b16 %v12804, %v12803
  %v12828 = vpack.c.b16 %v12806, %v12805
  %v12829 = vpack.c.b16 %v12808, %v12807
  %v12830 = vpack.c.b16 %v12810, %v12809
  %v12831 = vpack.c.b16 %v12812, %v12811
  %v12832 = vpack.c.b16 %v12814, %v12813
  %v12833 = vpack.c.b16 %v12816, %v12815
  %v12834 = vpack.c.b16 %v12818, %v12817
  %12851 = vmatpush.bf16.msra.mxu0 %v12826
  %12852 = vmatpush.bf16.msra.mxu0 %v12825
  %12853 = vmatpush.bf16.msra.mxu0 %v12824
  %12854 = vmatpush.bf16.msra.mxu0 %v12823
  %12855 = vmatpush.bf16.msra.mxu0 %v12822
  %12856 = vmatpush.bf16.msra.mxu0 %v12821
  %12857 = vmatpush.bf16.msra.mxu0 %v12820
  %12858 = vmatpush.bf16.msra.mxu0 %v12819
  %12859 = vmatmul.bf16.gmra.mxu0 %v12747
  %v12860 = vpop.f32.mrf.mxu0
  %v12861 = vadd.f32 0.0, %v12860
  %v12862 = vpop.f32.mrf.mxu0
  %12863 = vmatmul.bf16.gmra.mxu0 %v12746
  %v12864 = vpop.f32.mrf.mxu0
  %v12865 = vadd.f32 0.0, %v12864
  %v12866 = vpop.f32.mrf.mxu0
  %12867 = vdwg.mxu0
  %12868 = vmatpush.bf16.msra.mxu0 %v12834
  %12869 = vmatpush.bf16.msra.mxu0 %v12833
  %12870 = vmatpush.bf16.msra.mxu0 %v12832
  %12871 = vmatpush.bf16.msra.mxu0 %v12831
  %12872 = vmatpush.bf16.msra.mxu0 %v12830
  %12873 = vmatpush.bf16.msra.mxu0 %v12829
  %12874 = vmatpush.bf16.msra.mxu0 %v12828
  %12875 = vmatpush.bf16.msra.mxu0 %v12827
  %12876 = vmatmul.bf16.gmra.mxu0 %v12750
  %v12877 = vpop.f32.mrf.mxu0
  %v12878 = vadd.f32 %v12861, %v12877
  %v12879 = vpop.f32.mrf.mxu0
  %12880 = vmatmul.bf16.gmra.mxu0 %v12749
  %v12881 = vpop.f32.mrf.mxu0
  %v12882 = vadd.f32 %v12865, %v12881
  %v12883 = vpop.f32.mrf.mxu0
  %12884 = vdwg.mxu0
  %v12885 = vadd.f32 %v12699, %v12878
  %v12886 = vadd.f32 %v12700, %v12882
  %v12887 = vld [vmem:[%s10 + $0xb] sm:$0x1]
  %v12889 = vperm.slane %v12887, 0
  %v12891 = vadd.f32 %v12885, %v12889
  %v12892 = vadd.f32 %v12886, %v12889
  %vm12893 = vcmp.gt.f32.partialorder %v12891, 0.0
  %vm12894 = vcmp.gt.f32.partialorder %v12892, 0.0
  %v12895 = vsel %vm12893, 1.0, 0.0
  %v12896 = vsel %vm12894, 1.0, 0.0
  %v12897 = vpack.c.bf16 %v12895, %v12895
  %v12898 = vpack.c.bf16 %v12896, %v12896
  %12899 = vst [vmem:[%s11] sm:$0x1] %v12897
  %v12901 = vrot.slane %v12897, 5
  %v12902 = vrot.slane %v12901, 4
  %12904 = vst [vmem:[%s11] sm:$0x2] %v12902
  %v12906 = vrot.slane %v12898, 6
  %12908 = vst [vmem:[%s11] sm:$0x4] %v12906
  %v12909 = vrot.slane %v12898, 7
  %12911 = vst [vmem:[%s11] sm:$0x8] %v12909
  // Predicated region
  $region50: #{encoder_forward.1} parent=0 // pred_check
    _
  $region51: #{encoder_forward.1} parent=0 // pred_check_branch
    %12913 = sbr.rel (0) target = $region53
  $region52: #{encoder_forward.1} parent=0 // pred_region
    _
  $region53: #{encoder_forward.1} parent=0 // pred_fallthru
    _
  // Predicated region
  $region54: #{encoder_forward.1} parent=0 // pred_check
    _
  $region55: #{encoder_forward.1} parent=0 // pred_check_branch
    %12915 = sbr.rel (0) target = $region57
  $region56: #{encoder_forward.1} parent=0 // pred_region
    _
  $region57: #{encoder_forward.1} parent=0 // pred_fallthru
    _

</llo_original>
